<compile_context>
chip_gen: v5e
topology: v5e:2x2
jax: 0.10.0
libtpu: 0.0.40
codegen_flags: <defaults>
</compile_context>

<pallas_src>
import numpy as np
import jax
import jax.numpy as jnp
from jax import lax
from jax.experimental import pallas as pl
from jax.experimental.pallas import tpu as pltpu


def _round_up(x, m):
    return ((x + m - 1) // m) * m


def make_dilation_block_kernel(D, H, W, Cin, Cpad, dil, K=3,
                               compute_dtype=jnp.float32):
    p = dil                       # padding = dilation (keeps spatial size)
    K3 = K * K * K

    def kernel(x_ref, scale_ref, shift_ref, w_ref, o_ref, xpad_ref):
        # x_ref:     (1, D, H, W, Cin)   unpadded, pre-BN, channels-last
        # scale_ref: (1, Cin)            gamma / sqrt(var + eps)
        # shift_ref: (1, Cin)            beta - mean * scale
        # w_ref:     (K3*Cin, Cpad)      im2col weight, Cout zero-padded to Cpad
        # o_ref:     (1, D*H*W, Cpad)    lane-dense output slab
        # xpad_ref:  VMEM scratch (D+2p, H+2p, W+2p, Cin)

        # Zero the padded scratch; zeros in the halo reproduce padding_mode=
        # 'zeros' applied *after* BN + activation. (Unconditional so grid
        # iterations stay independent -> safe under "parallel"/megacore.)
        xpad_ref[...] = jnp.zeros_like(xpad_ref)

        # BatchNorm (folded scale/shift) + ReLU into the scratch interior.
        xn = jnp.maximum(x_ref[0] * scale_ref[0] + shift_ref[0], 0.0)
        xpad_ref[pl.ds(p, D), pl.ds(p, H), pl.ds(p, W), :] = xn

        # im2col: fold all 27 dilated taps into the contraction dimension and
        # issue a single MXU matmul (D*H*W, K3*Cin) @ (K3*Cin, Cpad).
        xp = xpad_ref[...]
        cols = []
        for kd in range(K):
            for kh in range(K):
                for kw in range(K):
                    cols.append(xp[kd * dil:kd * dil + D,
                                   kh * dil:kh * dil + H,
                                   kw * dil:kw * dil + W, :])
        col = jnp.concatenate(cols, axis=-1).reshape(D * H * W, K3 * Cin)
        o_ref[0] = jnp.dot(col.astype(compute_dtype), w_ref[...],
                           preferred_element_type=jnp.float32)

    return kernel


def dilation_block(x_ncdhw, gamma, beta, weight_oidhw, dilation, eps=1e-5,
                   compute_dtype=jnp.float32):
    """Pallas DilationBlock forward. x_ncdhw: (N, Cin, D, H, W) float32.

    compute_dtype: matmul input dtype (accumulation is always f32). On v6e/v7x
    at real scale, jnp.bfloat16 roughly doubles MXU throughput.
    """
    N, Cin, D, H, W = x_ncdhw.shape
    Cout, Cin_w, K, _, _ = weight_oidhw.shape
    assert Cin_w == Cin
    K3 = K * K * K
    p = dilation
    Dp, Hp, Wp = D + 2 * p, H + 2 * p, W + 2 * p
    Cpad = _round_up(Cout, 128)      # lane-dense accumulator / output

    xf = x_ncdhw.astype(jnp.float32)

    # ---- glue: BatchNorm3d training-mode batch statistics, single pass ----
    mean = jnp.mean(xf, axis=(0, 2, 3, 4))
    mean_sq = jnp.mean(xf * xf, axis=(0, 2, 3, 4))
    var = jnp.maximum(mean_sq - mean * mean, 0.0)        # biased variance
    scale = gamma * lax.rsqrt(var + eps)
    shift = beta - mean * scale

    # ---- glue: layout change NCDHW -> NDHWC (no spatial padding here) ----
    x = jnp.transpose(xf, (0, 2, 3, 4, 1))

    # (Cout, Cin, Kd, Kh, Kw) -> (Kd*Kh*Kw*Cin, Cout), zero-pad Cout -> Cpad.
    w = jnp.transpose(weight_oidhw, (2, 3, 4, 1, 0)).reshape(K3 * Cin, Cout)
    w = jnp.pad(w, ((0, 0), (0, Cpad - Cout))).astype(compute_dtype)

    kernel = make_dilation_block_kernel(D, H, W, Cin, Cpad, dilation, K,
                                        compute_dtype)

    out = pl.pallas_call(
        kernel,
        out_shape=jax.ShapeDtypeStruct((N, D * H * W, Cpad), jnp.float32),
        grid_spec=pltpu.PrefetchScalarGridSpec(
            num_scalar_prefetch=0,
            grid=(N,),
            in_specs=[
                pl.BlockSpec((1, D, H, W, Cin), lambda n: (n, 0, 0, 0, 0)),
                pl.BlockSpec((1, Cin), lambda n: (0, 0)),
                pl.BlockSpec((1, Cin), lambda n: (0, 0)),
                pl.BlockSpec((K3 * Cin, Cpad), lambda n: (0, 0)),
            ],
            out_specs=pl.BlockSpec((1, D * H * W, Cpad), lambda n: (n, 0, 0)),
            scratch_shapes=[pltpu.VMEM((Dp, Hp, Wp, Cin), jnp.float32)],
        ),
        compiler_params=pltpu.CompilerParams(
            dimension_semantics=("parallel",),
            vmem_limit_bytes=32 * 1024 * 1024,
        ),
    )(x, scale.reshape(1, Cin), shift.reshape(1, Cin), w)

    # Slice the lane-padded channels back to Cout and restore NCDHW.
    out = out[:, :, :Cout].reshape(N, D, H, W, Cout)
    return jnp.transpose(out, (0, 4, 1, 2, 3))


def reference(x, gamma, beta, weight, dilation, eps=1e-5):
    """Pure-JAX reference: BN(train) -> ReLU -> dilated conv3d, NCDHW."""
    mean = jnp.mean(x, axis=(0, 2, 3, 4), keepdims=True)
    var = jnp.mean((x - mean) ** 2, axis=(0, 2, 3, 4), keepdims=True)
    xn = (x - mean) / jnp.sqrt(var + eps)
    xn = xn * gamma[None, :, None, None, None] + beta[None, :, None, None, None]
    xn = jnp.maximum(xn, 0.0)
    return lax.conv_general_dilated(
        xn, weight,
        window_strides=(1, 1, 1),
        padding=[(dilation, dilation)] * 3,
        rhs_dilation=(dilation, dilation, dilation),
        dimension_numbers=("NCDHW", "OIDHW", "NCDHW"),
        precision=lax.Precision.HIGHEST,
    )


if __name__ == "__main__":
    # Small shapes consistent with the module: N=2, Cin=8, Cout=16, D=H=W=8, dilation=2
    N, Cin, Cout = 2, 8, 16
    D = H = W = 8
    dilation = 2
    K = 3

    key = jax.random.PRNGKey(0)
    kx, kw, kg, kb = jax.random.split(key, 4)
    x = jax.random.normal(kx, (N, Cin, D, H, W), dtype=jnp.float32)
    # Conv3d weight shape (out_channels, in_channels, 3, 3, 3), bias=False
    weight = 0.1 * jax.random.normal(kw, (Cout, Cin, K, K, K), dtype=jnp.float32)
    # BatchNorm3d affine params (deterministic, non-trivial)
    gamma = 1.0 + 0.1 * jax.random.normal(kg, (Cin,), dtype=jnp.float32)
    beta = 0.1 * jax.random.normal(kb, (Cin,), dtype=jnp.float32)

    out = dilation_block(x, gamma, beta, weight, dilation)
    out = jax.block_until_ready(out)

    ref = jax.block_until_ready(reference(x, gamma, beta, weight, dilation))
    assert out.shape == (N, Cout, D, H, W), out.shape
    np.testing.assert_allclose(np.asarray(out), np.asarray(ref), rtol=2e-4, atol=2e-4)

    print("KERNEL_OK")
</pallas_src>

<mosaic_0001>
module attributes {stable_mosaic.version = 11 : i64} {
  func.func @kernel(%arg0: i32, %arg1: memref<1x8x8x8x8xf32, #tpu.memory_space<vmem>>, %arg2: memref<1x8xf32, #tpu.memory_space<vmem>>, %arg3: memref<1x8xf32, #tpu.memory_space<vmem>>, %arg4: memref<216x128xf32, #tpu.memory_space<vmem>>, %arg5: memref<1x512x128xf32, #tpu.memory_space<vmem>>, %arg6: memref<12x12x12x8xf32, #tpu.memory_space<vmem>>) attributes {dimension_semantics = [#tpu.dimension_semantics<parallel>], iteration_bounds = array<i64: 2>, scalar_prefetch = 0 : i64, scratch_operands = 1 : i64, tpu.core_type = #tpu.core_type<tc>, window_params = [{transform_indices = @transform_0, window_bounds = array<i64: 1, 8, 8, 8, 8>}, {pipeline_mode = #tpu.pipeline_mode<synchronous>, transform_indices = @transform_1, window_bounds = array<i64: 1, 8>}, {pipeline_mode = #tpu.pipeline_mode<synchronous>, transform_indices = @transform_2, window_bounds = array<i64: 1, 8>}, {pipeline_mode = #tpu.pipeline_mode<synchronous>, transform_indices = @transform_3, window_bounds = array<i64: 216, 128>}, {transform_indices = @transform_4, window_bounds = array<i64: 1, 512, 128>}]} {
    %cst = arith.constant 0.000000e+00 : f32
    %0 = vector.broadcast %cst : f32 to vector<12x12x12x8xf32>
    %c0 = arith.constant 0 : index
    %c0_0 = arith.constant 0 : index
    %c0_1 = arith.constant 0 : index
    %c0_2 = arith.constant 0 : index
    %1 = vector.load %arg6[%c0, %c0_0, %c0_1, %c0_2] : memref<12x12x12x8xf32, #tpu.memory_space<vmem>>, vector<12x12x12x8xf32>
    tpu.vector_store %arg6[%c0, %c0_0, %c0_1, %c0_2], %0 {strides = array<i32>} : memref<12x12x12x8xf32, #tpu.memory_space<vmem>>, vector<12x12x12x8xf32>,
    %c0_3 = arith.constant 0 : index
    %c0_4 = arith.constant 0 : index
    %c0_5 = arith.constant 0 : index
    %c0_6 = arith.constant 0 : index
    %c0_7 = arith.constant 0 : index
    %2 = vector.load %arg1[%c0_3, %c0_4, %c0_5, %c0_6, %c0_7] : memref<1x8x8x8x8xf32, #tpu.memory_space<vmem>>, vector<1x8x8x8x8xf32>
    %3 = vector.shape_cast %2 : vector<1x8x8x8x8xf32> to vector<8x8x8x8xf32>
    %c0_8 = arith.constant 0 : index
    %c0_9 = arith.constant 0 : index
    %4 = vector.load %arg2[%c0_8, %c0_9] : memref<1x8xf32, #tpu.memory_space<vmem>>, vector<1x8xf32>
    %5 = vector.shape_cast %4 : vector<1x8xf32> to vector<8xf32>
    %6 = vector.shape_cast %5 : vector<8xf32> to vector<1x1x1x8xf32>
    %7 = vector.broadcast %6 : vector<1x1x1x8xf32> to vector<8x8x8x8xf32>
    %8 = arith.mulf %3, %7 : vector<8x8x8x8xf32>
    %c0_10 = arith.constant 0 : index
    %c0_11 = arith.constant 0 : index
    %9 = vector.load %arg3[%c0_10, %c0_11] : memref<1x8xf32, #tpu.memory_space<vmem>>, vector<1x8xf32>
    %10 = vector.shape_cast %9 : vector<1x8xf32> to vector<8xf32>
    %11 = vector.shape_cast %10 : vector<8xf32> to vector<1x1x1x8xf32>
    %12 = vector.broadcast %11 : vector<1x1x1x8xf32> to vector<8x8x8x8xf32>
    %13 = arith.addf %8, %12 : vector<8x8x8x8xf32>
    %cst_12 = arith.constant 0.000000e+00 : f32
    %14 = vector.broadcast %cst_12 : f32 to vector<8x8x8x8xf32>
    %15 = arith.maximumf %13, %14 : vector<8x8x8x8xf32>
    %c2 = arith.constant 2 : index
    %c2_13 = arith.constant 2 : index
    %c2_14 = arith.constant 2 : index
    %c0_15 = arith.constant 0 : index
    %16 = vector.load %arg6[%c2, %c2_13, %c2_14, %c0_15] : memref<12x12x12x8xf32, #tpu.memory_space<vmem>>, vector<8x8x8x8xf32>
    tpu.vector_store %arg6[%c2, %c2_13, %c2_14, %c0_15], %15 {strides = array<i32>} : memref<12x12x12x8xf32, #tpu.memory_space<vmem>>, vector<8x8x8x8xf32>,
    %c0_16 = arith.constant 0 : index
    %c0_17 = arith.constant 0 : index
    %c0_18 = arith.constant 0 : index
    %c0_19 = arith.constant 0 : index
    %17 = vector.load %arg6[%c0_16, %c0_17, %c0_18, %c0_19] : memref<12x12x12x8xf32, #tpu.memory_space<vmem>>, vector<12x12x12x8xf32>
    %18 = vector.extract_strided_slice %17 {offsets = [0, 0, 0, 0], sizes = [8, 8, 8, 8], strides = [1, 1, 1, 1]} : vector<12x12x12x8xf32> to vector<8x8x8x8xf32>
    %19 = vector.extract_strided_slice %17 {offsets = [0, 0, 2, 0], sizes = [8, 8, 8, 8], strides = [1, 1, 1, 1]} : vector<12x12x12x8xf32> to vector<8x8x8x8xf32>
    %20 = vector.extract_strided_slice %17 {offsets = [0, 0, 4, 0], sizes = [8, 8, 8, 8], strides = [1, 1, 1, 1]} : vector<12x12x12x8xf32> to vector<8x8x8x8xf32>
    %21 = vector.extract_strided_slice %17 {offsets = [0, 2, 0, 0], sizes = [8, 8, 8, 8], strides = [1, 1, 1, 1]} : vector<12x12x12x8xf32> to vector<8x8x8x8xf32>
    %22 = vector.extract_strided_slice %17 {offsets = [0, 2, 2, 0], sizes = [8, 8, 8, 8], strides = [1, 1, 1, 1]} : vector<12x12x12x8xf32> to vector<8x8x8x8xf32>
    %23 = vector.extract_strided_slice %17 {offsets = [0, 2, 4, 0], sizes = [8, 8, 8, 8], strides = [1, 1, 1, 1]} : vector<12x12x12x8xf32> to vector<8x8x8x8xf32>
    %24 = vector.extract_strided_slice %17 {offsets = [0, 4, 0, 0], sizes = [8, 8, 8, 8], strides = [1, 1, 1, 1]} : vector<12x12x12x8xf32> to vector<8x8x8x8xf32>
    %25 = vector.extract_strided_slice %17 {offsets = [0, 4, 2, 0], sizes = [8, 8, 8, 8], strides = [1, 1, 1, 1]} : vector<12x12x12x8xf32> to vector<8x8x8x8xf32>
    %26 = vector.extract_strided_slice %17 {offsets = [0, 4, 4, 0], sizes = [8, 8, 8, 8], strides = [1, 1, 1, 1]} : vector<12x12x12x8xf32> to vector<8x8x8x8xf32>
    %27 = vector.extract_strided_slice %17 {offsets = [2, 0, 0, 0], sizes = [8, 8, 8, 8], strides = [1, 1, 1, 1]} : vector<12x12x12x8xf32> to vector<8x8x8x8xf32>
    %28 = vector.extract_strided_slice %17 {offsets = [2, 0, 2, 0], sizes = [8, 8, 8, 8], strides = [1, 1, 1, 1]} : vector<12x12x12x8xf32> to vector<8x8x8x8xf32>
    %29 = vector.extract_strided_slice %17 {offsets = [2, 0, 4, 0], sizes = [8, 8, 8, 8], strides = [1, 1, 1, 1]} : vector<12x12x12x8xf32> to vector<8x8x8x8xf32>
    %30 = vector.extract_strided_slice %17 {offsets = [2, 2, 0, 0], sizes = [8, 8, 8, 8], strides = [1, 1, 1, 1]} : vector<12x12x12x8xf32> to vector<8x8x8x8xf32>
    %31 = vector.extract_strided_slice %17 {offsets = [2, 2, 2, 0], sizes = [8, 8, 8, 8], strides = [1, 1, 1, 1]} : vector<12x12x12x8xf32> to vector<8x8x8x8xf32>
    %32 = vector.extract_strided_slice %17 {offsets = [2, 2, 4, 0], sizes = [8, 8, 8, 8], strides = [1, 1, 1, 1]} : vector<12x12x12x8xf32> to vector<8x8x8x8xf32>
    %33 = vector.extract_strided_slice %17 {offsets = [2, 4, 0, 0], sizes = [8, 8, 8, 8], strides = [1, 1, 1, 1]} : vector<12x12x12x8xf32> to vector<8x8x8x8xf32>
    %34 = vector.extract_strided_slice %17 {offsets = [2, 4, 2, 0], sizes = [8, 8, 8, 8], strides = [1, 1, 1, 1]} : vector<12x12x12x8xf32> to vector<8x8x8x8xf32>
    %35 = vector.extract_strided_slice %17 {offsets = [2, 4, 4, 0], sizes = [8, 8, 8, 8], strides = [1, 1, 1, 1]} : vector<12x12x12x8xf32> to vector<8x8x8x8xf32>
    %36 = vector.extract_strided_slice %17 {offsets = [4, 0, 0, 0], sizes = [8, 8, 8, 8], strides = [1, 1, 1, 1]} : vector<12x12x12x8xf32> to vector<8x8x8x8xf32>
    %37 = vector.extract_strided_slice %17 {offsets = [4, 0, 2, 0], sizes = [8, 8, 8, 8], strides = [1, 1, 1, 1]} : vector<12x12x12x8xf32> to vector<8x8x8x8xf32>
    %38 = vector.extract_strided_slice %17 {offsets = [4, 0, 4, 0], sizes = [8, 8, 8, 8], strides = [1, 1, 1, 1]} : vector<12x12x12x8xf32> to vector<8x8x8x8xf32>
    %39 = vector.extract_strided_slice %17 {offsets = [4, 2, 0, 0], sizes = [8, 8, 8, 8], strides = [1, 1, 1, 1]} : vector<12x12x12x8xf32> to vector<8x8x8x8xf32>
    %40 = vector.extract_strided_slice %17 {offsets = [4, 2, 2, 0], sizes = [8, 8, 8, 8], strides = [1, 1, 1, 1]} : vector<12x12x12x8xf32> to vector<8x8x8x8xf32>
    %41 = vector.extract_strided_slice %17 {offsets = [4, 2, 4, 0], sizes = [8, 8, 8, 8], strides = [1, 1, 1, 1]} : vector<12x12x12x8xf32> to vector<8x8x8x8xf32>
    %42 = vector.extract_strided_slice %17 {offsets = [4, 4, 0, 0], sizes = [8, 8, 8, 8], strides = [1, 1, 1, 1]} : vector<12x12x12x8xf32> to vector<8x8x8x8xf32>
    %43 = vector.extract_strided_slice %17 {offsets = [4, 4, 2, 0], sizes = [8, 8, 8, 8], strides = [1, 1, 1, 1]} : vector<12x12x12x8xf32> to vector<8x8x8x8xf32>
    %44 = vector.extract_strided_slice %17 {offsets = [4, 4, 4, 0], sizes = [8, 8, 8, 8], strides = [1, 1, 1, 1]} : vector<12x12x12x8xf32> to vector<8x8x8x8xf32>
    %45 = tpu.concatenate %18, %19, %20, %21, %22, %23, %24, %25, %26, %27, %28, %29, %30, %31, %32, %33 in 3 : vector<8x8x8x8xf32>, vector<8x8x8x8xf32>, vector<8x8x8x8xf32>, vector<8x8x8x8xf32>, vector<8x8x8x8xf32>, vector<8x8x8x8xf32>, vector<8x8x8x8xf32>, vector<8x8x8x8xf32>, vector<8x8x8x8xf32>, vector<8x8x8x8xf32>, vector<8x8x8x8xf32>, vector<8x8x8x8xf32>, vector<8x8x8x8xf32>, vector<8x8x8x8xf32>, vector<8x8x8x8xf32>, vector<8x8x8x8xf32> -> vector<8x8x8x128xf32>
    %46 = tpu.concatenate %34, %35, %36, %37, %38, %39, %40, %41, %42, %43, %44 in 3 : vector<8x8x8x8xf32>, vector<8x8x8x8xf32>, vector<8x8x8x8xf32>, vector<8x8x8x8xf32>, vector<8x8x8x8xf32>, vector<8x8x8x8xf32>, vector<8x8x8x8xf32>, vector<8x8x8x8xf32>, vector<8x8x8x8xf32>, vector<8x8x8x8xf32>, vector<8x8x8x8xf32> -> vector<8x8x8x88xf32>
    %47 = tpu.concatenate %45, %46 in 3 : vector<8x8x8x128xf32>, vector<8x8x8x88xf32> -> vector<8x8x8x216xf32>
    %48 = vector.shape_cast %47 : vector<8x8x8x216xf32> to vector<512x216xf32>
    %c0_20 = arith.constant 0 : index
    %c0_21 = arith.constant 0 : index
    %49 = vector.load %arg4[%c0_20, %c0_21] : memref<216x128xf32, #tpu.memory_space<vmem>>, vector<216x128xf32>
    %cst_22 = arith.constant dense<0.000000e+00> : vector<512x128xf32>
    %50 = tpu.matmul %48, %49, %cst_22 {dimension_numbers = #tpu.dot_dimension_numbers<[1], [0], [0], [1], [0, 0, 1, 1], [], []>} : vector<512x216xf32>, vector<216x128xf32>, vector<512x128xf32> -> vector<512x128xf32>
    %c0_23 = arith.constant 0 : index
    %c0_24 = arith.constant 0 : index
    %c0_25 = arith.constant 0 : index
    %51 = vector.load %arg5[%c0_23, %c0_24, %c0_25] : memref<1x512x128xf32, #tpu.memory_space<vmem>>, vector<1x512x128xf32>
    %52 = vector.shape_cast %51 : vector<1x512x128xf32> to vector<512x128xf32>
    %53 = vector.shape_cast %50 : vector<512x128xf32> to vector<1x512x128xf32>
    tpu.vector_store %arg5[%c0_23, %c0_24, %c0_25], %53 {strides = array<i32>} : memref<1x512x128xf32, #tpu.memory_space<vmem>>, vector<1x512x128xf32>,
    return
  }
  func.func @transform_0(%arg0: i32) -> (i32, i32, i32, i32, i32) {
    %c0_i32 = arith.constant 0 : i32
    %c0_i32_0 = arith.constant 0 : i32
    %c0_i32_1 = arith.constant 0 : i32
    %c0_i32_2 = arith.constant 0 : i32
    %c0_i32_3 = arith.constant 0 : i32
    return %arg0, %c0_i32, %c0_i32_0, %c0_i32_1, %c0_i32_2 : i32, i32, i32, i32, i32
  }
  func.func @transform_1(%arg0: i32) -> (i32, i32) {
    %c0_i32 = arith.constant 0 : i32
    %c0_i32_0 = arith.constant 0 : i32
    %c0_i32_1 = arith.constant 0 : i32
    return %c0_i32, %c0_i32_0 : i32, i32
  }
  func.func @transform_2(%arg0: i32) -> (i32, i32) {
    %c0_i32 = arith.constant 0 : i32
    %c0_i32_0 = arith.constant 0 : i32
    %c0_i32_1 = arith.constant 0 : i32
    return %c0_i32, %c0_i32_0 : i32, i32
  }
  func.func @transform_3(%arg0: i32) -> (i32, i32) {
    %c0_i32 = arith.constant 0 : i32
    %c0_i32_0 = arith.constant 0 : i32
    %c0_i32_1 = arith.constant 0 : i32
    return %c0_i32, %c0_i32_0 : i32, i32
  }
  func.func @transform_4(%arg0: i32) -> (i32, i32, i32) {
    %c0_i32 = arith.constant 0 : i32
    %c0_i32_0 = arith.constant 0 : i32
    %c0_i32_1 = arith.constant 0 : i32
    return %arg0, %c0_i32, %c0_i32_0 : i32, i32, i32
  }
}

</mosaic_0001>

<llo_original>
// kernel: tpu_custom_call.1
$region0: #{tpu_custom_call.1}
  #allocation0 [shape = 'u32[]', space=smem, size = 0x4, offset = 0x4, fixed_abs, tag = 'smem constant byte address 0x4 - core index']
  #allocation1 [shape = 'u32[72,128]{1,0:T(1,128)}', space=vmem, size = 0x9000, scoped, tag = 'internal scratch']
  #allocation2 [shape = 'f32[12,12,12,8]{3,2,1,0:T(8,128)}', space=vmem, size = 0x120000, scoped, tag = 'scratch operand']
  %s0 = inlined_call_operand.hbm [shape: f32[2,8,8,8,8], index: 0, kind: input, shape index: {}]
  %s1 = inlined_call_operand.hbm [shape: f32[1,8], index: 1, kind: input, shape index: {}]
  %s2 = inlined_call_operand.vmem [shape: f32[1,8], index: 2, kind: input, shape index: {}]
  %s3 = inlined_call_operand.hbm [shape: f32[216,128], index: 3, kind: input, shape index: {}]
  %s4 = inlined_call_operand.hbm [shape: f32[2,512,128], index: 4, kind: output, shape index: {}]
  %s5 = sld [smem:[#allocation0]]
  $region61: #{tpu_custom_call.1} parent=0
    _
  %s7 = ssub.s32 1, %s5
  %s8 = scalar_select 0, %s7, %s5
  $region1: #{tpu_custom_call.1} parent=0
    #allocation3 [shape = 'u8[524288]{0}', space=vmem, size = 0x80000, scoped, tag = 'input window, operand 0']
    #allocation4 [shape = 's32[2]{0}', space=sflag, size = 0x8, scoped, tag = 'scoped memory for tpu_custom_call.1']
    #allocation5 [shape = 's32[2]{0}', space=sflag, size = 0x8, scoped, tag = 'scoped memory for tpu_custom_call.1']
    #allocation6 [shape = 'u8[512]{0}', space=vmem, size = 0x400, scoped, tag = 'input window, operand 1, single buffered']
    #allocation7 [shape = 's32[1]{0}', space=sflag, size = 0x4, scoped, tag = 'scoped memory for tpu_custom_call.1']
    #allocation8 [shape = 'u8[110592]{0}', space=vmem, size = 0x1b000, scoped, tag = 'input window, operand 3, single buffered']
    #allocation9 [shape = 'u8[524288]{0}', space=vmem, size = 0x80000, scoped, tag = 'output window, operand 0']
    %9 = vsyncpa [#allocation4], 0
    %s10 = scalar_lea.sflag [#allocation4], 1
    %11 = vsyncpa %s10, 0
    %12 = vsyncpa [#allocation7], 0
    %13 = vsyncpa [#allocation5], 0
    %s14 = scalar_lea.sflag [#allocation5], 1
    %15 = vsyncpa %s14, 0
    loop: start=0, step=1, limit=4
    $region2: #{tpu_custom_call.1} parent=1 // loop_pre_header
      _
    $region3: #{tpu_custom_call.1} parent=1 // loop_header
      %s17 = sphi 0, %s21
      %p18 = scmp.ge.s32.totalorder %s17, 4
      %s27 = sphi 0, %s29
      %s30 = sphi 0, %s27
      %s31 = sphi 0, %s30
      %s47 = sphi 0, %s31
      %s51 = sphi 0, %s51
      %s53 = sphi 0, %s51
      %s54 = sphi 0, %s53
      %s68 = sphi 0, %s54
      %s72 = sphi 0, %s72
      %s74 = sphi 0, %s72
      %s75 = sphi 0, %s74
      %s89 = sphi 0, %s75
      %s93 = sphi 0, %s93
      %s95 = sphi 0, %s93
      %s96 = sphi 0, %s95
      %s110 = sphi 0, %s96
      %s116 = sphi 0, %s118
      %s119 = sphi 0, %s116
      %s120 = sphi 0, %s119
      %s136 = sphi 0, %s120
    $region4: #{tpu_custom_call.1} parent=1 // loop_header_branch
      %20 = sbr.rel (%p18) target = $region8
    $region5: #{tpu_custom_call.1} parent=1 // loop_body
      %s22 = ssub.s32 %s17, 1
      %s23 = ssub.s32 %s17, 2
      %s24 = sadd.s32 %s17, 1
      %s25 = ssub.s32 %s17, %s24
      %p26 = scmp.eq.s32.totalorder %s25, 0
      %s28 = sadd.s32 %s27, 1
      %s29 = scalar_select %p26, %s27, %s28
      %p32 = pneg %p26
      %p33 = scmp.eq.s32.totalorder %s17, 1
      %p34 = por %p32, %p33
      %p35 = scmp.ne.s32.totalorder %s27, %s30
      %p36 = scmp.eq.s32.totalorder %s17, 0
      %p37 = por %p35, %p36
      %p38 = scmp.ne.s32.totalorder %s27, %s30
      %p39 = scmp.eq.s32.totalorder %s22, 1
      %p40 = por %p38, %p39
      %p41 = scmp.ne.s32.totalorder %s30, %s31
      %p42 = scmp.eq.s32.totalorder %s22, 0
      %p43 = por %p41, %p42
      %p44 = scmp.ne.s32.totalorder %s30, %s31
      %p45 = scmp.eq.s32.totalorder %s23, 1
      %p46 = por %p44, %p45
      %p48 = scmp.ne.s32.totalorder %s31, %s47
      %p49 = scmp.eq.s32.totalorder %s23, 0
      %p50 = por %p48, %p49
      %s52 = sadd.s32 %s51, 1
      %p55 = scmp.eq.s32.totalorder %s17, 1
      %p56 = scmp.ne.s32.totalorder %s51, %s53
      %p57 = scmp.eq.s32.totalorder %s17, 0
      %p58 = por %p56, %p57
      %p59 = scmp.ne.s32.totalorder %s51, %s53
      %p60 = scmp.eq.s32.totalorder %s22, 1
      %p61 = por %p59, %p60
      %p62 = scmp.ne.s32.totalorder %s53, %s54
      %p63 = scmp.eq.s32.totalorder %s22, 0
      %p64 = por %p62, %p63
      %p65 = scmp.ne.s32.totalorder %s53, %s54
      %p66 = scmp.eq.s32.totalorder %s23, 1
      %p67 = por %p65, %p66
      %p69 = scmp.ne.s32.totalorder %s54, %s68
      %p70 = scmp.eq.s32.totalorder %s23, 0
      %p71 = por %p69, %p70
      %s73 = sadd.s32 %s72, 1
      %p76 = scmp.eq.s32.totalorder %s17, 1
      %p77 = scmp.ne.s32.totalorder %s72, %s74
      %p78 = scmp.eq.s32.totalorder %s17, 0
      %p79 = por %p77, %p78
      %p80 = scmp.ne.s32.totalorder %s72, %s74
      %p81 = scmp.eq.s32.totalorder %s22, 1
      %p82 = por %p80, %p81
      %p83 = scmp.ne.s32.totalorder %s74, %s75
      %p84 = scmp.eq.s32.totalorder %s22, 0
      %p85 = por %p83, %p84
      %p86 = scmp.ne.s32.totalorder %s74, %s75
      %p87 = scmp.eq.s32.totalorder %s23, 1
      %p88 = por %p86, %p87
      %p90 = scmp.ne.s32.totalorder %s75, %s89
      %p91 = scmp.eq.s32.totalorder %s23, 0
      %p92 = por %p90, %p91
      %s94 = sadd.s32 %s93, 1
      %p97 = scmp.eq.s32.totalorder %s17, 1
      %p98 = scmp.ne.s32.totalorder %s93, %s95
      %p99 = scmp.eq.s32.totalorder %s17, 0
      %p100 = por %p98, %p99
      %p101 = scmp.ne.s32.totalorder %s93, %s95
      %p102 = scmp.eq.s32.totalorder %s22, 1
      %p103 = por %p101, %p102
      %p104 = scmp.ne.s32.totalorder %s95, %s96
      %p105 = scmp.eq.s32.totalorder %s22, 0
      %p106 = por %p104, %p105
      %p107 = scmp.ne.s32.totalorder %s95, %s96
      %p108 = scmp.eq.s32.totalorder %s23, 1
      %p109 = por %p107, %p108
      %p111 = scmp.ne.s32.totalorder %s96, %s110
      %p112 = scmp.eq.s32.totalorder %s23, 0
      %p113 = por %p111, %p112
      %s114 = ssub.s32 %s17, %s24
      %p115 = scmp.eq.s32.totalorder %s114, 0
      %s117 = sadd.s32 %s116, 1
      %s118 = scalar_select %p115, %s116, %s117
      %p121 = pneg %p115
      %p122 = scmp.eq.s32.totalorder %s17, 1
      %p123 = por %p121, %p122
      %p124 = scmp.ne.s32.totalorder %s116, %s119
      %p125 = scmp.eq.s32.totalorder %s17, 0
      %p126 = por %p124, %p125
      %p127 = scmp.ne.s32.totalorder %s116, %s119
      %p128 = scmp.eq.s32.totalorder %s22, 1
      %p129 = por %p127, %p128
      %p130 = scmp.ne.s32.totalorder %s119, %s120
      %p131 = scmp.eq.s32.totalorder %s22, 0
      %p132 = por %p130, %p131
      %p133 = scmp.ne.s32.totalorder %s119, %s120
      %p134 = scmp.eq.s32.totalorder %s23, 1
      %p135 = por %p133, %p134
      %p137 = scmp.ne.s32.totalorder %s120, %s136
      %p138 = scmp.eq.s32.totalorder %s23, 0
      %p139 = por %p137, %p138
      %p140 = scmp.le.s32.totalorder 1, %s17
      %p141 = scmp.lt.s32.totalorder %s17, 3
      %p142 = pnand %p140, %p141
      %p143 = pneg %p142
      // Predicated region
      $region9: #{tpu_custom_call.1} parent=5 // pred_check
        _
      $region10: #{tpu_custom_call.1} parent=5 // pred_check_branch
        %145 = sbr.rel (%p142) target = $region12
      $region11: #{tpu_custom_call.1} parent=5 // pred_region
        %s146 = ssub.s32 %s17, 1
        // Predicated region
        $region13: #{tpu_custom_call.1} parent=11 // pred_check
          %p147 = pneg %p64
        $region14: #{tpu_custom_call.1} parent=11 // pred_check_branch
          %149 = sbr.rel (%p147) target = $region16
        $region15: #{tpu_custom_call.1} parent=11 // pred_region
          %151 = vsyncadd [#allocation7], 0
          %s153 = sshll.u32 %s1, 4
          %s154 = int_to_ptr.hbm [resolvable:$true] %s153
          %s155 = sshll.u32 [#allocation6], 4
          %s156 = int_to_ptr.vmem [resolvable:$true] %s155
          %158 = dma.hbm_to_vmem [thread:$0]  %s154, 16, %s156, [#allocation7]
        $region16: #{tpu_custom_call.1} parent=11 // pred_fallthru
          _
        // Predicated region
        $region17: #{tpu_custom_call.1} parent=11 // pred_check
          %p159 = pneg %p85
        $region18: #{tpu_custom_call.1} parent=11 // pred_check_branch
          %161 = sbr.rel (%p159) target = $region20
        $region19: #{tpu_custom_call.1} parent=11 // pred_region
          _
        $region20: #{tpu_custom_call.1} parent=11 // pred_fallthru
          _
        // Predicated region
        $region21: #{tpu_custom_call.1} parent=11 // pred_check
          %p162 = pneg %p106
        $region22: #{tpu_custom_call.1} parent=11 // pred_check_branch
          %164 = sbr.rel (%p162) target = $region24
        $region23: #{tpu_custom_call.1} parent=11 // pred_region
          %166 = vsyncadd [#allocation7], 0
          %s167 = sshll.u32 %s3, 4
          %s168 = int_to_ptr.hbm [resolvable:$true] %s167
          %s169 = sshll.u32 [#allocation8], 4
          %s170 = int_to_ptr.vmem [resolvable:$true] %s169
          %175 = dma.hbm_to_vmem [thread:$0]  %s168, 3456, %s170, [#allocation7], 128, 128, 8
        $region24: #{tpu_custom_call.1} parent=11 // pred_fallthru
          _
      $region12: #{tpu_custom_call.1} parent=5 // pred_fallthru
        _
      %p176 = scmp.lt.s32.totalorder %s17, 2
      // Predicated region
      $region25: #{tpu_custom_call.1} parent=5 // pred_check
        %p177 = pneg %p176
      $region26: #{tpu_custom_call.1} parent=5 // pred_check_branch
        %179 = sbr.rel (%p177) target = $region28
      $region27: #{tpu_custom_call.1} parent=5 // pred_region
        // Predicated region
        $region29: #{tpu_custom_call.1} parent=27 // pred_check
          %p180 = pneg %p37
        $region30: #{tpu_custom_call.1} parent=27 // pred_check_branch
          %182 = sbr.rel (%p180) target = $region32
        $region31: #{tpu_custom_call.1} parent=27 // pred_region
          %s183 = sand.u32 %s27, 1
          %s184 = scalar_lea.sflag [#allocation4], %s183
          %s185 = sand.u32 %s27, 1
          %s186 = smul.addr %s185, 512
          %s187 = scalar_lea.vmem [#allocation3], %s186
          %189 = vsyncadd %s184, 0
          %s190 = smul.addr %s17, 64
          %s191 = smul.addr %s190, 8
          %s192 = scalar_lea.hbm %s0, %s191
          %s193 = sshll.u32 %s192, 4
          %s194 = int_to_ptr.hbm [resolvable:$true] %s193
          %s195 = sshll.u32 %s187, 4
          %s196 = int_to_ptr.vmem [resolvable:$true] %s195
          %201 = dma.hbm_to_vmem [thread:$0]  %s194, 8192, %s196, %s184, 128, 128, 8
        $region32: #{tpu_custom_call.1} parent=27 // pred_fallthru
          _
      $region28: #{tpu_custom_call.1} parent=5 // pred_fallthru
        _
      %p202 = scmp.le.s32.totalorder 1, %s17
      %p203 = scmp.lt.s32.totalorder %s17, 3
      %p204 = pnand %p202, %p203
      %p205 = pneg %p204
      // Predicated region
      $region33: #{tpu_custom_call.1} parent=5 // pred_check
        _
      $region34: #{tpu_custom_call.1} parent=5 // pred_check_branch
        %207 = sbr.rel (%p204) target = $region36
      $region35: #{tpu_custom_call.1} parent=5 // pred_region
        %s208 = ssub.s32 %s17, 1
        %s209 = sand.u32 %s30, 1
        %s210 = scalar_lea.sflag [#allocation4], %s209
        %s211 = sand.u32 %s30, 1
        %s212 = smul.addr %s211, 512
        %s213 = scalar_lea.vmem [#allocation3], %s212
        // Predicated region
        $region37: #{tpu_custom_call.1} parent=35 // pred_check
          %p214 = pneg %p43
        $region38: #{tpu_custom_call.1} parent=35 // pred_check_branch
          %216 = sbr.rel (%p214) target = $region40
        $region39: #{tpu_custom_call.1} parent=35 // pred_region
          %218 = dma.done %s210, 8192
        $region40: #{tpu_custom_call.1} parent=35 // pred_fallthru
          _
        // Predicated region
        $region41: #{tpu_custom_call.1} parent=35 // pred_check
          %p219 = pneg %p64
        $region42: #{tpu_custom_call.1} parent=35 // pred_check_branch
          %221 = sbr.rel (%p219) target = $region44
        $region43: #{tpu_custom_call.1} parent=35 // pred_region
          %223 = dma.done [#allocation7], 16
        $region44: #{tpu_custom_call.1} parent=35 // pred_fallthru
          _
        // Predicated region
        $region45: #{tpu_custom_call.1} parent=35 // pred_check
          %p224 = pneg %p106
        $region46: #{tpu_custom_call.1} parent=35 // pred_check_branch
          %226 = sbr.rel (%p224) target = $region48
        $region47: #{tpu_custom_call.1} parent=35 // pred_region
          %228 = dma.done [#allocation7], 3456
        $region48: #{tpu_custom_call.1} parent=35 // pred_fallthru
          _
        %s229 = sand.u32 %s30, 1
        %s230 = scalar_lea.sflag [#allocation4], %s229
        %s231 = sand.u32 %s30, 1
        %s232 = smul.addr %s231, 512
        %s233 = scalar_lea.vmem [#allocation3], %s232
        %p234 = pneg %p43
        %p235 = pneg %p40
        %p236 = pneg %p64
        %p237 = pneg %p61
        %p238 = pneg %p85
        %p239 = pneg %p82
        %p240 = pneg %p106
        %p241 = pneg %p103
        %p242 = pneg %p132
        %p243 = pneg %p129
        %s244 = sand.u32 %s119, 1
        %s245 = scalar_lea.sflag [#allocation5], %s244
        %s246 = sand.u32 %s119, 1
        %s247 = smul.addr %s246, 512
        %s248 = scalar_lea.vmem [#allocation9], %s247
        %vm249 = vcmask 64512
        %250 = vst.msk [vmem:[#allocation2] sm:$0xff] %vm249, 0.0
        %vm251 = vcmask 60416
        %252 = vst.msk [vmem:[#allocation2 + $0x8] sm:$0xf] %vm251, 0.0
        %253 = vst.msk [vmem:[#allocation2 + $0x10] sm:$0xff] %vm249, 0.0
        %254 = vst.msk [vmem:[#allocation2 + $0x18] sm:$0xf] %vm251, 0.0
        %255 = vst.msk [vmem:[#allocation2 + $0x20] sm:$0xff] %vm249, 0.0
        %256 = vst.msk [vmem:[#allocation2 + $0x28] sm:$0xf] %vm251, 0.0
        %257 = vst.msk [vmem:[#allocation2 + $0x30] sm:$0xff] %vm249, 0.0
        %258 = vst.msk [vmem:[#allocation2 + $0x38] sm:$0xf] %vm251, 0.0
        %259 = vst.msk [vmem:[#allocation2 + $0x40] sm:$0xff] %vm249, 0.0
        %260 = vst.msk [vmem:[#allocation2 + $0x48] sm:$0xf] %vm251, 0.0
        %261 = vst.msk [vmem:[#allocation2 + $0x50] sm:$0xff] %vm249, 0.0
        %262 = vst.msk [vmem:[#allocation2 + $0x58] sm:$0xf] %vm251, 0.0
        %263 = vst.msk [vmem:[#allocation2 + $0x60] sm:$0xff] %vm249, 0.0
        %264 = vst.msk [vmem:[#allocation2 + $0x68] sm:$0xf] %vm251, 0.0
        %265 = vst.msk [vmem:[#allocation2 + $0x70] sm:$0xff] %vm249, 0.0
        %266 = vst.msk [vmem:[#allocation2 + $0x78] sm:$0xf] %vm251, 0.0
        %267 = vst.msk [vmem:[#allocation2 + $0x80] sm:$0xff] %vm249, 0.0
        %268 = vst.msk [vmem:[#allocation2 + $0x88] sm:$0xf] %vm251, 0.0
        %269 = vst.msk [vmem:[#allocation2 + $0x90] sm:$0xff] %vm249, 0.0
        %270 = vst.msk [vmem:[#allocation2 + $0x98] sm:$0xf] %vm251, 0.0
        %271 = vst.msk [vmem:[#allocation2 + $0xa0] sm:$0xff] %vm249, 0.0
        %272 = vst.msk [vmem:[#allocation2 + $0xa8] sm:$0xf] %vm251, 0.0
        %273 = vst.msk [vmem:[#allocation2 + $0xb0] sm:$0xff] %vm249, 0.0
        %274 = vst.msk [vmem:[#allocation2 + $0xb8] sm:$0xf] %vm251, 0.0
        %275 = vst.msk [vmem:[#allocation2 + $0xc0] sm:$0xff] %vm249, 0.0
        %276 = vst.msk [vmem:[#allocation2 + $0xc8] sm:$0xf] %vm251, 0.0
        %277 = vst.msk [vmem:[#allocation2 + $0xd0] sm:$0xff] %vm249, 0.0
        %278 = vst.msk [vmem:[#allocation2 + $0xd8] sm:$0xf] %vm251, 0.0
        %279 = vst.msk [vmem:[#allocation2 + $0xe0] sm:$0xff] %vm249, 0.0
        %280 = vst.msk [vmem:[#allocation2 + $0xe8] sm:$0xf] %vm251, 0.0
        %281 = vst.msk [vmem:[#allocation2 + $0xf0] sm:$0xff] %vm249, 0.0
        %282 = vst.msk [vmem:[#allocation2 + $0xf8] sm:$0xf] %vm251, 0.0
        %283 = vst.msk [vmem:[#allocation2 + $0x100] sm:$0xff] %vm249, 0.0
        %284 = vst.msk [vmem:[#allocation2 + $0x108] sm:$0xf] %vm251, 0.0
        %285 = vst.msk [vmem:[#allocation2 + $0x110] sm:$0xff] %vm249, 0.0
        %286 = vst.msk [vmem:[#allocation2 + $0x118] sm:$0xf] %vm251, 0.0
        %287 = vst.msk [vmem:[#allocation2 + $0x120] sm:$0xff] %vm249, 0.0
        %288 = vst.msk [vmem:[#allocation2 + $0x128] sm:$0xf] %vm251, 0.0
        %289 = vst.msk [vmem:[#allocation2 + $0x130] sm:$0xff] %vm249, 0.0
        %290 = vst.msk [vmem:[#allocation2 + $0x138] sm:$0xf] %vm251, 0.0
        %291 = vst.msk [vmem:[#allocation2 + $0x140] sm:$0xff] %vm249, 0.0
        %292 = vst.msk [vmem:[#allocation2 + $0x148] sm:$0xf] %vm251, 0.0
        %293 = vst.msk [vmem:[#allocation2 + $0x150] sm:$0xff] %vm249, 0.0
        %294 = vst.msk [vmem:[#allocation2 + $0x158] sm:$0xf] %vm251, 0.0
        %295 = vst.msk [vmem:[#allocation2 + $0x160] sm:$0xff] %vm249, 0.0
        %296 = vst.msk [vmem:[#allocation2 + $0x168] sm:$0xf] %vm251, 0.0
        %297 = vst.msk [vmem:[#allocation2 + $0x170] sm:$0xff] %vm249, 0.0
        %298 = vst.msk [vmem:[#allocation2 + $0x178] sm:$0xf] %vm251, 0.0
        %299 = vst.msk [vmem:[#allocation2 + $0x180] sm:$0xff] %vm249, 0.0
        %300 = vst.msk [vmem:[#allocation2 + $0x188] sm:$0xf] %vm251, 0.0
        %301 = vst.msk [vmem:[#allocation2 + $0x190] sm:$0xff] %vm249, 0.0
        %302 = vst.msk [vmem:[#allocation2 + $0x198] sm:$0xf] %vm251, 0.0
        %303 = vst.msk [vmem:[#allocation2 + $0x1a0] sm:$0xff] %vm249, 0.0
        %304 = vst.msk [vmem:[#allocation2 + $0x1a8] sm:$0xf] %vm251, 0.0
        %305 = vst.msk [vmem:[#allocation2 + $0x1b0] sm:$0xff] %vm249, 0.0
        %306 = vst.msk [vmem:[#allocation2 + $0x1b8] sm:$0xf] %vm251, 0.0
        %307 = vst.msk [vmem:[#allocation2 + $0x1c0] sm:$0xff] %vm249, 0.0
        %308 = vst.msk [vmem:[#allocation2 + $0x1c8] sm:$0xf] %vm251, 0.0
        %309 = vst.msk [vmem:[#allocation2 + $0x1d0] sm:$0xff] %vm249, 0.0
        %310 = vst.msk [vmem:[#allocation2 + $0x1d8] sm:$0xf] %vm251, 0.0
        %311 = vst.msk [vmem:[#allocation2 + $0x1e0] sm:$0xff] %vm249, 0.0
        %312 = vst.msk [vmem:[#allocation2 + $0x1e8] sm:$0xf] %vm251, 0.0
        %313 = vst.msk [vmem:[#allocation2 + $0x1f0] sm:$0xff] %vm249, 0.0
        %314 = vst.msk [vmem:[#allocation2 + $0x1f8] sm:$0xf] %vm251, 0.0
        %315 = vst.msk [vmem:[#allocation2 + $0x200] sm:$0xff] %vm249, 0.0
        %316 = vst.msk [vmem:[#allocation2 + $0x208] sm:$0xf] %vm251, 0.0
        %317 = vst.msk [vmem:[#allocation2 + $0x210] sm:$0xff] %vm249, 0.0
        %318 = vst.msk [vmem:[#allocation2 + $0x218] sm:$0xf] %vm251, 0.0
        %319 = vst.msk [vmem:[#allocation2 + $0x220] sm:$0xff] %vm249, 0.0
        %320 = vst.msk [vmem:[#allocation2 + $0x228] sm:$0xf] %vm251, 0.0
        %321 = vst.msk [vmem:[#allocation2 + $0x230] sm:$0xff] %vm249, 0.0
        %322 = vst.msk [vmem:[#allocation2 + $0x238] sm:$0xf] %vm251, 0.0
        %323 = vst.msk [vmem:[#allocation2 + $0x240] sm:$0xff] %vm249, 0.0
        %324 = vst.msk [vmem:[#allocation2 + $0x248] sm:$0xf] %vm251, 0.0
        %325 = vst.msk [vmem:[#allocation2 + $0x250] sm:$0xff] %vm249, 0.0
        %326 = vst.msk [vmem:[#allocation2 + $0x258] sm:$0xf] %vm251, 0.0
        %327 = vst.msk [vmem:[#allocation2 + $0x260] sm:$0xff] %vm249, 0.0
        %328 = vst.msk [vmem:[#allocation2 + $0x268] sm:$0xf] %vm251, 0.0
        %329 = vst.msk [vmem:[#allocation2 + $0x270] sm:$0xff] %vm249, 0.0
        %330 = vst.msk [vmem:[#allocation2 + $0x278] sm:$0xf] %vm251, 0.0
        %331 = vst.msk [vmem:[#allocation2 + $0x280] sm:$0xff] %vm249, 0.0
        %332 = vst.msk [vmem:[#allocation2 + $0x288] sm:$0xf] %vm251, 0.0
        %333 = vst.msk [vmem:[#allocation2 + $0x290] sm:$0xff] %vm249, 0.0
        %334 = vst.msk [vmem:[#allocation2 + $0x298] sm:$0xf] %vm251, 0.0
        %335 = vst.msk [vmem:[#allocation2 + $0x2a0] sm:$0xff] %vm249, 0.0
        %336 = vst.msk [vmem:[#allocation2 + $0x2a8] sm:$0xf] %vm251, 0.0
        %337 = vst.msk [vmem:[#allocation2 + $0x2b0] sm:$0xff] %vm249, 0.0
        %338 = vst.msk [vmem:[#allocation2 + $0x2b8] sm:$0xf] %vm251, 0.0
        %339 = vst.msk [vmem:[#allocation2 + $0x2c0] sm:$0xff] %vm249, 0.0
        %340 = vst.msk [vmem:[#allocation2 + $0x2c8] sm:$0xf] %vm251, 0.0
        %341 = vst.msk [vmem:[#allocation2 + $0x2d0] sm:$0xff] %vm249, 0.0
        %342 = vst.msk [vmem:[#allocation2 + $0x2d8] sm:$0xf] %vm251, 0.0
        %343 = vst.msk [vmem:[#allocation2 + $0x2e0] sm:$0xff] %vm249, 0.0
        %344 = vst.msk [vmem:[#allocation2 + $0x2e8] sm:$0xf] %vm251, 0.0
        %345 = vst.msk [vmem:[#allocation2 + $0x2f0] sm:$0xff] %vm249, 0.0
        %346 = vst.msk [vmem:[#allocation2 + $0x2f8] sm:$0xf] %vm251, 0.0
        %347 = vst.msk [vmem:[#allocation2 + $0x300] sm:$0xff] %vm249, 0.0
        %348 = vst.msk [vmem:[#allocation2 + $0x308] sm:$0xf] %vm251, 0.0
        %349 = vst.msk [vmem:[#allocation2 + $0x310] sm:$0xff] %vm249, 0.0
        %350 = vst.msk [vmem:[#allocation2 + $0x318] sm:$0xf] %vm251, 0.0
        %351 = vst.msk [vmem:[#allocation2 + $0x320] sm:$0xff] %vm249, 0.0
        %352 = vst.msk [vmem:[#allocation2 + $0x328] sm:$0xf] %vm251, 0.0
        %353 = vst.msk [vmem:[#allocation2 + $0x330] sm:$0xff] %vm249, 0.0
        %354 = vst.msk [vmem:[#allocation2 + $0x338] sm:$0xf] %vm251, 0.0
        %355 = vst.msk [vmem:[#allocation2 + $0x340] sm:$0xff] %vm249, 0.0
        %356 = vst.msk [vmem:[#allocation2 + $0x348] sm:$0xf] %vm251, 0.0
        %357 = vst.msk [vmem:[#allocation2 + $0x350] sm:$0xff] %vm249, 0.0
        %358 = vst.msk [vmem:[#allocation2 + $0x358] sm:$0xf] %vm251, 0.0
        %359 = vst.msk [vmem:[#allocation2 + $0x360] sm:$0xff] %vm249, 0.0
        %360 = vst.msk [vmem:[#allocation2 + $0x368] sm:$0xf] %vm251, 0.0
        %361 = vst.msk [vmem:[#allocation2 + $0x370] sm:$0xff] %vm249, 0.0
        %362 = vst.msk [vmem:[#allocation2 + $0x378] sm:$0xf] %vm251, 0.0
        %363 = vst.msk [vmem:[#allocation2 + $0x380] sm:$0xff] %vm249, 0.0
        %364 = vst.msk [vmem:[#allocation2 + $0x388] sm:$0xf] %vm251, 0.0
        %365 = vst.msk [vmem:[#allocation2 + $0x390] sm:$0xff] %vm249, 0.0
        %366 = vst.msk [vmem:[#allocation2 + $0x398] sm:$0xf] %vm251, 0.0
        %367 = vst.msk [vmem:[#allocation2 + $0x3a0] sm:$0xff] %vm249, 0.0
        %368 = vst.msk [vmem:[#allocation2 + $0x3a8] sm:$0xf] %vm251, 0.0
        %369 = vst.msk [vmem:[#allocation2 + $0x3b0] sm:$0xff] %vm249, 0.0
        %370 = vst.msk [vmem:[#allocation2 + $0x3b8] sm:$0xf] %vm251, 0.0
        %371 = vst.msk [vmem:[#allocation2 + $0x3c0] sm:$0xff] %vm249, 0.0
        %372 = vst.msk [vmem:[#allocation2 + $0x3c8] sm:$0xf] %vm251, 0.0
        %373 = vst.msk [vmem:[#allocation2 + $0x3d0] sm:$0xff] %vm249, 0.0
        %374 = vst.msk [vmem:[#allocation2 + $0x3d8] sm:$0xf] %vm251, 0.0
        %375 = vst.msk [vmem:[#allocation2 + $0x3e0] sm:$0xff] %vm249, 0.0
        %376 = vst.msk [vmem:[#allocation2 + $0x3e8] sm:$0xf] %vm251, 0.0
        %377 = vst.msk [vmem:[#allocation2 + $0x3f0] sm:$0xff] %vm249, 0.0
        %378 = vst.msk [vmem:[#allocation2 + $0x3f8] sm:$0xf] %vm251, 0.0
        %379 = vst.msk [vmem:[#allocation2 + $0x400] sm:$0xff] %vm249, 0.0
        %380 = vst.msk [vmem:[#allocation2 + $0x408] sm:$0xf] %vm251, 0.0
        %381 = vst.msk [vmem:[#allocation2 + $0x410] sm:$0xff] %vm249, 0.0
        %382 = vst.msk [vmem:[#allocation2 + $0x418] sm:$0xf] %vm251, 0.0
        %383 = vst.msk [vmem:[#allocation2 + $0x420] sm:$0xff] %vm249, 0.0
        %384 = vst.msk [vmem:[#allocation2 + $0x428] sm:$0xf] %vm251, 0.0
        %385 = vst.msk [vmem:[#allocation2 + $0x430] sm:$0xff] %vm249, 0.0
        %386 = vst.msk [vmem:[#allocation2 + $0x438] sm:$0xf] %vm251, 0.0
        %387 = vst.msk [vmem:[#allocation2 + $0x440] sm:$0xff] %vm249, 0.0
        %388 = vst.msk [vmem:[#allocation2 + $0x448] sm:$0xf] %vm251, 0.0
        %389 = vst.msk [vmem:[#allocation2 + $0x450] sm:$0xff] %vm249, 0.0
        %390 = vst.msk [vmem:[#allocation2 + $0x458] sm:$0xf] %vm251, 0.0
        %391 = vst.msk [vmem:[#allocation2 + $0x460] sm:$0xff] %vm249, 0.0
        %392 = vst.msk [vmem:[#allocation2 + $0x468] sm:$0xf] %vm251, 0.0
        %393 = vst.msk [vmem:[#allocation2 + $0x470] sm:$0xff] %vm249, 0.0
        %394 = vst.msk [vmem:[#allocation2 + $0x478] sm:$0xf] %vm251, 0.0
        %395 = vst.msk [vmem:[#allocation2 + $0x480] sm:$0xff] %vm249, 0.0
        %396 = vst.msk [vmem:[#allocation2 + $0x488] sm:$0xf] %vm251, 0.0
        %397 = vst.msk [vmem:[#allocation2 + $0x490] sm:$0xff] %vm249, 0.0
        %398 = vst.msk [vmem:[#allocation2 + $0x498] sm:$0xf] %vm251, 0.0
        %399 = vst.msk [vmem:[#allocation2 + $0x4a0] sm:$0xff] %vm249, 0.0
        %400 = vst.msk [vmem:[#allocation2 + $0x4a8] sm:$0xf] %vm251, 0.0
        %401 = vst.msk [vmem:[#allocation2 + $0x4b0] sm:$0xff] %vm249, 0.0
        %402 = vst.msk [vmem:[#allocation2 + $0x4b8] sm:$0xf] %vm251, 0.0
        %403 = vst.msk [vmem:[#allocation2 + $0x4c0] sm:$0xff] %vm249, 0.0
        %404 = vst.msk [vmem:[#allocation2 + $0x4c8] sm:$0xf] %vm251, 0.0
        %405 = vst.msk [vmem:[#allocation2 + $0x4d0] sm:$0xff] %vm249, 0.0
        %406 = vst.msk [vmem:[#allocation2 + $0x4d8] sm:$0xf] %vm251, 0.0
        %407 = vst.msk [vmem:[#allocation2 + $0x4e0] sm:$0xff] %vm249, 0.0
        %408 = vst.msk [vmem:[#allocation2 + $0x4e8] sm:$0xf] %vm251, 0.0
        %409 = vst.msk [vmem:[#allocation2 + $0x4f0] sm:$0xff] %vm249, 0.0
        %410 = vst.msk [vmem:[#allocation2 + $0x4f8] sm:$0xf] %vm251, 0.0
        %411 = vst.msk [vmem:[#allocation2 + $0x500] sm:$0xff] %vm249, 0.0
        %412 = vst.msk [vmem:[#allocation2 + $0x508] sm:$0xf] %vm251, 0.0
        %413 = vst.msk [vmem:[#allocation2 + $0x510] sm:$0xff] %vm249, 0.0
        %414 = vst.msk [vmem:[#allocation2 + $0x518] sm:$0xf] %vm251, 0.0
        %415 = vst.msk [vmem:[#allocation2 + $0x520] sm:$0xff] %vm249, 0.0
        %416 = vst.msk [vmem:[#allocation2 + $0x528] sm:$0xf] %vm251, 0.0
        %417 = vst.msk [vmem:[#allocation2 + $0x530] sm:$0xff] %vm249, 0.0
        %418 = vst.msk [vmem:[#allocation2 + $0x538] sm:$0xf] %vm251, 0.0
        %419 = vst.msk [vmem:[#allocation2 + $0x540] sm:$0xff] %vm249, 0.0
        %420 = vst.msk [vmem:[#allocation2 + $0x548] sm:$0xf] %vm251, 0.0
        %421 = vst.msk [vmem:[#allocation2 + $0x550] sm:$0xff] %vm249, 0.0
        %422 = vst.msk [vmem:[#allocation2 + $0x558] sm:$0xf] %vm251, 0.0
        %423 = vst.msk [vmem:[#allocation2 + $0x560] sm:$0xff] %vm249, 0.0
        %424 = vst.msk [vmem:[#allocation2 + $0x568] sm:$0xf] %vm251, 0.0
        %425 = vst.msk [vmem:[#allocation2 + $0x570] sm:$0xff] %vm249, 0.0
        %426 = vst.msk [vmem:[#allocation2 + $0x578] sm:$0xf] %vm251, 0.0
        %427 = vst.msk [vmem:[#allocation2 + $0x580] sm:$0xff] %vm249, 0.0
        %428 = vst.msk [vmem:[#allocation2 + $0x588] sm:$0xf] %vm251, 0.0
        %429 = vst.msk [vmem:[#allocation2 + $0x590] sm:$0xff] %vm249, 0.0
        %430 = vst.msk [vmem:[#allocation2 + $0x598] sm:$0xf] %vm251, 0.0
        %431 = vst.msk [vmem:[#allocation2 + $0x5a0] sm:$0xff] %vm249, 0.0
        %432 = vst.msk [vmem:[#allocation2 + $0x5a8] sm:$0xf] %vm251, 0.0
        %433 = vst.msk [vmem:[#allocation2 + $0x5b0] sm:$0xff] %vm249, 0.0
        %434 = vst.msk [vmem:[#allocation2 + $0x5b8] sm:$0xf] %vm251, 0.0
        %435 = vst.msk [vmem:[#allocation2 + $0x5c0] sm:$0xff] %vm249, 0.0
        %436 = vst.msk [vmem:[#allocation2 + $0x5c8] sm:$0xf] %vm251, 0.0
        %437 = vst.msk [vmem:[#allocation2 + $0x5d0] sm:$0xff] %vm249, 0.0
        %438 = vst.msk [vmem:[#allocation2 + $0x5d8] sm:$0xf] %vm251, 0.0
        %439 = vst.msk [vmem:[#allocation2 + $0x5e0] sm:$0xff] %vm249, 0.0
        %440 = vst.msk [vmem:[#allocation2 + $0x5e8] sm:$0xf] %vm251, 0.0
        %441 = vst.msk [vmem:[#allocation2 + $0x5f0] sm:$0xff] %vm249, 0.0
        %442 = vst.msk [vmem:[#allocation2 + $0x5f8] sm:$0xf] %vm251, 0.0
        %443 = vst.msk [vmem:[#allocation2 + $0x600] sm:$0xff] %vm249, 0.0
        %444 = vst.msk [vmem:[#allocation2 + $0x608] sm:$0xf] %vm251, 0.0
        %445 = vst.msk [vmem:[#allocation2 + $0x610] sm:$0xff] %vm249, 0.0
        %446 = vst.msk [vmem:[#allocation2 + $0x618] sm:$0xf] %vm251, 0.0
        %447 = vst.msk [vmem:[#allocation2 + $0x620] sm:$0xff] %vm249, 0.0
        %448 = vst.msk [vmem:[#allocation2 + $0x628] sm:$0xf] %vm251, 0.0
        %449 = vst.msk [vmem:[#allocation2 + $0x630] sm:$0xff] %vm249, 0.0
        %450 = vst.msk [vmem:[#allocation2 + $0x638] sm:$0xf] %vm251, 0.0
        %451 = vst.msk [vmem:[#allocation2 + $0x640] sm:$0xff] %vm249, 0.0
        %452 = vst.msk [vmem:[#allocation2 + $0x648] sm:$0xf] %vm251, 0.0
        %453 = vst.msk [vmem:[#allocation2 + $0x650] sm:$0xff] %vm249, 0.0
        %454 = vst.msk [vmem:[#allocation2 + $0x658] sm:$0xf] %vm251, 0.0
        %455 = vst.msk [vmem:[#allocation2 + $0x660] sm:$0xff] %vm249, 0.0
        %456 = vst.msk [vmem:[#allocation2 + $0x668] sm:$0xf] %vm251, 0.0
        %457 = vst.msk [vmem:[#allocation2 + $0x670] sm:$0xff] %vm249, 0.0
        %458 = vst.msk [vmem:[#allocation2 + $0x678] sm:$0xf] %vm251, 0.0
        %459 = vst.msk [vmem:[#allocation2 + $0x680] sm:$0xff] %vm249, 0.0
        %460 = vst.msk [vmem:[#allocation2 + $0x688] sm:$0xf] %vm251, 0.0
        %461 = vst.msk [vmem:[#allocation2 + $0x690] sm:$0xff] %vm249, 0.0
        %462 = vst.msk [vmem:[#allocation2 + $0x698] sm:$0xf] %vm251, 0.0
        %463 = vst.msk [vmem:[#allocation2 + $0x6a0] sm:$0xff] %vm249, 0.0
        %464 = vst.msk [vmem:[#allocation2 + $0x6a8] sm:$0xf] %vm251, 0.0
        %465 = vst.msk [vmem:[#allocation2 + $0x6b0] sm:$0xff] %vm249, 0.0
        %466 = vst.msk [vmem:[#allocation2 + $0x6b8] sm:$0xf] %vm251, 0.0
        %467 = vst.msk [vmem:[#allocation2 + $0x6c0] sm:$0xff] %vm249, 0.0
        %468 = vst.msk [vmem:[#allocation2 + $0x6c8] sm:$0xf] %vm251, 0.0
        %469 = vst.msk [vmem:[#allocation2 + $0x6d0] sm:$0xff] %vm249, 0.0
        %470 = vst.msk [vmem:[#allocation2 + $0x6d8] sm:$0xf] %vm251, 0.0
        %471 = vst.msk [vmem:[#allocation2 + $0x6e0] sm:$0xff] %vm249, 0.0
        %472 = vst.msk [vmem:[#allocation2 + $0x6e8] sm:$0xf] %vm251, 0.0
        %473 = vst.msk [vmem:[#allocation2 + $0x6f0] sm:$0xff] %vm249, 0.0
        %474 = vst.msk [vmem:[#allocation2 + $0x6f8] sm:$0xf] %vm251, 0.0
        %475 = vst.msk [vmem:[#allocation2 + $0x700] sm:$0xff] %vm249, 0.0
        %476 = vst.msk [vmem:[#allocation2 + $0x708] sm:$0xf] %vm251, 0.0
        %477 = vst.msk [vmem:[#allocation2 + $0x710] sm:$0xff] %vm249, 0.0
        %478 = vst.msk [vmem:[#allocation2 + $0x718] sm:$0xf] %vm251, 0.0
        %479 = vst.msk [vmem:[#allocation2 + $0x720] sm:$0xff] %vm249, 0.0
        %480 = vst.msk [vmem:[#allocation2 + $0x728] sm:$0xf] %vm251, 0.0
        %481 = vst.msk [vmem:[#allocation2 + $0x730] sm:$0xff] %vm249, 0.0
        %482 = vst.msk [vmem:[#allocation2 + $0x738] sm:$0xf] %vm251, 0.0
        %483 = vst.msk [vmem:[#allocation2 + $0x740] sm:$0xff] %vm249, 0.0
        %484 = vst.msk [vmem:[#allocation2 + $0x748] sm:$0xf] %vm251, 0.0
        %485 = vst.msk [vmem:[#allocation2 + $0x750] sm:$0xff] %vm249, 0.0
        %486 = vst.msk [vmem:[#allocation2 + $0x758] sm:$0xf] %vm251, 0.0
        %487 = vst.msk [vmem:[#allocation2 + $0x760] sm:$0xff] %vm249, 0.0
        %488 = vst.msk [vmem:[#allocation2 + $0x768] sm:$0xf] %vm251, 0.0
        %489 = vst.msk [vmem:[#allocation2 + $0x770] sm:$0xff] %vm249, 0.0
        %490 = vst.msk [vmem:[#allocation2 + $0x778] sm:$0xf] %vm251, 0.0
        %491 = vst.msk [vmem:[#allocation2 + $0x780] sm:$0xff] %vm249, 0.0
        %492 = vst.msk [vmem:[#allocation2 + $0x788] sm:$0xf] %vm251, 0.0
        %493 = vst.msk [vmem:[#allocation2 + $0x790] sm:$0xff] %vm249, 0.0
        %494 = vst.msk [vmem:[#allocation2 + $0x798] sm:$0xf] %vm251, 0.0
        %495 = vst.msk [vmem:[#allocation2 + $0x7a0] sm:$0xff] %vm249, 0.0
        %496 = vst.msk [vmem:[#allocation2 + $0x7a8] sm:$0xf] %vm251, 0.0
        %497 = vst.msk [vmem:[#allocation2 + $0x7b0] sm:$0xff] %vm249, 0.0
        %498 = vst.msk [vmem:[#allocation2 + $0x7b8] sm:$0xf] %vm251, 0.0
        %499 = vst.msk [vmem:[#allocation2 + $0x7c0] sm:$0xff] %vm249, 0.0
        %500 = vst.msk [vmem:[#allocation2 + $0x7c8] sm:$0xf] %vm251, 0.0
        %501 = vst.msk [vmem:[#allocation2 + $0x7d0] sm:$0xff] %vm249, 0.0
        %502 = vst.msk [vmem:[#allocation2 + $0x7d8] sm:$0xf] %vm251, 0.0
        %503 = vst.msk [vmem:[#allocation2 + $0x7e0] sm:$0xff] %vm249, 0.0
        %504 = vst.msk [vmem:[#allocation2 + $0x7e8] sm:$0xf] %vm251, 0.0
        %505 = vst.msk [vmem:[#allocation2 + $0x7f0] sm:$0xff] %vm249, 0.0
        %506 = vst.msk [vmem:[#allocation2 + $0x7f8] sm:$0xf] %vm251, 0.0
        %507 = vst.msk [vmem:[#allocation2 + $0x800] sm:$0xff] %vm249, 0.0
        %508 = vst.msk [vmem:[#allocation2 + $0x808] sm:$0xf] %vm251, 0.0
        %509 = vst.msk [vmem:[#allocation2 + $0x810] sm:$0xff] %vm249, 0.0
        %510 = vst.msk [vmem:[#allocation2 + $0x818] sm:$0xf] %vm251, 0.0
        %511 = vst.msk [vmem:[#allocation2 + $0x820] sm:$0xff] %vm249, 0.0
        %512 = vst.msk [vmem:[#allocation2 + $0x828] sm:$0xf] %vm251, 0.0
        %513 = vst.msk [vmem:[#allocation2 + $0x830] sm:$0xff] %vm249, 0.0
        %514 = vst.msk [vmem:[#allocation2 + $0x838] sm:$0xf] %vm251, 0.0
        %515 = vst.msk [vmem:[#allocation2 + $0x840] sm:$0xff] %vm249, 0.0
        %516 = vst.msk [vmem:[#allocation2 + $0x848] sm:$0xf] %vm251, 0.0
        %517 = vst.msk [vmem:[#allocation2 + $0x850] sm:$0xff] %vm249, 0.0
        %518 = vst.msk [vmem:[#allocation2 + $0x858] sm:$0xf] %vm251, 0.0
        %519 = vst.msk [vmem:[#allocation2 + $0x860] sm:$0xff] %vm249, 0.0
        %520 = vst.msk [vmem:[#allocation2 + $0x868] sm:$0xf] %vm251, 0.0
        %521 = vst.msk [vmem:[#allocation2 + $0x870] sm:$0xff] %vm249, 0.0
        %522 = vst.msk [vmem:[#allocation2 + $0x878] sm:$0xf] %vm251, 0.0
        %523 = vst.msk [vmem:[#allocation2 + $0x880] sm:$0xff] %vm249, 0.0
        %524 = vst.msk [vmem:[#allocation2 + $0x888] sm:$0xf] %vm251, 0.0
        %525 = vst.msk [vmem:[#allocation2 + $0x890] sm:$0xff] %vm249, 0.0
        %526 = vst.msk [vmem:[#allocation2 + $0x898] sm:$0xf] %vm251, 0.0
        %527 = vst.msk [vmem:[#allocation2 + $0x8a0] sm:$0xff] %vm249, 0.0
        %528 = vst.msk [vmem:[#allocation2 + $0x8a8] sm:$0xf] %vm251, 0.0
        %529 = vst.msk [vmem:[#allocation2 + $0x8b0] sm:$0xff] %vm249, 0.0
        %530 = vst.msk [vmem:[#allocation2 + $0x8b8] sm:$0xf] %vm251, 0.0
        %531 = vst.msk [vmem:[#allocation2 + $0x8c0] sm:$0xff] %vm249, 0.0
        %532 = vst.msk [vmem:[#allocation2 + $0x8c8] sm:$0xf] %vm251, 0.0
        %533 = vst.msk [vmem:[#allocation2 + $0x8d0] sm:$0xff] %vm249, 0.0
        %534 = vst.msk [vmem:[#allocation2 + $0x8d8] sm:$0xf] %vm251, 0.0
        %535 = vst.msk [vmem:[#allocation2 + $0x8e0] sm:$0xff] %vm249, 0.0
        %536 = vst.msk [vmem:[#allocation2 + $0x8e8] sm:$0xf] %vm251, 0.0
        %537 = vst.msk [vmem:[#allocation2 + $0x8f0] sm:$0xff] %vm249, 0.0
        %538 = vst.msk [vmem:[#allocation2 + $0x8f8] sm:$0xf] %vm251, 0.0
        %v539 = vld [vmem:[%s213] sm:$0xff]
        %v540 = vld [vmem:[%s213 + $0x8] sm:$0xff]
        %v541 = vld [vmem:[%s213 + $0x10] sm:$0xff]
        %v542 = vld [vmem:[%s213 + $0x18] sm:$0xff]
        %v543 = vld [vmem:[%s213 + $0x20] sm:$0xff]
        %v544 = vld [vmem:[%s213 + $0x28] sm:$0xff]
        %v545 = vld [vmem:[%s213 + $0x30] sm:$0xff]
        %v546 = vld [vmem:[%s213 + $0x38] sm:$0xff]
        %v547 = vld [vmem:[%s213 + $0x40] sm:$0xff]
        %v548 = vld [vmem:[%s213 + $0x48] sm:$0xff]
        %v549 = vld [vmem:[%s213 + $0x50] sm:$0xff]
        %v550 = vld [vmem:[%s213 + $0x58] sm:$0xff]
        %v551 = vld [vmem:[%s213 + $0x60] sm:$0xff]
        %v552 = vld [vmem:[%s213 + $0x68] sm:$0xff]
        %v553 = vld [vmem:[%s213 + $0x70] sm:$0xff]
        %v554 = vld [vmem:[%s213 + $0x78] sm:$0xff]
        %v555 = vld [vmem:[%s213 + $0x80] sm:$0xff]
        %v556 = vld [vmem:[%s213 + $0x88] sm:$0xff]
        %v557 = vld [vmem:[%s213 + $0x90] sm:$0xff]
        %v558 = vld [vmem:[%s213 + $0x98] sm:$0xff]
        %v559 = vld [vmem:[%s213 + $0xa0] sm:$0xff]
        %v560 = vld [vmem:[%s213 + $0xa8] sm:$0xff]
        %v561 = vld [vmem:[%s213 + $0xb0] sm:$0xff]
        %v562 = vld [vmem:[%s213 + $0xb8] sm:$0xff]
        %v563 = vld [vmem:[%s213 + $0xc0] sm:$0xff]
        %v564 = vld [vmem:[%s213 + $0xc8] sm:$0xff]
        %v565 = vld [vmem:[%s213 + $0xd0] sm:$0xff]
        %v566 = vld [vmem:[%s213 + $0xd8] sm:$0xff]
        %v567 = vld [vmem:[%s213 + $0xe0] sm:$0xff]
        %v568 = vld [vmem:[%s213 + $0xe8] sm:$0xff]
        %v569 = vld [vmem:[%s213 + $0xf0] sm:$0xff]
        %v570 = vld [vmem:[%s213 + $0xf8] sm:$0xff]
        %v571 = vld [vmem:[%s213 + $0x100] sm:$0xff]
        %v572 = vld [vmem:[%s213 + $0x108] sm:$0xff]
        %v573 = vld [vmem:[%s213 + $0x110] sm:$0xff]
        %v574 = vld [vmem:[%s213 + $0x118] sm:$0xff]
        %v575 = vld [vmem:[%s213 + $0x120] sm:$0xff]
        %v576 = vld [vmem:[%s213 + $0x128] sm:$0xff]
        %v577 = vld [vmem:[%s213 + $0x130] sm:$0xff]
        %v578 = vld [vmem:[%s213 + $0x138] sm:$0xff]
        %v579 = vld [vmem:[%s213 + $0x140] sm:$0xff]
        %v580 = vld [vmem:[%s213 + $0x148] sm:$0xff]
        %v581 = vld [vmem:[%s213 + $0x150] sm:$0xff]
        %v582 = vld [vmem:[%s213 + $0x158] sm:$0xff]
        %v583 = vld [vmem:[%s213 + $0x160] sm:$0xff]
        %v584 = vld [vmem:[%s213 + $0x168] sm:$0xff]
        %v585 = vld [vmem:[%s213 + $0x170] sm:$0xff]
        %v586 = vld [vmem:[%s213 + $0x178] sm:$0xff]
        %v587 = vld [vmem:[%s213 + $0x180] sm:$0xff]
        %v588 = vld [vmem:[%s213 + $0x188] sm:$0xff]
        %v589 = vld [vmem:[%s213 + $0x190] sm:$0xff]
        %v590 = vld [vmem:[%s213 + $0x198] sm:$0xff]
        %v591 = vld [vmem:[%s213 + $0x1a0] sm:$0xff]
        %v592 = vld [vmem:[%s213 + $0x1a8] sm:$0xff]
        %v593 = vld [vmem:[%s213 + $0x1b0] sm:$0xff]
        %v594 = vld [vmem:[%s213 + $0x1b8] sm:$0xff]
        %v595 = vld [vmem:[%s213 + $0x1c0] sm:$0xff]
        %v596 = vld [vmem:[%s213 + $0x1c8] sm:$0xff]
        %v597 = vld [vmem:[%s213 + $0x1d0] sm:$0xff]
        %v598 = vld [vmem:[%s213 + $0x1d8] sm:$0xff]
        %v599 = vld [vmem:[%s213 + $0x1e0] sm:$0xff]
        %v600 = vld [vmem:[%s213 + $0x1e8] sm:$0xff]
        %v601 = vld [vmem:[%s213 + $0x1f0] sm:$0xff]
        %v602 = vld [vmem:[%s213 + $0x1f8] sm:$0xff]
        %v603 = vld [vmem:[#allocation6] sm:$0x1]
        %v605 = vperm.slane %v603, 0
        %v607 = vmul.f32 %v539, %v605
        %v608 = vmul.f32 %v540, %v605
        %v609 = vmul.f32 %v541, %v605
        %v610 = vmul.f32 %v542, %v605
        %v611 = vmul.f32 %v543, %v605
        %v612 = vmul.f32 %v544, %v605
        %v613 = vmul.f32 %v545, %v605
        %v614 = vmul.f32 %v546, %v605
        %v615 = vmul.f32 %v547, %v605
        %v616 = vmul.f32 %v548, %v605
        %v617 = vmul.f32 %v549, %v605
        %v618 = vmul.f32 %v550, %v605
        %v619 = vmul.f32 %v551, %v605
        %v620 = vmul.f32 %v552, %v605
        %v621 = vmul.f32 %v553, %v605
        %v622 = vmul.f32 %v554, %v605
        %v623 = vmul.f32 %v555, %v605
        %v624 = vmul.f32 %v556, %v605
        %v625 = vmul.f32 %v557, %v605
        %v626 = vmul.f32 %v558, %v605
        %v627 = vmul.f32 %v559, %v605
        %v628 = vmul.f32 %v560, %v605
        %v629 = vmul.f32 %v561, %v605
        %v630 = vmul.f32 %v562, %v605
        %v631 = vmul.f32 %v563, %v605
        %v632 = vmul.f32 %v564, %v605
        %v633 = vmul.f32 %v565, %v605
        %v634 = vmul.f32 %v566, %v605
        %v635 = vmul.f32 %v567, %v605
        %v636 = vmul.f32 %v568, %v605
        %v637 = vmul.f32 %v569, %v605
        %v638 = vmul.f32 %v570, %v605
        %v639 = vmul.f32 %v571, %v605
        %v640 = vmul.f32 %v572, %v605
        %v641 = vmul.f32 %v573, %v605
        %v642 = vmul.f32 %v574, %v605
        %v643 = vmul.f32 %v575, %v605
        %v644 = vmul.f32 %v576, %v605
        %v645 = vmul.f32 %v577, %v605
        %v646 = vmul.f32 %v578, %v605
        %v647 = vmul.f32 %v579, %v605
        %v648 = vmul.f32 %v580, %v605
        %v649 = vmul.f32 %v581, %v605
        %v650 = vmul.f32 %v582, %v605
        %v651 = vmul.f32 %v583, %v605
        %v652 = vmul.f32 %v584, %v605
        %v653 = vmul.f32 %v585, %v605
        %v654 = vmul.f32 %v586, %v605
        %v655 = vmul.f32 %v587, %v605
        %v656 = vmul.f32 %v588, %v605
        %v657 = vmul.f32 %v589, %v605
        %v658 = vmul.f32 %v590, %v605
        %v659 = vmul.f32 %v591, %v605
        %v660 = vmul.f32 %v592, %v605
        %v661 = vmul.f32 %v593, %v605
        %v662 = vmul.f32 %v594, %v605
        %v663 = vmul.f32 %v595, %v605
        %v664 = vmul.f32 %v596, %v605
        %v665 = vmul.f32 %v597, %v605
        %v666 = vmul.f32 %v598, %v605
        %v667 = vmul.f32 %v599, %v605
        %v668 = vmul.f32 %v600, %v605
        %v669 = vmul.f32 %v601, %v605
        %v670 = vmul.f32 %v602, %v605
        %v671 = vld [vmem:[%s2] sm:$0x1]
        %v673 = vperm.slane %v671, 0
        %v675 = vadd.f32 %v607, %v673
        %v676 = vadd.f32 %v608, %v673
        %v677 = vadd.f32 %v609, %v673
        %v678 = vadd.f32 %v610, %v673
        %v679 = vadd.f32 %v611, %v673
        %v680 = vadd.f32 %v612, %v673
        %v681 = vadd.f32 %v613, %v673
        %v682 = vadd.f32 %v614, %v673
        %v683 = vadd.f32 %v615, %v673
        %v684 = vadd.f32 %v616, %v673
        %v685 = vadd.f32 %v617, %v673
        %v686 = vadd.f32 %v618, %v673
        %v687 = vadd.f32 %v619, %v673
        %v688 = vadd.f32 %v620, %v673
        %v689 = vadd.f32 %v621, %v673
        %v690 = vadd.f32 %v622, %v673
        %v691 = vadd.f32 %v623, %v673
        %v692 = vadd.f32 %v624, %v673
        %v693 = vadd.f32 %v625, %v673
        %v694 = vadd.f32 %v626, %v673
        %v695 = vadd.f32 %v627, %v673
        %v696 = vadd.f32 %v628, %v673
        %v697 = vadd.f32 %v629, %v673
        %v698 = vadd.f32 %v630, %v673
        %v699 = vadd.f32 %v631, %v673
        %v700 = vadd.f32 %v632, %v673
        %v701 = vadd.f32 %v633, %v673
        %v702 = vadd.f32 %v634, %v673
        %v703 = vadd.f32 %v635, %v673
        %v704 = vadd.f32 %v636, %v673
        %v705 = vadd.f32 %v637, %v673
        %v706 = vadd.f32 %v638, %v673
        %v707 = vadd.f32 %v639, %v673
        %v708 = vadd.f32 %v640, %v673
        %v709 = vadd.f32 %v641, %v673
        %v710 = vadd.f32 %v642, %v673
        %v711 = vadd.f32 %v643, %v673
        %v712 = vadd.f32 %v644, %v673
        %v713 = vadd.f32 %v645, %v673
        %v714 = vadd.f32 %v646, %v673
        %v715 = vadd.f32 %v647, %v673
        %v716 = vadd.f32 %v648, %v673
        %v717 = vadd.f32 %v649, %v673
        %v718 = vadd.f32 %v650, %v673
        %v719 = vadd.f32 %v651, %v673
        %v720 = vadd.f32 %v652, %v673
        %v721 = vadd.f32 %v653, %v673
        %v722 = vadd.f32 %v654, %v673
        %v723 = vadd.f32 %v655, %v673
        %v724 = vadd.f32 %v656, %v673
        %v725 = vadd.f32 %v657, %v673
        %v726 = vadd.f32 %v658, %v673
        %v727 = vadd.f32 %v659, %v673
        %v728 = vadd.f32 %v660, %v673
        %v729 = vadd.f32 %v661, %v673
        %v730 = vadd.f32 %v662, %v673
        %v731 = vadd.f32 %v663, %v673
        %v732 = vadd.f32 %v664, %v673
        %v733 = vadd.f32 %v665, %v673
        %v734 = vadd.f32 %v666, %v673
        %v735 = vadd.f32 %v667, %v673
        %v736 = vadd.f32 %v668, %v673
        %v737 = vadd.f32 %v669, %v673
        %v738 = vadd.f32 %v670, %v673
        %v739 = vmax.f32 %v675, 0.0
        %v740 = vmax.f32 %v676, 0.0
        %v741 = vmax.f32 %v677, 0.0
        %v742 = vmax.f32 %v678, 0.0
        %v743 = vmax.f32 %v679, 0.0
        %v744 = vmax.f32 %v680, 0.0
        %v745 = vmax.f32 %v681, 0.0
        %v746 = vmax.f32 %v682, 0.0
        %v747 = vmax.f32 %v683, 0.0
        %v748 = vmax.f32 %v684, 0.0
        %v749 = vmax.f32 %v685, 0.0
        %v750 = vmax.f32 %v686, 0.0
        %v751 = vmax.f32 %v687, 0.0
        %v752 = vmax.f32 %v688, 0.0
        %v753 = vmax.f32 %v689, 0.0
        %v754 = vmax.f32 %v690, 0.0
        %v755 = vmax.f32 %v691, 0.0
        %v756 = vmax.f32 %v692, 0.0
        %v757 = vmax.f32 %v693, 0.0
        %v758 = vmax.f32 %v694, 0.0
        %v759 = vmax.f32 %v695, 0.0
        %v760 = vmax.f32 %v696, 0.0
        %v761 = vmax.f32 %v697, 0.0
        %v762 = vmax.f32 %v698, 0.0
        %v763 = vmax.f32 %v699, 0.0
        %v764 = vmax.f32 %v700, 0.0
        %v765 = vmax.f32 %v701, 0.0
        %v766 = vmax.f32 %v702, 0.0
        %v767 = vmax.f32 %v703, 0.0
        %v768 = vmax.f32 %v704, 0.0
        %v769 = vmax.f32 %v705, 0.0
        %v770 = vmax.f32 %v706, 0.0
        %v771 = vmax.f32 %v707, 0.0
        %v772 = vmax.f32 %v708, 0.0
        %v773 = vmax.f32 %v709, 0.0
        %v774 = vmax.f32 %v710, 0.0
        %v775 = vmax.f32 %v711, 0.0
        %v776 = vmax.f32 %v712, 0.0
        %v777 = vmax.f32 %v713, 0.0
        %v778 = vmax.f32 %v714, 0.0
        %v779 = vmax.f32 %v715, 0.0
        %v780 = vmax.f32 %v716, 0.0
        %v781 = vmax.f32 %v717, 0.0
        %v782 = vmax.f32 %v718, 0.0
        %v783 = vmax.f32 %v719, 0.0
        %v784 = vmax.f32 %v720, 0.0
        %v785 = vmax.f32 %v721, 0.0
        %v786 = vmax.f32 %v722, 0.0
        %v787 = vmax.f32 %v723, 0.0
        %v788 = vmax.f32 %v724, 0.0
        %v789 = vmax.f32 %v725, 0.0
        %v790 = vmax.f32 %v726, 0.0
        %v791 = vmax.f32 %v727, 0.0
        %v792 = vmax.f32 %v728, 0.0
        %v793 = vmax.f32 %v729, 0.0
        %v794 = vmax.f32 %v730, 0.0
        %v795 = vmax.f32 %v731, 0.0
        %v796 = vmax.f32 %v732, 0.0
        %v797 = vmax.f32 %v733, 0.0
        %v798 = vmax.f32 %v734, 0.0
        %v799 = vmax.f32 %v735, 0.0
        %v800 = vmax.f32 %v736, 0.0
        %v801 = vmax.f32 %v737, 0.0
        %v802 = vmax.f32 %v738, 0.0
        %s803 = scalar_lea.vmem [#allocation2], 416
        %804 = vst.msk [vmem:[%s803 + $0x2] sm:$0xff] %vm249, %v739
        %805 = vst.msk [vmem:[%s803 + $0x12] sm:$0xff] %vm249, %v740
        %806 = vst.msk [vmem:[%s803 + $0x22] sm:$0xff] %vm249, %v741
        %807 = vst.msk [vmem:[%s803 + $0x32] sm:$0xff] %vm249, %v742
        %808 = vst.msk [vmem:[%s803 + $0x42] sm:$0xff] %vm249, %v743
        %809 = vst.msk [vmem:[%s803 + $0x52] sm:$0xff] %vm249, %v744
        %810 = vst.msk [vmem:[%s803 + $0x62] sm:$0xff] %vm249, %v745
        %811 = vst.msk [vmem:[%s803 + $0x72] sm:$0xff] %vm249, %v746
        %812 = vst.msk [vmem:[%s803 + $0xc2] sm:$0xff] %vm249, %v747
        %813 = vst.msk [vmem:[%s803 + $0xd2] sm:$0xff] %vm249, %v748
        %814 = vst.msk [vmem:[%s803 + $0xe2] sm:$0xff] %vm249, %v749
        %815 = vst.msk [vmem:[%s803 + $0xf2] sm:$0xff] %vm249, %v750
        %816 = vst.msk [vmem:[%s803 + $0x102] sm:$0xff] %vm249, %v751
        %817 = vst.msk [vmem:[%s803 + $0x112] sm:$0xff] %vm249, %v752
        %818 = vst.msk [vmem:[%s803 + $0x122] sm:$0xff] %vm249, %v753
        %819 = vst.msk [vmem:[%s803 + $0x132] sm:$0xff] %vm249, %v754
        %820 = vst.msk [vmem:[%s803 + $0x182] sm:$0xff] %vm249, %v755
        %821 = vst.msk [vmem:[%s803 + $0x192] sm:$0xff] %vm249, %v756
        %822 = vst.msk [vmem:[%s803 + $0x1a2] sm:$0xff] %vm249, %v757
        %823 = vst.msk [vmem:[%s803 + $0x1b2] sm:$0xff] %vm249, %v758
        %824 = vst.msk [vmem:[%s803 + $0x1c2] sm:$0xff] %vm249, %v759
        %825 = vst.msk [vmem:[%s803 + $0x1d2] sm:$0xff] %vm249, %v760
        %826 = vst.msk [vmem:[%s803 + $0x1e2] sm:$0xff] %vm249, %v761
        %827 = vst.msk [vmem:[%s803 + $0x1f2] sm:$0xff] %vm249, %v762
        %828 = vst.msk [vmem:[%s803 + $0x242] sm:$0xff] %vm249, %v763
        %829 = vst.msk [vmem:[%s803 + $0x252] sm:$0xff] %vm249, %v764
        %830 = vst.msk [vmem:[%s803 + $0x262] sm:$0xff] %vm249, %v765
        %831 = vst.msk [vmem:[%s803 + $0x272] sm:$0xff] %vm249, %v766
        %832 = vst.msk [vmem:[%s803 + $0x282] sm:$0xff] %vm249, %v767
        %833 = vst.msk [vmem:[%s803 + $0x292] sm:$0xff] %vm249, %v768
        %834 = vst.msk [vmem:[%s803 + $0x2a2] sm:$0xff] %vm249, %v769
        %835 = vst.msk [vmem:[%s803 + $0x2b2] sm:$0xff] %vm249, %v770
        %836 = vst.msk [vmem:[%s803 + $0x302] sm:$0xff] %vm249, %v771
        %837 = vst.msk [vmem:[%s803 + $0x312] sm:$0xff] %vm249, %v772
        %838 = vst.msk [vmem:[%s803 + $0x322] sm:$0xff] %vm249, %v773
        %839 = vst.msk [vmem:[%s803 + $0x332] sm:$0xff] %vm249, %v774
        %840 = vst.msk [vmem:[%s803 + $0x342] sm:$0xff] %vm249, %v775
        %841 = vst.msk [vmem:[%s803 + $0x352] sm:$0xff] %vm249, %v776
        %842 = vst.msk [vmem:[%s803 + $0x362] sm:$0xff] %vm249, %v777
        %843 = vst.msk [vmem:[%s803 + $0x372] sm:$0xff] %vm249, %v778
        %844 = vst.msk [vmem:[%s803 + $0x3c2] sm:$0xff] %vm249, %v779
        %845 = vst.msk [vmem:[%s803 + $0x3d2] sm:$0xff] %vm249, %v780
        %846 = vst.msk [vmem:[%s803 + $0x3e2] sm:$0xff] %vm249, %v781
        %847 = vst.msk [vmem:[%s803 + $0x3f2] sm:$0xff] %vm249, %v782
        %848 = vst.msk [vmem:[%s803 + $0x402] sm:$0xff] %vm249, %v783
        %849 = vst.msk [vmem:[%s803 + $0x412] sm:$0xff] %vm249, %v784
        %850 = vst.msk [vmem:[%s803 + $0x422] sm:$0xff] %vm249, %v785
        %851 = vst.msk [vmem:[%s803 + $0x432] sm:$0xff] %vm249, %v786
        %852 = vst.msk [vmem:[%s803 + $0x482] sm:$0xff] %vm249, %v787
        %853 = vst.msk [vmem:[%s803 + $0x492] sm:$0xff] %vm249, %v788
        %854 = vst.msk [vmem:[%s803 + $0x4a2] sm:$0xff] %vm249, %v789
        %855 = vst.msk [vmem:[%s803 + $0x4b2] sm:$0xff] %vm249, %v790
        %856 = vst.msk [vmem:[%s803 + $0x4c2] sm:$0xff] %vm249, %v791
        %857 = vst.msk [vmem:[%s803 + $0x4d2] sm:$0xff] %vm249, %v792
        %858 = vst.msk [vmem:[%s803 + $0x4e2] sm:$0xff] %vm249, %v793
        %859 = vst.msk [vmem:[%s803 + $0x4f2] sm:$0xff] %vm249, %v794
        %860 = vst.msk [vmem:[%s803 + $0x542] sm:$0xff] %vm249, %v795
        %861 = vst.msk [vmem:[%s803 + $0x552] sm:$0xff] %vm249, %v796
        %862 = vst.msk [vmem:[%s803 + $0x562] sm:$0xff] %vm249, %v797
        %863 = vst.msk [vmem:[%s803 + $0x572] sm:$0xff] %vm249, %v798
        %864 = vst.msk [vmem:[%s803 + $0x582] sm:$0xff] %vm249, %v799
        %865 = vst.msk [vmem:[%s803 + $0x592] sm:$0xff] %vm249, %v800
        %866 = vst.msk [vmem:[%s803 + $0x5a2] sm:$0xff] %vm249, %v801
        %867 = vst.msk [vmem:[%s803 + $0x5b2] sm:$0xff] %vm249, %v802
        %v868 = vld [vmem:[#allocation2] sm:$0xff]
        %v869 = vld [vmem:[#allocation2 + $0x8] sm:$0xf]
        %v870 = vld [vmem:[#allocation2 + $0x10] sm:$0xff]
        %v871 = vld [vmem:[#allocation2 + $0x18] sm:$0xf]
        %v872 = vld [vmem:[#allocation2 + $0x20] sm:$0xff]
        %v873 = vld [vmem:[#allocation2 + $0x28] sm:$0xf]
        %v874 = vld [vmem:[#allocation2 + $0x30] sm:$0xff]
        %v875 = vld [vmem:[#allocation2 + $0x38] sm:$0xf]
        %v876 = vld [vmem:[#allocation2 + $0x40] sm:$0xff]
        %v877 = vld [vmem:[#allocation2 + $0x48] sm:$0xf]
        %v878 = vld [vmem:[#allocation2 + $0x50] sm:$0xff]
        %v879 = vld [vmem:[#allocation2 + $0x58] sm:$0xf]
        %v880 = vld [vmem:[#allocation2 + $0x60] sm:$0xff]
        %v881 = vld [vmem:[#allocation2 + $0x68] sm:$0xf]
        %v882 = vld [vmem:[#allocation2 + $0x70] sm:$0xff]
        %v883 = vld [vmem:[#allocation2 + $0x78] sm:$0xf]
        %v884 = vld [vmem:[#allocation2 + $0x80] sm:$0xff]
        %v885 = vld [vmem:[#allocation2 + $0x88] sm:$0xf]
        %v886 = vld [vmem:[#allocation2 + $0x90] sm:$0xff]
        %v887 = vld [vmem:[#allocation2 + $0x98] sm:$0xf]
        %v888 = vld [vmem:[#allocation2 + $0xa0] sm:$0xff]
        %v889 = vld [vmem:[#allocation2 + $0xa8] sm:$0xf]
        %v890 = vld [vmem:[#allocation2 + $0xb0] sm:$0xff]
        %v891 = vld [vmem:[#allocation2 + $0xb8] sm:$0xf]
        %v892 = vld [vmem:[#allocation2 + $0xc0] sm:$0xff]
        %v893 = vld [vmem:[#allocation2 + $0xc8] sm:$0xf]
        %v894 = vld [vmem:[#allocation2 + $0xd0] sm:$0xff]
        %v895 = vld [vmem:[#allocation2 + $0xd8] sm:$0xf]
        %v896 = vld [vmem:[#allocation2 + $0xe0] sm:$0xff]
        %v897 = vld [vmem:[#allocation2 + $0xe8] sm:$0xf]
        %v898 = vld [vmem:[#allocation2 + $0xf0] sm:$0xff]
        %v899 = vld [vmem:[#allocation2 + $0xf8] sm:$0xf]
        %v900 = vld [vmem:[#allocation2 + $0x100] sm:$0xff]
        %v901 = vld [vmem:[#allocation2 + $0x108] sm:$0xf]
        %v902 = vld [vmem:[#allocation2 + $0x110] sm:$0xff]
        %v903 = vld [vmem:[#allocation2 + $0x118] sm:$0xf]
        %v904 = vld [vmem:[#allocation2 + $0x120] sm:$0xff]
        %v905 = vld [vmem:[#allocation2 + $0x128] sm:$0xf]
        %v906 = vld [vmem:[#allocation2 + $0x130] sm:$0xff]
        %v907 = vld [vmem:[#allocation2 + $0x138] sm:$0xf]
        %v908 = vld [vmem:[#allocation2 + $0x140] sm:$0xff]
        %v909 = vld [vmem:[#allocation2 + $0x148] sm:$0xf]
        %v910 = vld [vmem:[#allocation2 + $0x150] sm:$0xff]
        %v911 = vld [vmem:[#allocation2 + $0x158] sm:$0xf]
        %v912 = vld [vmem:[#allocation2 + $0x160] sm:$0xff]
        %v913 = vld [vmem:[#allocation2 + $0x168] sm:$0xf]
        %v914 = vld [vmem:[#allocation2 + $0x170] sm:$0xff]
        %v915 = vld [vmem:[#allocation2 + $0x178] sm:$0xf]
        %v916 = vld [vmem:[#allocation2 + $0x180] sm:$0xff]
        %v917 = vld [vmem:[#allocation2 + $0x188] sm:$0xf]
        %v918 = vld [vmem:[#allocation2 + $0x190] sm:$0xff]
        %v919 = vld [vmem:[#allocation2 + $0x198] sm:$0xf]
        %v920 = vld [vmem:[#allocation2 + $0x1a0] sm:$0xff]
        %v921 = vld [vmem:[#allocation2 + $0x1a8] sm:$0xf]
        %v922 = vld [vmem:[#allocation2 + $0x1b0] sm:$0xff]
        %v923 = vld [vmem:[#allocation2 + $0x1b8] sm:$0xf]
        %v924 = vld [vmem:[#allocation2 + $0x1c0] sm:$0xff]
        %v925 = vld [vmem:[#allocation2 + $0x1c8] sm:$0xf]
        %v926 = vld [vmem:[#allocation2 + $0x1d0] sm:$0xff]
        %v927 = vld [vmem:[#allocation2 + $0x1d8] sm:$0xf]
        %v928 = vld [vmem:[#allocation2 + $0x1e0] sm:$0xff]
        %v929 = vld [vmem:[#allocation2 + $0x1e8] sm:$0xf]
        %v930 = vld [vmem:[#allocation2 + $0x1f0] sm:$0xff]
        %v931 = vld [vmem:[#allocation2 + $0x1f8] sm:$0xf]
        %v932 = vld [vmem:[#allocation2 + $0x200] sm:$0xff]
        %v933 = vld [vmem:[#allocation2 + $0x208] sm:$0xf]
        %v934 = vld [vmem:[#allocation2 + $0x210] sm:$0xff]
        %v935 = vld [vmem:[#allocation2 + $0x218] sm:$0xf]
        %v936 = vld [vmem:[#allocation2 + $0x220] sm:$0xff]
        %v937 = vld [vmem:[#allocation2 + $0x228] sm:$0xf]
        %v938 = vld [vmem:[#allocation2 + $0x230] sm:$0xff]
        %v939 = vld [vmem:[#allocation2 + $0x238] sm:$0xf]
        %v940 = vld [vmem:[#allocation2 + $0x240] sm:$0xff]
        %v941 = vld [vmem:[#allocation2 + $0x248] sm:$0xf]
        %v942 = vld [vmem:[#allocation2 + $0x250] sm:$0xff]
        %v943 = vld [vmem:[#allocation2 + $0x258] sm:$0xf]
        %v944 = vld [vmem:[#allocation2 + $0x260] sm:$0xff]
        %v945 = vld [vmem:[#allocation2 + $0x268] sm:$0xf]
        %v946 = vld [vmem:[#allocation2 + $0x270] sm:$0xff]
        %v947 = vld [vmem:[#allocation2 + $0x278] sm:$0xf]
        %v948 = vld [vmem:[#allocation2 + $0x280] sm:$0xff]
        %v949 = vld [vmem:[#allocation2 + $0x288] sm:$0xf]
        %v950 = vld [vmem:[#allocation2 + $0x290] sm:$0xff]
        %v951 = vld [vmem:[#allocation2 + $0x298] sm:$0xf]
        %v952 = vld [vmem:[#allocation2 + $0x2a0] sm:$0xff]
        %v953 = vld [vmem:[#allocation2 + $0x2a8] sm:$0xf]
        %v954 = vld [vmem:[#allocation2 + $0x2b0] sm:$0xff]
        %v955 = vld [vmem:[#allocation2 + $0x2b8] sm:$0xf]
        %v956 = vld [vmem:[#allocation2 + $0x2c0] sm:$0xff]
        %v957 = vld [vmem:[#allocation2 + $0x2c8] sm:$0xf]
        %v958 = vld [vmem:[#allocation2 + $0x2d0] sm:$0xff]
        %v959 = vld [vmem:[#allocation2 + $0x2d8] sm:$0xf]
        %v960 = vld [vmem:[#allocation2 + $0x2e0] sm:$0xff]
        %v961 = vld [vmem:[#allocation2 + $0x2e8] sm:$0xf]
        %v962 = vld [vmem:[#allocation2 + $0x2f0] sm:$0xff]
        %v963 = vld [vmem:[#allocation2 + $0x2f8] sm:$0xf]
        %v964 = vld [vmem:[#allocation2 + $0x300] sm:$0xff]
        %v965 = vld [vmem:[#allocation2 + $0x308] sm:$0xf]
        %v966 = vld [vmem:[#allocation2 + $0x310] sm:$0xff]
        %v967 = vld [vmem:[#allocation2 + $0x318] sm:$0xf]
        %v968 = vld [vmem:[#allocation2 + $0x320] sm:$0xff]
        %v969 = vld [vmem:[#allocation2 + $0x328] sm:$0xf]
        %v970 = vld [vmem:[#allocation2 + $0x330] sm:$0xff]
        %v971 = vld [vmem:[#allocation2 + $0x338] sm:$0xf]
        %v972 = vld [vmem:[#allocation2 + $0x340] sm:$0xff]
        %v973 = vld [vmem:[#allocation2 + $0x348] sm:$0xf]
        %v974 = vld [vmem:[#allocation2 + $0x350] sm:$0xff]
        %v975 = vld [vmem:[#allocation2 + $0x358] sm:$0xf]
        %v976 = vld [vmem:[#allocation2 + $0x360] sm:$0xff]
        %v977 = vld [vmem:[#allocation2 + $0x368] sm:$0xf]
        %v978 = vld [vmem:[#allocation2 + $0x370] sm:$0xff]
        %v979 = vld [vmem:[#allocation2 + $0x378] sm:$0xf]
        %v980 = vld [vmem:[#allocation2 + $0x380] sm:$0xff]
        %v981 = vld [vmem:[#allocation2 + $0x388] sm:$0xf]
        %v982 = vld [vmem:[#allocation2 + $0x390] sm:$0xff]
        %v983 = vld [vmem:[#allocation2 + $0x398] sm:$0xf]
        %v984 = vld [vmem:[#allocation2 + $0x3a0] sm:$0xff]
        %v985 = vld [vmem:[#allocation2 + $0x3a8] sm:$0xf]
        %v986 = vld [vmem:[#allocation2 + $0x3b0] sm:$0xff]
        %v987 = vld [vmem:[#allocation2 + $0x3b8] sm:$0xf]
        %v988 = vld [vmem:[#allocation2 + $0x3c0] sm:$0xff]
        %v989 = vld [vmem:[#allocation2 + $0x3c8] sm:$0xf]
        %v990 = vld [vmem:[#allocation2 + $0x3d0] sm:$0xff]
        %v991 = vld [vmem:[#allocation2 + $0x3d8] sm:$0xf]
        %v992 = vld [vmem:[#allocation2 + $0x3e0] sm:$0xff]
        %v993 = vld [vmem:[#allocation2 + $0x3e8] sm:$0xf]
        %v994 = vld [vmem:[#allocation2 + $0x3f0] sm:$0xff]
        %v995 = vld [vmem:[#allocation2 + $0x3f8] sm:$0xf]
        %v996 = vld [vmem:[#allocation2 + $0x400] sm:$0xff]
        %v997 = vld [vmem:[#allocation2 + $0x408] sm:$0xf]
        %v998 = vld [vmem:[#allocation2 + $0x410] sm:$0xff]
        %v999 = vld [vmem:[#allocation2 + $0x418] sm:$0xf]
        %v1000 = vld [vmem:[#allocation2 + $0x420] sm:$0xff]
        %v1001 = vld [vmem:[#allocation2 + $0x428] sm:$0xf]
        %v1002 = vld [vmem:[#allocation2 + $0x430] sm:$0xff]
        %v1003 = vld [vmem:[#allocation2 + $0x438] sm:$0xf]
        %v1004 = vld [vmem:[#allocation2 + $0x440] sm:$0xff]
        %v1005 = vld [vmem:[#allocation2 + $0x448] sm:$0xf]
        %v1006 = vld [vmem:[#allocation2 + $0x450] sm:$0xff]
        %v1007 = vld [vmem:[#allocation2 + $0x458] sm:$0xf]
        %v1008 = vld [vmem:[#allocation2 + $0x460] sm:$0xff]
        %v1009 = vld [vmem:[#allocation2 + $0x468] sm:$0xf]
        %v1010 = vld [vmem:[#allocation2 + $0x470] sm:$0xff]
        %v1011 = vld [vmem:[#allocation2 + $0x478] sm:$0xf]
        %v1012 = vld [vmem:[#allocation2 + $0x480] sm:$0xff]
        %v1013 = vld [vmem:[#allocation2 + $0x488] sm:$0xf]
        %v1014 = vld [vmem:[#allocation2 + $0x490] sm:$0xff]
        %v1015 = vld [vmem:[#allocation2 + $0x498] sm:$0xf]
        %v1016 = vld [vmem:[#allocation2 + $0x4a0] sm:$0xff]
        %v1017 = vld [vmem:[#allocation2 + $0x4a8] sm:$0xf]
        %v1018 = vld [vmem:[#allocation2 + $0x4b0] sm:$0xff]
        %v1019 = vld [vmem:[#allocation2 + $0x4b8] sm:$0xf]
        %v1020 = vld [vmem:[#allocation2 + $0x4c0] sm:$0xff]
        %v1021 = vld [vmem:[#allocation2 + $0x4c8] sm:$0xf]
        %v1022 = vld [vmem:[#allocation2 + $0x4d0] sm:$0xff]
        %v1023 = vld [vmem:[#allocation2 + $0x4d8] sm:$0xf]
        %v1024 = vld [vmem:[#allocation2 + $0x4e0] sm:$0xff]
        %v1025 = vld [vmem:[#allocation2 + $0x4e8] sm:$0xf]
        %v1026 = vld [vmem:[#allocation2 + $0x4f0] sm:$0xff]
        %v1027 = vld [vmem:[#allocation2 + $0x4f8] sm:$0xf]
        %v1028 = vld [vmem:[#allocation2 + $0x500] sm:$0xff]
        %v1029 = vld [vmem:[#allocation2 + $0x508] sm:$0xf]
        %v1030 = vld [vmem:[#allocation2 + $0x510] sm:$0xff]
        %v1031 = vld [vmem:[#allocation2 + $0x518] sm:$0xf]
        %v1032 = vld [vmem:[#allocation2 + $0x520] sm:$0xff]
        %v1033 = vld [vmem:[#allocation2 + $0x528] sm:$0xf]
        %v1034 = vld [vmem:[#allocation2 + $0x530] sm:$0xff]
        %v1035 = vld [vmem:[#allocation2 + $0x538] sm:$0xf]
        %v1036 = vld [vmem:[#allocation2 + $0x540] sm:$0xff]
        %v1037 = vld [vmem:[#allocation2 + $0x548] sm:$0xf]
        %v1038 = vld [vmem:[#allocation2 + $0x550] sm:$0xff]
        %v1039 = vld [vmem:[#allocation2 + $0x558] sm:$0xf]
        %v1040 = vld [vmem:[#allocation2 + $0x560] sm:$0xff]
        %v1041 = vld [vmem:[#allocation2 + $0x568] sm:$0xf]
        %v1042 = vld [vmem:[#allocation2 + $0x570] sm:$0xff]
        %v1043 = vld [vmem:[#allocation2 + $0x578] sm:$0xf]
        %v1044 = vld [vmem:[#allocation2 + $0x580] sm:$0xff]
        %v1045 = vld [vmem:[#allocation2 + $0x588] sm:$0xf]
        %v1046 = vld [vmem:[#allocation2 + $0x590] sm:$0xff]
        %v1047 = vld [vmem:[#allocation2 + $0x598] sm:$0xf]
        %v1048 = vld [vmem:[#allocation2 + $0x5a0] sm:$0xff]
        %v1049 = vld [vmem:[#allocation2 + $0x5a8] sm:$0xf]
        %v1050 = vld [vmem:[#allocation2 + $0x5b0] sm:$0xff]
        %v1051 = vld [vmem:[#allocation2 + $0x5b8] sm:$0xf]
        %v1052 = vld [vmem:[#allocation2 + $0x5c0] sm:$0xff]
        %v1053 = vld [vmem:[#allocation2 + $0x5c8] sm:$0xf]
        %v1054 = vld [vmem:[#allocation2 + $0x5d0] sm:$0xff]
        %v1055 = vld [vmem:[#allocation2 + $0x5d8] sm:$0xf]
        %v1056 = vld [vmem:[#allocation2 + $0x5e0] sm:$0xff]
        %v1057 = vld [vmem:[#allocation2 + $0x5e8] sm:$0xf]
        %v1058 = vld [vmem:[#allocation2 + $0x5f0] sm:$0xff]
        %v1059 = vld [vmem:[#allocation2 + $0x5f8] sm:$0xf]
        %v1060 = vld [vmem:[#allocation2 + $0x600] sm:$0xff]
        %v1061 = vld [vmem:[#allocation2 + $0x608] sm:$0xf]
        %v1062 = vld [vmem:[#allocation2 + $0x610] sm:$0xff]
        %v1063 = vld [vmem:[#allocation2 + $0x618] sm:$0xf]
        %v1064 = vld [vmem:[#allocation2 + $0x620] sm:$0xff]
        %v1065 = vld [vmem:[#allocation2 + $0x628] sm:$0xf]
        %v1066 = vld [vmem:[#allocation2 + $0x630] sm:$0xff]
        %v1067 = vld [vmem:[#allocation2 + $0x638] sm:$0xf]
        %v1068 = vld [vmem:[#allocation2 + $0x640] sm:$0xff]
        %v1069 = vld [vmem:[#allocation2 + $0x648] sm:$0xf]
        %v1070 = vld [vmem:[#allocation2 + $0x650] sm:$0xff]
        %v1071 = vld [vmem:[#allocation2 + $0x658] sm:$0xf]
        %v1072 = vld [vmem:[#allocation2 + $0x660] sm:$0xff]
        %v1073 = vld [vmem:[#allocation2 + $0x668] sm:$0xf]
        %v1074 = vld [vmem:[#allocation2 + $0x670] sm:$0xff]
        %v1075 = vld [vmem:[#allocation2 + $0x678] sm:$0xf]
        %v1076 = vld [vmem:[#allocation2 + $0x680] sm:$0xff]
        %v1077 = vld [vmem:[#allocation2 + $0x688] sm:$0xf]
        %v1078 = vld [vmem:[#allocation2 + $0x690] sm:$0xff]
        %v1079 = vld [vmem:[#allocation2 + $0x698] sm:$0xf]
        %v1080 = vld [vmem:[#allocation2 + $0x6a0] sm:$0xff]
        %v1081 = vld [vmem:[#allocation2 + $0x6a8] sm:$0xf]
        %v1082 = vld [vmem:[#allocation2 + $0x6b0] sm:$0xff]
        %v1083 = vld [vmem:[#allocation2 + $0x6b8] sm:$0xf]
        %v1084 = vld [vmem:[#allocation2 + $0x6c0] sm:$0xff]
        %v1085 = vld [vmem:[#allocation2 + $0x6c8] sm:$0xf]
        %v1086 = vld [vmem:[#allocation2 + $0x6d0] sm:$0xff]
        %v1087 = vld [vmem:[#allocation2 + $0x6d8] sm:$0xf]
        %v1088 = vld [vmem:[#allocation2 + $0x6e0] sm:$0xff]
        %v1089 = vld [vmem:[#allocation2 + $0x6e8] sm:$0xf]
        %v1090 = vld [vmem:[#allocation2 + $0x6f0] sm:$0xff]
        %v1091 = vld [vmem:[#allocation2 + $0x6f8] sm:$0xf]
        %v1092 = vld [vmem:[#allocation2 + $0x700] sm:$0xff]
        %v1093 = vld [vmem:[#allocation2 + $0x708] sm:$0xf]
        %v1094 = vld [vmem:[#allocation2 + $0x710] sm:$0xff]
        %v1095 = vld [vmem:[#allocation2 + $0x718] sm:$0xf]
        %v1096 = vld [vmem:[#allocation2 + $0x720] sm:$0xff]
        %v1097 = vld [vmem:[#allocation2 + $0x728] sm:$0xf]
        %v1098 = vld [vmem:[#allocation2 + $0x730] sm:$0xff]
        %v1099 = vld [vmem:[#allocation2 + $0x738] sm:$0xf]
        %v1100 = vld [vmem:[#allocation2 + $0x740] sm:$0xff]
        %v1101 = vld [vmem:[#allocation2 + $0x748] sm:$0xf]
        %v1102 = vld [vmem:[#allocation2 + $0x750] sm:$0xff]
        %v1103 = vld [vmem:[#allocation2 + $0x758] sm:$0xf]
        %v1104 = vld [vmem:[#allocation2 + $0x760] sm:$0xff]
        %v1105 = vld [vmem:[#allocation2 + $0x768] sm:$0xf]
        %v1106 = vld [vmem:[#allocation2 + $0x770] sm:$0xff]
        %v1107 = vld [vmem:[#allocation2 + $0x778] sm:$0xf]
        %v1108 = vld [vmem:[#allocation2 + $0x780] sm:$0xff]
        %v1109 = vld [vmem:[#allocation2 + $0x788] sm:$0xf]
        %v1110 = vld [vmem:[#allocation2 + $0x790] sm:$0xff]
        %v1111 = vld [vmem:[#allocation2 + $0x798] sm:$0xf]
        %v1112 = vld [vmem:[#allocation2 + $0x7a0] sm:$0xff]
        %v1113 = vld [vmem:[#allocation2 + $0x7a8] sm:$0xf]
        %v1114 = vld [vmem:[#allocation2 + $0x7b0] sm:$0xff]
        %v1115 = vld [vmem:[#allocation2 + $0x7b8] sm:$0xf]
        %v1116 = vld [vmem:[#allocation2 + $0x7c0] sm:$0xff]
        %v1117 = vld [vmem:[#allocation2 + $0x7c8] sm:$0xf]
        %v1118 = vld [vmem:[#allocation2 + $0x7d0] sm:$0xff]
        %v1119 = vld [vmem:[#allocation2 + $0x7d8] sm:$0xf]
        %v1120 = vld [vmem:[#allocation2 + $0x7e0] sm:$0xff]
        %v1121 = vld [vmem:[#allocation2 + $0x7e8] sm:$0xf]
        %v1122 = vld [vmem:[#allocation2 + $0x7f0] sm:$0xff]
        %v1123 = vld [vmem:[#allocation2 + $0x7f8] sm:$0xf]
        %v1124 = vld [vmem:[#allocation2 + $0x800] sm:$0xff]
        %v1125 = vld [vmem:[#allocation2 + $0x808] sm:$0xf]
        %v1126 = vld [vmem:[#allocation2 + $0x810] sm:$0xff]
        %v1127 = vld [vmem:[#allocation2 + $0x818] sm:$0xf]
        %v1128 = vld [vmem:[#allocation2 + $0x820] sm:$0xff]
        %v1129 = vld [vmem:[#allocation2 + $0x828] sm:$0xf]
        %v1130 = vld [vmem:[#allocation2 + $0x830] sm:$0xff]
        %v1131 = vld [vmem:[#allocation2 + $0x838] sm:$0xf]
        %v1132 = vld [vmem:[#allocation2 + $0x840] sm:$0xff]
        %v1133 = vld [vmem:[#allocation2 + $0x848] sm:$0xf]
        %v1134 = vld [vmem:[#allocation2 + $0x850] sm:$0xff]
        %v1135 = vld [vmem:[#allocation2 + $0x858] sm:$0xf]
        %v1136 = vld [vmem:[#allocation2 + $0x860] sm:$0xff]
        %v1137 = vld [vmem:[#allocation2 + $0x868] sm:$0xf]
        %v1138 = vld [vmem:[#allocation2 + $0x870] sm:$0xff]
        %v1139 = vld [vmem:[#allocation2 + $0x878] sm:$0xf]
        %v1140 = vld [vmem:[#allocation2 + $0x880] sm:$0xff]
        %v1141 = vld [vmem:[#allocation2 + $0x888] sm:$0xf]
        %v1142 = vld [vmem:[#allocation2 + $0x890] sm:$0xff]
        %v1143 = vld [vmem:[#allocation2 + $0x898] sm:$0xf]
        %v1144 = vld [vmem:[#allocation2 + $0x8a0] sm:$0xff]
        %v1145 = vld [vmem:[#allocation2 + $0x8a8] sm:$0xf]
        %v1146 = vld [vmem:[#allocation2 + $0x8b0] sm:$0xff]
        %v1147 = vld [vmem:[#allocation2 + $0x8b8] sm:$0xf]
        %v1148 = vld [vmem:[#allocation2 + $0x8c0] sm:$0xff]
        %v1149 = vld [vmem:[#allocation2 + $0x8c8] sm:$0xf]
        %v1150 = vld [vmem:[#allocation2 + $0x8d0] sm:$0xff]
        %v1151 = vld [vmem:[#allocation2 + $0x8d8] sm:$0xf]
        %v1152 = vld [vmem:[#allocation2 + $0x8e0] sm:$0xff]
        %v1153 = vld [vmem:[#allocation2 + $0x8e8] sm:$0xf]
        %v1154 = vld [vmem:[#allocation2 + $0x8f0] sm:$0xff]
        %v1155 = vld [vmem:[#allocation2 + $0x8f8] sm:$0xf]
        %vm1284 = vcmask 1045504
        %v1285 = vrot.slane %v868, 2
        %v1286 = vrot.slane %v869, 2
        %v1287 = vsel %vm1284, %v1285, %v1286
        %v1288 = vrot.slane %v870, 2
        %v1289 = vrot.slane %v871, 2
        %v1290 = vsel %vm1284, %v1288, %v1289
        %v1291 = vrot.slane %v872, 2
        %v1292 = vrot.slane %v873, 2
        %v1293 = vsel %vm1284, %v1291, %v1292
        %v1294 = vrot.slane %v874, 2
        %v1295 = vrot.slane %v875, 2
        %v1296 = vsel %vm1284, %v1294, %v1295
        %v1297 = vrot.slane %v876, 2
        %v1298 = vrot.slane %v877, 2
        %v1299 = vsel %vm1284, %v1297, %v1298
        %v1300 = vrot.slane %v878, 2
        %v1301 = vrot.slane %v879, 2
        %v1302 = vsel %vm1284, %v1300, %v1301
        %v1303 = vrot.slane %v880, 2
        %v1304 = vrot.slane %v881, 2
        %v1305 = vsel %vm1284, %v1303, %v1304
        %v1306 = vrot.slane %v882, 2
        %v1307 = vrot.slane %v883, 2
        %v1308 = vsel %vm1284, %v1306, %v1307
        %v1309 = vrot.slane %v892, 2
        %v1310 = vrot.slane %v893, 2
        %v1311 = vsel %vm1284, %v1309, %v1310
        %v1312 = vrot.slane %v894, 2
        %v1313 = vrot.slane %v895, 2
        %v1314 = vsel %vm1284, %v1312, %v1313
        %v1315 = vrot.slane %v896, 2
        %v1316 = vrot.slane %v897, 2
        %v1317 = vsel %vm1284, %v1315, %v1316
        %v1318 = vrot.slane %v898, 2
        %v1319 = vrot.slane %v899, 2
        %v1320 = vsel %vm1284, %v1318, %v1319
        %v1321 = vrot.slane %v900, 2
        %v1322 = vrot.slane %v901, 2
        %v1323 = vsel %vm1284, %v1321, %v1322
        %v1324 = vrot.slane %v902, 2
        %v1325 = vrot.slane %v903, 2
        %v1326 = vsel %vm1284, %v1324, %v1325
        %v1327 = vrot.slane %v904, 2
        %v1328 = vrot.slane %v905, 2
        %v1329 = vsel %vm1284, %v1327, %v1328
        %v1330 = vrot.slane %v906, 2
        %v1331 = vrot.slane %v907, 2
        %v1332 = vsel %vm1284, %v1330, %v1331
        %v1333 = vrot.slane %v916, 2
        %v1334 = vrot.slane %v917, 2
        %v1335 = vsel %vm1284, %v1333, %v1334
        %v1336 = vrot.slane %v918, 2
        %v1337 = vrot.slane %v919, 2
        %v1338 = vsel %vm1284, %v1336, %v1337
        %v1339 = vrot.slane %v920, 2
        %v1340 = vrot.slane %v921, 2
        %v1341 = vsel %vm1284, %v1339, %v1340
        %v1342 = vrot.slane %v922, 2
        %v1343 = vrot.slane %v923, 2
        %v1344 = vsel %vm1284, %v1342, %v1343
        %v1345 = vrot.slane %v924, 2
        %v1346 = vrot.slane %v925, 2
        %v1347 = vsel %vm1284, %v1345, %v1346
        %v1348 = vrot.slane %v926, 2
        %v1349 = vrot.slane %v927, 2
        %v1350 = vsel %vm1284, %v1348, %v1349
        %v1351 = vrot.slane %v928, 2
        %v1352 = vrot.slane %v929, 2
        %v1353 = vsel %vm1284, %v1351, %v1352
        %v1354 = vrot.slane %v930, 2
        %v1355 = vrot.slane %v931, 2
        %v1356 = vsel %vm1284, %v1354, %v1355
        %v1357 = vrot.slane %v940, 2
        %v1358 = vrot.slane %v941, 2
        %v1359 = vsel %vm1284, %v1357, %v1358
        %v1360 = vrot.slane %v942, 2
        %v1361 = vrot.slane %v943, 2
        %v1362 = vsel %vm1284, %v1360, %v1361
        %v1363 = vrot.slane %v944, 2
        %v1364 = vrot.slane %v945, 2
        %v1365 = vsel %vm1284, %v1363, %v1364
        %v1366 = vrot.slane %v946, 2
        %v1367 = vrot.slane %v947, 2
        %v1368 = vsel %vm1284, %v1366, %v1367
        %v1369 = vrot.slane %v948, 2
        %v1370 = vrot.slane %v949, 2
        %v1371 = vsel %vm1284, %v1369, %v1370
        %v1372 = vrot.slane %v950, 2
        %v1373 = vrot.slane %v951, 2
        %v1374 = vsel %vm1284, %v1372, %v1373
        %v1375 = vrot.slane %v952, 2
        %v1376 = vrot.slane %v953, 2
        %v1377 = vsel %vm1284, %v1375, %v1376
        %v1378 = vrot.slane %v954, 2
        %v1379 = vrot.slane %v955, 2
        %v1380 = vsel %vm1284, %v1378, %v1379
        %v1381 = vrot.slane %v964, 2
        %v1382 = vrot.slane %v965, 2
        %v1383 = vsel %vm1284, %v1381, %v1382
        %v1384 = vrot.slane %v966, 2
        %v1385 = vrot.slane %v967, 2
        %v1386 = vsel %vm1284, %v1384, %v1385
        %v1387 = vrot.slane %v968, 2
        %v1388 = vrot.slane %v969, 2
        %v1389 = vsel %vm1284, %v1387, %v1388
        %v1390 = vrot.slane %v970, 2
        %v1391 = vrot.slane %v971, 2
        %v1392 = vsel %vm1284, %v1390, %v1391
        %v1393 = vrot.slane %v972, 2
        %v1394 = vrot.slane %v973, 2
        %v1395 = vsel %vm1284, %v1393, %v1394
        %v1396 = vrot.slane %v974, 2
        %v1397 = vrot.slane %v975, 2
        %v1398 = vsel %vm1284, %v1396, %v1397
        %v1399 = vrot.slane %v976, 2
        %v1400 = vrot.slane %v977, 2
        %v1401 = vsel %vm1284, %v1399, %v1400
        %v1402 = vrot.slane %v978, 2
        %v1403 = vrot.slane %v979, 2
        %v1404 = vsel %vm1284, %v1402, %v1403
        %v1405 = vrot.slane %v988, 2
        %v1406 = vrot.slane %v989, 2
        %v1407 = vsel %vm1284, %v1405, %v1406
        %v1408 = vrot.slane %v990, 2
        %v1409 = vrot.slane %v991, 2
        %v1410 = vsel %vm1284, %v1408, %v1409
        %v1411 = vrot.slane %v992, 2
        %v1412 = vrot.slane %v993, 2
        %v1413 = vsel %vm1284, %v1411, %v1412
        %v1414 = vrot.slane %v994, 2
        %v1415 = vrot.slane %v995, 2
        %v1416 = vsel %vm1284, %v1414, %v1415
        %v1417 = vrot.slane %v996, 2
        %v1418 = vrot.slane %v997, 2
        %v1419 = vsel %vm1284, %v1417, %v1418
        %v1420 = vrot.slane %v998, 2
        %v1421 = vrot.slane %v999, 2
        %v1422 = vsel %vm1284, %v1420, %v1421
        %v1423 = vrot.slane %v1000, 2
        %v1424 = vrot.slane %v1001, 2
        %v1425 = vsel %vm1284, %v1423, %v1424
        %v1426 = vrot.slane %v1002, 2
        %v1427 = vrot.slane %v1003, 2
        %v1428 = vsel %vm1284, %v1426, %v1427
        %v1429 = vrot.slane %v1012, 2
        %v1430 = vrot.slane %v1013, 2
        %v1431 = vsel %vm1284, %v1429, %v1430
        %v1432 = vrot.slane %v1014, 2
        %v1433 = vrot.slane %v1015, 2
        %v1434 = vsel %vm1284, %v1432, %v1433
        %v1435 = vrot.slane %v1016, 2
        %v1436 = vrot.slane %v1017, 2
        %v1437 = vsel %vm1284, %v1435, %v1436
        %v1438 = vrot.slane %v1018, 2
        %v1439 = vrot.slane %v1019, 2
        %v1440 = vsel %vm1284, %v1438, %v1439
        %v1441 = vrot.slane %v1020, 2
        %v1442 = vrot.slane %v1021, 2
        %v1443 = vsel %vm1284, %v1441, %v1442
        %v1444 = vrot.slane %v1022, 2
        %v1445 = vrot.slane %v1023, 2
        %v1446 = vsel %vm1284, %v1444, %v1445
        %v1447 = vrot.slane %v1024, 2
        %v1448 = vrot.slane %v1025, 2
        %v1449 = vsel %vm1284, %v1447, %v1448
        %v1450 = vrot.slane %v1026, 2
        %v1451 = vrot.slane %v1027, 2
        %v1452 = vsel %vm1284, %v1450, %v1451
        %v1453 = vrot.slane %v1036, 2
        %v1454 = vrot.slane %v1037, 2
        %v1455 = vsel %vm1284, %v1453, %v1454
        %v1456 = vrot.slane %v1038, 2
        %v1457 = vrot.slane %v1039, 2
        %v1458 = vsel %vm1284, %v1456, %v1457
        %v1459 = vrot.slane %v1040, 2
        %v1460 = vrot.slane %v1041, 2
        %v1461 = vsel %vm1284, %v1459, %v1460
        %v1462 = vrot.slane %v1042, 2
        %v1463 = vrot.slane %v1043, 2
        %v1464 = vsel %vm1284, %v1462, %v1463
        %v1465 = vrot.slane %v1044, 2
        %v1466 = vrot.slane %v1045, 2
        %v1467 = vsel %vm1284, %v1465, %v1466
        %v1468 = vrot.slane %v1046, 2
        %v1469 = vrot.slane %v1047, 2
        %v1470 = vsel %vm1284, %v1468, %v1469
        %v1471 = vrot.slane %v1048, 2
        %v1472 = vrot.slane %v1049, 2
        %v1473 = vsel %vm1284, %v1471, %v1472
        %v1474 = vrot.slane %v1050, 2
        %v1475 = vrot.slane %v1051, 2
        %v1476 = vsel %vm1284, %v1474, %v1475
        %1477 = vrot.lane.b32.xlu0 %v1287, 8
        %v1478 = vpop.permute.xlu0 %1477
        %1479 = vrot.lane.b32.xlu0 %v1290, 8
        %v1480 = vpop.permute.xlu0 %1479
        %1481 = vrot.lane.b32.xlu0 %v1293, 8
        %v1482 = vpop.permute.xlu0 %1481
        %1483 = vrot.lane.b32.xlu0 %v1296, 8
        %v1484 = vpop.permute.xlu0 %1483
        %1485 = vrot.lane.b32.xlu0 %v1299, 8
        %v1486 = vpop.permute.xlu0 %1485
        %1487 = vrot.lane.b32.xlu0 %v1302, 8
        %v1488 = vpop.permute.xlu0 %1487
        %1489 = vrot.lane.b32.xlu0 %v1305, 8
        %v1490 = vpop.permute.xlu0 %1489
        %1491 = vrot.lane.b32.xlu0 %v1308, 8
        %v1492 = vpop.permute.xlu0 %1491
        %1493 = vrot.lane.b32.xlu0 %v1311, 8
        %v1494 = vpop.permute.xlu0 %1493
        %1495 = vrot.lane.b32.xlu0 %v1314, 8
        %v1496 = vpop.permute.xlu0 %1495
        %1497 = vrot.lane.b32.xlu0 %v1317, 8
        %v1498 = vpop.permute.xlu0 %1497
        %1499 = vrot.lane.b32.xlu0 %v1320, 8
        %v1500 = vpop.permute.xlu0 %1499
        %1501 = vrot.lane.b32.xlu0 %v1323, 8
        %v1502 = vpop.permute.xlu0 %1501
        %1503 = vrot.lane.b32.xlu0 %v1326, 8
        %v1504 = vpop.permute.xlu0 %1503
        %1505 = vrot.lane.b32.xlu0 %v1329, 8
        %v1506 = vpop.permute.xlu0 %1505
        %1507 = vrot.lane.b32.xlu0 %v1332, 8
        %v1508 = vpop.permute.xlu0 %1507
        %1509 = vrot.lane.b32.xlu0 %v1335, 8
        %v1510 = vpop.permute.xlu0 %1509
        %1511 = vrot.lane.b32.xlu0 %v1338, 8
        %v1512 = vpop.permute.xlu0 %1511
        %1513 = vrot.lane.b32.xlu0 %v1341, 8
        %v1514 = vpop.permute.xlu0 %1513
        %1515 = vrot.lane.b32.xlu0 %v1344, 8
        %v1516 = vpop.permute.xlu0 %1515
        %1517 = vrot.lane.b32.xlu0 %v1347, 8
        %v1518 = vpop.permute.xlu0 %1517
        %1519 = vrot.lane.b32.xlu0 %v1350, 8
        %v1520 = vpop.permute.xlu0 %1519
        %1521 = vrot.lane.b32.xlu0 %v1353, 8
        %v1522 = vpop.permute.xlu0 %1521
        %1523 = vrot.lane.b32.xlu0 %v1356, 8
        %v1524 = vpop.permute.xlu0 %1523
        %1525 = vrot.lane.b32.xlu0 %v1359, 8
        %v1526 = vpop.permute.xlu0 %1525
        %1527 = vrot.lane.b32.xlu0 %v1362, 8
        %v1528 = vpop.permute.xlu0 %1527
        %1529 = vrot.lane.b32.xlu0 %v1365, 8
        %v1530 = vpop.permute.xlu0 %1529
        %1531 = vrot.lane.b32.xlu0 %v1368, 8
        %v1532 = vpop.permute.xlu0 %1531
        %1533 = vrot.lane.b32.xlu0 %v1371, 8
        %v1534 = vpop.permute.xlu0 %1533
        %1535 = vrot.lane.b32.xlu0 %v1374, 8
        %v1536 = vpop.permute.xlu0 %1535
        %1537 = vrot.lane.b32.xlu0 %v1377, 8
        %v1538 = vpop.permute.xlu0 %1537
        %1539 = vrot.lane.b32.xlu0 %v1380, 8
        %v1540 = vpop.permute.xlu0 %1539
        %1541 = vrot.lane.b32.xlu0 %v1383, 8
        %v1542 = vpop.permute.xlu0 %1541
        %1543 = vrot.lane.b32.xlu0 %v1386, 8
        %v1544 = vpop.permute.xlu0 %1543
        %1545 = vrot.lane.b32.xlu0 %v1389, 8
        %v1546 = vpop.permute.xlu0 %1545
        %1547 = vrot.lane.b32.xlu0 %v1392, 8
        %v1548 = vpop.permute.xlu0 %1547
        %1549 = vrot.lane.b32.xlu0 %v1395, 8
        %v1550 = vpop.permute.xlu0 %1549
        %1551 = vrot.lane.b32.xlu0 %v1398, 8
        %v1552 = vpop.permute.xlu0 %1551
        %1553 = vrot.lane.b32.xlu0 %v1401, 8
        %v1554 = vpop.permute.xlu0 %1553
        %1555 = vrot.lane.b32.xlu0 %v1404, 8
        %v1556 = vpop.permute.xlu0 %1555
        %1557 = vrot.lane.b32.xlu0 %v1407, 8
        %v1558 = vpop.permute.xlu0 %1557
        %1559 = vrot.lane.b32.xlu0 %v1410, 8
        %v1560 = vpop.permute.xlu0 %1559
        %1561 = vrot.lane.b32.xlu0 %v1413, 8
        %v1562 = vpop.permute.xlu0 %1561
        %1563 = vrot.lane.b32.xlu0 %v1416, 8
        %v1564 = vpop.permute.xlu0 %1563
        %1565 = vrot.lane.b32.xlu0 %v1419, 8
        %v1566 = vpop.permute.xlu0 %1565
        %1567 = vrot.lane.b32.xlu0 %v1422, 8
        %v1568 = vpop.permute.xlu0 %1567
        %1569 = vrot.lane.b32.xlu0 %v1425, 8
        %v1570 = vpop.permute.xlu0 %1569
        %1571 = vrot.lane.b32.xlu0 %v1428, 8
        %v1572 = vpop.permute.xlu0 %1571
        %1573 = vrot.lane.b32.xlu0 %v1431, 8
        %v1574 = vpop.permute.xlu0 %1573
        %1575 = vrot.lane.b32.xlu0 %v1434, 8
        %v1576 = vpop.permute.xlu0 %1575
        %1577 = vrot.lane.b32.xlu0 %v1437, 8
        %v1578 = vpop.permute.xlu0 %1577
        %1579 = vrot.lane.b32.xlu0 %v1440, 8
        %v1580 = vpop.permute.xlu0 %1579
        %1581 = vrot.lane.b32.xlu0 %v1443, 8
        %v1582 = vpop.permute.xlu0 %1581
        %1583 = vrot.lane.b32.xlu0 %v1446, 8
        %v1584 = vpop.permute.xlu0 %1583
        %1585 = vrot.lane.b32.xlu0 %v1449, 8
        %v1586 = vpop.permute.xlu0 %1585
        %1587 = vrot.lane.b32.xlu0 %v1452, 8
        %v1588 = vpop.permute.xlu0 %1587
        %1589 = vrot.lane.b32.xlu0 %v1455, 8
        %v1590 = vpop.permute.xlu0 %1589
        %1591 = vrot.lane.b32.xlu0 %v1458, 8
        %v1592 = vpop.permute.xlu0 %1591
        %1593 = vrot.lane.b32.xlu0 %v1461, 8
        %v1594 = vpop.permute.xlu0 %1593
        %1595 = vrot.lane.b32.xlu0 %v1464, 8
        %v1596 = vpop.permute.xlu0 %1595
        %1597 = vrot.lane.b32.xlu0 %v1467, 8
        %v1598 = vpop.permute.xlu0 %1597
        %1599 = vrot.lane.b32.xlu0 %v1470, 8
        %v1600 = vpop.permute.xlu0 %1599
        %1601 = vrot.lane.b32.xlu0 %v1473, 8
        %v1602 = vpop.permute.xlu0 %1601
        %1603 = vrot.lane.b32.xlu0 %v1476, 8
        %v1604 = vpop.permute.xlu0 %1603
        %vm1669 = vcmask 1043456
        %v1670 = vrot.slane %v868, 4
        %v1671 = vrot.slane %v869, 4
        %v1672 = vsel %vm1669, %v1670, %v1671
        %v1673 = vrot.slane %v870, 4
        %v1674 = vrot.slane %v871, 4
        %v1675 = vsel %vm1669, %v1673, %v1674
        %v1676 = vrot.slane %v872, 4
        %v1677 = vrot.slane %v873, 4
        %v1678 = vsel %vm1669, %v1676, %v1677
        %v1679 = vrot.slane %v874, 4
        %v1680 = vrot.slane %v875, 4
        %v1681 = vsel %vm1669, %v1679, %v1680
        %v1682 = vrot.slane %v876, 4
        %v1683 = vrot.slane %v877, 4
        %v1684 = vsel %vm1669, %v1682, %v1683
        %v1685 = vrot.slane %v878, 4
        %v1686 = vrot.slane %v879, 4
        %v1687 = vsel %vm1669, %v1685, %v1686
        %v1688 = vrot.slane %v880, 4
        %v1689 = vrot.slane %v881, 4
        %v1690 = vsel %vm1669, %v1688, %v1689
        %v1691 = vrot.slane %v882, 4
        %v1692 = vrot.slane %v883, 4
        %v1693 = vsel %vm1669, %v1691, %v1692
        %v1694 = vrot.slane %v892, 4
        %v1695 = vrot.slane %v893, 4
        %v1696 = vsel %vm1669, %v1694, %v1695
        %v1697 = vrot.slane %v894, 4
        %v1698 = vrot.slane %v895, 4
        %v1699 = vsel %vm1669, %v1697, %v1698
        %v1700 = vrot.slane %v896, 4
        %v1701 = vrot.slane %v897, 4
        %v1702 = vsel %vm1669, %v1700, %v1701
        %v1703 = vrot.slane %v898, 4
        %v1704 = vrot.slane %v899, 4
        %v1705 = vsel %vm1669, %v1703, %v1704
        %v1706 = vrot.slane %v900, 4
        %v1707 = vrot.slane %v901, 4
        %v1708 = vsel %vm1669, %v1706, %v1707
        %v1709 = vrot.slane %v902, 4
        %v1710 = vrot.slane %v903, 4
        %v1711 = vsel %vm1669, %v1709, %v1710
        %v1712 = vrot.slane %v904, 4
        %v1713 = vrot.slane %v905, 4
        %v1714 = vsel %vm1669, %v1712, %v1713
        %v1715 = vrot.slane %v906, 4
        %v1716 = vrot.slane %v907, 4
        %v1717 = vsel %vm1669, %v1715, %v1716
        %v1718 = vrot.slane %v916, 4
        %v1719 = vrot.slane %v917, 4
        %v1720 = vsel %vm1669, %v1718, %v1719
        %v1721 = vrot.slane %v918, 4
        %v1722 = vrot.slane %v919, 4
        %v1723 = vsel %vm1669, %v1721, %v1722
        %v1724 = vrot.slane %v920, 4
        %v1725 = vrot.slane %v921, 4
        %v1726 = vsel %vm1669, %v1724, %v1725
        %v1727 = vrot.slane %v922, 4
        %v1728 = vrot.slane %v923, 4
        %v1729 = vsel %vm1669, %v1727, %v1728
        %v1730 = vrot.slane %v924, 4
        %v1731 = vrot.slane %v925, 4
        %v1732 = vsel %vm1669, %v1730, %v1731
        %v1733 = vrot.slane %v926, 4
        %v1734 = vrot.slane %v927, 4
        %v1735 = vsel %vm1669, %v1733, %v1734
        %v1736 = vrot.slane %v928, 4
        %v1737 = vrot.slane %v929, 4
        %v1738 = vsel %vm1669, %v1736, %v1737
        %v1739 = vrot.slane %v930, 4
        %v1740 = vrot.slane %v931, 4
        %v1741 = vsel %vm1669, %v1739, %v1740
        %v1742 = vrot.slane %v940, 4
        %v1743 = vrot.slane %v941, 4
        %v1744 = vsel %vm1669, %v1742, %v1743
        %v1745 = vrot.slane %v942, 4
        %v1746 = vrot.slane %v943, 4
        %v1747 = vsel %vm1669, %v1745, %v1746
        %v1748 = vrot.slane %v944, 4
        %v1749 = vrot.slane %v945, 4
        %v1750 = vsel %vm1669, %v1748, %v1749
        %v1751 = vrot.slane %v946, 4
        %v1752 = vrot.slane %v947, 4
        %v1753 = vsel %vm1669, %v1751, %v1752
        %v1754 = vrot.slane %v948, 4
        %v1755 = vrot.slane %v949, 4
        %v1756 = vsel %vm1669, %v1754, %v1755
        %v1757 = vrot.slane %v950, 4
        %v1758 = vrot.slane %v951, 4
        %v1759 = vsel %vm1669, %v1757, %v1758
        %v1760 = vrot.slane %v952, 4
        %v1761 = vrot.slane %v953, 4
        %v1762 = vsel %vm1669, %v1760, %v1761
        %v1763 = vrot.slane %v954, 4
        %v1764 = vrot.slane %v955, 4
        %v1765 = vsel %vm1669, %v1763, %v1764
        %v1766 = vrot.slane %v964, 4
        %v1767 = vrot.slane %v965, 4
        %v1768 = vsel %vm1669, %v1766, %v1767
        %v1769 = vrot.slane %v966, 4
        %v1770 = vrot.slane %v967, 4
        %v1771 = vsel %vm1669, %v1769, %v1770
        %v1772 = vrot.slane %v968, 4
        %v1773 = vrot.slane %v969, 4
        %v1774 = vsel %vm1669, %v1772, %v1773
        %v1775 = vrot.slane %v970, 4
        %v1776 = vrot.slane %v971, 4
        %v1777 = vsel %vm1669, %v1775, %v1776
        %v1778 = vrot.slane %v972, 4
        %v1779 = vrot.slane %v973, 4
        %v1780 = vsel %vm1669, %v1778, %v1779
        %v1781 = vrot.slane %v974, 4
        %v1782 = vrot.slane %v975, 4
        %v1783 = vsel %vm1669, %v1781, %v1782
        %v1784 = vrot.slane %v976, 4
        %v1785 = vrot.slane %v977, 4
        %v1786 = vsel %vm1669, %v1784, %v1785
        %v1787 = vrot.slane %v978, 4
        %v1788 = vrot.slane %v979, 4
        %v1789 = vsel %vm1669, %v1787, %v1788
        %v1790 = vrot.slane %v988, 4
        %v1791 = vrot.slane %v989, 4
        %v1792 = vsel %vm1669, %v1790, %v1791
        %v1793 = vrot.slane %v990, 4
        %v1794 = vrot.slane %v991, 4
        %v1795 = vsel %vm1669, %v1793, %v1794
        %v1796 = vrot.slane %v992, 4
        %v1797 = vrot.slane %v993, 4
        %v1798 = vsel %vm1669, %v1796, %v1797
        %v1799 = vrot.slane %v994, 4
        %v1800 = vrot.slane %v995, 4
        %v1801 = vsel %vm1669, %v1799, %v1800
        %v1802 = vrot.slane %v996, 4
        %v1803 = vrot.slane %v997, 4
        %v1804 = vsel %vm1669, %v1802, %v1803
        %v1805 = vrot.slane %v998, 4
        %v1806 = vrot.slane %v999, 4
        %v1807 = vsel %vm1669, %v1805, %v1806
        %v1808 = vrot.slane %v1000, 4
        %v1809 = vrot.slane %v1001, 4
        %v1810 = vsel %vm1669, %v1808, %v1809
        %v1811 = vrot.slane %v1002, 4
        %v1812 = vrot.slane %v1003, 4
        %v1813 = vsel %vm1669, %v1811, %v1812
        %v1814 = vrot.slane %v1012, 4
        %v1815 = vrot.slane %v1013, 4
        %v1816 = vsel %vm1669, %v1814, %v1815
        %v1817 = vrot.slane %v1014, 4
        %v1818 = vrot.slane %v1015, 4
        %v1819 = vsel %vm1669, %v1817, %v1818
        %v1820 = vrot.slane %v1016, 4
        %v1821 = vrot.slane %v1017, 4
        %v1822 = vsel %vm1669, %v1820, %v1821
        %v1823 = vrot.slane %v1018, 4
        %v1824 = vrot.slane %v1019, 4
        %v1825 = vsel %vm1669, %v1823, %v1824
        %v1826 = vrot.slane %v1020, 4
        %v1827 = vrot.slane %v1021, 4
        %v1828 = vsel %vm1669, %v1826, %v1827
        %v1829 = vrot.slane %v1022, 4
        %v1830 = vrot.slane %v1023, 4
        %v1831 = vsel %vm1669, %v1829, %v1830
        %v1832 = vrot.slane %v1024, 4
        %v1833 = vrot.slane %v1025, 4
        %v1834 = vsel %vm1669, %v1832, %v1833
        %v1835 = vrot.slane %v1026, 4
        %v1836 = vrot.slane %v1027, 4
        %v1837 = vsel %vm1669, %v1835, %v1836
        %v1838 = vrot.slane %v1036, 4
        %v1839 = vrot.slane %v1037, 4
        %v1840 = vsel %vm1669, %v1838, %v1839
        %v1841 = vrot.slane %v1038, 4
        %v1842 = vrot.slane %v1039, 4
        %v1843 = vsel %vm1669, %v1841, %v1842
        %v1844 = vrot.slane %v1040, 4
        %v1845 = vrot.slane %v1041, 4
        %v1846 = vsel %vm1669, %v1844, %v1845
        %v1847 = vrot.slane %v1042, 4
        %v1848 = vrot.slane %v1043, 4
        %v1849 = vsel %vm1669, %v1847, %v1848
        %v1850 = vrot.slane %v1044, 4
        %v1851 = vrot.slane %v1045, 4
        %v1852 = vsel %vm1669, %v1850, %v1851
        %v1853 = vrot.slane %v1046, 4
        %v1854 = vrot.slane %v1047, 4
        %v1855 = vsel %vm1669, %v1853, %v1854
        %v1856 = vrot.slane %v1048, 4
        %v1857 = vrot.slane %v1049, 4
        %v1858 = vsel %vm1669, %v1856, %v1857
        %v1859 = vrot.slane %v1050, 4
        %v1860 = vrot.slane %v1051, 4
        %v1861 = vsel %vm1669, %v1859, %v1860
        %1862 = vrot.lane.b32.xlu0 %v1672, 16
        %v1863 = vpop.permute.xlu0 %1862
        %1864 = vrot.lane.b32.xlu0 %v1675, 16
        %v1865 = vpop.permute.xlu0 %1864
        %1866 = vrot.lane.b32.xlu0 %v1678, 16
        %v1867 = vpop.permute.xlu0 %1866
        %1868 = vrot.lane.b32.xlu0 %v1681, 16
        %v1869 = vpop.permute.xlu0 %1868
        %1870 = vrot.lane.b32.xlu0 %v1684, 16
        %v1871 = vpop.permute.xlu0 %1870
        %1872 = vrot.lane.b32.xlu0 %v1687, 16
        %v1873 = vpop.permute.xlu0 %1872
        %1874 = vrot.lane.b32.xlu0 %v1690, 16
        %v1875 = vpop.permute.xlu0 %1874
        %1876 = vrot.lane.b32.xlu0 %v1693, 16
        %v1877 = vpop.permute.xlu0 %1876
        %1878 = vrot.lane.b32.xlu0 %v1696, 16
        %v1879 = vpop.permute.xlu0 %1878
        %1880 = vrot.lane.b32.xlu0 %v1699, 16
        %v1881 = vpop.permute.xlu0 %1880
        %1882 = vrot.lane.b32.xlu0 %v1702, 16
        %v1883 = vpop.permute.xlu0 %1882
        %1884 = vrot.lane.b32.xlu0 %v1705, 16
        %v1885 = vpop.permute.xlu0 %1884
        %1886 = vrot.lane.b32.xlu0 %v1708, 16
        %v1887 = vpop.permute.xlu0 %1886
        %1888 = vrot.lane.b32.xlu0 %v1711, 16
        %v1889 = vpop.permute.xlu0 %1888
        %1890 = vrot.lane.b32.xlu0 %v1714, 16
        %v1891 = vpop.permute.xlu0 %1890
        %1892 = vrot.lane.b32.xlu0 %v1717, 16
        %v1893 = vpop.permute.xlu0 %1892
        %1894 = vrot.lane.b32.xlu0 %v1720, 16
        %v1895 = vpop.permute.xlu0 %1894
        %1896 = vrot.lane.b32.xlu0 %v1723, 16
        %v1897 = vpop.permute.xlu0 %1896
        %1898 = vrot.lane.b32.xlu0 %v1726, 16
        %v1899 = vpop.permute.xlu0 %1898
        %1900 = vrot.lane.b32.xlu0 %v1729, 16
        %v1901 = vpop.permute.xlu0 %1900
        %1902 = vrot.lane.b32.xlu0 %v1732, 16
        %v1903 = vpop.permute.xlu0 %1902
        %1904 = vrot.lane.b32.xlu0 %v1735, 16
        %v1905 = vpop.permute.xlu0 %1904
        %1906 = vrot.lane.b32.xlu0 %v1738, 16
        %v1907 = vpop.permute.xlu0 %1906
        %1908 = vrot.lane.b32.xlu0 %v1741, 16
        %v1909 = vpop.permute.xlu0 %1908
        %1910 = vrot.lane.b32.xlu0 %v1744, 16
        %v1911 = vpop.permute.xlu0 %1910
        %1912 = vrot.lane.b32.xlu0 %v1747, 16
        %v1913 = vpop.permute.xlu0 %1912
        %1914 = vrot.lane.b32.xlu0 %v1750, 16
        %v1915 = vpop.permute.xlu0 %1914
        %1916 = vrot.lane.b32.xlu0 %v1753, 16
        %v1917 = vpop.permute.xlu0 %1916
        %1918 = vrot.lane.b32.xlu0 %v1756, 16
        %v1919 = vpop.permute.xlu0 %1918
        %1920 = vrot.lane.b32.xlu0 %v1759, 16
        %v1921 = vpop.permute.xlu0 %1920
        %1922 = vrot.lane.b32.xlu0 %v1762, 16
        %v1923 = vpop.permute.xlu0 %1922
        %1924 = vrot.lane.b32.xlu0 %v1765, 16
        %v1925 = vpop.permute.xlu0 %1924
        %1926 = vrot.lane.b32.xlu0 %v1768, 16
        %v1927 = vpop.permute.xlu0 %1926
        %1928 = vrot.lane.b32.xlu0 %v1771, 16
        %v1929 = vpop.permute.xlu0 %1928
        %1930 = vrot.lane.b32.xlu0 %v1774, 16
        %v1931 = vpop.permute.xlu0 %1930
        %1932 = vrot.lane.b32.xlu0 %v1777, 16
        %v1933 = vpop.permute.xlu0 %1932
        %1934 = vrot.lane.b32.xlu0 %v1780, 16
        %v1935 = vpop.permute.xlu0 %1934
        %1936 = vrot.lane.b32.xlu0 %v1783, 16
        %v1937 = vpop.permute.xlu0 %1936
        %1938 = vrot.lane.b32.xlu0 %v1786, 16
        %v1939 = vpop.permute.xlu0 %1938
        %1940 = vrot.lane.b32.xlu0 %v1789, 16
        %v1941 = vpop.permute.xlu0 %1940
        %1942 = vrot.lane.b32.xlu0 %v1792, 16
        %v1943 = vpop.permute.xlu0 %1942
        %1944 = vrot.lane.b32.xlu0 %v1795, 16
        %v1945 = vpop.permute.xlu0 %1944
        %1946 = vrot.lane.b32.xlu0 %v1798, 16
        %v1947 = vpop.permute.xlu0 %1946
        %1948 = vrot.lane.b32.xlu0 %v1801, 16
        %v1949 = vpop.permute.xlu0 %1948
        %1950 = vrot.lane.b32.xlu0 %v1804, 16
        %v1951 = vpop.permute.xlu0 %1950
        %1952 = vrot.lane.b32.xlu0 %v1807, 16
        %v1953 = vpop.permute.xlu0 %1952
        %1954 = vrot.lane.b32.xlu0 %v1810, 16
        %v1955 = vpop.permute.xlu0 %1954
        %1956 = vrot.lane.b32.xlu0 %v1813, 16
        %v1957 = vpop.permute.xlu0 %1956
        %1958 = vrot.lane.b32.xlu0 %v1816, 16
        %v1959 = vpop.permute.xlu0 %1958
        %1960 = vrot.lane.b32.xlu0 %v1819, 16
        %v1961 = vpop.permute.xlu0 %1960
        %1962 = vrot.lane.b32.xlu0 %v1822, 16
        %v1963 = vpop.permute.xlu0 %1962
        %1964 = vrot.lane.b32.xlu0 %v1825, 16
        %v1965 = vpop.permute.xlu0 %1964
        %1966 = vrot.lane.b32.xlu0 %v1828, 16
        %v1967 = vpop.permute.xlu0 %1966
        %1968 = vrot.lane.b32.xlu0 %v1831, 16
        %v1969 = vpop.permute.xlu0 %1968
        %1970 = vrot.lane.b32.xlu0 %v1834, 16
        %v1971 = vpop.permute.xlu0 %1970
        %1972 = vrot.lane.b32.xlu0 %v1837, 16
        %v1973 = vpop.permute.xlu0 %1972
        %1974 = vrot.lane.b32.xlu0 %v1840, 16
        %v1975 = vpop.permute.xlu0 %1974
        %1976 = vrot.lane.b32.xlu0 %v1843, 16
        %v1977 = vpop.permute.xlu0 %1976
        %1978 = vrot.lane.b32.xlu0 %v1846, 16
        %v1979 = vpop.permute.xlu0 %1978
        %1980 = vrot.lane.b32.xlu0 %v1849, 16
        %v1981 = vpop.permute.xlu0 %1980
        %1982 = vrot.lane.b32.xlu0 %v1852, 16
        %v1983 = vpop.permute.xlu0 %1982
        %1984 = vrot.lane.b32.xlu0 %v1855, 16
        %v1985 = vpop.permute.xlu0 %1984
        %1986 = vrot.lane.b32.xlu0 %v1858, 16
        %v1987 = vpop.permute.xlu0 %1986
        %1988 = vrot.lane.b32.xlu0 %v1861, 16
        %v1989 = vpop.permute.xlu0 %1988
        %2070 = vrot.lane.b32.xlu0 %v872, 24
        %v2071 = vpop.permute.xlu0 %2070
        %2072 = vrot.lane.b32.xlu0 %v874, 24
        %v2073 = vpop.permute.xlu0 %2072
        %2074 = vrot.lane.b32.xlu0 %v876, 24
        %v2075 = vpop.permute.xlu0 %2074
        %2076 = vrot.lane.b32.xlu0 %v878, 24
        %v2077 = vpop.permute.xlu0 %2076
        %2078 = vrot.lane.b32.xlu0 %v880, 24
        %v2079 = vpop.permute.xlu0 %2078
        %2080 = vrot.lane.b32.xlu0 %v882, 24
        %v2081 = vpop.permute.xlu0 %2080
        %2082 = vrot.lane.b32.xlu0 %v884, 24
        %v2083 = vpop.permute.xlu0 %2082
        %2084 = vrot.lane.b32.xlu0 %v886, 24
        %v2085 = vpop.permute.xlu0 %2084
        %2086 = vrot.lane.b32.xlu0 %v896, 24
        %v2087 = vpop.permute.xlu0 %2086
        %2088 = vrot.lane.b32.xlu0 %v898, 24
        %v2089 = vpop.permute.xlu0 %2088
        %2090 = vrot.lane.b32.xlu0 %v900, 24
        %v2091 = vpop.permute.xlu0 %2090
        %2092 = vrot.lane.b32.xlu0 %v902, 24
        %v2093 = vpop.permute.xlu0 %2092
        %2094 = vrot.lane.b32.xlu0 %v904, 24
        %v2095 = vpop.permute.xlu0 %2094
        %2096 = vrot.lane.b32.xlu0 %v906, 24
        %v2097 = vpop.permute.xlu0 %2096
        %2098 = vrot.lane.b32.xlu0 %v908, 24
        %v2099 = vpop.permute.xlu0 %2098
        %2100 = vrot.lane.b32.xlu0 %v910, 24
        %v2101 = vpop.permute.xlu0 %2100
        %2102 = vrot.lane.b32.xlu0 %v920, 24
        %v2103 = vpop.permute.xlu0 %2102
        %2104 = vrot.lane.b32.xlu0 %v922, 24
        %v2105 = vpop.permute.xlu0 %2104
        %2106 = vrot.lane.b32.xlu0 %v924, 24
        %v2107 = vpop.permute.xlu0 %2106
        %2108 = vrot.lane.b32.xlu0 %v926, 24
        %v2109 = vpop.permute.xlu0 %2108
        %2110 = vrot.lane.b32.xlu0 %v928, 24
        %v2111 = vpop.permute.xlu0 %2110
        %2112 = vrot.lane.b32.xlu0 %v930, 24
        %v2113 = vpop.permute.xlu0 %2112
        %2114 = vrot.lane.b32.xlu0 %v932, 24
        %v2115 = vpop.permute.xlu0 %2114
        %2116 = vrot.lane.b32.xlu0 %v934, 24
        %v2117 = vpop.permute.xlu0 %2116
        %2118 = vrot.lane.b32.xlu0 %v944, 24
        %v2119 = vpop.permute.xlu0 %2118
        %2120 = vrot.lane.b32.xlu0 %v946, 24
        %v2121 = vpop.permute.xlu0 %2120
        %2122 = vrot.lane.b32.xlu0 %v948, 24
        %v2123 = vpop.permute.xlu0 %2122
        %2124 = vrot.lane.b32.xlu0 %v950, 24
        %v2125 = vpop.permute.xlu0 %2124
        %2126 = vrot.lane.b32.xlu0 %v952, 24
        %v2127 = vpop.permute.xlu0 %2126
        %2128 = vrot.lane.b32.xlu0 %v954, 24
        %v2129 = vpop.permute.xlu0 %2128
        %2130 = vrot.lane.b32.xlu0 %v956, 24
        %v2131 = vpop.permute.xlu0 %2130
        %2132 = vrot.lane.b32.xlu0 %v958, 24
        %v2133 = vpop.permute.xlu0 %2132
        %2134 = vrot.lane.b32.xlu0 %v968, 24
        %v2135 = vpop.permute.xlu0 %2134
        %2136 = vrot.lane.b32.xlu0 %v970, 24
        %v2137 = vpop.permute.xlu0 %2136
        %2138 = vrot.lane.b32.xlu0 %v972, 24
        %v2139 = vpop.permute.xlu0 %2138
        %2140 = vrot.lane.b32.xlu0 %v974, 24
        %v2141 = vpop.permute.xlu0 %2140
        %2142 = vrot.lane.b32.xlu0 %v976, 24
        %v2143 = vpop.permute.xlu0 %2142
        %2144 = vrot.lane.b32.xlu0 %v978, 24
        %v2145 = vpop.permute.xlu0 %2144
        %2146 = vrot.lane.b32.xlu0 %v980, 24
        %v2147 = vpop.permute.xlu0 %2146
        %2148 = vrot.lane.b32.xlu0 %v982, 24
        %v2149 = vpop.permute.xlu0 %2148
        %2150 = vrot.lane.b32.xlu0 %v992, 24
        %v2151 = vpop.permute.xlu0 %2150
        %2152 = vrot.lane.b32.xlu0 %v994, 24
        %v2153 = vpop.permute.xlu0 %2152
        %2154 = vrot.lane.b32.xlu0 %v996, 24
        %v2155 = vpop.permute.xlu0 %2154
        %2156 = vrot.lane.b32.xlu0 %v998, 24
        %v2157 = vpop.permute.xlu0 %2156
        %2158 = vrot.lane.b32.xlu0 %v1000, 24
        %v2159 = vpop.permute.xlu0 %2158
        %2160 = vrot.lane.b32.xlu0 %v1002, 24
        %v2161 = vpop.permute.xlu0 %2160
        %2162 = vrot.lane.b32.xlu0 %v1004, 24
        %v2163 = vpop.permute.xlu0 %2162
        %2164 = vrot.lane.b32.xlu0 %v1006, 24
        %v2165 = vpop.permute.xlu0 %2164
        %2166 = vrot.lane.b32.xlu0 %v1016, 24
        %v2167 = vpop.permute.xlu0 %2166
        %2168 = vrot.lane.b32.xlu0 %v1018, 24
        %v2169 = vpop.permute.xlu0 %2168
        %2170 = vrot.lane.b32.xlu0 %v1020, 24
        %v2171 = vpop.permute.xlu0 %2170
        %2172 = vrot.lane.b32.xlu0 %v1022, 24
        %v2173 = vpop.permute.xlu0 %2172
        %2174 = vrot.lane.b32.xlu0 %v1024, 24
        %v2175 = vpop.permute.xlu0 %2174
        %2176 = vrot.lane.b32.xlu0 %v1026, 24
        %v2177 = vpop.permute.xlu0 %2176
        %2178 = vrot.lane.b32.xlu0 %v1028, 24
        %v2179 = vpop.permute.xlu0 %2178
        %2180 = vrot.lane.b32.xlu0 %v1030, 24
        %v2181 = vpop.permute.xlu0 %2180
        %2182 = vrot.lane.b32.xlu0 %v1040, 24
        %v2183 = vpop.permute.xlu0 %2182
        %2184 = vrot.lane.b32.xlu0 %v1042, 24
        %v2185 = vpop.permute.xlu0 %2184
        %2186 = vrot.lane.b32.xlu0 %v1044, 24
        %v2187 = vpop.permute.xlu0 %2186
        %2188 = vrot.lane.b32.xlu0 %v1046, 24
        %v2189 = vpop.permute.xlu0 %2188
        %2190 = vrot.lane.b32.xlu0 %v1048, 24
        %v2191 = vpop.permute.xlu0 %2190
        %2192 = vrot.lane.b32.xlu0 %v1050, 24
        %v2193 = vpop.permute.xlu0 %2192
        %2194 = vrot.lane.b32.xlu0 %v1052, 24
        %v2195 = vpop.permute.xlu0 %2194
        %2196 = vrot.lane.b32.xlu0 %v1054, 24
        %v2197 = vpop.permute.xlu0 %2196
        %v2278 = vrot.slane %v884, 2
        %v2279 = vrot.slane %v885, 2
        %v2280 = vsel %vm1284, %v2278, %v2279
        %v2281 = vrot.slane %v886, 2
        %v2282 = vrot.slane %v887, 2
        %v2283 = vsel %vm1284, %v2281, %v2282
        %v2284 = vrot.slane %v908, 2
        %v2285 = vrot.slane %v909, 2
        %v2286 = vsel %vm1284, %v2284, %v2285
        %v2287 = vrot.slane %v910, 2
        %v2288 = vrot.slane %v911, 2
        %v2289 = vsel %vm1284, %v2287, %v2288
        %v2290 = vrot.slane %v932, 2
        %v2291 = vrot.slane %v933, 2
        %v2292 = vsel %vm1284, %v2290, %v2291
        %v2293 = vrot.slane %v934, 2
        %v2294 = vrot.slane %v935, 2
        %v2295 = vsel %vm1284, %v2293, %v2294
        %v2296 = vrot.slane %v956, 2
        %v2297 = vrot.slane %v957, 2
        %v2298 = vsel %vm1284, %v2296, %v2297
        %v2299 = vrot.slane %v958, 2
        %v2300 = vrot.slane %v959, 2
        %v2301 = vsel %vm1284, %v2299, %v2300
        %v2302 = vrot.slane %v980, 2
        %v2303 = vrot.slane %v981, 2
        %v2304 = vsel %vm1284, %v2302, %v2303
        %v2305 = vrot.slane %v982, 2
        %v2306 = vrot.slane %v983, 2
        %v2307 = vsel %vm1284, %v2305, %v2306
        %v2308 = vrot.slane %v1004, 2
        %v2309 = vrot.slane %v1005, 2
        %v2310 = vsel %vm1284, %v2308, %v2309
        %v2311 = vrot.slane %v1006, 2
        %v2312 = vrot.slane %v1007, 2
        %v2313 = vsel %vm1284, %v2311, %v2312
        %v2314 = vrot.slane %v1028, 2
        %v2315 = vrot.slane %v1029, 2
        %v2316 = vsel %vm1284, %v2314, %v2315
        %v2317 = vrot.slane %v1030, 2
        %v2318 = vrot.slane %v1031, 2
        %v2319 = vsel %vm1284, %v2317, %v2318
        %v2320 = vrot.slane %v1052, 2
        %v2321 = vrot.slane %v1053, 2
        %v2322 = vsel %vm1284, %v2320, %v2321
        %v2323 = vrot.slane %v1054, 2
        %v2324 = vrot.slane %v1055, 2
        %v2325 = vsel %vm1284, %v2323, %v2324
        %2326 = vrot.lane.b32.xlu0 %v1293, 32
        %v2327 = vpop.permute.xlu0 %2326
        %2328 = vrot.lane.b32.xlu0 %v1296, 32
        %v2329 = vpop.permute.xlu0 %2328
        %2330 = vrot.lane.b32.xlu0 %v1299, 32
        %v2331 = vpop.permute.xlu0 %2330
        %2332 = vrot.lane.b32.xlu0 %v1302, 32
        %v2333 = vpop.permute.xlu0 %2332
        %2334 = vrot.lane.b32.xlu0 %v1305, 32
        %v2335 = vpop.permute.xlu0 %2334
        %2336 = vrot.lane.b32.xlu0 %v1308, 32
        %v2337 = vpop.permute.xlu0 %2336
        %2338 = vrot.lane.b32.xlu0 %v2280, 32
        %v2339 = vpop.permute.xlu0 %2338
        %2340 = vrot.lane.b32.xlu0 %v2283, 32
        %v2341 = vpop.permute.xlu0 %2340
        %2342 = vrot.lane.b32.xlu0 %v1317, 32
        %v2343 = vpop.permute.xlu0 %2342
        %2344 = vrot.lane.b32.xlu0 %v1320, 32
        %v2345 = vpop.permute.xlu0 %2344
        %2346 = vrot.lane.b32.xlu0 %v1323, 32
        %v2347 = vpop.permute.xlu0 %2346
        %2348 = vrot.lane.b32.xlu0 %v1326, 32
        %v2349 = vpop.permute.xlu0 %2348
        %2350 = vrot.lane.b32.xlu0 %v1329, 32
        %v2351 = vpop.permute.xlu0 %2350
        %2352 = vrot.lane.b32.xlu0 %v1332, 32
        %v2353 = vpop.permute.xlu0 %2352
        %2354 = vrot.lane.b32.xlu0 %v2286, 32
        %v2355 = vpop.permute.xlu0 %2354
        %2356 = vrot.lane.b32.xlu0 %v2289, 32
        %v2357 = vpop.permute.xlu0 %2356
        %2358 = vrot.lane.b32.xlu0 %v1341, 32
        %v2359 = vpop.permute.xlu0 %2358
        %2360 = vrot.lane.b32.xlu0 %v1344, 32
        %v2361 = vpop.permute.xlu0 %2360
        %2362 = vrot.lane.b32.xlu0 %v1347, 32
        %v2363 = vpop.permute.xlu0 %2362
        %2364 = vrot.lane.b32.xlu0 %v1350, 32
        %v2365 = vpop.permute.xlu0 %2364
        %2366 = vrot.lane.b32.xlu0 %v1353, 32
        %v2367 = vpop.permute.xlu0 %2366
        %2368 = vrot.lane.b32.xlu0 %v1356, 32
        %v2369 = vpop.permute.xlu0 %2368
        %2370 = vrot.lane.b32.xlu0 %v2292, 32
        %v2371 = vpop.permute.xlu0 %2370
        %2372 = vrot.lane.b32.xlu0 %v2295, 32
        %v2373 = vpop.permute.xlu0 %2372
        %2374 = vrot.lane.b32.xlu0 %v1365, 32
        %v2375 = vpop.permute.xlu0 %2374
        %2376 = vrot.lane.b32.xlu0 %v1368, 32
        %v2377 = vpop.permute.xlu0 %2376
        %2378 = vrot.lane.b32.xlu0 %v1371, 32
        %v2379 = vpop.permute.xlu0 %2378
        %2380 = vrot.lane.b32.xlu0 %v1374, 32
        %v2381 = vpop.permute.xlu0 %2380
        %2382 = vrot.lane.b32.xlu0 %v1377, 32
        %v2383 = vpop.permute.xlu0 %2382
        %2384 = vrot.lane.b32.xlu0 %v1380, 32
        %v2385 = vpop.permute.xlu0 %2384
        %2386 = vrot.lane.b32.xlu0 %v2298, 32
        %v2387 = vpop.permute.xlu0 %2386
        %2388 = vrot.lane.b32.xlu0 %v2301, 32
        %v2389 = vpop.permute.xlu0 %2388
        %2390 = vrot.lane.b32.xlu0 %v1389, 32
        %v2391 = vpop.permute.xlu0 %2390
        %2392 = vrot.lane.b32.xlu0 %v1392, 32
        %v2393 = vpop.permute.xlu0 %2392
        %2394 = vrot.lane.b32.xlu0 %v1395, 32
        %v2395 = vpop.permute.xlu0 %2394
        %2396 = vrot.lane.b32.xlu0 %v1398, 32
        %v2397 = vpop.permute.xlu0 %2396
        %2398 = vrot.lane.b32.xlu0 %v1401, 32
        %v2399 = vpop.permute.xlu0 %2398
        %2400 = vrot.lane.b32.xlu0 %v1404, 32
        %v2401 = vpop.permute.xlu0 %2400
        %2402 = vrot.lane.b32.xlu0 %v2304, 32
        %v2403 = vpop.permute.xlu0 %2402
        %2404 = vrot.lane.b32.xlu0 %v2307, 32
        %v2405 = vpop.permute.xlu0 %2404
        %2406 = vrot.lane.b32.xlu0 %v1413, 32
        %v2407 = vpop.permute.xlu0 %2406
        %2408 = vrot.lane.b32.xlu0 %v1416, 32
        %v2409 = vpop.permute.xlu0 %2408
        %2410 = vrot.lane.b32.xlu0 %v1419, 32
        %v2411 = vpop.permute.xlu0 %2410
        %2412 = vrot.lane.b32.xlu0 %v1422, 32
        %v2413 = vpop.permute.xlu0 %2412
        %2414 = vrot.lane.b32.xlu0 %v1425, 32
        %v2415 = vpop.permute.xlu0 %2414
        %2416 = vrot.lane.b32.xlu0 %v1428, 32
        %v2417 = vpop.permute.xlu0 %2416
        %2418 = vrot.lane.b32.xlu0 %v2310, 32
        %v2419 = vpop.permute.xlu0 %2418
        %2420 = vrot.lane.b32.xlu0 %v2313, 32
        %v2421 = vpop.permute.xlu0 %2420
        %2422 = vrot.lane.b32.xlu0 %v1437, 32
        %v2423 = vpop.permute.xlu0 %2422
        %2424 = vrot.lane.b32.xlu0 %v1440, 32
        %v2425 = vpop.permute.xlu0 %2424
        %2426 = vrot.lane.b32.xlu0 %v1443, 32
        %v2427 = vpop.permute.xlu0 %2426
        %2428 = vrot.lane.b32.xlu0 %v1446, 32
        %v2429 = vpop.permute.xlu0 %2428
        %2430 = vrot.lane.b32.xlu0 %v1449, 32
        %v2431 = vpop.permute.xlu0 %2430
        %2432 = vrot.lane.b32.xlu0 %v1452, 32
        %v2433 = vpop.permute.xlu0 %2432
        %2434 = vrot.lane.b32.xlu0 %v2316, 32
        %v2435 = vpop.permute.xlu0 %2434
        %2436 = vrot.lane.b32.xlu0 %v2319, 32
        %v2437 = vpop.permute.xlu0 %2436
        %2438 = vrot.lane.b32.xlu0 %v1461, 32
        %v2439 = vpop.permute.xlu0 %2438
        %2440 = vrot.lane.b32.xlu0 %v1464, 32
        %v2441 = vpop.permute.xlu0 %2440
        %2442 = vrot.lane.b32.xlu0 %v1467, 32
        %v2443 = vpop.permute.xlu0 %2442
        %2444 = vrot.lane.b32.xlu0 %v1470, 32
        %v2445 = vpop.permute.xlu0 %2444
        %2446 = vrot.lane.b32.xlu0 %v1473, 32
        %v2447 = vpop.permute.xlu0 %2446
        %2448 = vrot.lane.b32.xlu0 %v1476, 32
        %v2449 = vpop.permute.xlu0 %2448
        %2450 = vrot.lane.b32.xlu0 %v2322, 32
        %v2451 = vpop.permute.xlu0 %2450
        %2452 = vrot.lane.b32.xlu0 %v2325, 32
        %v2453 = vpop.permute.xlu0 %2452
        %v2518 = vrot.slane %v884, 4
        %v2519 = vrot.slane %v885, 4
        %v2520 = vsel %vm1669, %v2518, %v2519
        %v2521 = vrot.slane %v886, 4
        %v2522 = vrot.slane %v887, 4
        %v2523 = vsel %vm1669, %v2521, %v2522
        %v2524 = vrot.slane %v908, 4
        %v2525 = vrot.slane %v909, 4
        %v2526 = vsel %vm1669, %v2524, %v2525
        %v2527 = vrot.slane %v910, 4
        %v2528 = vrot.slane %v911, 4
        %v2529 = vsel %vm1669, %v2527, %v2528
        %v2530 = vrot.slane %v932, 4
        %v2531 = vrot.slane %v933, 4
        %v2532 = vsel %vm1669, %v2530, %v2531
        %v2533 = vrot.slane %v934, 4
        %v2534 = vrot.slane %v935, 4
        %v2535 = vsel %vm1669, %v2533, %v2534
        %v2536 = vrot.slane %v956, 4
        %v2537 = vrot.slane %v957, 4
        %v2538 = vsel %vm1669, %v2536, %v2537
        %v2539 = vrot.slane %v958, 4
        %v2540 = vrot.slane %v959, 4
        %v2541 = vsel %vm1669, %v2539, %v2540
        %v2542 = vrot.slane %v980, 4
        %v2543 = vrot.slane %v981, 4
        %v2544 = vsel %vm1669, %v2542, %v2543
        %v2545 = vrot.slane %v982, 4
        %v2546 = vrot.slane %v983, 4
        %v2547 = vsel %vm1669, %v2545, %v2546
        %v2548 = vrot.slane %v1004, 4
        %v2549 = vrot.slane %v1005, 4
        %v2550 = vsel %vm1669, %v2548, %v2549
        %v2551 = vrot.slane %v1006, 4
        %v2552 = vrot.slane %v1007, 4
        %v2553 = vsel %vm1669, %v2551, %v2552
        %v2554 = vrot.slane %v1028, 4
        %v2555 = vrot.slane %v1029, 4
        %v2556 = vsel %vm1669, %v2554, %v2555
        %v2557 = vrot.slane %v1030, 4
        %v2558 = vrot.slane %v1031, 4
        %v2559 = vsel %vm1669, %v2557, %v2558
        %v2560 = vrot.slane %v1052, 4
        %v2561 = vrot.slane %v1053, 4
        %v2562 = vsel %vm1669, %v2560, %v2561
        %v2563 = vrot.slane %v1054, 4
        %v2564 = vrot.slane %v1055, 4
        %v2565 = vsel %vm1669, %v2563, %v2564
        %2566 = vrot.lane.b32.xlu0 %v1678, 40
        %v2567 = vpop.permute.xlu0 %2566
        %2568 = vrot.lane.b32.xlu0 %v1681, 40
        %v2569 = vpop.permute.xlu0 %2568
        %2570 = vrot.lane.b32.xlu0 %v1684, 40
        %v2571 = vpop.permute.xlu0 %2570
        %2572 = vrot.lane.b32.xlu0 %v1687, 40
        %v2573 = vpop.permute.xlu0 %2572
        %2574 = vrot.lane.b32.xlu0 %v1690, 40
        %v2575 = vpop.permute.xlu0 %2574
        %2576 = vrot.lane.b32.xlu0 %v1693, 40
        %v2577 = vpop.permute.xlu0 %2576
        %2578 = vrot.lane.b32.xlu0 %v2520, 40
        %v2579 = vpop.permute.xlu0 %2578
        %2580 = vrot.lane.b32.xlu0 %v2523, 40
        %v2581 = vpop.permute.xlu0 %2580
        %2582 = vrot.lane.b32.xlu0 %v1702, 40
        %v2583 = vpop.permute.xlu0 %2582
        %2584 = vrot.lane.b32.xlu0 %v1705, 40
        %v2585 = vpop.permute.xlu0 %2584
        %2586 = vrot.lane.b32.xlu0 %v1708, 40
        %v2587 = vpop.permute.xlu0 %2586
        %2588 = vrot.lane.b32.xlu0 %v1711, 40
        %v2589 = vpop.permute.xlu0 %2588
        %2590 = vrot.lane.b32.xlu0 %v1714, 40
        %v2591 = vpop.permute.xlu0 %2590
        %2592 = vrot.lane.b32.xlu0 %v1717, 40
        %v2593 = vpop.permute.xlu0 %2592
        %2594 = vrot.lane.b32.xlu0 %v2526, 40
        %v2595 = vpop.permute.xlu0 %2594
        %2596 = vrot.lane.b32.xlu0 %v2529, 40
        %v2597 = vpop.permute.xlu0 %2596
        %2598 = vrot.lane.b32.xlu0 %v1726, 40
        %v2599 = vpop.permute.xlu0 %2598
        %2600 = vrot.lane.b32.xlu0 %v1729, 40
        %v2601 = vpop.permute.xlu0 %2600
        %2602 = vrot.lane.b32.xlu0 %v1732, 40
        %v2603 = vpop.permute.xlu0 %2602
        %2604 = vrot.lane.b32.xlu0 %v1735, 40
        %v2605 = vpop.permute.xlu0 %2604
        %2606 = vrot.lane.b32.xlu0 %v1738, 40
        %v2607 = vpop.permute.xlu0 %2606
        %2608 = vrot.lane.b32.xlu0 %v1741, 40
        %v2609 = vpop.permute.xlu0 %2608
        %2610 = vrot.lane.b32.xlu0 %v2532, 40
        %v2611 = vpop.permute.xlu0 %2610
        %2612 = vrot.lane.b32.xlu0 %v2535, 40
        %v2613 = vpop.permute.xlu0 %2612
        %2614 = vrot.lane.b32.xlu0 %v1750, 40
        %v2615 = vpop.permute.xlu0 %2614
        %2616 = vrot.lane.b32.xlu0 %v1753, 40
        %v2617 = vpop.permute.xlu0 %2616
        %2618 = vrot.lane.b32.xlu0 %v1756, 40
        %v2619 = vpop.permute.xlu0 %2618
        %2620 = vrot.lane.b32.xlu0 %v1759, 40
        %v2621 = vpop.permute.xlu0 %2620
        %2622 = vrot.lane.b32.xlu0 %v1762, 40
        %v2623 = vpop.permute.xlu0 %2622
        %2624 = vrot.lane.b32.xlu0 %v1765, 40
        %v2625 = vpop.permute.xlu0 %2624
        %2626 = vrot.lane.b32.xlu0 %v2538, 40
        %v2627 = vpop.permute.xlu0 %2626
        %2628 = vrot.lane.b32.xlu0 %v2541, 40
        %v2629 = vpop.permute.xlu0 %2628
        %2630 = vrot.lane.b32.xlu0 %v1774, 40
        %v2631 = vpop.permute.xlu0 %2630
        %2632 = vrot.lane.b32.xlu0 %v1777, 40
        %v2633 = vpop.permute.xlu0 %2632
        %2634 = vrot.lane.b32.xlu0 %v1780, 40
        %v2635 = vpop.permute.xlu0 %2634
        %2636 = vrot.lane.b32.xlu0 %v1783, 40
        %v2637 = vpop.permute.xlu0 %2636
        %2638 = vrot.lane.b32.xlu0 %v1786, 40
        %v2639 = vpop.permute.xlu0 %2638
        %2640 = vrot.lane.b32.xlu0 %v1789, 40
        %v2641 = vpop.permute.xlu0 %2640
        %2642 = vrot.lane.b32.xlu0 %v2544, 40
        %v2643 = vpop.permute.xlu0 %2642
        %2644 = vrot.lane.b32.xlu0 %v2547, 40
        %v2645 = vpop.permute.xlu0 %2644
        %2646 = vrot.lane.b32.xlu0 %v1798, 40
        %v2647 = vpop.permute.xlu0 %2646
        %2648 = vrot.lane.b32.xlu0 %v1801, 40
        %v2649 = vpop.permute.xlu0 %2648
        %2650 = vrot.lane.b32.xlu0 %v1804, 40
        %v2651 = vpop.permute.xlu0 %2650
        %2652 = vrot.lane.b32.xlu0 %v1807, 40
        %v2653 = vpop.permute.xlu0 %2652
        %2654 = vrot.lane.b32.xlu0 %v1810, 40
        %v2655 = vpop.permute.xlu0 %2654
        %2656 = vrot.lane.b32.xlu0 %v1813, 40
        %v2657 = vpop.permute.xlu0 %2656
        %2658 = vrot.lane.b32.xlu0 %v2550, 40
        %v2659 = vpop.permute.xlu0 %2658
        %2660 = vrot.lane.b32.xlu0 %v2553, 40
        %v2661 = vpop.permute.xlu0 %2660
        %2662 = vrot.lane.b32.xlu0 %v1822, 40
        %v2663 = vpop.permute.xlu0 %2662
        %2664 = vrot.lane.b32.xlu0 %v1825, 40
        %v2665 = vpop.permute.xlu0 %2664
        %2666 = vrot.lane.b32.xlu0 %v1828, 40
        %v2667 = vpop.permute.xlu0 %2666
        %2668 = vrot.lane.b32.xlu0 %v1831, 40
        %v2669 = vpop.permute.xlu0 %2668
        %2670 = vrot.lane.b32.xlu0 %v1834, 40
        %v2671 = vpop.permute.xlu0 %2670
        %2672 = vrot.lane.b32.xlu0 %v1837, 40
        %v2673 = vpop.permute.xlu0 %2672
        %2674 = vrot.lane.b32.xlu0 %v2556, 40
        %v2675 = vpop.permute.xlu0 %2674
        %2676 = vrot.lane.b32.xlu0 %v2559, 40
        %v2677 = vpop.permute.xlu0 %2676
        %2678 = vrot.lane.b32.xlu0 %v1846, 40
        %v2679 = vpop.permute.xlu0 %2678
        %2680 = vrot.lane.b32.xlu0 %v1849, 40
        %v2681 = vpop.permute.xlu0 %2680
        %2682 = vrot.lane.b32.xlu0 %v1852, 40
        %v2683 = vpop.permute.xlu0 %2682
        %2684 = vrot.lane.b32.xlu0 %v1855, 40
        %v2685 = vpop.permute.xlu0 %2684
        %2686 = vrot.lane.b32.xlu0 %v1858, 40
        %v2687 = vpop.permute.xlu0 %2686
        %2688 = vrot.lane.b32.xlu0 %v1861, 40
        %v2689 = vpop.permute.xlu0 %2688
        %2690 = vrot.lane.b32.xlu0 %v2562, 40
        %v2691 = vpop.permute.xlu0 %2690
        %2692 = vrot.lane.b32.xlu0 %v2565, 40
        %v2693 = vpop.permute.xlu0 %2692
        %2774 = vrot.lane.b32.xlu0 %v876, 48
        %v2775 = vpop.permute.xlu0 %2774
        %2776 = vrot.lane.b32.xlu0 %v878, 48
        %v2777 = vpop.permute.xlu0 %2776
        %2778 = vrot.lane.b32.xlu0 %v880, 48
        %v2779 = vpop.permute.xlu0 %2778
        %2780 = vrot.lane.b32.xlu0 %v882, 48
        %v2781 = vpop.permute.xlu0 %2780
        %2782 = vrot.lane.b32.xlu0 %v884, 48
        %v2783 = vpop.permute.xlu0 %2782
        %2784 = vrot.lane.b32.xlu0 %v886, 48
        %v2785 = vpop.permute.xlu0 %2784
        %2786 = vrot.lane.b32.xlu0 %v888, 48
        %v2787 = vpop.permute.xlu0 %2786
        %2788 = vrot.lane.b32.xlu0 %v890, 48
        %v2789 = vpop.permute.xlu0 %2788
        %2790 = vrot.lane.b32.xlu0 %v900, 48
        %v2791 = vpop.permute.xlu0 %2790
        %2792 = vrot.lane.b32.xlu0 %v902, 48
        %v2793 = vpop.permute.xlu0 %2792
        %2794 = vrot.lane.b32.xlu0 %v904, 48
        %v2795 = vpop.permute.xlu0 %2794
        %2796 = vrot.lane.b32.xlu0 %v906, 48
        %v2797 = vpop.permute.xlu0 %2796
        %2798 = vrot.lane.b32.xlu0 %v908, 48
        %v2799 = vpop.permute.xlu0 %2798
        %2800 = vrot.lane.b32.xlu0 %v910, 48
        %v2801 = vpop.permute.xlu0 %2800
        %2802 = vrot.lane.b32.xlu0 %v912, 48
        %v2803 = vpop.permute.xlu0 %2802
        %2804 = vrot.lane.b32.xlu0 %v914, 48
        %v2805 = vpop.permute.xlu0 %2804
        %2806 = vrot.lane.b32.xlu0 %v924, 48
        %v2807 = vpop.permute.xlu0 %2806
        %2808 = vrot.lane.b32.xlu0 %v926, 48
        %v2809 = vpop.permute.xlu0 %2808
        %2810 = vrot.lane.b32.xlu0 %v928, 48
        %v2811 = vpop.permute.xlu0 %2810
        %2812 = vrot.lane.b32.xlu0 %v930, 48
        %v2813 = vpop.permute.xlu0 %2812
        %2814 = vrot.lane.b32.xlu0 %v932, 48
        %v2815 = vpop.permute.xlu0 %2814
        %2816 = vrot.lane.b32.xlu0 %v934, 48
        %v2817 = vpop.permute.xlu0 %2816
        %2818 = vrot.lane.b32.xlu0 %v936, 48
        %v2819 = vpop.permute.xlu0 %2818
        %2820 = vrot.lane.b32.xlu0 %v938, 48
        %v2821 = vpop.permute.xlu0 %2820
        %2822 = vrot.lane.b32.xlu0 %v948, 48
        %v2823 = vpop.permute.xlu0 %2822
        %2824 = vrot.lane.b32.xlu0 %v950, 48
        %v2825 = vpop.permute.xlu0 %2824
        %2826 = vrot.lane.b32.xlu0 %v952, 48
        %v2827 = vpop.permute.xlu0 %2826
        %2828 = vrot.lane.b32.xlu0 %v954, 48
        %v2829 = vpop.permute.xlu0 %2828
        %2830 = vrot.lane.b32.xlu0 %v956, 48
        %v2831 = vpop.permute.xlu0 %2830
        %2832 = vrot.lane.b32.xlu0 %v958, 48
        %v2833 = vpop.permute.xlu0 %2832
        %2834 = vrot.lane.b32.xlu0 %v960, 48
        %v2835 = vpop.permute.xlu0 %2834
        %2836 = vrot.lane.b32.xlu0 %v962, 48
        %v2837 = vpop.permute.xlu0 %2836
        %2838 = vrot.lane.b32.xlu0 %v972, 48
        %v2839 = vpop.permute.xlu0 %2838
        %2840 = vrot.lane.b32.xlu0 %v974, 48
        %v2841 = vpop.permute.xlu0 %2840
        %2842 = vrot.lane.b32.xlu0 %v976, 48
        %v2843 = vpop.permute.xlu0 %2842
        %2844 = vrot.lane.b32.xlu0 %v978, 48
        %v2845 = vpop.permute.xlu0 %2844
        %2846 = vrot.lane.b32.xlu0 %v980, 48
        %v2847 = vpop.permute.xlu0 %2846
        %2848 = vrot.lane.b32.xlu0 %v982, 48
        %v2849 = vpop.permute.xlu0 %2848
        %2850 = vrot.lane.b32.xlu0 %v984, 48
        %v2851 = vpop.permute.xlu0 %2850
        %2852 = vrot.lane.b32.xlu0 %v986, 48
        %v2853 = vpop.permute.xlu0 %2852
        %2854 = vrot.lane.b32.xlu0 %v996, 48
        %v2855 = vpop.permute.xlu0 %2854
        %2856 = vrot.lane.b32.xlu0 %v998, 48
        %v2857 = vpop.permute.xlu0 %2856
        %2858 = vrot.lane.b32.xlu0 %v1000, 48
        %v2859 = vpop.permute.xlu0 %2858
        %2860 = vrot.lane.b32.xlu0 %v1002, 48
        %v2861 = vpop.permute.xlu0 %2860
        %2862 = vrot.lane.b32.xlu0 %v1004, 48
        %v2863 = vpop.permute.xlu0 %2862
        %2864 = vrot.lane.b32.xlu0 %v1006, 48
        %v2865 = vpop.permute.xlu0 %2864
        %2866 = vrot.lane.b32.xlu0 %v1008, 48
        %v2867 = vpop.permute.xlu0 %2866
        %2868 = vrot.lane.b32.xlu0 %v1010, 48
        %v2869 = vpop.permute.xlu0 %2868
        %2870 = vrot.lane.b32.xlu0 %v1020, 48
        %v2871 = vpop.permute.xlu0 %2870
        %2872 = vrot.lane.b32.xlu0 %v1022, 48
        %v2873 = vpop.permute.xlu0 %2872
        %2874 = vrot.lane.b32.xlu0 %v1024, 48
        %v2875 = vpop.permute.xlu0 %2874
        %2876 = vrot.lane.b32.xlu0 %v1026, 48
        %v2877 = vpop.permute.xlu0 %2876
        %2878 = vrot.lane.b32.xlu0 %v1028, 48
        %v2879 = vpop.permute.xlu0 %2878
        %2880 = vrot.lane.b32.xlu0 %v1030, 48
        %v2881 = vpop.permute.xlu0 %2880
        %2882 = vrot.lane.b32.xlu0 %v1032, 48
        %v2883 = vpop.permute.xlu0 %2882
        %2884 = vrot.lane.b32.xlu0 %v1034, 48
        %v2885 = vpop.permute.xlu0 %2884
        %2886 = vrot.lane.b32.xlu0 %v1044, 48
        %v2887 = vpop.permute.xlu0 %2886
        %2888 = vrot.lane.b32.xlu0 %v1046, 48
        %v2889 = vpop.permute.xlu0 %2888
        %2890 = vrot.lane.b32.xlu0 %v1048, 48
        %v2891 = vpop.permute.xlu0 %2890
        %2892 = vrot.lane.b32.xlu0 %v1050, 48
        %v2893 = vpop.permute.xlu0 %2892
        %2894 = vrot.lane.b32.xlu0 %v1052, 48
        %v2895 = vpop.permute.xlu0 %2894
        %2896 = vrot.lane.b32.xlu0 %v1054, 48
        %v2897 = vpop.permute.xlu0 %2896
        %2898 = vrot.lane.b32.xlu0 %v1056, 48
        %v2899 = vpop.permute.xlu0 %2898
        %2900 = vrot.lane.b32.xlu0 %v1058, 48
        %v2901 = vpop.permute.xlu0 %2900
        %v2982 = vrot.slane %v888, 2
        %v2983 = vrot.slane %v889, 2
        %v2984 = vsel %vm1284, %v2982, %v2983
        %v2985 = vrot.slane %v890, 2
        %v2986 = vrot.slane %v891, 2
        %v2987 = vsel %vm1284, %v2985, %v2986
        %v2988 = vrot.slane %v912, 2
        %v2989 = vrot.slane %v913, 2
        %v2990 = vsel %vm1284, %v2988, %v2989
        %v2991 = vrot.slane %v914, 2
        %v2992 = vrot.slane %v915, 2
        %v2993 = vsel %vm1284, %v2991, %v2992
        %v2994 = vrot.slane %v936, 2
        %v2995 = vrot.slane %v937, 2
        %v2996 = vsel %vm1284, %v2994, %v2995
        %v2997 = vrot.slane %v938, 2
        %v2998 = vrot.slane %v939, 2
        %v2999 = vsel %vm1284, %v2997, %v2998
        %v3000 = vrot.slane %v960, 2
        %v3001 = vrot.slane %v961, 2
        %v3002 = vsel %vm1284, %v3000, %v3001
        %v3003 = vrot.slane %v962, 2
        %v3004 = vrot.slane %v963, 2
        %v3005 = vsel %vm1284, %v3003, %v3004
        %v3006 = vrot.slane %v984, 2
        %v3007 = vrot.slane %v985, 2
        %v3008 = vsel %vm1284, %v3006, %v3007
        %v3009 = vrot.slane %v986, 2
        %v3010 = vrot.slane %v987, 2
        %v3011 = vsel %vm1284, %v3009, %v3010
        %v3012 = vrot.slane %v1008, 2
        %v3013 = vrot.slane %v1009, 2
        %v3014 = vsel %vm1284, %v3012, %v3013
        %v3015 = vrot.slane %v1010, 2
        %v3016 = vrot.slane %v1011, 2
        %v3017 = vsel %vm1284, %v3015, %v3016
        %v3018 = vrot.slane %v1032, 2
        %v3019 = vrot.slane %v1033, 2
        %v3020 = vsel %vm1284, %v3018, %v3019
        %v3021 = vrot.slane %v1034, 2
        %v3022 = vrot.slane %v1035, 2
        %v3023 = vsel %vm1284, %v3021, %v3022
        %v3024 = vrot.slane %v1056, 2
        %v3025 = vrot.slane %v1057, 2
        %v3026 = vsel %vm1284, %v3024, %v3025
        %v3027 = vrot.slane %v1058, 2
        %v3028 = vrot.slane %v1059, 2
        %v3029 = vsel %vm1284, %v3027, %v3028
        %3030 = vrot.lane.b32.xlu0 %v1299, 56
        %v3031 = vpop.permute.xlu0 %3030
        %3032 = vrot.lane.b32.xlu0 %v1302, 56
        %v3033 = vpop.permute.xlu0 %3032
        %3034 = vrot.lane.b32.xlu0 %v1305, 56
        %v3035 = vpop.permute.xlu0 %3034
        %3036 = vrot.lane.b32.xlu0 %v1308, 56
        %v3037 = vpop.permute.xlu0 %3036
        %3038 = vrot.lane.b32.xlu0 %v2280, 56
        %v3039 = vpop.permute.xlu0 %3038
        %3040 = vrot.lane.b32.xlu0 %v2283, 56
        %v3041 = vpop.permute.xlu0 %3040
        %3042 = vrot.lane.b32.xlu0 %v2984, 56
        %v3043 = vpop.permute.xlu0 %3042
        %3044 = vrot.lane.b32.xlu0 %v2987, 56
        %v3045 = vpop.permute.xlu0 %3044
        %3046 = vrot.lane.b32.xlu0 %v1323, 56
        %v3047 = vpop.permute.xlu0 %3046
        %3048 = vrot.lane.b32.xlu0 %v1326, 56
        %v3049 = vpop.permute.xlu0 %3048
        %3050 = vrot.lane.b32.xlu0 %v1329, 56
        %v3051 = vpop.permute.xlu0 %3050
        %3052 = vrot.lane.b32.xlu0 %v1332, 56
        %v3053 = vpop.permute.xlu0 %3052
        %3054 = vrot.lane.b32.xlu0 %v2286, 56
        %v3055 = vpop.permute.xlu0 %3054
        %3056 = vrot.lane.b32.xlu0 %v2289, 56
        %v3057 = vpop.permute.xlu0 %3056
        %3058 = vrot.lane.b32.xlu0 %v2990, 56
        %v3059 = vpop.permute.xlu0 %3058
        %3060 = vrot.lane.b32.xlu0 %v2993, 56
        %v3061 = vpop.permute.xlu0 %3060
        %3062 = vrot.lane.b32.xlu0 %v1347, 56
        %v3063 = vpop.permute.xlu0 %3062
        %3064 = vrot.lane.b32.xlu0 %v1350, 56
        %v3065 = vpop.permute.xlu0 %3064
        %3066 = vrot.lane.b32.xlu0 %v1353, 56
        %v3067 = vpop.permute.xlu0 %3066
        %3068 = vrot.lane.b32.xlu0 %v1356, 56
        %v3069 = vpop.permute.xlu0 %3068
        %3070 = vrot.lane.b32.xlu0 %v2292, 56
        %v3071 = vpop.permute.xlu0 %3070
        %3072 = vrot.lane.b32.xlu0 %v2295, 56
        %v3073 = vpop.permute.xlu0 %3072
        %3074 = vrot.lane.b32.xlu0 %v2996, 56
        %v3075 = vpop.permute.xlu0 %3074
        %3076 = vrot.lane.b32.xlu0 %v2999, 56
        %v3077 = vpop.permute.xlu0 %3076
        %3078 = vrot.lane.b32.xlu0 %v1371, 56
        %v3079 = vpop.permute.xlu0 %3078
        %3080 = vrot.lane.b32.xlu0 %v1374, 56
        %v3081 = vpop.permute.xlu0 %3080
        %3082 = vrot.lane.b32.xlu0 %v1377, 56
        %v3083 = vpop.permute.xlu0 %3082
        %3084 = vrot.lane.b32.xlu0 %v1380, 56
        %v3085 = vpop.permute.xlu0 %3084
        %3086 = vrot.lane.b32.xlu0 %v2298, 56
        %v3087 = vpop.permute.xlu0 %3086
        %3088 = vrot.lane.b32.xlu0 %v2301, 56
        %v3089 = vpop.permute.xlu0 %3088
        %3090 = vrot.lane.b32.xlu0 %v3002, 56
        %v3091 = vpop.permute.xlu0 %3090
        %3092 = vrot.lane.b32.xlu0 %v3005, 56
        %v3093 = vpop.permute.xlu0 %3092
        %3094 = vrot.lane.b32.xlu0 %v1395, 56
        %v3095 = vpop.permute.xlu0 %3094
        %3096 = vrot.lane.b32.xlu0 %v1398, 56
        %v3097 = vpop.permute.xlu0 %3096
        %3098 = vrot.lane.b32.xlu0 %v1401, 56
        %v3099 = vpop.permute.xlu0 %3098
        %3100 = vrot.lane.b32.xlu0 %v1404, 56
        %v3101 = vpop.permute.xlu0 %3100
        %3102 = vrot.lane.b32.xlu0 %v2304, 56
        %v3103 = vpop.permute.xlu0 %3102
        %3104 = vrot.lane.b32.xlu0 %v2307, 56
        %v3105 = vpop.permute.xlu0 %3104
        %3106 = vrot.lane.b32.xlu0 %v3008, 56
        %v3107 = vpop.permute.xlu0 %3106
        %3108 = vrot.lane.b32.xlu0 %v3011, 56
        %v3109 = vpop.permute.xlu0 %3108
        %3110 = vrot.lane.b32.xlu0 %v1419, 56
        %v3111 = vpop.permute.xlu0 %3110
        %3112 = vrot.lane.b32.xlu0 %v1422, 56
        %v3113 = vpop.permute.xlu0 %3112
        %3114 = vrot.lane.b32.xlu0 %v1425, 56
        %v3115 = vpop.permute.xlu0 %3114
        %3116 = vrot.lane.b32.xlu0 %v1428, 56
        %v3117 = vpop.permute.xlu0 %3116
        %3118 = vrot.lane.b32.xlu0 %v2310, 56
        %v3119 = vpop.permute.xlu0 %3118
        %3120 = vrot.lane.b32.xlu0 %v2313, 56
        %v3121 = vpop.permute.xlu0 %3120
        %3122 = vrot.lane.b32.xlu0 %v3014, 56
        %v3123 = vpop.permute.xlu0 %3122
        %3124 = vrot.lane.b32.xlu0 %v3017, 56
        %v3125 = vpop.permute.xlu0 %3124
        %3126 = vrot.lane.b32.xlu0 %v1443, 56
        %v3127 = vpop.permute.xlu0 %3126
        %3128 = vrot.lane.b32.xlu0 %v1446, 56
        %v3129 = vpop.permute.xlu0 %3128
        %3130 = vrot.lane.b32.xlu0 %v1449, 56
        %v3131 = vpop.permute.xlu0 %3130
        %3132 = vrot.lane.b32.xlu0 %v1452, 56
        %v3133 = vpop.permute.xlu0 %3132
        %3134 = vrot.lane.b32.xlu0 %v2316, 56
        %v3135 = vpop.permute.xlu0 %3134
        %3136 = vrot.lane.b32.xlu0 %v2319, 56
        %v3137 = vpop.permute.xlu0 %3136
        %3138 = vrot.lane.b32.xlu0 %v3020, 56
        %v3139 = vpop.permute.xlu0 %3138
        %3140 = vrot.lane.b32.xlu0 %v3023, 56
        %v3141 = vpop.permute.xlu0 %3140
        %3142 = vrot.lane.b32.xlu0 %v1467, 56
        %v3143 = vpop.permute.xlu0 %3142
        %3144 = vrot.lane.b32.xlu0 %v1470, 56
        %v3145 = vpop.permute.xlu0 %3144
        %3146 = vrot.lane.b32.xlu0 %v1473, 56
        %v3147 = vpop.permute.xlu0 %3146
        %3148 = vrot.lane.b32.xlu0 %v1476, 56
        %v3149 = vpop.permute.xlu0 %3148
        %3150 = vrot.lane.b32.xlu0 %v2322, 56
        %v3151 = vpop.permute.xlu0 %3150
        %3152 = vrot.lane.b32.xlu0 %v2325, 56
        %v3153 = vpop.permute.xlu0 %3152
        %3154 = vrot.lane.b32.xlu0 %v3026, 56
        %v3155 = vpop.permute.xlu0 %3154
        %3156 = vrot.lane.b32.xlu0 %v3029, 56
        %v3157 = vpop.permute.xlu0 %3156
        %v3222 = vrot.slane %v888, 4
        %v3223 = vrot.slane %v889, 4
        %v3224 = vsel %vm1669, %v3222, %v3223
        %v3225 = vrot.slane %v890, 4
        %v3226 = vrot.slane %v891, 4
        %v3227 = vsel %vm1669, %v3225, %v3226
        %v3228 = vrot.slane %v912, 4
        %v3229 = vrot.slane %v913, 4
        %v3230 = vsel %vm1669, %v3228, %v3229
        %v3231 = vrot.slane %v914, 4
        %v3232 = vrot.slane %v915, 4
        %v3233 = vsel %vm1669, %v3231, %v3232
        %v3234 = vrot.slane %v936, 4
        %v3235 = vrot.slane %v937, 4
        %v3236 = vsel %vm1669, %v3234, %v3235
        %v3237 = vrot.slane %v938, 4
        %v3238 = vrot.slane %v939, 4
        %v3239 = vsel %vm1669, %v3237, %v3238
        %v3240 = vrot.slane %v960, 4
        %v3241 = vrot.slane %v961, 4
        %v3242 = vsel %vm1669, %v3240, %v3241
        %v3243 = vrot.slane %v962, 4
        %v3244 = vrot.slane %v963, 4
        %v3245 = vsel %vm1669, %v3243, %v3244
        %v3246 = vrot.slane %v984, 4
        %v3247 = vrot.slane %v985, 4
        %v3248 = vsel %vm1669, %v3246, %v3247
        %v3249 = vrot.slane %v986, 4
        %v3250 = vrot.slane %v987, 4
        %v3251 = vsel %vm1669, %v3249, %v3250
        %v3252 = vrot.slane %v1008, 4
        %v3253 = vrot.slane %v1009, 4
        %v3254 = vsel %vm1669, %v3252, %v3253
        %v3255 = vrot.slane %v1010, 4
        %v3256 = vrot.slane %v1011, 4
        %v3257 = vsel %vm1669, %v3255, %v3256
        %v3258 = vrot.slane %v1032, 4
        %v3259 = vrot.slane %v1033, 4
        %v3260 = vsel %vm1669, %v3258, %v3259
        %v3261 = vrot.slane %v1034, 4
        %v3262 = vrot.slane %v1035, 4
        %v3263 = vsel %vm1669, %v3261, %v3262
        %v3264 = vrot.slane %v1056, 4
        %v3265 = vrot.slane %v1057, 4
        %v3266 = vsel %vm1669, %v3264, %v3265
        %v3267 = vrot.slane %v1058, 4
        %v3268 = vrot.slane %v1059, 4
        %v3269 = vsel %vm1669, %v3267, %v3268
        %3270 = vrot.lane.b32.xlu0 %v1684, 64
        %v3271 = vpop.permute.xlu0 %3270
        %3272 = vrot.lane.b32.xlu0 %v1687, 64
        %v3273 = vpop.permute.xlu0 %3272
        %3274 = vrot.lane.b32.xlu0 %v1690, 64
        %v3275 = vpop.permute.xlu0 %3274
        %3276 = vrot.lane.b32.xlu0 %v1693, 64
        %v3277 = vpop.permute.xlu0 %3276
        %3278 = vrot.lane.b32.xlu0 %v2520, 64
        %v3279 = vpop.permute.xlu0 %3278
        %3280 = vrot.lane.b32.xlu0 %v2523, 64
        %v3281 = vpop.permute.xlu0 %3280
        %3282 = vrot.lane.b32.xlu0 %v3224, 64
        %v3283 = vpop.permute.xlu0 %3282
        %3284 = vrot.lane.b32.xlu0 %v3227, 64
        %v3285 = vpop.permute.xlu0 %3284
        %3286 = vrot.lane.b32.xlu0 %v1708, 64
        %v3287 = vpop.permute.xlu0 %3286
        %3288 = vrot.lane.b32.xlu0 %v1711, 64
        %v3289 = vpop.permute.xlu0 %3288
        %3290 = vrot.lane.b32.xlu0 %v1714, 64
        %v3291 = vpop.permute.xlu0 %3290
        %3292 = vrot.lane.b32.xlu0 %v1717, 64
        %v3293 = vpop.permute.xlu0 %3292
        %3294 = vrot.lane.b32.xlu0 %v2526, 64
        %v3295 = vpop.permute.xlu0 %3294
        %3296 = vrot.lane.b32.xlu0 %v2529, 64
        %v3297 = vpop.permute.xlu0 %3296
        %3298 = vrot.lane.b32.xlu0 %v3230, 64
        %v3299 = vpop.permute.xlu0 %3298
        %3300 = vrot.lane.b32.xlu0 %v3233, 64
        %v3301 = vpop.permute.xlu0 %3300
        %3302 = vrot.lane.b32.xlu0 %v1732, 64
        %v3303 = vpop.permute.xlu0 %3302
        %3304 = vrot.lane.b32.xlu0 %v1735, 64
        %v3305 = vpop.permute.xlu0 %3304
        %3306 = vrot.lane.b32.xlu0 %v1738, 64
        %v3307 = vpop.permute.xlu0 %3306
        %3308 = vrot.lane.b32.xlu0 %v1741, 64
        %v3309 = vpop.permute.xlu0 %3308
        %3310 = vrot.lane.b32.xlu0 %v2532, 64
        %v3311 = vpop.permute.xlu0 %3310
        %3312 = vrot.lane.b32.xlu0 %v2535, 64
        %v3313 = vpop.permute.xlu0 %3312
        %3314 = vrot.lane.b32.xlu0 %v3236, 64
        %v3315 = vpop.permute.xlu0 %3314
        %3316 = vrot.lane.b32.xlu0 %v3239, 64
        %v3317 = vpop.permute.xlu0 %3316
        %3318 = vrot.lane.b32.xlu0 %v1756, 64
        %v3319 = vpop.permute.xlu0 %3318
        %3320 = vrot.lane.b32.xlu0 %v1759, 64
        %v3321 = vpop.permute.xlu0 %3320
        %3322 = vrot.lane.b32.xlu0 %v1762, 64
        %v3323 = vpop.permute.xlu0 %3322
        %3324 = vrot.lane.b32.xlu0 %v1765, 64
        %v3325 = vpop.permute.xlu0 %3324
        %3326 = vrot.lane.b32.xlu0 %v2538, 64
        %v3327 = vpop.permute.xlu0 %3326
        %3328 = vrot.lane.b32.xlu0 %v2541, 64
        %v3329 = vpop.permute.xlu0 %3328
        %3330 = vrot.lane.b32.xlu0 %v3242, 64
        %v3331 = vpop.permute.xlu0 %3330
        %3332 = vrot.lane.b32.xlu0 %v3245, 64
        %v3333 = vpop.permute.xlu0 %3332
        %3334 = vrot.lane.b32.xlu0 %v1780, 64
        %v3335 = vpop.permute.xlu0 %3334
        %3336 = vrot.lane.b32.xlu0 %v1783, 64
        %v3337 = vpop.permute.xlu0 %3336
        %3338 = vrot.lane.b32.xlu0 %v1786, 64
        %v3339 = vpop.permute.xlu0 %3338
        %3340 = vrot.lane.b32.xlu0 %v1789, 64
        %v3341 = vpop.permute.xlu0 %3340
        %3342 = vrot.lane.b32.xlu0 %v2544, 64
        %v3343 = vpop.permute.xlu0 %3342
        %3344 = vrot.lane.b32.xlu0 %v2547, 64
        %v3345 = vpop.permute.xlu0 %3344
        %3346 = vrot.lane.b32.xlu0 %v3248, 64
        %v3347 = vpop.permute.xlu0 %3346
        %3348 = vrot.lane.b32.xlu0 %v3251, 64
        %v3349 = vpop.permute.xlu0 %3348
        %3350 = vrot.lane.b32.xlu0 %v1804, 64
        %v3351 = vpop.permute.xlu0 %3350
        %3352 = vrot.lane.b32.xlu0 %v1807, 64
        %v3353 = vpop.permute.xlu0 %3352
        %3354 = vrot.lane.b32.xlu0 %v1810, 64
        %v3355 = vpop.permute.xlu0 %3354
        %3356 = vrot.lane.b32.xlu0 %v1813, 64
        %v3357 = vpop.permute.xlu0 %3356
        %3358 = vrot.lane.b32.xlu0 %v2550, 64
        %v3359 = vpop.permute.xlu0 %3358
        %3360 = vrot.lane.b32.xlu0 %v2553, 64
        %v3361 = vpop.permute.xlu0 %3360
        %3362 = vrot.lane.b32.xlu0 %v3254, 64
        %v3363 = vpop.permute.xlu0 %3362
        %3364 = vrot.lane.b32.xlu0 %v3257, 64
        %v3365 = vpop.permute.xlu0 %3364
        %3366 = vrot.lane.b32.xlu0 %v1828, 64
        %v3367 = vpop.permute.xlu0 %3366
        %3368 = vrot.lane.b32.xlu0 %v1831, 64
        %v3369 = vpop.permute.xlu0 %3368
        %3370 = vrot.lane.b32.xlu0 %v1834, 64
        %v3371 = vpop.permute.xlu0 %3370
        %3372 = vrot.lane.b32.xlu0 %v1837, 64
        %v3373 = vpop.permute.xlu0 %3372
        %3374 = vrot.lane.b32.xlu0 %v2556, 64
        %v3375 = vpop.permute.xlu0 %3374
        %3376 = vrot.lane.b32.xlu0 %v2559, 64
        %v3377 = vpop.permute.xlu0 %3376
        %3378 = vrot.lane.b32.xlu0 %v3260, 64
        %v3379 = vpop.permute.xlu0 %3378
        %3380 = vrot.lane.b32.xlu0 %v3263, 64
        %v3381 = vpop.permute.xlu0 %3380
        %3382 = vrot.lane.b32.xlu0 %v1852, 64
        %v3383 = vpop.permute.xlu0 %3382
        %3384 = vrot.lane.b32.xlu0 %v1855, 64
        %v3385 = vpop.permute.xlu0 %3384
        %3386 = vrot.lane.b32.xlu0 %v1858, 64
        %v3387 = vpop.permute.xlu0 %3386
        %3388 = vrot.lane.b32.xlu0 %v1861, 64
        %v3389 = vpop.permute.xlu0 %3388
        %3390 = vrot.lane.b32.xlu0 %v2562, 64
        %v3391 = vpop.permute.xlu0 %3390
        %3392 = vrot.lane.b32.xlu0 %v2565, 64
        %v3393 = vpop.permute.xlu0 %3392
        %3394 = vrot.lane.b32.xlu0 %v3266, 64
        %v3395 = vpop.permute.xlu0 %3394
        %3396 = vrot.lane.b32.xlu0 %v3269, 64
        %v3397 = vpop.permute.xlu0 %3396
        %3478 = vrot.lane.b32.xlu0 %v916, 72
        %v3479 = vpop.permute.xlu0 %3478
        %3480 = vrot.lane.b32.xlu0 %v918, 72
        %v3481 = vpop.permute.xlu0 %3480
        %3482 = vrot.lane.b32.xlu0 %v920, 72
        %v3483 = vpop.permute.xlu0 %3482
        %3484 = vrot.lane.b32.xlu0 %v922, 72
        %v3485 = vpop.permute.xlu0 %3484
        %3486 = vrot.lane.b32.xlu0 %v924, 72
        %v3487 = vpop.permute.xlu0 %3486
        %3488 = vrot.lane.b32.xlu0 %v926, 72
        %v3489 = vpop.permute.xlu0 %3488
        %3490 = vrot.lane.b32.xlu0 %v928, 72
        %v3491 = vpop.permute.xlu0 %3490
        %3492 = vrot.lane.b32.xlu0 %v930, 72
        %v3493 = vpop.permute.xlu0 %3492
        %3494 = vrot.lane.b32.xlu0 %v940, 72
        %v3495 = vpop.permute.xlu0 %3494
        %3496 = vrot.lane.b32.xlu0 %v942, 72
        %v3497 = vpop.permute.xlu0 %3496
        %3498 = vrot.lane.b32.xlu0 %v944, 72
        %v3499 = vpop.permute.xlu0 %3498
        %3500 = vrot.lane.b32.xlu0 %v946, 72
        %v3501 = vpop.permute.xlu0 %3500
        %3502 = vrot.lane.b32.xlu0 %v948, 72
        %v3503 = vpop.permute.xlu0 %3502
        %3504 = vrot.lane.b32.xlu0 %v950, 72
        %v3505 = vpop.permute.xlu0 %3504
        %3506 = vrot.lane.b32.xlu0 %v952, 72
        %v3507 = vpop.permute.xlu0 %3506
        %3508 = vrot.lane.b32.xlu0 %v954, 72
        %v3509 = vpop.permute.xlu0 %3508
        %3510 = vrot.lane.b32.xlu0 %v964, 72
        %v3511 = vpop.permute.xlu0 %3510
        %3512 = vrot.lane.b32.xlu0 %v966, 72
        %v3513 = vpop.permute.xlu0 %3512
        %3514 = vrot.lane.b32.xlu0 %v968, 72
        %v3515 = vpop.permute.xlu0 %3514
        %3516 = vrot.lane.b32.xlu0 %v970, 72
        %v3517 = vpop.permute.xlu0 %3516
        %3518 = vrot.lane.b32.xlu0 %v972, 72
        %v3519 = vpop.permute.xlu0 %3518
        %3520 = vrot.lane.b32.xlu0 %v974, 72
        %v3521 = vpop.permute.xlu0 %3520
        %3522 = vrot.lane.b32.xlu0 %v976, 72
        %v3523 = vpop.permute.xlu0 %3522
        %3524 = vrot.lane.b32.xlu0 %v978, 72
        %v3525 = vpop.permute.xlu0 %3524
        %3526 = vrot.lane.b32.xlu0 %v988, 72
        %v3527 = vpop.permute.xlu0 %3526
        %3528 = vrot.lane.b32.xlu0 %v990, 72
        %v3529 = vpop.permute.xlu0 %3528
        %3530 = vrot.lane.b32.xlu0 %v992, 72
        %v3531 = vpop.permute.xlu0 %3530
        %3532 = vrot.lane.b32.xlu0 %v994, 72
        %v3533 = vpop.permute.xlu0 %3532
        %3534 = vrot.lane.b32.xlu0 %v996, 72
        %v3535 = vpop.permute.xlu0 %3534
        %3536 = vrot.lane.b32.xlu0 %v998, 72
        %v3537 = vpop.permute.xlu0 %3536
        %3538 = vrot.lane.b32.xlu0 %v1000, 72
        %v3539 = vpop.permute.xlu0 %3538
        %3540 = vrot.lane.b32.xlu0 %v1002, 72
        %v3541 = vpop.permute.xlu0 %3540
        %3542 = vrot.lane.b32.xlu0 %v1012, 72
        %v3543 = vpop.permute.xlu0 %3542
        %3544 = vrot.lane.b32.xlu0 %v1014, 72
        %v3545 = vpop.permute.xlu0 %3544
        %3546 = vrot.lane.b32.xlu0 %v1016, 72
        %v3547 = vpop.permute.xlu0 %3546
        %3548 = vrot.lane.b32.xlu0 %v1018, 72
        %v3549 = vpop.permute.xlu0 %3548
        %3550 = vrot.lane.b32.xlu0 %v1020, 72
        %v3551 = vpop.permute.xlu0 %3550
        %3552 = vrot.lane.b32.xlu0 %v1022, 72
        %v3553 = vpop.permute.xlu0 %3552
        %3554 = vrot.lane.b32.xlu0 %v1024, 72
        %v3555 = vpop.permute.xlu0 %3554
        %3556 = vrot.lane.b32.xlu0 %v1026, 72
        %v3557 = vpop.permute.xlu0 %3556
        %3558 = vrot.lane.b32.xlu0 %v1036, 72
        %v3559 = vpop.permute.xlu0 %3558
        %3560 = vrot.lane.b32.xlu0 %v1038, 72
        %v3561 = vpop.permute.xlu0 %3560
        %3562 = vrot.lane.b32.xlu0 %v1040, 72
        %v3563 = vpop.permute.xlu0 %3562
        %3564 = vrot.lane.b32.xlu0 %v1042, 72
        %v3565 = vpop.permute.xlu0 %3564
        %3566 = vrot.lane.b32.xlu0 %v1044, 72
        %v3567 = vpop.permute.xlu0 %3566
        %3568 = vrot.lane.b32.xlu0 %v1046, 72
        %v3569 = vpop.permute.xlu0 %3568
        %3570 = vrot.lane.b32.xlu0 %v1048, 72
        %v3571 = vpop.permute.xlu0 %3570
        %3572 = vrot.lane.b32.xlu0 %v1050, 72
        %v3573 = vpop.permute.xlu0 %3572
        %3574 = vrot.lane.b32.xlu0 %v1060, 72
        %v3575 = vpop.permute.xlu0 %3574
        %3576 = vrot.lane.b32.xlu0 %v1062, 72
        %v3577 = vpop.permute.xlu0 %3576
        %3578 = vrot.lane.b32.xlu0 %v1064, 72
        %v3579 = vpop.permute.xlu0 %3578
        %3580 = vrot.lane.b32.xlu0 %v1066, 72
        %v3581 = vpop.permute.xlu0 %3580
        %3582 = vrot.lane.b32.xlu0 %v1068, 72
        %v3583 = vpop.permute.xlu0 %3582
        %3584 = vrot.lane.b32.xlu0 %v1070, 72
        %v3585 = vpop.permute.xlu0 %3584
        %3586 = vrot.lane.b32.xlu0 %v1072, 72
        %v3587 = vpop.permute.xlu0 %3586
        %3588 = vrot.lane.b32.xlu0 %v1074, 72
        %v3589 = vpop.permute.xlu0 %3588
        %3590 = vrot.lane.b32.xlu0 %v1084, 72
        %v3591 = vpop.permute.xlu0 %3590
        %3592 = vrot.lane.b32.xlu0 %v1086, 72
        %v3593 = vpop.permute.xlu0 %3592
        %3594 = vrot.lane.b32.xlu0 %v1088, 72
        %v3595 = vpop.permute.xlu0 %3594
        %3596 = vrot.lane.b32.xlu0 %v1090, 72
        %v3597 = vpop.permute.xlu0 %3596
        %3598 = vrot.lane.b32.xlu0 %v1092, 72
        %v3599 = vpop.permute.xlu0 %3598
        %3600 = vrot.lane.b32.xlu0 %v1094, 72
        %v3601 = vpop.permute.xlu0 %3600
        %3602 = vrot.lane.b32.xlu0 %v1096, 72
        %v3603 = vpop.permute.xlu0 %3602
        %3604 = vrot.lane.b32.xlu0 %v1098, 72
        %v3605 = vpop.permute.xlu0 %3604
        %v3686 = vrot.slane %v1060, 2
        %v3687 = vrot.slane %v1061, 2
        %v3688 = vsel %vm1284, %v3686, %v3687
        %v3689 = vrot.slane %v1062, 2
        %v3690 = vrot.slane %v1063, 2
        %v3691 = vsel %vm1284, %v3689, %v3690
        %v3692 = vrot.slane %v1064, 2
        %v3693 = vrot.slane %v1065, 2
        %v3694 = vsel %vm1284, %v3692, %v3693
        %v3695 = vrot.slane %v1066, 2
        %v3696 = vrot.slane %v1067, 2
        %v3697 = vsel %vm1284, %v3695, %v3696
        %v3698 = vrot.slane %v1068, 2
        %v3699 = vrot.slane %v1069, 2
        %v3700 = vsel %vm1284, %v3698, %v3699
        %v3701 = vrot.slane %v1070, 2
        %v3702 = vrot.slane %v1071, 2
        %v3703 = vsel %vm1284, %v3701, %v3702
        %v3704 = vrot.slane %v1072, 2
        %v3705 = vrot.slane %v1073, 2
        %v3706 = vsel %vm1284, %v3704, %v3705
        %v3707 = vrot.slane %v1074, 2
        %v3708 = vrot.slane %v1075, 2
        %v3709 = vsel %vm1284, %v3707, %v3708
        %v3710 = vrot.slane %v1084, 2
        %v3711 = vrot.slane %v1085, 2
        %v3712 = vsel %vm1284, %v3710, %v3711
        %v3713 = vrot.slane %v1086, 2
        %v3714 = vrot.slane %v1087, 2
        %v3715 = vsel %vm1284, %v3713, %v3714
        %v3716 = vrot.slane %v1088, 2
        %v3717 = vrot.slane %v1089, 2
        %v3718 = vsel %vm1284, %v3716, %v3717
        %v3719 = vrot.slane %v1090, 2
        %v3720 = vrot.slane %v1091, 2
        %v3721 = vsel %vm1284, %v3719, %v3720
        %v3722 = vrot.slane %v1092, 2
        %v3723 = vrot.slane %v1093, 2
        %v3724 = vsel %vm1284, %v3722, %v3723
        %v3725 = vrot.slane %v1094, 2
        %v3726 = vrot.slane %v1095, 2
        %v3727 = vsel %vm1284, %v3725, %v3726
        %v3728 = vrot.slane %v1096, 2
        %v3729 = vrot.slane %v1097, 2
        %v3730 = vsel %vm1284, %v3728, %v3729
        %v3731 = vrot.slane %v1098, 2
        %v3732 = vrot.slane %v1099, 2
        %v3733 = vsel %vm1284, %v3731, %v3732
        %3734 = vrot.lane.b32.xlu0 %v1335, 80
        %v3735 = vpop.permute.xlu0 %3734
        %3736 = vrot.lane.b32.xlu0 %v1338, 80
        %v3737 = vpop.permute.xlu0 %3736
        %3738 = vrot.lane.b32.xlu0 %v1341, 80
        %v3739 = vpop.permute.xlu0 %3738
        %3740 = vrot.lane.b32.xlu0 %v1344, 80
        %v3741 = vpop.permute.xlu0 %3740
        %3742 = vrot.lane.b32.xlu0 %v1347, 80
        %v3743 = vpop.permute.xlu0 %3742
        %3744 = vrot.lane.b32.xlu0 %v1350, 80
        %v3745 = vpop.permute.xlu0 %3744
        %3746 = vrot.lane.b32.xlu0 %v1353, 80
        %v3747 = vpop.permute.xlu0 %3746
        %3748 = vrot.lane.b32.xlu0 %v1356, 80
        %v3749 = vpop.permute.xlu0 %3748
        %3750 = vrot.lane.b32.xlu0 %v1359, 80
        %v3751 = vpop.permute.xlu0 %3750
        %3752 = vrot.lane.b32.xlu0 %v1362, 80
        %v3753 = vpop.permute.xlu0 %3752
        %3754 = vrot.lane.b32.xlu0 %v1365, 80
        %v3755 = vpop.permute.xlu0 %3754
        %3756 = vrot.lane.b32.xlu0 %v1368, 80
        %v3757 = vpop.permute.xlu0 %3756
        %3758 = vrot.lane.b32.xlu0 %v1371, 80
        %v3759 = vpop.permute.xlu0 %3758
        %3760 = vrot.lane.b32.xlu0 %v1374, 80
        %v3761 = vpop.permute.xlu0 %3760
        %3762 = vrot.lane.b32.xlu0 %v1377, 80
        %v3763 = vpop.permute.xlu0 %3762
        %3764 = vrot.lane.b32.xlu0 %v1380, 80
        %v3765 = vpop.permute.xlu0 %3764
        %3766 = vrot.lane.b32.xlu0 %v1383, 80
        %v3767 = vpop.permute.xlu0 %3766
        %3768 = vrot.lane.b32.xlu0 %v1386, 80
        %v3769 = vpop.permute.xlu0 %3768
        %3770 = vrot.lane.b32.xlu0 %v1389, 80
        %v3771 = vpop.permute.xlu0 %3770
        %3772 = vrot.lane.b32.xlu0 %v1392, 80
        %v3773 = vpop.permute.xlu0 %3772
        %3774 = vrot.lane.b32.xlu0 %v1395, 80
        %v3775 = vpop.permute.xlu0 %3774
        %3776 = vrot.lane.b32.xlu0 %v1398, 80
        %v3777 = vpop.permute.xlu0 %3776
        %3778 = vrot.lane.b32.xlu0 %v1401, 80
        %v3779 = vpop.permute.xlu0 %3778
        %3780 = vrot.lane.b32.xlu0 %v1404, 80
        %v3781 = vpop.permute.xlu0 %3780
        %3782 = vrot.lane.b32.xlu0 %v1407, 80
        %v3783 = vpop.permute.xlu0 %3782
        %3784 = vrot.lane.b32.xlu0 %v1410, 80
        %v3785 = vpop.permute.xlu0 %3784
        %3786 = vrot.lane.b32.xlu0 %v1413, 80
        %v3787 = vpop.permute.xlu0 %3786
        %3788 = vrot.lane.b32.xlu0 %v1416, 80
        %v3789 = vpop.permute.xlu0 %3788
        %3790 = vrot.lane.b32.xlu0 %v1419, 80
        %v3791 = vpop.permute.xlu0 %3790
        %3792 = vrot.lane.b32.xlu0 %v1422, 80
        %v3793 = vpop.permute.xlu0 %3792
        %3794 = vrot.lane.b32.xlu0 %v1425, 80
        %v3795 = vpop.permute.xlu0 %3794
        %3796 = vrot.lane.b32.xlu0 %v1428, 80
        %v3797 = vpop.permute.xlu0 %3796
        %3798 = vrot.lane.b32.xlu0 %v1431, 80
        %v3799 = vpop.permute.xlu0 %3798
        %3800 = vrot.lane.b32.xlu0 %v1434, 80
        %v3801 = vpop.permute.xlu0 %3800
        %3802 = vrot.lane.b32.xlu0 %v1437, 80
        %v3803 = vpop.permute.xlu0 %3802
        %3804 = vrot.lane.b32.xlu0 %v1440, 80
        %v3805 = vpop.permute.xlu0 %3804
        %3806 = vrot.lane.b32.xlu0 %v1443, 80
        %v3807 = vpop.permute.xlu0 %3806
        %3808 = vrot.lane.b32.xlu0 %v1446, 80
        %v3809 = vpop.permute.xlu0 %3808
        %3810 = vrot.lane.b32.xlu0 %v1449, 80
        %v3811 = vpop.permute.xlu0 %3810
        %3812 = vrot.lane.b32.xlu0 %v1452, 80
        %v3813 = vpop.permute.xlu0 %3812
        %3814 = vrot.lane.b32.xlu0 %v1455, 80
        %v3815 = vpop.permute.xlu0 %3814
        %3816 = vrot.lane.b32.xlu0 %v1458, 80
        %v3817 = vpop.permute.xlu0 %3816
        %3818 = vrot.lane.b32.xlu0 %v1461, 80
        %v3819 = vpop.permute.xlu0 %3818
        %3820 = vrot.lane.b32.xlu0 %v1464, 80
        %v3821 = vpop.permute.xlu0 %3820
        %3822 = vrot.lane.b32.xlu0 %v1467, 80
        %v3823 = vpop.permute.xlu0 %3822
        %3824 = vrot.lane.b32.xlu0 %v1470, 80
        %v3825 = vpop.permute.xlu0 %3824
        %3826 = vrot.lane.b32.xlu0 %v1473, 80
        %v3827 = vpop.permute.xlu0 %3826
        %3828 = vrot.lane.b32.xlu0 %v1476, 80
        %v3829 = vpop.permute.xlu0 %3828
        %3830 = vrot.lane.b32.xlu0 %v3688, 80
        %v3831 = vpop.permute.xlu0 %3830
        %3832 = vrot.lane.b32.xlu0 %v3691, 80
        %v3833 = vpop.permute.xlu0 %3832
        %3834 = vrot.lane.b32.xlu0 %v3694, 80
        %v3835 = vpop.permute.xlu0 %3834
        %3836 = vrot.lane.b32.xlu0 %v3697, 80
        %v3837 = vpop.permute.xlu0 %3836
        %3838 = vrot.lane.b32.xlu0 %v3700, 80
        %v3839 = vpop.permute.xlu0 %3838
        %3840 = vrot.lane.b32.xlu0 %v3703, 80
        %v3841 = vpop.permute.xlu0 %3840
        %3842 = vrot.lane.b32.xlu0 %v3706, 80
        %v3843 = vpop.permute.xlu0 %3842
        %3844 = vrot.lane.b32.xlu0 %v3709, 80
        %v3845 = vpop.permute.xlu0 %3844
        %3846 = vrot.lane.b32.xlu0 %v3712, 80
        %v3847 = vpop.permute.xlu0 %3846
        %3848 = vrot.lane.b32.xlu0 %v3715, 80
        %v3849 = vpop.permute.xlu0 %3848
        %3850 = vrot.lane.b32.xlu0 %v3718, 80
        %v3851 = vpop.permute.xlu0 %3850
        %3852 = vrot.lane.b32.xlu0 %v3721, 80
        %v3853 = vpop.permute.xlu0 %3852
        %3854 = vrot.lane.b32.xlu0 %v3724, 80
        %v3855 = vpop.permute.xlu0 %3854
        %3856 = vrot.lane.b32.xlu0 %v3727, 80
        %v3857 = vpop.permute.xlu0 %3856
        %3858 = vrot.lane.b32.xlu0 %v3730, 80
        %v3859 = vpop.permute.xlu0 %3858
        %3860 = vrot.lane.b32.xlu0 %v3733, 80
        %v3861 = vpop.permute.xlu0 %3860
        %v3926 = vrot.slane %v1060, 4
        %v3927 = vrot.slane %v1061, 4
        %v3928 = vsel %vm1669, %v3926, %v3927
        %v3929 = vrot.slane %v1062, 4
        %v3930 = vrot.slane %v1063, 4
        %v3931 = vsel %vm1669, %v3929, %v3930
        %v3932 = vrot.slane %v1064, 4
        %v3933 = vrot.slane %v1065, 4
        %v3934 = vsel %vm1669, %v3932, %v3933
        %v3935 = vrot.slane %v1066, 4
        %v3936 = vrot.slane %v1067, 4
        %v3937 = vsel %vm1669, %v3935, %v3936
        %v3938 = vrot.slane %v1068, 4
        %v3939 = vrot.slane %v1069, 4
        %v3940 = vsel %vm1669, %v3938, %v3939
        %v3941 = vrot.slane %v1070, 4
        %v3942 = vrot.slane %v1071, 4
        %v3943 = vsel %vm1669, %v3941, %v3942
        %v3944 = vrot.slane %v1072, 4
        %v3945 = vrot.slane %v1073, 4
        %v3946 = vsel %vm1669, %v3944, %v3945
        %v3947 = vrot.slane %v1074, 4
        %v3948 = vrot.slane %v1075, 4
        %v3949 = vsel %vm1669, %v3947, %v3948
        %v3950 = vrot.slane %v1084, 4
        %v3951 = vrot.slane %v1085, 4
        %v3952 = vsel %vm1669, %v3950, %v3951
        %v3953 = vrot.slane %v1086, 4
        %v3954 = vrot.slane %v1087, 4
        %v3955 = vsel %vm1669, %v3953, %v3954
        %v3956 = vrot.slane %v1088, 4
        %v3957 = vrot.slane %v1089, 4
        %v3958 = vsel %vm1669, %v3956, %v3957
        %v3959 = vrot.slane %v1090, 4
        %v3960 = vrot.slane %v1091, 4
        %v3961 = vsel %vm1669, %v3959, %v3960
        %v3962 = vrot.slane %v1092, 4
        %v3963 = vrot.slane %v1093, 4
        %v3964 = vsel %vm1669, %v3962, %v3963
        %v3965 = vrot.slane %v1094, 4
        %v3966 = vrot.slane %v1095, 4
        %v3967 = vsel %vm1669, %v3965, %v3966
        %v3968 = vrot.slane %v1096, 4
        %v3969 = vrot.slane %v1097, 4
        %v3970 = vsel %vm1669, %v3968, %v3969
        %v3971 = vrot.slane %v1098, 4
        %v3972 = vrot.slane %v1099, 4
        %v3973 = vsel %vm1669, %v3971, %v3972
        %3974 = vrot.lane.b32.xlu0 %v1720, 88
        %v3975 = vpop.permute.xlu0 %3974
        %3976 = vrot.lane.b32.xlu0 %v1723, 88
        %v3977 = vpop.permute.xlu0 %3976
        %3978 = vrot.lane.b32.xlu0 %v1726, 88
        %v3979 = vpop.permute.xlu0 %3978
        %3980 = vrot.lane.b32.xlu0 %v1729, 88
        %v3981 = vpop.permute.xlu0 %3980
        %3982 = vrot.lane.b32.xlu0 %v1732, 88
        %v3983 = vpop.permute.xlu0 %3982
        %3984 = vrot.lane.b32.xlu0 %v1735, 88
        %v3985 = vpop.permute.xlu0 %3984
        %3986 = vrot.lane.b32.xlu0 %v1738, 88
        %v3987 = vpop.permute.xlu0 %3986
        %3988 = vrot.lane.b32.xlu0 %v1741, 88
        %v3989 = vpop.permute.xlu0 %3988
        %3990 = vrot.lane.b32.xlu0 %v1744, 88
        %v3991 = vpop.permute.xlu0 %3990
        %3992 = vrot.lane.b32.xlu0 %v1747, 88
        %v3993 = vpop.permute.xlu0 %3992
        %3994 = vrot.lane.b32.xlu0 %v1750, 88
        %v3995 = vpop.permute.xlu0 %3994
        %3996 = vrot.lane.b32.xlu0 %v1753, 88
        %v3997 = vpop.permute.xlu0 %3996
        %3998 = vrot.lane.b32.xlu0 %v1756, 88
        %v3999 = vpop.permute.xlu0 %3998
        %4000 = vrot.lane.b32.xlu0 %v1759, 88
        %v4001 = vpop.permute.xlu0 %4000
        %4002 = vrot.lane.b32.xlu0 %v1762, 88
        %v4003 = vpop.permute.xlu0 %4002
        %4004 = vrot.lane.b32.xlu0 %v1765, 88
        %v4005 = vpop.permute.xlu0 %4004
        %4006 = vrot.lane.b32.xlu0 %v1768, 88
        %v4007 = vpop.permute.xlu0 %4006
        %4008 = vrot.lane.b32.xlu0 %v1771, 88
        %v4009 = vpop.permute.xlu0 %4008
        %4010 = vrot.lane.b32.xlu0 %v1774, 88
        %v4011 = vpop.permute.xlu0 %4010
        %4012 = vrot.lane.b32.xlu0 %v1777, 88
        %v4013 = vpop.permute.xlu0 %4012
        %4014 = vrot.lane.b32.xlu0 %v1780, 88
        %v4015 = vpop.permute.xlu0 %4014
        %4016 = vrot.lane.b32.xlu0 %v1783, 88
        %v4017 = vpop.permute.xlu0 %4016
        %4018 = vrot.lane.b32.xlu0 %v1786, 88
        %v4019 = vpop.permute.xlu0 %4018
        %4020 = vrot.lane.b32.xlu0 %v1789, 88
        %v4021 = vpop.permute.xlu0 %4020
        %4022 = vrot.lane.b32.xlu0 %v1792, 88
        %v4023 = vpop.permute.xlu0 %4022
        %4024 = vrot.lane.b32.xlu0 %v1795, 88
        %v4025 = vpop.permute.xlu0 %4024
        %4026 = vrot.lane.b32.xlu0 %v1798, 88
        %v4027 = vpop.permute.xlu0 %4026
        %4028 = vrot.lane.b32.xlu0 %v1801, 88
        %v4029 = vpop.permute.xlu0 %4028
        %4030 = vrot.lane.b32.xlu0 %v1804, 88
        %v4031 = vpop.permute.xlu0 %4030
        %4032 = vrot.lane.b32.xlu0 %v1807, 88
        %v4033 = vpop.permute.xlu0 %4032
        %4034 = vrot.lane.b32.xlu0 %v1810, 88
        %v4035 = vpop.permute.xlu0 %4034
        %4036 = vrot.lane.b32.xlu0 %v1813, 88
        %v4037 = vpop.permute.xlu0 %4036
        %4038 = vrot.lane.b32.xlu0 %v1816, 88
        %v4039 = vpop.permute.xlu0 %4038
        %4040 = vrot.lane.b32.xlu0 %v1819, 88
        %v4041 = vpop.permute.xlu0 %4040
        %4042 = vrot.lane.b32.xlu0 %v1822, 88
        %v4043 = vpop.permute.xlu0 %4042
        %4044 = vrot.lane.b32.xlu0 %v1825, 88
        %v4045 = vpop.permute.xlu0 %4044
        %4046 = vrot.lane.b32.xlu0 %v1828, 88
        %v4047 = vpop.permute.xlu0 %4046
        %4048 = vrot.lane.b32.xlu0 %v1831, 88
        %v4049 = vpop.permute.xlu0 %4048
        %4050 = vrot.lane.b32.xlu0 %v1834, 88
        %v4051 = vpop.permute.xlu0 %4050
        %4052 = vrot.lane.b32.xlu0 %v1837, 88
        %v4053 = vpop.permute.xlu0 %4052
        %4054 = vrot.lane.b32.xlu0 %v1840, 88
        %v4055 = vpop.permute.xlu0 %4054
        %4056 = vrot.lane.b32.xlu0 %v1843, 88
        %v4057 = vpop.permute.xlu0 %4056
        %4058 = vrot.lane.b32.xlu0 %v1846, 88
        %v4059 = vpop.permute.xlu0 %4058
        %4060 = vrot.lane.b32.xlu0 %v1849, 88
        %v4061 = vpop.permute.xlu0 %4060
        %4062 = vrot.lane.b32.xlu0 %v1852, 88
        %v4063 = vpop.permute.xlu0 %4062
        %4064 = vrot.lane.b32.xlu0 %v1855, 88
        %v4065 = vpop.permute.xlu0 %4064
        %4066 = vrot.lane.b32.xlu0 %v1858, 88
        %v4067 = vpop.permute.xlu0 %4066
        %4068 = vrot.lane.b32.xlu0 %v1861, 88
        %v4069 = vpop.permute.xlu0 %4068
        %4070 = vrot.lane.b32.xlu0 %v3928, 88
        %v4071 = vpop.permute.xlu0 %4070
        %4072 = vrot.lane.b32.xlu0 %v3931, 88
        %v4073 = vpop.permute.xlu0 %4072
        %4074 = vrot.lane.b32.xlu0 %v3934, 88
        %v4075 = vpop.permute.xlu0 %4074
        %4076 = vrot.lane.b32.xlu0 %v3937, 88
        %v4077 = vpop.permute.xlu0 %4076
        %4078 = vrot.lane.b32.xlu0 %v3940, 88
        %v4079 = vpop.permute.xlu0 %4078
        %4080 = vrot.lane.b32.xlu0 %v3943, 88
        %v4081 = vpop.permute.xlu0 %4080
        %4082 = vrot.lane.b32.xlu0 %v3946, 88
        %v4083 = vpop.permute.xlu0 %4082
        %4084 = vrot.lane.b32.xlu0 %v3949, 88
        %v4085 = vpop.permute.xlu0 %4084
        %4086 = vrot.lane.b32.xlu0 %v3952, 88
        %v4087 = vpop.permute.xlu0 %4086
        %4088 = vrot.lane.b32.xlu0 %v3955, 88
        %v4089 = vpop.permute.xlu0 %4088
        %4090 = vrot.lane.b32.xlu0 %v3958, 88
        %v4091 = vpop.permute.xlu0 %4090
        %4092 = vrot.lane.b32.xlu0 %v3961, 88
        %v4093 = vpop.permute.xlu0 %4092
        %4094 = vrot.lane.b32.xlu0 %v3964, 88
        %v4095 = vpop.permute.xlu0 %4094
        %4096 = vrot.lane.b32.xlu0 %v3967, 88
        %v4097 = vpop.permute.xlu0 %4096
        %4098 = vrot.lane.b32.xlu0 %v3970, 88
        %v4099 = vpop.permute.xlu0 %4098
        %4100 = vrot.lane.b32.xlu0 %v3973, 88
        %v4101 = vpop.permute.xlu0 %4100
        %4170 = vrot.lane.b32.xlu0 %v920, 96
        %v4171 = vpop.permute.xlu0 %4170
        %4172 = vrot.lane.b32.xlu0 %v922, 96
        %v4173 = vpop.permute.xlu0 %4172
        %4174 = vrot.lane.b32.xlu0 %v924, 96
        %v4175 = vpop.permute.xlu0 %4174
        %4176 = vrot.lane.b32.xlu0 %v926, 96
        %v4177 = vpop.permute.xlu0 %4176
        %4178 = vrot.lane.b32.xlu0 %v928, 96
        %v4179 = vpop.permute.xlu0 %4178
        %4180 = vrot.lane.b32.xlu0 %v930, 96
        %v4181 = vpop.permute.xlu0 %4180
        %4182 = vrot.lane.b32.xlu0 %v932, 96
        %v4183 = vpop.permute.xlu0 %4182
        %4184 = vrot.lane.b32.xlu0 %v934, 96
        %v4185 = vpop.permute.xlu0 %4184
        %4186 = vrot.lane.b32.xlu0 %v944, 96
        %v4187 = vpop.permute.xlu0 %4186
        %4188 = vrot.lane.b32.xlu0 %v946, 96
        %v4189 = vpop.permute.xlu0 %4188
        %4190 = vrot.lane.b32.xlu0 %v948, 96
        %v4191 = vpop.permute.xlu0 %4190
        %4192 = vrot.lane.b32.xlu0 %v950, 96
        %v4193 = vpop.permute.xlu0 %4192
        %4194 = vrot.lane.b32.xlu0 %v952, 96
        %v4195 = vpop.permute.xlu0 %4194
        %4196 = vrot.lane.b32.xlu0 %v954, 96
        %v4197 = vpop.permute.xlu0 %4196
        %4198 = vrot.lane.b32.xlu0 %v956, 96
        %v4199 = vpop.permute.xlu0 %4198
        %4200 = vrot.lane.b32.xlu0 %v958, 96
        %v4201 = vpop.permute.xlu0 %4200
        %4202 = vrot.lane.b32.xlu0 %v968, 96
        %v4203 = vpop.permute.xlu0 %4202
        %4204 = vrot.lane.b32.xlu0 %v970, 96
        %v4205 = vpop.permute.xlu0 %4204
        %4206 = vrot.lane.b32.xlu0 %v972, 96
        %v4207 = vpop.permute.xlu0 %4206
        %4208 = vrot.lane.b32.xlu0 %v974, 96
        %v4209 = vpop.permute.xlu0 %4208
        %4210 = vrot.lane.b32.xlu0 %v976, 96
        %v4211 = vpop.permute.xlu0 %4210
        %4212 = vrot.lane.b32.xlu0 %v978, 96
        %v4213 = vpop.permute.xlu0 %4212
        %4214 = vrot.lane.b32.xlu0 %v980, 96
        %v4215 = vpop.permute.xlu0 %4214
        %4216 = vrot.lane.b32.xlu0 %v982, 96
        %v4217 = vpop.permute.xlu0 %4216
        %4218 = vrot.lane.b32.xlu0 %v992, 96
        %v4219 = vpop.permute.xlu0 %4218
        %4220 = vrot.lane.b32.xlu0 %v994, 96
        %v4221 = vpop.permute.xlu0 %4220
        %4222 = vrot.lane.b32.xlu0 %v996, 96
        %v4223 = vpop.permute.xlu0 %4222
        %4224 = vrot.lane.b32.xlu0 %v998, 96
        %v4225 = vpop.permute.xlu0 %4224
        %4226 = vrot.lane.b32.xlu0 %v1000, 96
        %v4227 = vpop.permute.xlu0 %4226
        %4228 = vrot.lane.b32.xlu0 %v1002, 96
        %v4229 = vpop.permute.xlu0 %4228
        %4230 = vrot.lane.b32.xlu0 %v1004, 96
        %v4231 = vpop.permute.xlu0 %4230
        %4232 = vrot.lane.b32.xlu0 %v1006, 96
        %v4233 = vpop.permute.xlu0 %4232
        %4234 = vrot.lane.b32.xlu0 %v1016, 96
        %v4235 = vpop.permute.xlu0 %4234
        %4236 = vrot.lane.b32.xlu0 %v1018, 96
        %v4237 = vpop.permute.xlu0 %4236
        %4238 = vrot.lane.b32.xlu0 %v1020, 96
        %v4239 = vpop.permute.xlu0 %4238
        %4240 = vrot.lane.b32.xlu0 %v1022, 96
        %v4241 = vpop.permute.xlu0 %4240
        %4242 = vrot.lane.b32.xlu0 %v1024, 96
        %v4243 = vpop.permute.xlu0 %4242
        %4244 = vrot.lane.b32.xlu0 %v1026, 96
        %v4245 = vpop.permute.xlu0 %4244
        %4246 = vrot.lane.b32.xlu0 %v1028, 96
        %v4247 = vpop.permute.xlu0 %4246
        %4248 = vrot.lane.b32.xlu0 %v1030, 96
        %v4249 = vpop.permute.xlu0 %4248
        %4250 = vrot.lane.b32.xlu0 %v1040, 96
        %v4251 = vpop.permute.xlu0 %4250
        %4252 = vrot.lane.b32.xlu0 %v1042, 96
        %v4253 = vpop.permute.xlu0 %4252
        %4254 = vrot.lane.b32.xlu0 %v1044, 96
        %v4255 = vpop.permute.xlu0 %4254
        %4256 = vrot.lane.b32.xlu0 %v1046, 96
        %v4257 = vpop.permute.xlu0 %4256
        %4258 = vrot.lane.b32.xlu0 %v1048, 96
        %v4259 = vpop.permute.xlu0 %4258
        %4260 = vrot.lane.b32.xlu0 %v1050, 96
        %v4261 = vpop.permute.xlu0 %4260
        %4262 = vrot.lane.b32.xlu0 %v1052, 96
        %v4263 = vpop.permute.xlu0 %4262
        %4264 = vrot.lane.b32.xlu0 %v1054, 96
        %v4265 = vpop.permute.xlu0 %4264
        %4266 = vrot.lane.b32.xlu0 %v1064, 96
        %v4267 = vpop.permute.xlu0 %4266
        %4268 = vrot.lane.b32.xlu0 %v1066, 96
        %v4269 = vpop.permute.xlu0 %4268
        %4270 = vrot.lane.b32.xlu0 %v1068, 96
        %v4271 = vpop.permute.xlu0 %4270
        %4272 = vrot.lane.b32.xlu0 %v1070, 96
        %v4273 = vpop.permute.xlu0 %4272
        %4274 = vrot.lane.b32.xlu0 %v1072, 96
        %v4275 = vpop.permute.xlu0 %4274
        %4276 = vrot.lane.b32.xlu0 %v1074, 96
        %v4277 = vpop.permute.xlu0 %4276
        %4278 = vrot.lane.b32.xlu0 %v1076, 96
        %v4279 = vpop.permute.xlu0 %4278
        %4280 = vrot.lane.b32.xlu0 %v1078, 96
        %v4281 = vpop.permute.xlu0 %4280
        %4282 = vrot.lane.b32.xlu0 %v1088, 96
        %v4283 = vpop.permute.xlu0 %4282
        %4284 = vrot.lane.b32.xlu0 %v1090, 96
        %v4285 = vpop.permute.xlu0 %4284
        %4286 = vrot.lane.b32.xlu0 %v1092, 96
        %v4287 = vpop.permute.xlu0 %4286
        %4288 = vrot.lane.b32.xlu0 %v1094, 96
        %v4289 = vpop.permute.xlu0 %4288
        %4290 = vrot.lane.b32.xlu0 %v1096, 96
        %v4291 = vpop.permute.xlu0 %4290
        %4292 = vrot.lane.b32.xlu0 %v1098, 96
        %v4293 = vpop.permute.xlu0 %4292
        %4294 = vrot.lane.b32.xlu0 %v1100, 96
        %v4295 = vpop.permute.xlu0 %4294
        %4296 = vrot.lane.b32.xlu0 %v1102, 96
        %v4297 = vpop.permute.xlu0 %4296
        %v4366 = vrot.slane %v1076, 2
        %v4367 = vrot.slane %v1077, 2
        %v4368 = vsel %vm1284, %v4366, %v4367
        %v4369 = vrot.slane %v1078, 2
        %v4370 = vrot.slane %v1079, 2
        %v4371 = vsel %vm1284, %v4369, %v4370
        %v4372 = vrot.slane %v1100, 2
        %v4373 = vrot.slane %v1101, 2
        %v4374 = vsel %vm1284, %v4372, %v4373
        %v4375 = vrot.slane %v1102, 2
        %v4376 = vrot.slane %v1103, 2
        %v4377 = vsel %vm1284, %v4375, %v4376
        %4378 = vrot.lane.b32.xlu0 %v1341, 104
        %v4379 = vpop.permute.xlu0 %4378
        %4380 = vrot.lane.b32.xlu0 %v1344, 104
        %v4381 = vpop.permute.xlu0 %4380
        %4382 = vrot.lane.b32.xlu0 %v1347, 104
        %v4383 = vpop.permute.xlu0 %4382
        %4384 = vrot.lane.b32.xlu0 %v1350, 104
        %v4385 = vpop.permute.xlu0 %4384
        %4386 = vrot.lane.b32.xlu0 %v1353, 104
        %v4387 = vpop.permute.xlu0 %4386
        %4388 = vrot.lane.b32.xlu0 %v1356, 104
        %v4389 = vpop.permute.xlu0 %4388
        %4390 = vrot.lane.b32.xlu0 %v2292, 104
        %v4391 = vpop.permute.xlu0 %4390
        %4392 = vrot.lane.b32.xlu0 %v2295, 104
        %v4393 = vpop.permute.xlu0 %4392
        %4394 = vrot.lane.b32.xlu0 %v1365, 104
        %v4395 = vpop.permute.xlu0 %4394
        %4396 = vrot.lane.b32.xlu0 %v1368, 104
        %v4397 = vpop.permute.xlu0 %4396
        %4398 = vrot.lane.b32.xlu0 %v1371, 104
        %v4399 = vpop.permute.xlu0 %4398
        %4400 = vrot.lane.b32.xlu0 %v1374, 104
        %v4401 = vpop.permute.xlu0 %4400
        %4402 = vrot.lane.b32.xlu0 %v1377, 104
        %v4403 = vpop.permute.xlu0 %4402
        %4404 = vrot.lane.b32.xlu0 %v1380, 104
        %v4405 = vpop.permute.xlu0 %4404
        %4406 = vrot.lane.b32.xlu0 %v2298, 104
        %v4407 = vpop.permute.xlu0 %4406
        %4408 = vrot.lane.b32.xlu0 %v2301, 104
        %v4409 = vpop.permute.xlu0 %4408
        %4410 = vrot.lane.b32.xlu0 %v1389, 104
        %v4411 = vpop.permute.xlu0 %4410
        %4412 = vrot.lane.b32.xlu0 %v1392, 104
        %v4413 = vpop.permute.xlu0 %4412
        %4414 = vrot.lane.b32.xlu0 %v1395, 104
        %v4415 = vpop.permute.xlu0 %4414
        %4416 = vrot.lane.b32.xlu0 %v1398, 104
        %v4417 = vpop.permute.xlu0 %4416
        %4418 = vrot.lane.b32.xlu0 %v1401, 104
        %v4419 = vpop.permute.xlu0 %4418
        %4420 = vrot.lane.b32.xlu0 %v1404, 104
        %v4421 = vpop.permute.xlu0 %4420
        %4422 = vrot.lane.b32.xlu0 %v2304, 104
        %v4423 = vpop.permute.xlu0 %4422
        %4424 = vrot.lane.b32.xlu0 %v2307, 104
        %v4425 = vpop.permute.xlu0 %4424
        %4426 = vrot.lane.b32.xlu0 %v1413, 104
        %v4427 = vpop.permute.xlu0 %4426
        %4428 = vrot.lane.b32.xlu0 %v1416, 104
        %v4429 = vpop.permute.xlu0 %4428
        %4430 = vrot.lane.b32.xlu0 %v1419, 104
        %v4431 = vpop.permute.xlu0 %4430
        %4432 = vrot.lane.b32.xlu0 %v1422, 104
        %v4433 = vpop.permute.xlu0 %4432
        %4434 = vrot.lane.b32.xlu0 %v1425, 104
        %v4435 = vpop.permute.xlu0 %4434
        %4436 = vrot.lane.b32.xlu0 %v1428, 104
        %v4437 = vpop.permute.xlu0 %4436
        %4438 = vrot.lane.b32.xlu0 %v2310, 104
        %v4439 = vpop.permute.xlu0 %4438
        %4440 = vrot.lane.b32.xlu0 %v2313, 104
        %v4441 = vpop.permute.xlu0 %4440
        %4442 = vrot.lane.b32.xlu0 %v1437, 104
        %v4443 = vpop.permute.xlu0 %4442
        %4444 = vrot.lane.b32.xlu0 %v1440, 104
        %v4445 = vpop.permute.xlu0 %4444
        %4446 = vrot.lane.b32.xlu0 %v1443, 104
        %v4447 = vpop.permute.xlu0 %4446
        %4448 = vrot.lane.b32.xlu0 %v1446, 104
        %v4449 = vpop.permute.xlu0 %4448
        %4450 = vrot.lane.b32.xlu0 %v1449, 104
        %v4451 = vpop.permute.xlu0 %4450
        %4452 = vrot.lane.b32.xlu0 %v1452, 104
        %v4453 = vpop.permute.xlu0 %4452
        %4454 = vrot.lane.b32.xlu0 %v2316, 104
        %v4455 = vpop.permute.xlu0 %4454
        %4456 = vrot.lane.b32.xlu0 %v2319, 104
        %v4457 = vpop.permute.xlu0 %4456
        %4458 = vrot.lane.b32.xlu0 %v1461, 104
        %v4459 = vpop.permute.xlu0 %4458
        %4460 = vrot.lane.b32.xlu0 %v1464, 104
        %v4461 = vpop.permute.xlu0 %4460
        %4462 = vrot.lane.b32.xlu0 %v1467, 104
        %v4463 = vpop.permute.xlu0 %4462
        %4464 = vrot.lane.b32.xlu0 %v1470, 104
        %v4465 = vpop.permute.xlu0 %4464
        %4466 = vrot.lane.b32.xlu0 %v1473, 104
        %v4467 = vpop.permute.xlu0 %4466
        %4468 = vrot.lane.b32.xlu0 %v1476, 104
        %v4469 = vpop.permute.xlu0 %4468
        %4470 = vrot.lane.b32.xlu0 %v2322, 104
        %v4471 = vpop.permute.xlu0 %4470
        %4472 = vrot.lane.b32.xlu0 %v2325, 104
        %v4473 = vpop.permute.xlu0 %4472
        %4474 = vrot.lane.b32.xlu0 %v3694, 104
        %v4475 = vpop.permute.xlu0 %4474
        %4476 = vrot.lane.b32.xlu0 %v3697, 104
        %v4477 = vpop.permute.xlu0 %4476
        %4478 = vrot.lane.b32.xlu0 %v3700, 104
        %v4479 = vpop.permute.xlu0 %4478
        %4480 = vrot.lane.b32.xlu0 %v3703, 104
        %v4481 = vpop.permute.xlu0 %4480
        %4482 = vrot.lane.b32.xlu0 %v3706, 104
        %v4483 = vpop.permute.xlu0 %4482
        %4484 = vrot.lane.b32.xlu0 %v3709, 104
        %v4485 = vpop.permute.xlu0 %4484
        %4486 = vrot.lane.b32.xlu0 %v4368, 104
        %v4487 = vpop.permute.xlu0 %4486
        %4488 = vrot.lane.b32.xlu0 %v4371, 104
        %v4489 = vpop.permute.xlu0 %4488
        %4490 = vrot.lane.b32.xlu0 %v3718, 104
        %v4491 = vpop.permute.xlu0 %4490
        %4492 = vrot.lane.b32.xlu0 %v3721, 104
        %v4493 = vpop.permute.xlu0 %4492
        %4494 = vrot.lane.b32.xlu0 %v3724, 104
        %v4495 = vpop.permute.xlu0 %4494
        %4496 = vrot.lane.b32.xlu0 %v3727, 104
        %v4497 = vpop.permute.xlu0 %4496
        %4498 = vrot.lane.b32.xlu0 %v3730, 104
        %v4499 = vpop.permute.xlu0 %4498
        %4500 = vrot.lane.b32.xlu0 %v3733, 104
        %v4501 = vpop.permute.xlu0 %4500
        %4502 = vrot.lane.b32.xlu0 %v4374, 104
        %v4503 = vpop.permute.xlu0 %4502
        %4504 = vrot.lane.b32.xlu0 %v4377, 104
        %v4505 = vpop.permute.xlu0 %4504
        %v4570 = vrot.slane %v1076, 4
        %v4571 = vrot.slane %v1077, 4
        %v4572 = vsel %vm1669, %v4570, %v4571
        %v4573 = vrot.slane %v1078, 4
        %v4574 = vrot.slane %v1079, 4
        %v4575 = vsel %vm1669, %v4573, %v4574
        %v4576 = vrot.slane %v1100, 4
        %v4577 = vrot.slane %v1101, 4
        %v4578 = vsel %vm1669, %v4576, %v4577
        %v4579 = vrot.slane %v1102, 4
        %v4580 = vrot.slane %v1103, 4
        %v4581 = vsel %vm1669, %v4579, %v4580
        %4582 = vrot.lane.b32.xlu0 %v1726, 112
        %v4583 = vpop.permute.xlu0 %4582
        %4584 = vrot.lane.b32.xlu0 %v1729, 112
        %v4585 = vpop.permute.xlu0 %4584
        %4586 = vrot.lane.b32.xlu0 %v1732, 112
        %v4587 = vpop.permute.xlu0 %4586
        %4588 = vrot.lane.b32.xlu0 %v1735, 112
        %v4589 = vpop.permute.xlu0 %4588
        %4590 = vrot.lane.b32.xlu0 %v1738, 112
        %v4591 = vpop.permute.xlu0 %4590
        %4592 = vrot.lane.b32.xlu0 %v1741, 112
        %v4593 = vpop.permute.xlu0 %4592
        %4594 = vrot.lane.b32.xlu0 %v2532, 112
        %v4595 = vpop.permute.xlu0 %4594
        %4596 = vrot.lane.b32.xlu0 %v2535, 112
        %v4597 = vpop.permute.xlu0 %4596
        %4598 = vrot.lane.b32.xlu0 %v1750, 112
        %v4599 = vpop.permute.xlu0 %4598
        %4600 = vrot.lane.b32.xlu0 %v1753, 112
        %v4601 = vpop.permute.xlu0 %4600
        %4602 = vrot.lane.b32.xlu0 %v1756, 112
        %v4603 = vpop.permute.xlu0 %4602
        %4604 = vrot.lane.b32.xlu0 %v1759, 112
        %v4605 = vpop.permute.xlu0 %4604
        %4606 = vrot.lane.b32.xlu0 %v1762, 112
        %v4607 = vpop.permute.xlu0 %4606
        %4608 = vrot.lane.b32.xlu0 %v1765, 112
        %v4609 = vpop.permute.xlu0 %4608
        %4610 = vrot.lane.b32.xlu0 %v2538, 112
        %v4611 = vpop.permute.xlu0 %4610
        %4612 = vrot.lane.b32.xlu0 %v2541, 112
        %v4613 = vpop.permute.xlu0 %4612
        %4614 = vrot.lane.b32.xlu0 %v1774, 112
        %v4615 = vpop.permute.xlu0 %4614
        %4616 = vrot.lane.b32.xlu0 %v1777, 112
        %v4617 = vpop.permute.xlu0 %4616
        %4618 = vrot.lane.b32.xlu0 %v1780, 112
        %v4619 = vpop.permute.xlu0 %4618
        %4620 = vrot.lane.b32.xlu0 %v1783, 112
        %v4621 = vpop.permute.xlu0 %4620
        %4622 = vrot.lane.b32.xlu0 %v1786, 112
        %v4623 = vpop.permute.xlu0 %4622
        %4624 = vrot.lane.b32.xlu0 %v1789, 112
        %v4625 = vpop.permute.xlu0 %4624
        %4626 = vrot.lane.b32.xlu0 %v2544, 112
        %v4627 = vpop.permute.xlu0 %4626
        %4628 = vrot.lane.b32.xlu0 %v2547, 112
        %v4629 = vpop.permute.xlu0 %4628
        %4630 = vrot.lane.b32.xlu0 %v1798, 112
        %v4631 = vpop.permute.xlu0 %4630
        %4632 = vrot.lane.b32.xlu0 %v1801, 112
        %v4633 = vpop.permute.xlu0 %4632
        %4634 = vrot.lane.b32.xlu0 %v1804, 112
        %v4635 = vpop.permute.xlu0 %4634
        %4636 = vrot.lane.b32.xlu0 %v1807, 112
        %v4637 = vpop.permute.xlu0 %4636
        %4638 = vrot.lane.b32.xlu0 %v1810, 112
        %v4639 = vpop.permute.xlu0 %4638
        %4640 = vrot.lane.b32.xlu0 %v1813, 112
        %v4641 = vpop.permute.xlu0 %4640
        %4642 = vrot.lane.b32.xlu0 %v2550, 112
        %v4643 = vpop.permute.xlu0 %4642
        %4644 = vrot.lane.b32.xlu0 %v2553, 112
        %v4645 = vpop.permute.xlu0 %4644
        %4646 = vrot.lane.b32.xlu0 %v1822, 112
        %v4647 = vpop.permute.xlu0 %4646
        %4648 = vrot.lane.b32.xlu0 %v1825, 112
        %v4649 = vpop.permute.xlu0 %4648
        %4650 = vrot.lane.b32.xlu0 %v1828, 112
        %v4651 = vpop.permute.xlu0 %4650
        %4652 = vrot.lane.b32.xlu0 %v1831, 112
        %v4653 = vpop.permute.xlu0 %4652
        %4654 = vrot.lane.b32.xlu0 %v1834, 112
        %v4655 = vpop.permute.xlu0 %4654
        %4656 = vrot.lane.b32.xlu0 %v1837, 112
        %v4657 = vpop.permute.xlu0 %4656
        %4658 = vrot.lane.b32.xlu0 %v2556, 112
        %v4659 = vpop.permute.xlu0 %4658
        %4660 = vrot.lane.b32.xlu0 %v2559, 112
        %v4661 = vpop.permute.xlu0 %4660
        %4662 = vrot.lane.b32.xlu0 %v1846, 112
        %v4663 = vpop.permute.xlu0 %4662
        %4664 = vrot.lane.b32.xlu0 %v1849, 112
        %v4665 = vpop.permute.xlu0 %4664
        %4666 = vrot.lane.b32.xlu0 %v1852, 112
        %v4667 = vpop.permute.xlu0 %4666
        %4668 = vrot.lane.b32.xlu0 %v1855, 112
        %v4669 = vpop.permute.xlu0 %4668
        %4670 = vrot.lane.b32.xlu0 %v1858, 112
        %v4671 = vpop.permute.xlu0 %4670
        %4672 = vrot.lane.b32.xlu0 %v1861, 112
        %v4673 = vpop.permute.xlu0 %4672
        %4674 = vrot.lane.b32.xlu0 %v2562, 112
        %v4675 = vpop.permute.xlu0 %4674
        %4676 = vrot.lane.b32.xlu0 %v2565, 112
        %v4677 = vpop.permute.xlu0 %4676
        %4678 = vrot.lane.b32.xlu0 %v3934, 112
        %v4679 = vpop.permute.xlu0 %4678
        %4680 = vrot.lane.b32.xlu0 %v3937, 112
        %v4681 = vpop.permute.xlu0 %4680
        %4682 = vrot.lane.b32.xlu0 %v3940, 112
        %v4683 = vpop.permute.xlu0 %4682
        %4684 = vrot.lane.b32.xlu0 %v3943, 112
        %v4685 = vpop.permute.xlu0 %4684
        %4686 = vrot.lane.b32.xlu0 %v3946, 112
        %v4687 = vpop.permute.xlu0 %4686
        %4688 = vrot.lane.b32.xlu0 %v3949, 112
        %v4689 = vpop.permute.xlu0 %4688
        %4690 = vrot.lane.b32.xlu0 %v4572, 112
        %v4691 = vpop.permute.xlu0 %4690
        %4692 = vrot.lane.b32.xlu0 %v4575, 112
        %v4693 = vpop.permute.xlu0 %4692
        %4694 = vrot.lane.b32.xlu0 %v3958, 112
        %v4695 = vpop.permute.xlu0 %4694
        %4696 = vrot.lane.b32.xlu0 %v3961, 112
        %v4697 = vpop.permute.xlu0 %4696
        %4698 = vrot.lane.b32.xlu0 %v3964, 112
        %v4699 = vpop.permute.xlu0 %4698
        %4700 = vrot.lane.b32.xlu0 %v3967, 112
        %v4701 = vpop.permute.xlu0 %4700
        %4702 = vrot.lane.b32.xlu0 %v3970, 112
        %v4703 = vpop.permute.xlu0 %4702
        %4704 = vrot.lane.b32.xlu0 %v3973, 112
        %v4705 = vpop.permute.xlu0 %4704
        %4706 = vrot.lane.b32.xlu0 %v4578, 112
        %v4707 = vpop.permute.xlu0 %4706
        %4708 = vrot.lane.b32.xlu0 %v4581, 112
        %v4709 = vpop.permute.xlu0 %4708
        %4778 = vrot.lane.b32.xlu0 %v924, 120
        %v4779 = vpop.permute.xlu0 %4778
        %4780 = vrot.lane.b32.xlu0 %v926, 120
        %v4781 = vpop.permute.xlu0 %4780
        %4782 = vrot.lane.b32.xlu0 %v928, 120
        %v4783 = vpop.permute.xlu0 %4782
        %4784 = vrot.lane.b32.xlu0 %v930, 120
        %v4785 = vpop.permute.xlu0 %4784
        %4786 = vrot.lane.b32.xlu0 %v932, 120
        %v4787 = vpop.permute.xlu0 %4786
        %4788 = vrot.lane.b32.xlu0 %v934, 120
        %v4789 = vpop.permute.xlu0 %4788
        %4790 = vrot.lane.b32.xlu0 %v936, 120
        %v4791 = vpop.permute.xlu0 %4790
        %4792 = vrot.lane.b32.xlu0 %v938, 120
        %v4793 = vpop.permute.xlu0 %4792
        %4794 = vrot.lane.b32.xlu0 %v948, 120
        %v4795 = vpop.permute.xlu0 %4794
        %4796 = vrot.lane.b32.xlu0 %v950, 120
        %v4797 = vpop.permute.xlu0 %4796
        %4798 = vrot.lane.b32.xlu0 %v952, 120
        %v4799 = vpop.permute.xlu0 %4798
        %4800 = vrot.lane.b32.xlu0 %v954, 120
        %v4801 = vpop.permute.xlu0 %4800
        %4802 = vrot.lane.b32.xlu0 %v956, 120
        %v4803 = vpop.permute.xlu0 %4802
        %4804 = vrot.lane.b32.xlu0 %v958, 120
        %v4805 = vpop.permute.xlu0 %4804
        %4806 = vrot.lane.b32.xlu0 %v960, 120
        %v4807 = vpop.permute.xlu0 %4806
        %4808 = vrot.lane.b32.xlu0 %v962, 120
        %v4809 = vpop.permute.xlu0 %4808
        %4810 = vrot.lane.b32.xlu0 %v972, 120
        %v4811 = vpop.permute.xlu0 %4810
        %4812 = vrot.lane.b32.xlu0 %v974, 120
        %v4813 = vpop.permute.xlu0 %4812
        %4814 = vrot.lane.b32.xlu0 %v976, 120
        %v4815 = vpop.permute.xlu0 %4814
        %4816 = vrot.lane.b32.xlu0 %v978, 120
        %v4817 = vpop.permute.xlu0 %4816
        %4818 = vrot.lane.b32.xlu0 %v980, 120
        %v4819 = vpop.permute.xlu0 %4818
        %4820 = vrot.lane.b32.xlu0 %v982, 120
        %v4821 = vpop.permute.xlu0 %4820
        %4822 = vrot.lane.b32.xlu0 %v984, 120
        %v4823 = vpop.permute.xlu0 %4822
        %4824 = vrot.lane.b32.xlu0 %v986, 120
        %v4825 = vpop.permute.xlu0 %4824
        %4826 = vrot.lane.b32.xlu0 %v996, 120
        %v4827 = vpop.permute.xlu0 %4826
        %4828 = vrot.lane.b32.xlu0 %v998, 120
        %v4829 = vpop.permute.xlu0 %4828
        %4830 = vrot.lane.b32.xlu0 %v1000, 120
        %v4831 = vpop.permute.xlu0 %4830
        %4832 = vrot.lane.b32.xlu0 %v1002, 120
        %v4833 = vpop.permute.xlu0 %4832
        %4834 = vrot.lane.b32.xlu0 %v1004, 120
        %v4835 = vpop.permute.xlu0 %4834
        %4836 = vrot.lane.b32.xlu0 %v1006, 120
        %v4837 = vpop.permute.xlu0 %4836
        %4838 = vrot.lane.b32.xlu0 %v1008, 120
        %v4839 = vpop.permute.xlu0 %4838
        %4840 = vrot.lane.b32.xlu0 %v1010, 120
        %v4841 = vpop.permute.xlu0 %4840
        %4842 = vrot.lane.b32.xlu0 %v1020, 120
        %v4843 = vpop.permute.xlu0 %4842
        %4844 = vrot.lane.b32.xlu0 %v1022, 120
        %v4845 = vpop.permute.xlu0 %4844
        %4846 = vrot.lane.b32.xlu0 %v1024, 120
        %v4847 = vpop.permute.xlu0 %4846
        %4848 = vrot.lane.b32.xlu0 %v1026, 120
        %v4849 = vpop.permute.xlu0 %4848
        %4850 = vrot.lane.b32.xlu0 %v1028, 120
        %v4851 = vpop.permute.xlu0 %4850
        %4852 = vrot.lane.b32.xlu0 %v1030, 120
        %v4853 = vpop.permute.xlu0 %4852
        %4854 = vrot.lane.b32.xlu0 %v1032, 120
        %v4855 = vpop.permute.xlu0 %4854
        %4856 = vrot.lane.b32.xlu0 %v1034, 120
        %v4857 = vpop.permute.xlu0 %4856
        %4858 = vrot.lane.b32.xlu0 %v1044, 120
        %v4859 = vpop.permute.xlu0 %4858
        %4860 = vrot.lane.b32.xlu0 %v1046, 120
        %v4861 = vpop.permute.xlu0 %4860
        %4862 = vrot.lane.b32.xlu0 %v1048, 120
        %v4863 = vpop.permute.xlu0 %4862
        %4864 = vrot.lane.b32.xlu0 %v1050, 120
        %v4865 = vpop.permute.xlu0 %4864
        %4866 = vrot.lane.b32.xlu0 %v1052, 120
        %v4867 = vpop.permute.xlu0 %4866
        %4868 = vrot.lane.b32.xlu0 %v1054, 120
        %v4869 = vpop.permute.xlu0 %4868
        %4870 = vrot.lane.b32.xlu0 %v1056, 120
        %v4871 = vpop.permute.xlu0 %4870
        %4872 = vrot.lane.b32.xlu0 %v1058, 120
        %v4873 = vpop.permute.xlu0 %4872
        %4874 = vrot.lane.b32.xlu0 %v1068, 120
        %v4875 = vpop.permute.xlu0 %4874
        %4876 = vrot.lane.b32.xlu0 %v1070, 120
        %v4877 = vpop.permute.xlu0 %4876
        %4878 = vrot.lane.b32.xlu0 %v1072, 120
        %v4879 = vpop.permute.xlu0 %4878
        %4880 = vrot.lane.b32.xlu0 %v1074, 120
        %v4881 = vpop.permute.xlu0 %4880
        %4882 = vrot.lane.b32.xlu0 %v1076, 120
        %v4883 = vpop.permute.xlu0 %4882
        %4884 = vrot.lane.b32.xlu0 %v1078, 120
        %v4885 = vpop.permute.xlu0 %4884
        %4886 = vrot.lane.b32.xlu0 %v1080, 120
        %v4887 = vpop.permute.xlu0 %4886
        %4888 = vrot.lane.b32.xlu0 %v1082, 120
        %v4889 = vpop.permute.xlu0 %4888
        %4890 = vrot.lane.b32.xlu0 %v1092, 120
        %v4891 = vpop.permute.xlu0 %4890
        %4892 = vrot.lane.b32.xlu0 %v1094, 120
        %v4893 = vpop.permute.xlu0 %4892
        %4894 = vrot.lane.b32.xlu0 %v1096, 120
        %v4895 = vpop.permute.xlu0 %4894
        %4896 = vrot.lane.b32.xlu0 %v1098, 120
        %v4897 = vpop.permute.xlu0 %4896
        %4898 = vrot.lane.b32.xlu0 %v1100, 120
        %v4899 = vpop.permute.xlu0 %4898
        %4900 = vrot.lane.b32.xlu0 %v1102, 120
        %v4901 = vpop.permute.xlu0 %4900
        %4902 = vrot.lane.b32.xlu0 %v1104, 120
        %v4903 = vpop.permute.xlu0 %4902
        %4904 = vrot.lane.b32.xlu0 %v1106, 120
        %v4905 = vpop.permute.xlu0 %4904
        %v4970 = vsel %vm249, %v868, %v1478
        %v4971 = vsel %vm249, %v870, %v1480
        %v4972 = vsel %vm249, %v872, %v1482
        %v4973 = vsel %vm249, %v874, %v1484
        %v4974 = vsel %vm249, %v876, %v1486
        %v4975 = vsel %vm249, %v878, %v1488
        %v4976 = vsel %vm249, %v880, %v1490
        %v4977 = vsel %vm249, %v882, %v1492
        %v4978 = vsel %vm249, %v892, %v1494
        %v4979 = vsel %vm249, %v894, %v1496
        %v4980 = vsel %vm249, %v896, %v1498
        %v4981 = vsel %vm249, %v898, %v1500
        %v4982 = vsel %vm249, %v900, %v1502
        %v4983 = vsel %vm249, %v902, %v1504
        %v4984 = vsel %vm249, %v904, %v1506
        %v4985 = vsel %vm249, %v906, %v1508
        %v4986 = vsel %vm249, %v916, %v1510
        %v4987 = vsel %vm249, %v918, %v1512
        %v4988 = vsel %vm249, %v920, %v1514
        %v4989 = vsel %vm249, %v922, %v1516
        %v4990 = vsel %vm249, %v924, %v1518
        %v4991 = vsel %vm249, %v926, %v1520
        %v4992 = vsel %vm249, %v928, %v1522
        %v4993 = vsel %vm249, %v930, %v1524
        %v4994 = vsel %vm249, %v940, %v1526
        %v4995 = vsel %vm249, %v942, %v1528
        %v4996 = vsel %vm249, %v944, %v1530
        %v4997 = vsel %vm249, %v946, %v1532
        %v4998 = vsel %vm249, %v948, %v1534
        %v4999 = vsel %vm249, %v950, %v1536
        %v5000 = vsel %vm249, %v952, %v1538
        %v5001 = vsel %vm249, %v954, %v1540
        %v5002 = vsel %vm249, %v964, %v1542
        %v5003 = vsel %vm249, %v966, %v1544
        %v5004 = vsel %vm249, %v968, %v1546
        %v5005 = vsel %vm249, %v970, %v1548
        %v5006 = vsel %vm249, %v972, %v1550
        %v5007 = vsel %vm249, %v974, %v1552
        %v5008 = vsel %vm249, %v976, %v1554
        %v5009 = vsel %vm249, %v978, %v1556
        %v5010 = vsel %vm249, %v988, %v1558
        %v5011 = vsel %vm249, %v990, %v1560
        %v5012 = vsel %vm249, %v992, %v1562
        %v5013 = vsel %vm249, %v994, %v1564
        %v5014 = vsel %vm249, %v996, %v1566
        %v5015 = vsel %vm249, %v998, %v1568
        %v5016 = vsel %vm249, %v1000, %v1570
        %v5017 = vsel %vm249, %v1002, %v1572
        %v5018 = vsel %vm249, %v1012, %v1574
        %v5019 = vsel %vm249, %v1014, %v1576
        %v5020 = vsel %vm249, %v1016, %v1578
        %v5021 = vsel %vm249, %v1018, %v1580
        %v5022 = vsel %vm249, %v1020, %v1582
        %v5023 = vsel %vm249, %v1022, %v1584
        %v5024 = vsel %vm249, %v1024, %v1586
        %v5025 = vsel %vm249, %v1026, %v1588
        %v5026 = vsel %vm249, %v1036, %v1590
        %v5027 = vsel %vm249, %v1038, %v1592
        %v5028 = vsel %vm249, %v1040, %v1594
        %v5029 = vsel %vm249, %v1042, %v1596
        %v5030 = vsel %vm249, %v1044, %v1598
        %v5031 = vsel %vm249, %v1046, %v1600
        %v5032 = vsel %vm249, %v1048, %v1602
        %v5033 = vsel %vm249, %v1050, %v1604
        %vm5034 = vcmask 130048
        %v5035 = vsel %vm5034, %v4970, %v1863
        %v5036 = vsel %vm5034, %v4971, %v1865
        %v5037 = vsel %vm5034, %v4972, %v1867
        %v5038 = vsel %vm5034, %v4973, %v1869
        %v5039 = vsel %vm5034, %v4974, %v1871
        %v5040 = vsel %vm5034, %v4975, %v1873
        %v5041 = vsel %vm5034, %v4976, %v1875
        %v5042 = vsel %vm5034, %v4977, %v1877
        %v5043 = vsel %vm5034, %v4978, %v1879
        %v5044 = vsel %vm5034, %v4979, %v1881
        %v5045 = vsel %vm5034, %v4980, %v1883
        %v5046 = vsel %vm5034, %v4981, %v1885
        %v5047 = vsel %vm5034, %v4982, %v1887
        %v5048 = vsel %vm5034, %v4983, %v1889
        %v5049 = vsel %vm5034, %v4984, %v1891
        %v5050 = vsel %vm5034, %v4985, %v1893
        %v5051 = vsel %vm5034, %v4986, %v1895
        %v5052 = vsel %vm5034, %v4987, %v1897
        %v5053 = vsel %vm5034, %v4988, %v1899
        %v5054 = vsel %vm5034, %v4989, %v1901
        %v5055 = vsel %vm5034, %v4990, %v1903
        %v5056 = vsel %vm5034, %v4991, %v1905
        %v5057 = vsel %vm5034, %v4992, %v1907
        %v5058 = vsel %vm5034, %v4993, %v1909
        %v5059 = vsel %vm5034, %v4994, %v1911
        %v5060 = vsel %vm5034, %v4995, %v1913
        %v5061 = vsel %vm5034, %v4996, %v1915
        %v5062 = vsel %vm5034, %v4997, %v1917
        %v5063 = vsel %vm5034, %v4998, %v1919
        %v5064 = vsel %vm5034, %v4999, %v1921
        %v5065 = vsel %vm5034, %v5000, %v1923
        %v5066 = vsel %vm5034, %v5001, %v1925
        %v5067 = vsel %vm5034, %v5002, %v1927
        %v5068 = vsel %vm5034, %v5003, %v1929
        %v5069 = vsel %vm5034, %v5004, %v1931
        %v5070 = vsel %vm5034, %v5005, %v1933
        %v5071 = vsel %vm5034, %v5006, %v1935
        %v5072 = vsel %vm5034, %v5007, %v1937
        %v5073 = vsel %vm5034, %v5008, %v1939
        %v5074 = vsel %vm5034, %v5009, %v1941
        %v5075 = vsel %vm5034, %v5010, %v1943
        %v5076 = vsel %vm5034, %v5011, %v1945
        %v5077 = vsel %vm5034, %v5012, %v1947
        %v5078 = vsel %vm5034, %v5013, %v1949
        %v5079 = vsel %vm5034, %v5014, %v1951
        %v5080 = vsel %vm5034, %v5015, %v1953
        %v5081 = vsel %vm5034, %v5016, %v1955
        %v5082 = vsel %vm5034, %v5017, %v1957
        %v5083 = vsel %vm5034, %v5018, %v1959
        %v5084 = vsel %vm5034, %v5019, %v1961
        %v5085 = vsel %vm5034, %v5020, %v1963
        %v5086 = vsel %vm5034, %v5021, %v1965
        %v5087 = vsel %vm5034, %v5022, %v1967
        %v5088 = vsel %vm5034, %v5023, %v1969
        %v5089 = vsel %vm5034, %v5024, %v1971
        %v5090 = vsel %vm5034, %v5025, %v1973
        %v5091 = vsel %vm5034, %v5026, %v1975
        %v5092 = vsel %vm5034, %v5027, %v1977
        %v5093 = vsel %vm5034, %v5028, %v1979
        %v5094 = vsel %vm5034, %v5029, %v1981
        %v5095 = vsel %vm5034, %v5030, %v1983
        %v5096 = vsel %vm5034, %v5031, %v1985
        %v5097 = vsel %vm5034, %v5032, %v1987
        %v5098 = vsel %vm5034, %v5033, %v1989
        %vm5099 = vcmask 195584
        %v5100 = vsel %vm5099, %v5035, %v2071
        %v5101 = vsel %vm5099, %v5036, %v2073
        %v5102 = vsel %vm5099, %v5037, %v2075
        %v5103 = vsel %vm5099, %v5038, %v2077
        %v5104 = vsel %vm5099, %v5039, %v2079
        %v5105 = vsel %vm5099, %v5040, %v2081
        %v5106 = vsel %vm5099, %v5041, %v2083
        %v5107 = vsel %vm5099, %v5042, %v2085
        %v5108 = vsel %vm5099, %v5043, %v2087
        %v5109 = vsel %vm5099, %v5044, %v2089
        %v5110 = vsel %vm5099, %v5045, %v2091
        %v5111 = vsel %vm5099, %v5046, %v2093
        %v5112 = vsel %vm5099, %v5047, %v2095
        %v5113 = vsel %vm5099, %v5048, %v2097
        %v5114 = vsel %vm5099, %v5049, %v2099
        %v5115 = vsel %vm5099, %v5050, %v2101
        %v5116 = vsel %vm5099, %v5051, %v2103
        %v5117 = vsel %vm5099, %v5052, %v2105
        %v5118 = vsel %vm5099, %v5053, %v2107
        %v5119 = vsel %vm5099, %v5054, %v2109
        %v5120 = vsel %vm5099, %v5055, %v2111
        %v5121 = vsel %vm5099, %v5056, %v2113
        %v5122 = vsel %vm5099, %v5057, %v2115
        %v5123 = vsel %vm5099, %v5058, %v2117
        %v5124 = vsel %vm5099, %v5059, %v2119
        %v5125 = vsel %vm5099, %v5060, %v2121
        %v5126 = vsel %vm5099, %v5061, %v2123
        %v5127 = vsel %vm5099, %v5062, %v2125
        %v5128 = vsel %vm5099, %v5063, %v2127
        %v5129 = vsel %vm5099, %v5064, %v2129
        %v5130 = vsel %vm5099, %v5065, %v2131
        %v5131 = vsel %vm5099, %v5066, %v2133
        %v5132 = vsel %vm5099, %v5067, %v2135
        %v5133 = vsel %vm5099, %v5068, %v2137
        %v5134 = vsel %vm5099, %v5069, %v2139
        %v5135 = vsel %vm5099, %v5070, %v2141
        %v5136 = vsel %vm5099, %v5071, %v2143
        %v5137 = vsel %vm5099, %v5072, %v2145
        %v5138 = vsel %vm5099, %v5073, %v2147
        %v5139 = vsel %vm5099, %v5074, %v2149
        %v5140 = vsel %vm5099, %v5075, %v2151
        %v5141 = vsel %vm5099, %v5076, %v2153
        %v5142 = vsel %vm5099, %v5077, %v2155
        %v5143 = vsel %vm5099, %v5078, %v2157
        %v5144 = vsel %vm5099, %v5079, %v2159
        %v5145 = vsel %vm5099, %v5080, %v2161
        %v5146 = vsel %vm5099, %v5081, %v2163
        %v5147 = vsel %vm5099, %v5082, %v2165
        %v5148 = vsel %vm5099, %v5083, %v2167
        %v5149 = vsel %vm5099, %v5084, %v2169
        %v5150 = vsel %vm5099, %v5085, %v2171
        %v5151 = vsel %vm5099, %v5086, %v2173
        %v5152 = vsel %vm5099, %v5087, %v2175
        %v5153 = vsel %vm5099, %v5088, %v2177
        %v5154 = vsel %vm5099, %v5089, %v2179
        %v5155 = vsel %vm5099, %v5090, %v2181
        %v5156 = vsel %vm5099, %v5091, %v2183
        %v5157 = vsel %vm5099, %v5092, %v2185
        %v5158 = vsel %vm5099, %v5093, %v2187
        %v5159 = vsel %vm5099, %v5094, %v2189
        %v5160 = vsel %vm5099, %v5095, %v2191
        %v5161 = vsel %vm5099, %v5096, %v2193
        %v5162 = vsel %vm5099, %v5097, %v2195
        %v5163 = vsel %vm5099, %v5098, %v2197
        %vm5164 = vcmask 261120
        %v5165 = vsel %vm5164, %v5100, %v2327
        %v5166 = vsel %vm5164, %v5101, %v2329
        %v5167 = vsel %vm5164, %v5102, %v2331
        %v5168 = vsel %vm5164, %v5103, %v2333
        %v5169 = vsel %vm5164, %v5104, %v2335
        %v5170 = vsel %vm5164, %v5105, %v2337
        %v5171 = vsel %vm5164, %v5106, %v2339
        %v5172 = vsel %vm5164, %v5107, %v2341
        %v5173 = vsel %vm5164, %v5108, %v2343
        %v5174 = vsel %vm5164, %v5109, %v2345
        %v5175 = vsel %vm5164, %v5110, %v2347
        %v5176 = vsel %vm5164, %v5111, %v2349
        %v5177 = vsel %vm5164, %v5112, %v2351
        %v5178 = vsel %vm5164, %v5113, %v2353
        %v5179 = vsel %vm5164, %v5114, %v2355
        %v5180 = vsel %vm5164, %v5115, %v2357
        %v5181 = vsel %vm5164, %v5116, %v2359
        %v5182 = vsel %vm5164, %v5117, %v2361
        %v5183 = vsel %vm5164, %v5118, %v2363
        %v5184 = vsel %vm5164, %v5119, %v2365
        %v5185 = vsel %vm5164, %v5120, %v2367
        %v5186 = vsel %vm5164, %v5121, %v2369
        %v5187 = vsel %vm5164, %v5122, %v2371
        %v5188 = vsel %vm5164, %v5123, %v2373
        %v5189 = vsel %vm5164, %v5124, %v2375
        %v5190 = vsel %vm5164, %v5125, %v2377
        %v5191 = vsel %vm5164, %v5126, %v2379
        %v5192 = vsel %vm5164, %v5127, %v2381
        %v5193 = vsel %vm5164, %v5128, %v2383
        %v5194 = vsel %vm5164, %v5129, %v2385
        %v5195 = vsel %vm5164, %v5130, %v2387
        %v5196 = vsel %vm5164, %v5131, %v2389
        %v5197 = vsel %vm5164, %v5132, %v2391
        %v5198 = vsel %vm5164, %v5133, %v2393
        %v5199 = vsel %vm5164, %v5134, %v2395
        %v5200 = vsel %vm5164, %v5135, %v2397
        %v5201 = vsel %vm5164, %v5136, %v2399
        %v5202 = vsel %vm5164, %v5137, %v2401
        %v5203 = vsel %vm5164, %v5138, %v2403
        %v5204 = vsel %vm5164, %v5139, %v2405
        %v5205 = vsel %vm5164, %v5140, %v2407
        %v5206 = vsel %vm5164, %v5141, %v2409
        %v5207 = vsel %vm5164, %v5142, %v2411
        %v5208 = vsel %vm5164, %v5143, %v2413
        %v5209 = vsel %vm5164, %v5144, %v2415
        %v5210 = vsel %vm5164, %v5145, %v2417
        %v5211 = vsel %vm5164, %v5146, %v2419
        %v5212 = vsel %vm5164, %v5147, %v2421
        %v5213 = vsel %vm5164, %v5148, %v2423
        %v5214 = vsel %vm5164, %v5149, %v2425
        %v5215 = vsel %vm5164, %v5150, %v2427
        %v5216 = vsel %vm5164, %v5151, %v2429
        %v5217 = vsel %vm5164, %v5152, %v2431
        %v5218 = vsel %vm5164, %v5153, %v2433
        %v5219 = vsel %vm5164, %v5154, %v2435
        %v5220 = vsel %vm5164, %v5155, %v2437
        %v5221 = vsel %vm5164, %v5156, %v2439
        %v5222 = vsel %vm5164, %v5157, %v2441
        %v5223 = vsel %vm5164, %v5158, %v2443
        %v5224 = vsel %vm5164, %v5159, %v2445
        %v5225 = vsel %vm5164, %v5160, %v2447
        %v5226 = vsel %vm5164, %v5161, %v2449
        %v5227 = vsel %vm5164, %v5162, %v2451
        %v5228 = vsel %vm5164, %v5163, %v2453
        %vm5229 = vcmask 326656
        %v5230 = vsel %vm5229, %v5165, %v2567
        %v5231 = vsel %vm5229, %v5166, %v2569
        %v5232 = vsel %vm5229, %v5167, %v2571
        %v5233 = vsel %vm5229, %v5168, %v2573
        %v5234 = vsel %vm5229, %v5169, %v2575
        %v5235 = vsel %vm5229, %v5170, %v2577
        %v5236 = vsel %vm5229, %v5171, %v2579
        %v5237 = vsel %vm5229, %v5172, %v2581
        %v5238 = vsel %vm5229, %v5173, %v2583
        %v5239 = vsel %vm5229, %v5174, %v2585
        %v5240 = vsel %vm5229, %v5175, %v2587
        %v5241 = vsel %vm5229, %v5176, %v2589
        %v5242 = vsel %vm5229, %v5177, %v2591
        %v5243 = vsel %vm5229, %v5178, %v2593
        %v5244 = vsel %vm5229, %v5179, %v2595
        %v5245 = vsel %vm5229, %v5180, %v2597
        %v5246 = vsel %vm5229, %v5181, %v2599
        %v5247 = vsel %vm5229, %v5182, %v2601
        %v5248 = vsel %vm5229, %v5183, %v2603
        %v5249 = vsel %vm5229, %v5184, %v2605
        %v5250 = vsel %vm5229, %v5185, %v2607
        %v5251 = vsel %vm5229, %v5186, %v2609
        %v5252 = vsel %vm5229, %v5187, %v2611
        %v5253 = vsel %vm5229, %v5188, %v2613
        %v5254 = vsel %vm5229, %v5189, %v2615
        %v5255 = vsel %vm5229, %v5190, %v2617
        %v5256 = vsel %vm5229, %v5191, %v2619
        %v5257 = vsel %vm5229, %v5192, %v2621
        %v5258 = vsel %vm5229, %v5193, %v2623
        %v5259 = vsel %vm5229, %v5194, %v2625
        %v5260 = vsel %vm5229, %v5195, %v2627
        %v5261 = vsel %vm5229, %v5196, %v2629
        %v5262 = vsel %vm5229, %v5197, %v2631
        %v5263 = vsel %vm5229, %v5198, %v2633
        %v5264 = vsel %vm5229, %v5199, %v2635
        %v5265 = vsel %vm5229, %v5200, %v2637
        %v5266 = vsel %vm5229, %v5201, %v2639
        %v5267 = vsel %vm5229, %v5202, %v2641
        %v5268 = vsel %vm5229, %v5203, %v2643
        %v5269 = vsel %vm5229, %v5204, %v2645
        %v5270 = vsel %vm5229, %v5205, %v2647
        %v5271 = vsel %vm5229, %v5206, %v2649
        %v5272 = vsel %vm5229, %v5207, %v2651
        %v5273 = vsel %vm5229, %v5208, %v2653
        %v5274 = vsel %vm5229, %v5209, %v2655
        %v5275 = vsel %vm5229, %v5210, %v2657
        %v5276 = vsel %vm5229, %v5211, %v2659
        %v5277 = vsel %vm5229, %v5212, %v2661
        %v5278 = vsel %vm5229, %v5213, %v2663
        %v5279 = vsel %vm5229, %v5214, %v2665
        %v5280 = vsel %vm5229, %v5215, %v2667
        %v5281 = vsel %vm5229, %v5216, %v2669
        %v5282 = vsel %vm5229, %v5217, %v2671
        %v5283 = vsel %vm5229, %v5218, %v2673
        %v5284 = vsel %vm5229, %v5219, %v2675
        %v5285 = vsel %vm5229, %v5220, %v2677
        %v5286 = vsel %vm5229, %v5221, %v2679
        %v5287 = vsel %vm5229, %v5222, %v2681
        %v5288 = vsel %vm5229, %v5223, %v2683
        %v5289 = vsel %vm5229, %v5224, %v2685
        %v5290 = vsel %vm5229, %v5225, %v2687
        %v5291 = vsel %vm5229, %v5226, %v2689
        %v5292 = vsel %vm5229, %v5227, %v2691
        %v5293 = vsel %vm5229, %v5228, %v2693
        %vm5294 = vcmask 392192
        %v5295 = vsel %vm5294, %v5230, %v2775
        %v5296 = vsel %vm5294, %v5231, %v2777
        %v5297 = vsel %vm5294, %v5232, %v2779
        %v5298 = vsel %vm5294, %v5233, %v2781
        %v5299 = vsel %vm5294, %v5234, %v2783
        %v5300 = vsel %vm5294, %v5235, %v2785
        %v5301 = vsel %vm5294, %v5236, %v2787
        %v5302 = vsel %vm5294, %v5237, %v2789
        %v5303 = vsel %vm5294, %v5238, %v2791
        %v5304 = vsel %vm5294, %v5239, %v2793
        %v5305 = vsel %vm5294, %v5240, %v2795
        %v5306 = vsel %vm5294, %v5241, %v2797
        %v5307 = vsel %vm5294, %v5242, %v2799
        %v5308 = vsel %vm5294, %v5243, %v2801
        %v5309 = vsel %vm5294, %v5244, %v2803
        %v5310 = vsel %vm5294, %v5245, %v2805
        %v5311 = vsel %vm5294, %v5246, %v2807
        %v5312 = vsel %vm5294, %v5247, %v2809
        %v5313 = vsel %vm5294, %v5248, %v2811
        %v5314 = vsel %vm5294, %v5249, %v2813
        %v5315 = vsel %vm5294, %v5250, %v2815
        %v5316 = vsel %vm5294, %v5251, %v2817
        %v5317 = vsel %vm5294, %v5252, %v2819
        %v5318 = vsel %vm5294, %v5253, %v2821
        %v5319 = vsel %vm5294, %v5254, %v2823
        %v5320 = vsel %vm5294, %v5255, %v2825
        %v5321 = vsel %vm5294, %v5256, %v2827
        %v5322 = vsel %vm5294, %v5257, %v2829
        %v5323 = vsel %vm5294, %v5258, %v2831
        %v5324 = vsel %vm5294, %v5259, %v2833
        %v5325 = vsel %vm5294, %v5260, %v2835
        %v5326 = vsel %vm5294, %v5261, %v2837
        %v5327 = vsel %vm5294, %v5262, %v2839
        %v5328 = vsel %vm5294, %v5263, %v2841
        %v5329 = vsel %vm5294, %v5264, %v2843
        %v5330 = vsel %vm5294, %v5265, %v2845
        %v5331 = vsel %vm5294, %v5266, %v2847
        %v5332 = vsel %vm5294, %v5267, %v2849
        %v5333 = vsel %vm5294, %v5268, %v2851
        %v5334 = vsel %vm5294, %v5269, %v2853
        %v5335 = vsel %vm5294, %v5270, %v2855
        %v5336 = vsel %vm5294, %v5271, %v2857
        %v5337 = vsel %vm5294, %v5272, %v2859
        %v5338 = vsel %vm5294, %v5273, %v2861
        %v5339 = vsel %vm5294, %v5274, %v2863
        %v5340 = vsel %vm5294, %v5275, %v2865
        %v5341 = vsel %vm5294, %v5276, %v2867
        %v5342 = vsel %vm5294, %v5277, %v2869
        %v5343 = vsel %vm5294, %v5278, %v2871
        %v5344 = vsel %vm5294, %v5279, %v2873
        %v5345 = vsel %vm5294, %v5280, %v2875
        %v5346 = vsel %vm5294, %v5281, %v2877
        %v5347 = vsel %vm5294, %v5282, %v2879
        %v5348 = vsel %vm5294, %v5283, %v2881
        %v5349 = vsel %vm5294, %v5284, %v2883
        %v5350 = vsel %vm5294, %v5285, %v2885
        %v5351 = vsel %vm5294, %v5286, %v2887
        %v5352 = vsel %vm5294, %v5287, %v2889
        %v5353 = vsel %vm5294, %v5288, %v2891
        %v5354 = vsel %vm5294, %v5289, %v2893
        %v5355 = vsel %vm5294, %v5290, %v2895
        %v5356 = vsel %vm5294, %v5291, %v2897
        %v5357 = vsel %vm5294, %v5292, %v2899
        %v5358 = vsel %vm5294, %v5293, %v2901
        %vm5359 = vcmask 457728
        %v5360 = vsel %vm5359, %v5295, %v3031
        %v5361 = vsel %vm5359, %v5296, %v3033
        %v5362 = vsel %vm5359, %v5297, %v3035
        %v5363 = vsel %vm5359, %v5298, %v3037
        %v5364 = vsel %vm5359, %v5299, %v3039
        %v5365 = vsel %vm5359, %v5300, %v3041
        %v5366 = vsel %vm5359, %v5301, %v3043
        %v5367 = vsel %vm5359, %v5302, %v3045
        %v5368 = vsel %vm5359, %v5303, %v3047
        %v5369 = vsel %vm5359, %v5304, %v3049
        %v5370 = vsel %vm5359, %v5305, %v3051
        %v5371 = vsel %vm5359, %v5306, %v3053
        %v5372 = vsel %vm5359, %v5307, %v3055
        %v5373 = vsel %vm5359, %v5308, %v3057
        %v5374 = vsel %vm5359, %v5309, %v3059
        %v5375 = vsel %vm5359, %v5310, %v3061
        %v5376 = vsel %vm5359, %v5311, %v3063
        %v5377 = vsel %vm5359, %v5312, %v3065
        %v5378 = vsel %vm5359, %v5313, %v3067
        %v5379 = vsel %vm5359, %v5314, %v3069
        %v5380 = vsel %vm5359, %v5315, %v3071
        %v5381 = vsel %vm5359, %v5316, %v3073
        %v5382 = vsel %vm5359, %v5317, %v3075
        %v5383 = vsel %vm5359, %v5318, %v3077
        %v5384 = vsel %vm5359, %v5319, %v3079
        %v5385 = vsel %vm5359, %v5320, %v3081
        %v5386 = vsel %vm5359, %v5321, %v3083
        %v5387 = vsel %vm5359, %v5322, %v3085
        %v5388 = vsel %vm5359, %v5323, %v3087
        %v5389 = vsel %vm5359, %v5324, %v3089
        %v5390 = vsel %vm5359, %v5325, %v3091
        %v5391 = vsel %vm5359, %v5326, %v3093
        %v5392 = vsel %vm5359, %v5327, %v3095
        %v5393 = vsel %vm5359, %v5328, %v3097
        %v5394 = vsel %vm5359, %v5329, %v3099
        %v5395 = vsel %vm5359, %v5330, %v3101
        %v5396 = vsel %vm5359, %v5331, %v3103
        %v5397 = vsel %vm5359, %v5332, %v3105
        %v5398 = vsel %vm5359, %v5333, %v3107
        %v5399 = vsel %vm5359, %v5334, %v3109
        %v5400 = vsel %vm5359, %v5335, %v3111
        %v5401 = vsel %vm5359, %v5336, %v3113
        %v5402 = vsel %vm5359, %v5337, %v3115
        %v5403 = vsel %vm5359, %v5338, %v3117
        %v5404 = vsel %vm5359, %v5339, %v3119
        %v5405 = vsel %vm5359, %v5340, %v3121
        %v5406 = vsel %vm5359, %v5341, %v3123
        %v5407 = vsel %vm5359, %v5342, %v3125
        %v5408 = vsel %vm5359, %v5343, %v3127
        %v5409 = vsel %vm5359, %v5344, %v3129
        %v5410 = vsel %vm5359, %v5345, %v3131
        %v5411 = vsel %vm5359, %v5346, %v3133
        %v5412 = vsel %vm5359, %v5347, %v3135
        %v5413 = vsel %vm5359, %v5348, %v3137
        %v5414 = vsel %vm5359, %v5349, %v3139
        %v5415 = vsel %vm5359, %v5350, %v3141
        %v5416 = vsel %vm5359, %v5351, %v3143
        %v5417 = vsel %vm5359, %v5352, %v3145
        %v5418 = vsel %vm5359, %v5353, %v3147
        %v5419 = vsel %vm5359, %v5354, %v3149
        %v5420 = vsel %vm5359, %v5355, %v3151
        %v5421 = vsel %vm5359, %v5356, %v3153
        %v5422 = vsel %vm5359, %v5357, %v3155
        %v5423 = vsel %vm5359, %v5358, %v3157
        %vm5424 = vcmask 523264
        %v5425 = vsel %vm5424, %v5360, %v3271
        %v5426 = vsel %vm5424, %v5361, %v3273
        %v5427 = vsel %vm5424, %v5362, %v3275
        %v5428 = vsel %vm5424, %v5363, %v3277
        %v5429 = vsel %vm5424, %v5364, %v3279
        %v5430 = vsel %vm5424, %v5365, %v3281
        %v5431 = vsel %vm5424, %v5366, %v3283
        %v5432 = vsel %vm5424, %v5367, %v3285
        %v5433 = vsel %vm5424, %v5368, %v3287
        %v5434 = vsel %vm5424, %v5369, %v3289
        %v5435 = vsel %vm5424, %v5370, %v3291
        %v5436 = vsel %vm5424, %v5371, %v3293
        %v5437 = vsel %vm5424, %v5372, %v3295
        %v5438 = vsel %vm5424, %v5373, %v3297
        %v5439 = vsel %vm5424, %v5374, %v3299
        %v5440 = vsel %vm5424, %v5375, %v3301
        %v5441 = vsel %vm5424, %v5376, %v3303
        %v5442 = vsel %vm5424, %v5377, %v3305
        %v5443 = vsel %vm5424, %v5378, %v3307
        %v5444 = vsel %vm5424, %v5379, %v3309
        %v5445 = vsel %vm5424, %v5380, %v3311
        %v5446 = vsel %vm5424, %v5381, %v3313
        %v5447 = vsel %vm5424, %v5382, %v3315
        %v5448 = vsel %vm5424, %v5383, %v3317
        %v5449 = vsel %vm5424, %v5384, %v3319
        %v5450 = vsel %vm5424, %v5385, %v3321
        %v5451 = vsel %vm5424, %v5386, %v3323
        %v5452 = vsel %vm5424, %v5387, %v3325
        %v5453 = vsel %vm5424, %v5388, %v3327
        %v5454 = vsel %vm5424, %v5389, %v3329
        %v5455 = vsel %vm5424, %v5390, %v3331
        %v5456 = vsel %vm5424, %v5391, %v3333
        %v5457 = vsel %vm5424, %v5392, %v3335
        %v5458 = vsel %vm5424, %v5393, %v3337
        %v5459 = vsel %vm5424, %v5394, %v3339
        %v5460 = vsel %vm5424, %v5395, %v3341
        %v5461 = vsel %vm5424, %v5396, %v3343
        %v5462 = vsel %vm5424, %v5397, %v3345
        %v5463 = vsel %vm5424, %v5398, %v3347
        %v5464 = vsel %vm5424, %v5399, %v3349
        %v5465 = vsel %vm5424, %v5400, %v3351
        %v5466 = vsel %vm5424, %v5401, %v3353
        %v5467 = vsel %vm5424, %v5402, %v3355
        %v5468 = vsel %vm5424, %v5403, %v3357
        %v5469 = vsel %vm5424, %v5404, %v3359
        %v5470 = vsel %vm5424, %v5405, %v3361
        %v5471 = vsel %vm5424, %v5406, %v3363
        %v5472 = vsel %vm5424, %v5407, %v3365
        %v5473 = vsel %vm5424, %v5408, %v3367
        %v5474 = vsel %vm5424, %v5409, %v3369
        %v5475 = vsel %vm5424, %v5410, %v3371
        %v5476 = vsel %vm5424, %v5411, %v3373
        %v5477 = vsel %vm5424, %v5412, %v3375
        %v5478 = vsel %vm5424, %v5413, %v3377
        %v5479 = vsel %vm5424, %v5414, %v3379
        %v5480 = vsel %vm5424, %v5415, %v3381
        %v5481 = vsel %vm5424, %v5416, %v3383
        %v5482 = vsel %vm5424, %v5417, %v3385
        %v5483 = vsel %vm5424, %v5418, %v3387
        %v5484 = vsel %vm5424, %v5419, %v3389
        %v5485 = vsel %vm5424, %v5420, %v3391
        %v5486 = vsel %vm5424, %v5421, %v3393
        %v5487 = vsel %vm5424, %v5422, %v3395
        %v5488 = vsel %vm5424, %v5423, %v3397
        %vm5489 = vcmask 588800
        %v5490 = vsel %vm5489, %v5425, %v3479
        %v5491 = vsel %vm5489, %v5426, %v3481
        %v5492 = vsel %vm5489, %v5427, %v3483
        %v5493 = vsel %vm5489, %v5428, %v3485
        %v5494 = vsel %vm5489, %v5429, %v3487
        %v5495 = vsel %vm5489, %v5430, %v3489
        %v5496 = vsel %vm5489, %v5431, %v3491
        %v5497 = vsel %vm5489, %v5432, %v3493
        %v5498 = vsel %vm5489, %v5433, %v3495
        %v5499 = vsel %vm5489, %v5434, %v3497
        %v5500 = vsel %vm5489, %v5435, %v3499
        %v5501 = vsel %vm5489, %v5436, %v3501
        %v5502 = vsel %vm5489, %v5437, %v3503
        %v5503 = vsel %vm5489, %v5438, %v3505
        %v5504 = vsel %vm5489, %v5439, %v3507
        %v5505 = vsel %vm5489, %v5440, %v3509
        %v5506 = vsel %vm5489, %v5441, %v3511
        %v5507 = vsel %vm5489, %v5442, %v3513
        %v5508 = vsel %vm5489, %v5443, %v3515
        %v5509 = vsel %vm5489, %v5444, %v3517
        %v5510 = vsel %vm5489, %v5445, %v3519
        %v5511 = vsel %vm5489, %v5446, %v3521
        %v5512 = vsel %vm5489, %v5447, %v3523
        %v5513 = vsel %vm5489, %v5448, %v3525
        %v5514 = vsel %vm5489, %v5449, %v3527
        %v5515 = vsel %vm5489, %v5450, %v3529
        %v5516 = vsel %vm5489, %v5451, %v3531
        %v5517 = vsel %vm5489, %v5452, %v3533
        %v5518 = vsel %vm5489, %v5453, %v3535
        %v5519 = vsel %vm5489, %v5454, %v3537
        %v5520 = vsel %vm5489, %v5455, %v3539
        %v5521 = vsel %vm5489, %v5456, %v3541
        %v5522 = vsel %vm5489, %v5457, %v3543
        %v5523 = vsel %vm5489, %v5458, %v3545
        %v5524 = vsel %vm5489, %v5459, %v3547
        %v5525 = vsel %vm5489, %v5460, %v3549
        %v5526 = vsel %vm5489, %v5461, %v3551
        %v5527 = vsel %vm5489, %v5462, %v3553
        %v5528 = vsel %vm5489, %v5463, %v3555
        %v5529 = vsel %vm5489, %v5464, %v3557
        %v5530 = vsel %vm5489, %v5465, %v3559
        %v5531 = vsel %vm5489, %v5466, %v3561
        %v5532 = vsel %vm5489, %v5467, %v3563
        %v5533 = vsel %vm5489, %v5468, %v3565
        %v5534 = vsel %vm5489, %v5469, %v3567
        %v5535 = vsel %vm5489, %v5470, %v3569
        %v5536 = vsel %vm5489, %v5471, %v3571
        %v5537 = vsel %vm5489, %v5472, %v3573
        %v5538 = vsel %vm5489, %v5473, %v3575
        %v5539 = vsel %vm5489, %v5474, %v3577
        %v5540 = vsel %vm5489, %v5475, %v3579
        %v5541 = vsel %vm5489, %v5476, %v3581
        %v5542 = vsel %vm5489, %v5477, %v3583
        %v5543 = vsel %vm5489, %v5478, %v3585
        %v5544 = vsel %vm5489, %v5479, %v3587
        %v5545 = vsel %vm5489, %v5480, %v3589
        %v5546 = vsel %vm5489, %v5481, %v3591
        %v5547 = vsel %vm5489, %v5482, %v3593
        %v5548 = vsel %vm5489, %v5483, %v3595
        %v5549 = vsel %vm5489, %v5484, %v3597
        %v5550 = vsel %vm5489, %v5485, %v3599
        %v5551 = vsel %vm5489, %v5486, %v3601
        %v5552 = vsel %vm5489, %v5487, %v3603
        %v5553 = vsel %vm5489, %v5488, %v3605
        %vm5554 = vcmask 654336
        %v5555 = vsel %vm5554, %v5490, %v3735
        %v5556 = vsel %vm5554, %v5491, %v3737
        %v5557 = vsel %vm5554, %v5492, %v3739
        %v5558 = vsel %vm5554, %v5493, %v3741
        %v5559 = vsel %vm5554, %v5494, %v3743
        %v5560 = vsel %vm5554, %v5495, %v3745
        %v5561 = vsel %vm5554, %v5496, %v3747
        %v5562 = vsel %vm5554, %v5497, %v3749
        %v5563 = vsel %vm5554, %v5498, %v3751
        %v5564 = vsel %vm5554, %v5499, %v3753
        %v5565 = vsel %vm5554, %v5500, %v3755
        %v5566 = vsel %vm5554, %v5501, %v3757
        %v5567 = vsel %vm5554, %v5502, %v3759
        %v5568 = vsel %vm5554, %v5503, %v3761
        %v5569 = vsel %vm5554, %v5504, %v3763
        %v5570 = vsel %vm5554, %v5505, %v3765
        %v5571 = vsel %vm5554, %v5506, %v3767
        %v5572 = vsel %vm5554, %v5507, %v3769
        %v5573 = vsel %vm5554, %v5508, %v3771
        %v5574 = vsel %vm5554, %v5509, %v3773
        %v5575 = vsel %vm5554, %v5510, %v3775
        %v5576 = vsel %vm5554, %v5511, %v3777
        %v5577 = vsel %vm5554, %v5512, %v3779
        %v5578 = vsel %vm5554, %v5513, %v3781
        %v5579 = vsel %vm5554, %v5514, %v3783
        %v5580 = vsel %vm5554, %v5515, %v3785
        %v5581 = vsel %vm5554, %v5516, %v3787
        %v5582 = vsel %vm5554, %v5517, %v3789
        %v5583 = vsel %vm5554, %v5518, %v3791
        %v5584 = vsel %vm5554, %v5519, %v3793
        %v5585 = vsel %vm5554, %v5520, %v3795
        %v5586 = vsel %vm5554, %v5521, %v3797
        %v5587 = vsel %vm5554, %v5522, %v3799
        %v5588 = vsel %vm5554, %v5523, %v3801
        %v5589 = vsel %vm5554, %v5524, %v3803
        %v5590 = vsel %vm5554, %v5525, %v3805
        %v5591 = vsel %vm5554, %v5526, %v3807
        %v5592 = vsel %vm5554, %v5527, %v3809
        %v5593 = vsel %vm5554, %v5528, %v3811
        %v5594 = vsel %vm5554, %v5529, %v3813
        %v5595 = vsel %vm5554, %v5530, %v3815
        %v5596 = vsel %vm5554, %v5531, %v3817
        %v5597 = vsel %vm5554, %v5532, %v3819
        %v5598 = vsel %vm5554, %v5533, %v3821
        %v5599 = vsel %vm5554, %v5534, %v3823
        %v5600 = vsel %vm5554, %v5535, %v3825
        %v5601 = vsel %vm5554, %v5536, %v3827
        %v5602 = vsel %vm5554, %v5537, %v3829
        %v5603 = vsel %vm5554, %v5538, %v3831
        %v5604 = vsel %vm5554, %v5539, %v3833
        %v5605 = vsel %vm5554, %v5540, %v3835
        %v5606 = vsel %vm5554, %v5541, %v3837
        %v5607 = vsel %vm5554, %v5542, %v3839
        %v5608 = vsel %vm5554, %v5543, %v3841
        %v5609 = vsel %vm5554, %v5544, %v3843
        %v5610 = vsel %vm5554, %v5545, %v3845
        %v5611 = vsel %vm5554, %v5546, %v3847
        %v5612 = vsel %vm5554, %v5547, %v3849
        %v5613 = vsel %vm5554, %v5548, %v3851
        %v5614 = vsel %vm5554, %v5549, %v3853
        %v5615 = vsel %vm5554, %v5550, %v3855
        %v5616 = vsel %vm5554, %v5551, %v3857
        %v5617 = vsel %vm5554, %v5552, %v3859
        %v5618 = vsel %vm5554, %v5553, %v3861
        %vm5619 = vcmask 719872
        %v5620 = vsel %vm5619, %v5555, %v3975
        %v5621 = vsel %vm5619, %v5556, %v3977
        %v5622 = vsel %vm5619, %v5557, %v3979
        %v5623 = vsel %vm5619, %v5558, %v3981
        %v5624 = vsel %vm5619, %v5559, %v3983
        %v5625 = vsel %vm5619, %v5560, %v3985
        %v5626 = vsel %vm5619, %v5561, %v3987
        %v5627 = vsel %vm5619, %v5562, %v3989
        %v5628 = vsel %vm5619, %v5563, %v3991
        %v5629 = vsel %vm5619, %v5564, %v3993
        %v5630 = vsel %vm5619, %v5565, %v3995
        %v5631 = vsel %vm5619, %v5566, %v3997
        %v5632 = vsel %vm5619, %v5567, %v3999
        %v5633 = vsel %vm5619, %v5568, %v4001
        %v5634 = vsel %vm5619, %v5569, %v4003
        %v5635 = vsel %vm5619, %v5570, %v4005
        %v5636 = vsel %vm5619, %v5571, %v4007
        %v5637 = vsel %vm5619, %v5572, %v4009
        %v5638 = vsel %vm5619, %v5573, %v4011
        %v5639 = vsel %vm5619, %v5574, %v4013
        %v5640 = vsel %vm5619, %v5575, %v4015
        %v5641 = vsel %vm5619, %v5576, %v4017
        %v5642 = vsel %vm5619, %v5577, %v4019
        %v5643 = vsel %vm5619, %v5578, %v4021
        %v5644 = vsel %vm5619, %v5579, %v4023
        %v5645 = vsel %vm5619, %v5580, %v4025
        %v5646 = vsel %vm5619, %v5581, %v4027
        %v5647 = vsel %vm5619, %v5582, %v4029
        %v5648 = vsel %vm5619, %v5583, %v4031
        %v5649 = vsel %vm5619, %v5584, %v4033
        %v5650 = vsel %vm5619, %v5585, %v4035
        %v5651 = vsel %vm5619, %v5586, %v4037
        %v5652 = vsel %vm5619, %v5587, %v4039
        %v5653 = vsel %vm5619, %v5588, %v4041
        %v5654 = vsel %vm5619, %v5589, %v4043
        %v5655 = vsel %vm5619, %v5590, %v4045
        %v5656 = vsel %vm5619, %v5591, %v4047
        %v5657 = vsel %vm5619, %v5592, %v4049
        %v5658 = vsel %vm5619, %v5593, %v4051
        %v5659 = vsel %vm5619, %v5594, %v4053
        %v5660 = vsel %vm5619, %v5595, %v4055
        %v5661 = vsel %vm5619, %v5596, %v4057
        %v5662 = vsel %vm5619, %v5597, %v4059
        %v5663 = vsel %vm5619, %v5598, %v4061
        %v5664 = vsel %vm5619, %v5599, %v4063
        %v5665 = vsel %vm5619, %v5600, %v4065
        %v5666 = vsel %vm5619, %v5601, %v4067
        %v5667 = vsel %vm5619, %v5602, %v4069
        %v5668 = vsel %vm5619, %v5603, %v4071
        %v5669 = vsel %vm5619, %v5604, %v4073
        %v5670 = vsel %vm5619, %v5605, %v4075
        %v5671 = vsel %vm5619, %v5606, %v4077
        %v5672 = vsel %vm5619, %v5607, %v4079
        %v5673 = vsel %vm5619, %v5608, %v4081
        %v5674 = vsel %vm5619, %v5609, %v4083
        %v5675 = vsel %vm5619, %v5610, %v4085
        %v5676 = vsel %vm5619, %v5611, %v4087
        %v5677 = vsel %vm5619, %v5612, %v4089
        %v5678 = vsel %vm5619, %v5613, %v4091
        %v5679 = vsel %vm5619, %v5614, %v4093
        %v5680 = vsel %vm5619, %v5615, %v4095
        %v5681 = vsel %vm5619, %v5616, %v4097
        %v5682 = vsel %vm5619, %v5617, %v4099
        %v5683 = vsel %vm5619, %v5618, %v4101
        %vm5684 = vcmask 785408
        %v5685 = vsel %vm5684, %v5620, %v4171
        %v5686 = vsel %vm5684, %v5621, %v4173
        %v5687 = vsel %vm5684, %v5622, %v4175
        %v5688 = vsel %vm5684, %v5623, %v4177
        %v5689 = vsel %vm5684, %v5624, %v4179
        %v5690 = vsel %vm5684, %v5625, %v4181
        %v5691 = vsel %vm5684, %v5626, %v4183
        %v5692 = vsel %vm5684, %v5627, %v4185
        %v5693 = vsel %vm5684, %v5628, %v4187
        %v5694 = vsel %vm5684, %v5629, %v4189
        %v5695 = vsel %vm5684, %v5630, %v4191
        %v5696 = vsel %vm5684, %v5631, %v4193
        %v5697 = vsel %vm5684, %v5632, %v4195
        %v5698 = vsel %vm5684, %v5633, %v4197
        %v5699 = vsel %vm5684, %v5634, %v4199
        %v5700 = vsel %vm5684, %v5635, %v4201
        %v5701 = vsel %vm5684, %v5636, %v4203
        %v5702 = vsel %vm5684, %v5637, %v4205
        %v5703 = vsel %vm5684, %v5638, %v4207
        %v5704 = vsel %vm5684, %v5639, %v4209
        %v5705 = vsel %vm5684, %v5640, %v4211
        %v5706 = vsel %vm5684, %v5641, %v4213
        %v5707 = vsel %vm5684, %v5642, %v4215
        %v5708 = vsel %vm5684, %v5643, %v4217
        %v5709 = vsel %vm5684, %v5644, %v4219
        %v5710 = vsel %vm5684, %v5645, %v4221
        %v5711 = vsel %vm5684, %v5646, %v4223
        %v5712 = vsel %vm5684, %v5647, %v4225
        %v5713 = vsel %vm5684, %v5648, %v4227
        %v5714 = vsel %vm5684, %v5649, %v4229
        %v5715 = vsel %vm5684, %v5650, %v4231
        %v5716 = vsel %vm5684, %v5651, %v4233
        %v5717 = vsel %vm5684, %v5652, %v4235
        %v5718 = vsel %vm5684, %v5653, %v4237
        %v5719 = vsel %vm5684, %v5654, %v4239
        %v5720 = vsel %vm5684, %v5655, %v4241
        %v5721 = vsel %vm5684, %v5656, %v4243
        %v5722 = vsel %vm5684, %v5657, %v4245
        %v5723 = vsel %vm5684, %v5658, %v4247
        %v5724 = vsel %vm5684, %v5659, %v4249
        %v5725 = vsel %vm5684, %v5660, %v4251
        %v5726 = vsel %vm5684, %v5661, %v4253
        %v5727 = vsel %vm5684, %v5662, %v4255
        %v5728 = vsel %vm5684, %v5663, %v4257
        %v5729 = vsel %vm5684, %v5664, %v4259
        %v5730 = vsel %vm5684, %v5665, %v4261
        %v5731 = vsel %vm5684, %v5666, %v4263
        %v5732 = vsel %vm5684, %v5667, %v4265
        %v5733 = vsel %vm5684, %v5668, %v4267
        %v5734 = vsel %vm5684, %v5669, %v4269
        %v5735 = vsel %vm5684, %v5670, %v4271
        %v5736 = vsel %vm5684, %v5671, %v4273
        %v5737 = vsel %vm5684, %v5672, %v4275
        %v5738 = vsel %vm5684, %v5673, %v4277
        %v5739 = vsel %vm5684, %v5674, %v4279
        %v5740 = vsel %vm5684, %v5675, %v4281
        %v5741 = vsel %vm5684, %v5676, %v4283
        %v5742 = vsel %vm5684, %v5677, %v4285
        %v5743 = vsel %vm5684, %v5678, %v4287
        %v5744 = vsel %vm5684, %v5679, %v4289
        %v5745 = vsel %vm5684, %v5680, %v4291
        %v5746 = vsel %vm5684, %v5681, %v4293
        %v5747 = vsel %vm5684, %v5682, %v4295
        %v5748 = vsel %vm5684, %v5683, %v4297
        %vm5749 = vcmask 850944
        %v5750 = vsel %vm5749, %v5685, %v4379
        %v5751 = vsel %vm5749, %v5686, %v4381
        %v5752 = vsel %vm5749, %v5687, %v4383
        %v5753 = vsel %vm5749, %v5688, %v4385
        %v5754 = vsel %vm5749, %v5689, %v4387
        %v5755 = vsel %vm5749, %v5690, %v4389
        %v5756 = vsel %vm5749, %v5691, %v4391
        %v5757 = vsel %vm5749, %v5692, %v4393
        %v5758 = vsel %vm5749, %v5693, %v4395
        %v5759 = vsel %vm5749, %v5694, %v4397
        %v5760 = vsel %vm5749, %v5695, %v4399
        %v5761 = vsel %vm5749, %v5696, %v4401
        %v5762 = vsel %vm5749, %v5697, %v4403
        %v5763 = vsel %vm5749, %v5698, %v4405
        %v5764 = vsel %vm5749, %v5699, %v4407
        %v5765 = vsel %vm5749, %v5700, %v4409
        %v5766 = vsel %vm5749, %v5701, %v4411
        %v5767 = vsel %vm5749, %v5702, %v4413
        %v5768 = vsel %vm5749, %v5703, %v4415
        %v5769 = vsel %vm5749, %v5704, %v4417
        %v5770 = vsel %vm5749, %v5705, %v4419
        %v5771 = vsel %vm5749, %v5706, %v4421
        %v5772 = vsel %vm5749, %v5707, %v4423
        %v5773 = vsel %vm5749, %v5708, %v4425
        %v5774 = vsel %vm5749, %v5709, %v4427
        %v5775 = vsel %vm5749, %v5710, %v4429
        %v5776 = vsel %vm5749, %v5711, %v4431
        %v5777 = vsel %vm5749, %v5712, %v4433
        %v5778 = vsel %vm5749, %v5713, %v4435
        %v5779 = vsel %vm5749, %v5714, %v4437
        %v5780 = vsel %vm5749, %v5715, %v4439
        %v5781 = vsel %vm5749, %v5716, %v4441
        %v5782 = vsel %vm5749, %v5717, %v4443
        %v5783 = vsel %vm5749, %v5718, %v4445
        %v5784 = vsel %vm5749, %v5719, %v4447
        %v5785 = vsel %vm5749, %v5720, %v4449
        %v5786 = vsel %vm5749, %v5721, %v4451
        %v5787 = vsel %vm5749, %v5722, %v4453
        %v5788 = vsel %vm5749, %v5723, %v4455
        %v5789 = vsel %vm5749, %v5724, %v4457
        %v5790 = vsel %vm5749, %v5725, %v4459
        %v5791 = vsel %vm5749, %v5726, %v4461
        %v5792 = vsel %vm5749, %v5727, %v4463
        %v5793 = vsel %vm5749, %v5728, %v4465
        %v5794 = vsel %vm5749, %v5729, %v4467
        %v5795 = vsel %vm5749, %v5730, %v4469
        %v5796 = vsel %vm5749, %v5731, %v4471
        %v5797 = vsel %vm5749, %v5732, %v4473
        %v5798 = vsel %vm5749, %v5733, %v4475
        %v5799 = vsel %vm5749, %v5734, %v4477
        %v5800 = vsel %vm5749, %v5735, %v4479
        %v5801 = vsel %vm5749, %v5736, %v4481
        %v5802 = vsel %vm5749, %v5737, %v4483
        %v5803 = vsel %vm5749, %v5738, %v4485
        %v5804 = vsel %vm5749, %v5739, %v4487
        %v5805 = vsel %vm5749, %v5740, %v4489
        %v5806 = vsel %vm5749, %v5741, %v4491
        %v5807 = vsel %vm5749, %v5742, %v4493
        %v5808 = vsel %vm5749, %v5743, %v4495
        %v5809 = vsel %vm5749, %v5744, %v4497
        %v5810 = vsel %vm5749, %v5745, %v4499
        %v5811 = vsel %vm5749, %v5746, %v4501
        %v5812 = vsel %vm5749, %v5747, %v4503
        %v5813 = vsel %vm5749, %v5748, %v4505
        %vm5814 = vcmask 916480
        %v5815 = vsel %vm5814, %v5750, %v4583
        %v5816 = vsel %vm5814, %v5751, %v4585
        %v5817 = vsel %vm5814, %v5752, %v4587
        %v5818 = vsel %vm5814, %v5753, %v4589
        %v5819 = vsel %vm5814, %v5754, %v4591
        %v5820 = vsel %vm5814, %v5755, %v4593
        %v5821 = vsel %vm5814, %v5756, %v4595
        %v5822 = vsel %vm5814, %v5757, %v4597
        %v5823 = vsel %vm5814, %v5758, %v4599
        %v5824 = vsel %vm5814, %v5759, %v4601
        %v5825 = vsel %vm5814, %v5760, %v4603
        %v5826 = vsel %vm5814, %v5761, %v4605
        %v5827 = vsel %vm5814, %v5762, %v4607
        %v5828 = vsel %vm5814, %v5763, %v4609
        %v5829 = vsel %vm5814, %v5764, %v4611
        %v5830 = vsel %vm5814, %v5765, %v4613
        %v5831 = vsel %vm5814, %v5766, %v4615
        %v5832 = vsel %vm5814, %v5767, %v4617
        %v5833 = vsel %vm5814, %v5768, %v4619
        %v5834 = vsel %vm5814, %v5769, %v4621
        %v5835 = vsel %vm5814, %v5770, %v4623
        %v5836 = vsel %vm5814, %v5771, %v4625
        %v5837 = vsel %vm5814, %v5772, %v4627
        %v5838 = vsel %vm5814, %v5773, %v4629
        %v5839 = vsel %vm5814, %v5774, %v4631
        %v5840 = vsel %vm5814, %v5775, %v4633
        %v5841 = vsel %vm5814, %v5776, %v4635
        %v5842 = vsel %vm5814, %v5777, %v4637
        %v5843 = vsel %vm5814, %v5778, %v4639
        %v5844 = vsel %vm5814, %v5779, %v4641
        %v5845 = vsel %vm5814, %v5780, %v4643
        %v5846 = vsel %vm5814, %v5781, %v4645
        %v5847 = vsel %vm5814, %v5782, %v4647
        %v5848 = vsel %vm5814, %v5783, %v4649
        %v5849 = vsel %vm5814, %v5784, %v4651
        %v5850 = vsel %vm5814, %v5785, %v4653
        %v5851 = vsel %vm5814, %v5786, %v4655
        %v5852 = vsel %vm5814, %v5787, %v4657
        %v5853 = vsel %vm5814, %v5788, %v4659
        %v5854 = vsel %vm5814, %v5789, %v4661
        %v5855 = vsel %vm5814, %v5790, %v4663
        %v5856 = vsel %vm5814, %v5791, %v4665
        %v5857 = vsel %vm5814, %v5792, %v4667
        %v5858 = vsel %vm5814, %v5793, %v4669
        %v5859 = vsel %vm5814, %v5794, %v4671
        %v5860 = vsel %vm5814, %v5795, %v4673
        %v5861 = vsel %vm5814, %v5796, %v4675
        %v5862 = vsel %vm5814, %v5797, %v4677
        %v5863 = vsel %vm5814, %v5798, %v4679
        %v5864 = vsel %vm5814, %v5799, %v4681
        %v5865 = vsel %vm5814, %v5800, %v4683
        %v5866 = vsel %vm5814, %v5801, %v4685
        %v5867 = vsel %vm5814, %v5802, %v4687
        %v5868 = vsel %vm5814, %v5803, %v4689
        %v5869 = vsel %vm5814, %v5804, %v4691
        %v5870 = vsel %vm5814, %v5805, %v4693
        %v5871 = vsel %vm5814, %v5806, %v4695
        %v5872 = vsel %vm5814, %v5807, %v4697
        %v5873 = vsel %vm5814, %v5808, %v4699
        %v5874 = vsel %vm5814, %v5809, %v4701
        %v5875 = vsel %vm5814, %v5810, %v4703
        %v5876 = vsel %vm5814, %v5811, %v4705
        %v5877 = vsel %vm5814, %v5812, %v4707
        %v5878 = vsel %vm5814, %v5813, %v4709
        %vm5879 = vcmask 982016
        %v5880 = vsel %vm5879, %v5815, %v4779
        %v5881 = vsel %vm5879, %v5816, %v4781
        %v5882 = vsel %vm5879, %v5817, %v4783
        %v5883 = vsel %vm5879, %v5818, %v4785
        %v5884 = vsel %vm5879, %v5819, %v4787
        %v5885 = vsel %vm5879, %v5820, %v4789
        %v5886 = vsel %vm5879, %v5821, %v4791
        %v5887 = vsel %vm5879, %v5822, %v4793
        %v5888 = vsel %vm5879, %v5823, %v4795
        %v5889 = vsel %vm5879, %v5824, %v4797
        %v5890 = vsel %vm5879, %v5825, %v4799
        %v5891 = vsel %vm5879, %v5826, %v4801
        %v5892 = vsel %vm5879, %v5827, %v4803
        %v5893 = vsel %vm5879, %v5828, %v4805
        %v5894 = vsel %vm5879, %v5829, %v4807
        %v5895 = vsel %vm5879, %v5830, %v4809
        %v5896 = vsel %vm5879, %v5831, %v4811
        %v5897 = vsel %vm5879, %v5832, %v4813
        %v5898 = vsel %vm5879, %v5833, %v4815
        %v5899 = vsel %vm5879, %v5834, %v4817
        %v5900 = vsel %vm5879, %v5835, %v4819
        %v5901 = vsel %vm5879, %v5836, %v4821
        %v5902 = vsel %vm5879, %v5837, %v4823
        %v5903 = vsel %vm5879, %v5838, %v4825
        %v5904 = vsel %vm5879, %v5839, %v4827
        %v5905 = vsel %vm5879, %v5840, %v4829
        %v5906 = vsel %vm5879, %v5841, %v4831
        %v5907 = vsel %vm5879, %v5842, %v4833
        %v5908 = vsel %vm5879, %v5843, %v4835
        %v5909 = vsel %vm5879, %v5844, %v4837
        %v5910 = vsel %vm5879, %v5845, %v4839
        %v5911 = vsel %vm5879, %v5846, %v4841
        %v5912 = vsel %vm5879, %v5847, %v4843
        %v5913 = vsel %vm5879, %v5848, %v4845
        %v5914 = vsel %vm5879, %v5849, %v4847
        %v5915 = vsel %vm5879, %v5850, %v4849
        %v5916 = vsel %vm5879, %v5851, %v4851
        %v5917 = vsel %vm5879, %v5852, %v4853
        %v5918 = vsel %vm5879, %v5853, %v4855
        %v5919 = vsel %vm5879, %v5854, %v4857
        %v5920 = vsel %vm5879, %v5855, %v4859
        %v5921 = vsel %vm5879, %v5856, %v4861
        %v5922 = vsel %vm5879, %v5857, %v4863
        %v5923 = vsel %vm5879, %v5858, %v4865
        %v5924 = vsel %vm5879, %v5859, %v4867
        %v5925 = vsel %vm5879, %v5860, %v4869
        %v5926 = vsel %vm5879, %v5861, %v4871
        %v5927 = vsel %vm5879, %v5862, %v4873
        %v5928 = vsel %vm5879, %v5863, %v4875
        %v5929 = vsel %vm5879, %v5864, %v4877
        %v5930 = vsel %vm5879, %v5865, %v4879
        %v5931 = vsel %vm5879, %v5866, %v4881
        %v5932 = vsel %vm5879, %v5867, %v4883
        %v5933 = vsel %vm5879, %v5868, %v4885
        %v5934 = vsel %vm5879, %v5869, %v4887
        %v5935 = vsel %vm5879, %v5870, %v4889
        %v5936 = vsel %vm5879, %v5871, %v4891
        %v5937 = vsel %vm5879, %v5872, %v4893
        %v5938 = vsel %vm5879, %v5873, %v4895
        %v5939 = vsel %vm5879, %v5874, %v4897
        %v5940 = vsel %vm5879, %v5875, %v4899
        %v5941 = vsel %vm5879, %v5876, %v4901
        %v5942 = vsel %vm5879, %v5877, %v4903
        %v5943 = vsel %vm5879, %v5878, %v4905
        %v5948 = vrot.slane %v1080, 2
        %v5949 = vrot.slane %v1081, 2
        %v5950 = vsel %vm1284, %v5948, %v5949
        %v5951 = vrot.slane %v1082, 2
        %v5952 = vrot.slane %v1083, 2
        %v5953 = vsel %vm1284, %v5951, %v5952
        %v5954 = vrot.slane %v1104, 2
        %v5955 = vrot.slane %v1105, 2
        %v5956 = vsel %vm1284, %v5954, %v5955
        %v5957 = vrot.slane %v1106, 2
        %v5958 = vrot.slane %v1107, 2
        %v5959 = vsel %vm1284, %v5957, %v5958
        %5960 = vrot.lane.b32.xlu0 %v1346, 8
        %v5961 = vpop.permute.xlu0 %5960
        %5962 = vrot.lane.b32.xlu0 %v1349, 8
        %v5963 = vpop.permute.xlu0 %5962
        %5964 = vrot.lane.b32.xlu0 %v1352, 8
        %v5965 = vpop.permute.xlu0 %5964
        %5966 = vrot.lane.b32.xlu0 %v1355, 8
        %v5967 = vpop.permute.xlu0 %5966
        %5968 = vrot.lane.b32.xlu0 %v2292, 8
        %v5969 = vpop.permute.xlu0 %5968
        %5970 = vrot.lane.b32.xlu0 %v2291, 8
        %v5971 = vpop.permute.xlu0 %5970
        %5972 = vrot.lane.b32.xlu0 %v2295, 8
        %v5973 = vpop.permute.xlu0 %5972
        %5974 = vrot.lane.b32.xlu0 %v2294, 8
        %v5975 = vpop.permute.xlu0 %5974
        %5976 = vrot.lane.b32.xlu0 %v2996, 8
        %v5977 = vpop.permute.xlu0 %5976
        %5978 = vrot.lane.b32.xlu0 %v2995, 8
        %v5979 = vpop.permute.xlu0 %5978
        %5980 = vrot.lane.b32.xlu0 %v2999, 8
        %v5981 = vpop.permute.xlu0 %5980
        %5982 = vrot.lane.b32.xlu0 %v2998, 8
        %v5983 = vpop.permute.xlu0 %5982
        %5984 = vrot.lane.b32.xlu0 %v1370, 8
        %v5985 = vpop.permute.xlu0 %5984
        %5986 = vrot.lane.b32.xlu0 %v1373, 8
        %v5987 = vpop.permute.xlu0 %5986
        %5988 = vrot.lane.b32.xlu0 %v1376, 8
        %v5989 = vpop.permute.xlu0 %5988
        %5990 = vrot.lane.b32.xlu0 %v1379, 8
        %v5991 = vpop.permute.xlu0 %5990
        %5992 = vrot.lane.b32.xlu0 %v2298, 8
        %v5993 = vpop.permute.xlu0 %5992
        %5994 = vrot.lane.b32.xlu0 %v2297, 8
        %v5995 = vpop.permute.xlu0 %5994
        %5996 = vrot.lane.b32.xlu0 %v2301, 8
        %v5997 = vpop.permute.xlu0 %5996
        %5998 = vrot.lane.b32.xlu0 %v2300, 8
        %v5999 = vpop.permute.xlu0 %5998
        %6000 = vrot.lane.b32.xlu0 %v3002, 8
        %v6001 = vpop.permute.xlu0 %6000
        %6002 = vrot.lane.b32.xlu0 %v3001, 8
        %v6003 = vpop.permute.xlu0 %6002
        %6004 = vrot.lane.b32.xlu0 %v3005, 8
        %v6005 = vpop.permute.xlu0 %6004
        %6006 = vrot.lane.b32.xlu0 %v3004, 8
        %v6007 = vpop.permute.xlu0 %6006
        %6008 = vrot.lane.b32.xlu0 %v1394, 8
        %v6009 = vpop.permute.xlu0 %6008
        %6010 = vrot.lane.b32.xlu0 %v1397, 8
        %v6011 = vpop.permute.xlu0 %6010
        %6012 = vrot.lane.b32.xlu0 %v1400, 8
        %v6013 = vpop.permute.xlu0 %6012
        %6014 = vrot.lane.b32.xlu0 %v1403, 8
        %v6015 = vpop.permute.xlu0 %6014
        %6016 = vrot.lane.b32.xlu0 %v2304, 8
        %v6017 = vpop.permute.xlu0 %6016
        %6018 = vrot.lane.b32.xlu0 %v2303, 8
        %v6019 = vpop.permute.xlu0 %6018
        %6020 = vrot.lane.b32.xlu0 %v2307, 8
        %v6021 = vpop.permute.xlu0 %6020
        %6022 = vrot.lane.b32.xlu0 %v2306, 8
        %v6023 = vpop.permute.xlu0 %6022
        %6024 = vrot.lane.b32.xlu0 %v3008, 8
        %v6025 = vpop.permute.xlu0 %6024
        %6026 = vrot.lane.b32.xlu0 %v3007, 8
        %v6027 = vpop.permute.xlu0 %6026
        %6028 = vrot.lane.b32.xlu0 %v3011, 8
        %v6029 = vpop.permute.xlu0 %6028
        %6030 = vrot.lane.b32.xlu0 %v3010, 8
        %v6031 = vpop.permute.xlu0 %6030
        %6032 = vrot.lane.b32.xlu0 %v1418, 8
        %v6033 = vpop.permute.xlu0 %6032
        %6034 = vrot.lane.b32.xlu0 %v1421, 8
        %v6035 = vpop.permute.xlu0 %6034
        %6036 = vrot.lane.b32.xlu0 %v1424, 8
        %v6037 = vpop.permute.xlu0 %6036
        %6038 = vrot.lane.b32.xlu0 %v1427, 8
        %v6039 = vpop.permute.xlu0 %6038
        %6040 = vrot.lane.b32.xlu0 %v2310, 8
        %v6041 = vpop.permute.xlu0 %6040
        %6042 = vrot.lane.b32.xlu0 %v2309, 8
        %v6043 = vpop.permute.xlu0 %6042
        %6044 = vrot.lane.b32.xlu0 %v2313, 8
        %v6045 = vpop.permute.xlu0 %6044
        %6046 = vrot.lane.b32.xlu0 %v2312, 8
        %v6047 = vpop.permute.xlu0 %6046
        %6048 = vrot.lane.b32.xlu0 %v3014, 8
        %v6049 = vpop.permute.xlu0 %6048
        %6050 = vrot.lane.b32.xlu0 %v3013, 8
        %v6051 = vpop.permute.xlu0 %6050
        %6052 = vrot.lane.b32.xlu0 %v3017, 8
        %v6053 = vpop.permute.xlu0 %6052
        %6054 = vrot.lane.b32.xlu0 %v3016, 8
        %v6055 = vpop.permute.xlu0 %6054
        %6056 = vrot.lane.b32.xlu0 %v1442, 8
        %v6057 = vpop.permute.xlu0 %6056
        %6058 = vrot.lane.b32.xlu0 %v1445, 8
        %v6059 = vpop.permute.xlu0 %6058
        %6060 = vrot.lane.b32.xlu0 %v1448, 8
        %v6061 = vpop.permute.xlu0 %6060
        %6062 = vrot.lane.b32.xlu0 %v1451, 8
        %v6063 = vpop.permute.xlu0 %6062
        %6064 = vrot.lane.b32.xlu0 %v2316, 8
        %v6065 = vpop.permute.xlu0 %6064
        %6066 = vrot.lane.b32.xlu0 %v2315, 8
        %v6067 = vpop.permute.xlu0 %6066
        %6068 = vrot.lane.b32.xlu0 %v2319, 8
        %v6069 = vpop.permute.xlu0 %6068
        %6070 = vrot.lane.b32.xlu0 %v2318, 8
        %v6071 = vpop.permute.xlu0 %6070
        %6072 = vrot.lane.b32.xlu0 %v3020, 8
        %v6073 = vpop.permute.xlu0 %6072
        %6074 = vrot.lane.b32.xlu0 %v3019, 8
        %v6075 = vpop.permute.xlu0 %6074
        %6076 = vrot.lane.b32.xlu0 %v3023, 8
        %v6077 = vpop.permute.xlu0 %6076
        %6078 = vrot.lane.b32.xlu0 %v3022, 8
        %v6079 = vpop.permute.xlu0 %6078
        %6080 = vrot.lane.b32.xlu0 %v1466, 8
        %v6081 = vpop.permute.xlu0 %6080
        %6082 = vrot.lane.b32.xlu0 %v1469, 8
        %v6083 = vpop.permute.xlu0 %6082
        %6084 = vrot.lane.b32.xlu0 %v1472, 8
        %v6085 = vpop.permute.xlu0 %6084
        %6086 = vrot.lane.b32.xlu0 %v1475, 8
        %v6087 = vpop.permute.xlu0 %6086
        %6088 = vrot.lane.b32.xlu0 %v2322, 8
        %v6089 = vpop.permute.xlu0 %6088
        %6090 = vrot.lane.b32.xlu0 %v2321, 8
        %v6091 = vpop.permute.xlu0 %6090
        %6092 = vrot.lane.b32.xlu0 %v2325, 8
        %v6093 = vpop.permute.xlu0 %6092
        %6094 = vrot.lane.b32.xlu0 %v2324, 8
        %v6095 = vpop.permute.xlu0 %6094
        %6096 = vrot.lane.b32.xlu0 %v3026, 8
        %v6097 = vpop.permute.xlu0 %6096
        %6098 = vrot.lane.b32.xlu0 %v3025, 8
        %v6099 = vpop.permute.xlu0 %6098
        %6100 = vrot.lane.b32.xlu0 %v3029, 8
        %v6101 = vpop.permute.xlu0 %6100
        %6102 = vrot.lane.b32.xlu0 %v3028, 8
        %v6103 = vpop.permute.xlu0 %6102
        %6104 = vrot.lane.b32.xlu0 %v3700, 8
        %v6105 = vpop.permute.xlu0 %6104
        %6106 = vrot.lane.b32.xlu0 %v3699, 8
        %v6107 = vpop.permute.xlu0 %6106
        %6108 = vrot.lane.b32.xlu0 %v3703, 8
        %v6109 = vpop.permute.xlu0 %6108
        %6110 = vrot.lane.b32.xlu0 %v3702, 8
        %v6111 = vpop.permute.xlu0 %6110
        %6112 = vrot.lane.b32.xlu0 %v3706, 8
        %v6113 = vpop.permute.xlu0 %6112
        %6114 = vrot.lane.b32.xlu0 %v3705, 8
        %v6115 = vpop.permute.xlu0 %6114
        %6116 = vrot.lane.b32.xlu0 %v3709, 8
        %v6117 = vpop.permute.xlu0 %6116
        %6118 = vrot.lane.b32.xlu0 %v3708, 8
        %v6119 = vpop.permute.xlu0 %6118
        %6120 = vrot.lane.b32.xlu0 %v4368, 8
        %v6121 = vpop.permute.xlu0 %6120
        %6122 = vrot.lane.b32.xlu0 %v4367, 8
        %v6123 = vpop.permute.xlu0 %6122
        %6124 = vrot.lane.b32.xlu0 %v4371, 8
        %v6125 = vpop.permute.xlu0 %6124
        %6126 = vrot.lane.b32.xlu0 %v4370, 8
        %v6127 = vpop.permute.xlu0 %6126
        %6128 = vrot.lane.b32.xlu0 %v5950, 8
        %v6129 = vpop.permute.xlu0 %6128
        %6130 = vrot.lane.b32.xlu0 %v5949, 8
        %v6131 = vpop.permute.xlu0 %6130
        %6132 = vrot.lane.b32.xlu0 %v5953, 8
        %v6133 = vpop.permute.xlu0 %6132
        %6134 = vrot.lane.b32.xlu0 %v5952, 8
        %v6135 = vpop.permute.xlu0 %6134
        %6136 = vrot.lane.b32.xlu0 %v3724, 8
        %v6137 = vpop.permute.xlu0 %6136
        %6138 = vrot.lane.b32.xlu0 %v3723, 8
        %v6139 = vpop.permute.xlu0 %6138
        %6140 = vrot.lane.b32.xlu0 %v3727, 8
        %v6141 = vpop.permute.xlu0 %6140
        %6142 = vrot.lane.b32.xlu0 %v3726, 8
        %v6143 = vpop.permute.xlu0 %6142
        %6144 = vrot.lane.b32.xlu0 %v3730, 8
        %v6145 = vpop.permute.xlu0 %6144
        %6146 = vrot.lane.b32.xlu0 %v3729, 8
        %v6147 = vpop.permute.xlu0 %6146
        %6148 = vrot.lane.b32.xlu0 %v3733, 8
        %v6149 = vpop.permute.xlu0 %6148
        %6150 = vrot.lane.b32.xlu0 %v3732, 8
        %v6151 = vpop.permute.xlu0 %6150
        %6152 = vrot.lane.b32.xlu0 %v4374, 8
        %v6153 = vpop.permute.xlu0 %6152
        %6154 = vrot.lane.b32.xlu0 %v4373, 8
        %v6155 = vpop.permute.xlu0 %6154
        %6156 = vrot.lane.b32.xlu0 %v4377, 8
        %v6157 = vpop.permute.xlu0 %6156
        %6158 = vrot.lane.b32.xlu0 %v4376, 8
        %v6159 = vpop.permute.xlu0 %6158
        %6160 = vrot.lane.b32.xlu0 %v5956, 8
        %v6161 = vpop.permute.xlu0 %6160
        %6162 = vrot.lane.b32.xlu0 %v5955, 8
        %v6163 = vpop.permute.xlu0 %6162
        %6164 = vrot.lane.b32.xlu0 %v5959, 8
        %v6165 = vpop.permute.xlu0 %6164
        %6166 = vrot.lane.b32.xlu0 %v5958, 8
        %v6167 = vpop.permute.xlu0 %6166
        %v6288 = vrot.slane %v964, 6
        %v6289 = vrot.slane %v966, 6
        %v6290 = vrot.slane %v968, 6
        %v6291 = vrot.slane %v970, 6
        %v6292 = vrot.slane %v972, 6
        %v6293 = vrot.slane %v974, 6
        %v6294 = vrot.slane %v976, 6
        %v6295 = vrot.slane %v978, 6
        %v6296 = vrot.slane %v988, 6
        %v6297 = vrot.slane %v990, 6
        %v6298 = vrot.slane %v992, 6
        %v6299 = vrot.slane %v994, 6
        %v6300 = vrot.slane %v996, 6
        %v6301 = vrot.slane %v998, 6
        %v6302 = vrot.slane %v1000, 6
        %v6303 = vrot.slane %v1002, 6
        %v6304 = vrot.slane %v1012, 6
        %v6305 = vrot.slane %v1014, 6
        %v6306 = vrot.slane %v1016, 6
        %v6307 = vrot.slane %v1018, 6
        %v6308 = vrot.slane %v1020, 6
        %v6309 = vrot.slane %v1022, 6
        %v6310 = vrot.slane %v1024, 6
        %v6311 = vrot.slane %v1026, 6
        %v6312 = vrot.slane %v1036, 6
        %v6313 = vrot.slane %v1038, 6
        %v6314 = vrot.slane %v1040, 6
        %v6315 = vrot.slane %v1042, 6
        %v6316 = vrot.slane %v1044, 6
        %v6317 = vrot.slane %v1046, 6
        %v6318 = vrot.slane %v1048, 6
        %v6319 = vrot.slane %v1050, 6
        %v6320 = vrot.slane %v1060, 6
        %v6321 = vrot.slane %v1062, 6
        %v6322 = vrot.slane %v1064, 6
        %v6323 = vrot.slane %v1066, 6
        %v6324 = vrot.slane %v1068, 6
        %v6325 = vrot.slane %v1070, 6
        %v6326 = vrot.slane %v1072, 6
        %v6327 = vrot.slane %v1074, 6
        %v6328 = vrot.slane %v1084, 6
        %v6329 = vrot.slane %v1086, 6
        %v6330 = vrot.slane %v1088, 6
        %v6331 = vrot.slane %v1090, 6
        %v6332 = vrot.slane %v1092, 6
        %v6333 = vrot.slane %v1094, 6
        %v6334 = vrot.slane %v1096, 6
        %v6335 = vrot.slane %v1098, 6
        %v6336 = vrot.slane %v1108, 6
        %v6337 = vrot.slane %v1110, 6
        %v6338 = vrot.slane %v1112, 6
        %v6339 = vrot.slane %v1114, 6
        %v6340 = vrot.slane %v1116, 6
        %v6341 = vrot.slane %v1118, 6
        %v6342 = vrot.slane %v1120, 6
        %v6343 = vrot.slane %v1122, 6
        %v6344 = vrot.slane %v1132, 6
        %v6345 = vrot.slane %v1134, 6
        %v6346 = vrot.slane %v1136, 6
        %v6347 = vrot.slane %v1138, 6
        %v6348 = vrot.slane %v1140, 6
        %v6349 = vrot.slane %v1142, 6
        %v6350 = vrot.slane %v1144, 6
        %v6351 = vrot.slane %v1146, 6
        %6352 = vrot.lane.b32.xlu0 %v6288, 16
        %v6353 = vpop.permute.xlu0 %6352
        %6354 = vrot.lane.b32.xlu0 %v6289, 16
        %v6355 = vpop.permute.xlu0 %6354
        %6356 = vrot.lane.b32.xlu0 %v6290, 16
        %v6357 = vpop.permute.xlu0 %6356
        %6358 = vrot.lane.b32.xlu0 %v6291, 16
        %v6359 = vpop.permute.xlu0 %6358
        %6360 = vrot.lane.b32.xlu0 %v6292, 16
        %v6361 = vpop.permute.xlu0 %6360
        %6362 = vrot.lane.b32.xlu0 %v6293, 16
        %v6363 = vpop.permute.xlu0 %6362
        %6364 = vrot.lane.b32.xlu0 %v6294, 16
        %v6365 = vpop.permute.xlu0 %6364
        %6366 = vrot.lane.b32.xlu0 %v6295, 16
        %v6367 = vpop.permute.xlu0 %6366
        %6368 = vrot.lane.b32.xlu0 %v6296, 16
        %v6369 = vpop.permute.xlu0 %6368
        %6370 = vrot.lane.b32.xlu0 %v6297, 16
        %v6371 = vpop.permute.xlu0 %6370
        %6372 = vrot.lane.b32.xlu0 %v6298, 16
        %v6373 = vpop.permute.xlu0 %6372
        %6374 = vrot.lane.b32.xlu0 %v6299, 16
        %v6375 = vpop.permute.xlu0 %6374
        %6376 = vrot.lane.b32.xlu0 %v6300, 16
        %v6377 = vpop.permute.xlu0 %6376
        %6378 = vrot.lane.b32.xlu0 %v6301, 16
        %v6379 = vpop.permute.xlu0 %6378
        %6380 = vrot.lane.b32.xlu0 %v6302, 16
        %v6381 = vpop.permute.xlu0 %6380
        %6382 = vrot.lane.b32.xlu0 %v6303, 16
        %v6383 = vpop.permute.xlu0 %6382
        %6384 = vrot.lane.b32.xlu0 %v6304, 16
        %v6385 = vpop.permute.xlu0 %6384
        %6386 = vrot.lane.b32.xlu0 %v6305, 16
        %v6387 = vpop.permute.xlu0 %6386
        %6388 = vrot.lane.b32.xlu0 %v6306, 16
        %v6389 = vpop.permute.xlu0 %6388
        %6390 = vrot.lane.b32.xlu0 %v6307, 16
        %v6391 = vpop.permute.xlu0 %6390
        %6392 = vrot.lane.b32.xlu0 %v6308, 16
        %v6393 = vpop.permute.xlu0 %6392
        %6394 = vrot.lane.b32.xlu0 %v6309, 16
        %v6395 = vpop.permute.xlu0 %6394
        %6396 = vrot.lane.b32.xlu0 %v6310, 16
        %v6397 = vpop.permute.xlu0 %6396
        %6398 = vrot.lane.b32.xlu0 %v6311, 16
        %v6399 = vpop.permute.xlu0 %6398
        %6400 = vrot.lane.b32.xlu0 %v6312, 16
        %v6401 = vpop.permute.xlu0 %6400
        %6402 = vrot.lane.b32.xlu0 %v6313, 16
        %v6403 = vpop.permute.xlu0 %6402
        %6404 = vrot.lane.b32.xlu0 %v6314, 16
        %v6405 = vpop.permute.xlu0 %6404
        %6406 = vrot.lane.b32.xlu0 %v6315, 16
        %v6407 = vpop.permute.xlu0 %6406
        %6408 = vrot.lane.b32.xlu0 %v6316, 16
        %v6409 = vpop.permute.xlu0 %6408
        %6410 = vrot.lane.b32.xlu0 %v6317, 16
        %v6411 = vpop.permute.xlu0 %6410
        %6412 = vrot.lane.b32.xlu0 %v6318, 16
        %v6413 = vpop.permute.xlu0 %6412
        %6414 = vrot.lane.b32.xlu0 %v6319, 16
        %v6415 = vpop.permute.xlu0 %6414
        %6416 = vrot.lane.b32.xlu0 %v6320, 16
        %v6417 = vpop.permute.xlu0 %6416
        %6418 = vrot.lane.b32.xlu0 %v6321, 16
        %v6419 = vpop.permute.xlu0 %6418
        %6420 = vrot.lane.b32.xlu0 %v6322, 16
        %v6421 = vpop.permute.xlu0 %6420
        %6422 = vrot.lane.b32.xlu0 %v6323, 16
        %v6423 = vpop.permute.xlu0 %6422
        %6424 = vrot.lane.b32.xlu0 %v6324, 16
        %v6425 = vpop.permute.xlu0 %6424
        %6426 = vrot.lane.b32.xlu0 %v6325, 16
        %v6427 = vpop.permute.xlu0 %6426
        %6428 = vrot.lane.b32.xlu0 %v6326, 16
        %v6429 = vpop.permute.xlu0 %6428
        %6430 = vrot.lane.b32.xlu0 %v6327, 16
        %v6431 = vpop.permute.xlu0 %6430
        %6432 = vrot.lane.b32.xlu0 %v6328, 16
        %v6433 = vpop.permute.xlu0 %6432
        %6434 = vrot.lane.b32.xlu0 %v6329, 16
        %v6435 = vpop.permute.xlu0 %6434
        %6436 = vrot.lane.b32.xlu0 %v6330, 16
        %v6437 = vpop.permute.xlu0 %6436
        %6438 = vrot.lane.b32.xlu0 %v6331, 16
        %v6439 = vpop.permute.xlu0 %6438
        %6440 = vrot.lane.b32.xlu0 %v6332, 16
        %v6441 = vpop.permute.xlu0 %6440
        %6442 = vrot.lane.b32.xlu0 %v6333, 16
        %v6443 = vpop.permute.xlu0 %6442
        %6444 = vrot.lane.b32.xlu0 %v6334, 16
        %v6445 = vpop.permute.xlu0 %6444
        %6446 = vrot.lane.b32.xlu0 %v6335, 16
        %v6447 = vpop.permute.xlu0 %6446
        %6448 = vrot.lane.b32.xlu0 %v6336, 16
        %v6449 = vpop.permute.xlu0 %6448
        %6450 = vrot.lane.b32.xlu0 %v6337, 16
        %v6451 = vpop.permute.xlu0 %6450
        %6452 = vrot.lane.b32.xlu0 %v6338, 16
        %v6453 = vpop.permute.xlu0 %6452
        %6454 = vrot.lane.b32.xlu0 %v6339, 16
        %v6455 = vpop.permute.xlu0 %6454
        %6456 = vrot.lane.b32.xlu0 %v6340, 16
        %v6457 = vpop.permute.xlu0 %6456
        %6458 = vrot.lane.b32.xlu0 %v6341, 16
        %v6459 = vpop.permute.xlu0 %6458
        %6460 = vrot.lane.b32.xlu0 %v6342, 16
        %v6461 = vpop.permute.xlu0 %6460
        %6462 = vrot.lane.b32.xlu0 %v6343, 16
        %v6463 = vpop.permute.xlu0 %6462
        %6464 = vrot.lane.b32.xlu0 %v6344, 16
        %v6465 = vpop.permute.xlu0 %6464
        %6466 = vrot.lane.b32.xlu0 %v6345, 16
        %v6467 = vpop.permute.xlu0 %6466
        %6468 = vrot.lane.b32.xlu0 %v6346, 16
        %v6469 = vpop.permute.xlu0 %6468
        %6470 = vrot.lane.b32.xlu0 %v6347, 16
        %v6471 = vpop.permute.xlu0 %6470
        %6472 = vrot.lane.b32.xlu0 %v6348, 16
        %v6473 = vpop.permute.xlu0 %6472
        %6474 = vrot.lane.b32.xlu0 %v6349, 16
        %v6475 = vpop.permute.xlu0 %6474
        %6476 = vrot.lane.b32.xlu0 %v6350, 16
        %v6477 = vpop.permute.xlu0 %6476
        %6478 = vrot.lane.b32.xlu0 %v6351, 16
        %v6479 = vpop.permute.xlu0 %6478
        %6560 = vrot.lane.b32.xlu0 %v964, 24
        %v6561 = vpop.permute.xlu0 %6560
        %6562 = vrot.lane.b32.xlu0 %v965, 24
        %v6563 = vpop.permute.xlu0 %6562
        %6564 = vrot.lane.b32.xlu0 %v966, 24
        %v6565 = vpop.permute.xlu0 %6564
        %6566 = vrot.lane.b32.xlu0 %v967, 24
        %v6567 = vpop.permute.xlu0 %6566
        %6568 = vrot.lane.b32.xlu0 %v969, 24
        %v6569 = vpop.permute.xlu0 %6568
        %6570 = vrot.lane.b32.xlu0 %v971, 24
        %v6571 = vpop.permute.xlu0 %6570
        %6572 = vrot.lane.b32.xlu0 %v973, 24
        %v6573 = vpop.permute.xlu0 %6572
        %6574 = vrot.lane.b32.xlu0 %v975, 24
        %v6575 = vpop.permute.xlu0 %6574
        %6576 = vrot.lane.b32.xlu0 %v977, 24
        %v6577 = vpop.permute.xlu0 %6576
        %6578 = vrot.lane.b32.xlu0 %v979, 24
        %v6579 = vpop.permute.xlu0 %6578
        %6580 = vrot.lane.b32.xlu0 %v988, 24
        %v6581 = vpop.permute.xlu0 %6580
        %6582 = vrot.lane.b32.xlu0 %v989, 24
        %v6583 = vpop.permute.xlu0 %6582
        %6584 = vrot.lane.b32.xlu0 %v990, 24
        %v6585 = vpop.permute.xlu0 %6584
        %6586 = vrot.lane.b32.xlu0 %v991, 24
        %v6587 = vpop.permute.xlu0 %6586
        %6588 = vrot.lane.b32.xlu0 %v993, 24
        %v6589 = vpop.permute.xlu0 %6588
        %6590 = vrot.lane.b32.xlu0 %v995, 24
        %v6591 = vpop.permute.xlu0 %6590
        %6592 = vrot.lane.b32.xlu0 %v997, 24
        %v6593 = vpop.permute.xlu0 %6592
        %6594 = vrot.lane.b32.xlu0 %v999, 24
        %v6595 = vpop.permute.xlu0 %6594
        %6596 = vrot.lane.b32.xlu0 %v1001, 24
        %v6597 = vpop.permute.xlu0 %6596
        %6598 = vrot.lane.b32.xlu0 %v1003, 24
        %v6599 = vpop.permute.xlu0 %6598
        %6600 = vrot.lane.b32.xlu0 %v1012, 24
        %v6601 = vpop.permute.xlu0 %6600
        %6602 = vrot.lane.b32.xlu0 %v1013, 24
        %v6603 = vpop.permute.xlu0 %6602
        %6604 = vrot.lane.b32.xlu0 %v1014, 24
        %v6605 = vpop.permute.xlu0 %6604
        %6606 = vrot.lane.b32.xlu0 %v1015, 24
        %v6607 = vpop.permute.xlu0 %6606
        %6608 = vrot.lane.b32.xlu0 %v1017, 24
        %v6609 = vpop.permute.xlu0 %6608
        %6610 = vrot.lane.b32.xlu0 %v1019, 24
        %v6611 = vpop.permute.xlu0 %6610
        %6612 = vrot.lane.b32.xlu0 %v1021, 24
        %v6613 = vpop.permute.xlu0 %6612
        %6614 = vrot.lane.b32.xlu0 %v1023, 24
        %v6615 = vpop.permute.xlu0 %6614
        %6616 = vrot.lane.b32.xlu0 %v1025, 24
        %v6617 = vpop.permute.xlu0 %6616
        %6618 = vrot.lane.b32.xlu0 %v1027, 24
        %v6619 = vpop.permute.xlu0 %6618
        %6620 = vrot.lane.b32.xlu0 %v1036, 24
        %v6621 = vpop.permute.xlu0 %6620
        %6622 = vrot.lane.b32.xlu0 %v1037, 24
        %v6623 = vpop.permute.xlu0 %6622
        %6624 = vrot.lane.b32.xlu0 %v1038, 24
        %v6625 = vpop.permute.xlu0 %6624
        %6626 = vrot.lane.b32.xlu0 %v1039, 24
        %v6627 = vpop.permute.xlu0 %6626
        %6628 = vrot.lane.b32.xlu0 %v1041, 24
        %v6629 = vpop.permute.xlu0 %6628
        %6630 = vrot.lane.b32.xlu0 %v1043, 24
        %v6631 = vpop.permute.xlu0 %6630
        %6632 = vrot.lane.b32.xlu0 %v1045, 24
        %v6633 = vpop.permute.xlu0 %6632
        %6634 = vrot.lane.b32.xlu0 %v1047, 24
        %v6635 = vpop.permute.xlu0 %6634
        %6636 = vrot.lane.b32.xlu0 %v1049, 24
        %v6637 = vpop.permute.xlu0 %6636
        %6638 = vrot.lane.b32.xlu0 %v1051, 24
        %v6639 = vpop.permute.xlu0 %6638
        %6640 = vrot.lane.b32.xlu0 %v1060, 24
        %v6641 = vpop.permute.xlu0 %6640
        %6642 = vrot.lane.b32.xlu0 %v1061, 24
        %v6643 = vpop.permute.xlu0 %6642
        %6644 = vrot.lane.b32.xlu0 %v1062, 24
        %v6645 = vpop.permute.xlu0 %6644
        %6646 = vrot.lane.b32.xlu0 %v1063, 24
        %v6647 = vpop.permute.xlu0 %6646
        %6648 = vrot.lane.b32.xlu0 %v1064, 24
        %v6649 = vpop.permute.xlu0 %6648
        %6650 = vrot.lane.b32.xlu0 %v1065, 24
        %v6651 = vpop.permute.xlu0 %6650
        %6652 = vrot.lane.b32.xlu0 %v1066, 24
        %v6653 = vpop.permute.xlu0 %6652
        %6654 = vrot.lane.b32.xlu0 %v1067, 24
        %v6655 = vpop.permute.xlu0 %6654
        %6656 = vrot.lane.b32.xlu0 %v1068, 24
        %v6657 = vpop.permute.xlu0 %6656
        %6658 = vrot.lane.b32.xlu0 %v1069, 24
        %v6659 = vpop.permute.xlu0 %6658
        %6660 = vrot.lane.b32.xlu0 %v1070, 24
        %v6661 = vpop.permute.xlu0 %6660
        %6662 = vrot.lane.b32.xlu0 %v1071, 24
        %v6663 = vpop.permute.xlu0 %6662
        %6664 = vrot.lane.b32.xlu0 %v1072, 24
        %v6665 = vpop.permute.xlu0 %6664
        %6666 = vrot.lane.b32.xlu0 %v1073, 24
        %v6667 = vpop.permute.xlu0 %6666
        %6668 = vrot.lane.b32.xlu0 %v1074, 24
        %v6669 = vpop.permute.xlu0 %6668
        %6670 = vrot.lane.b32.xlu0 %v1075, 24
        %v6671 = vpop.permute.xlu0 %6670
        %6672 = vrot.lane.b32.xlu0 %v1084, 24
        %v6673 = vpop.permute.xlu0 %6672
        %6674 = vrot.lane.b32.xlu0 %v1085, 24
        %v6675 = vpop.permute.xlu0 %6674
        %6676 = vrot.lane.b32.xlu0 %v1086, 24
        %v6677 = vpop.permute.xlu0 %6676
        %6678 = vrot.lane.b32.xlu0 %v1087, 24
        %v6679 = vpop.permute.xlu0 %6678
        %6680 = vrot.lane.b32.xlu0 %v1088, 24
        %v6681 = vpop.permute.xlu0 %6680
        %6682 = vrot.lane.b32.xlu0 %v1089, 24
        %v6683 = vpop.permute.xlu0 %6682
        %6684 = vrot.lane.b32.xlu0 %v1090, 24
        %v6685 = vpop.permute.xlu0 %6684
        %6686 = vrot.lane.b32.xlu0 %v1091, 24
        %v6687 = vpop.permute.xlu0 %6686
        %6688 = vrot.lane.b32.xlu0 %v1092, 24
        %v6689 = vpop.permute.xlu0 %6688
        %6690 = vrot.lane.b32.xlu0 %v1093, 24
        %v6691 = vpop.permute.xlu0 %6690
        %6692 = vrot.lane.b32.xlu0 %v1094, 24
        %v6693 = vpop.permute.xlu0 %6692
        %6694 = vrot.lane.b32.xlu0 %v1095, 24
        %v6695 = vpop.permute.xlu0 %6694
        %6696 = vrot.lane.b32.xlu0 %v1096, 24
        %v6697 = vpop.permute.xlu0 %6696
        %6698 = vrot.lane.b32.xlu0 %v1097, 24
        %v6699 = vpop.permute.xlu0 %6698
        %6700 = vrot.lane.b32.xlu0 %v1098, 24
        %v6701 = vpop.permute.xlu0 %6700
        %6702 = vrot.lane.b32.xlu0 %v1099, 24
        %v6703 = vpop.permute.xlu0 %6702
        %6704 = vrot.lane.b32.xlu0 %v1108, 24
        %v6705 = vpop.permute.xlu0 %6704
        %6706 = vrot.lane.b32.xlu0 %v1109, 24
        %v6707 = vpop.permute.xlu0 %6706
        %6708 = vrot.lane.b32.xlu0 %v1110, 24
        %v6709 = vpop.permute.xlu0 %6708
        %6710 = vrot.lane.b32.xlu0 %v1111, 24
        %v6711 = vpop.permute.xlu0 %6710
        %6712 = vrot.lane.b32.xlu0 %v1112, 24
        %v6713 = vpop.permute.xlu0 %6712
        %6714 = vrot.lane.b32.xlu0 %v1113, 24
        %v6715 = vpop.permute.xlu0 %6714
        %6716 = vrot.lane.b32.xlu0 %v1114, 24
        %v6717 = vpop.permute.xlu0 %6716
        %6718 = vrot.lane.b32.xlu0 %v1115, 24
        %v6719 = vpop.permute.xlu0 %6718
        %6720 = vrot.lane.b32.xlu0 %v1116, 24
        %v6721 = vpop.permute.xlu0 %6720
        %6722 = vrot.lane.b32.xlu0 %v1117, 24
        %v6723 = vpop.permute.xlu0 %6722
        %6724 = vrot.lane.b32.xlu0 %v1118, 24
        %v6725 = vpop.permute.xlu0 %6724
        %6726 = vrot.lane.b32.xlu0 %v1119, 24
        %v6727 = vpop.permute.xlu0 %6726
        %6728 = vrot.lane.b32.xlu0 %v1120, 24
        %v6729 = vpop.permute.xlu0 %6728
        %6730 = vrot.lane.b32.xlu0 %v1121, 24
        %v6731 = vpop.permute.xlu0 %6730
        %6732 = vrot.lane.b32.xlu0 %v1122, 24
        %v6733 = vpop.permute.xlu0 %6732
        %6734 = vrot.lane.b32.xlu0 %v1123, 24
        %v6735 = vpop.permute.xlu0 %6734
        %6736 = vrot.lane.b32.xlu0 %v1132, 24
        %v6737 = vpop.permute.xlu0 %6736
        %6738 = vrot.lane.b32.xlu0 %v1133, 24
        %v6739 = vpop.permute.xlu0 %6738
        %6740 = vrot.lane.b32.xlu0 %v1134, 24
        %v6741 = vpop.permute.xlu0 %6740
        %6742 = vrot.lane.b32.xlu0 %v1135, 24
        %v6743 = vpop.permute.xlu0 %6742
        %6744 = vrot.lane.b32.xlu0 %v1136, 24
        %v6745 = vpop.permute.xlu0 %6744
        %6746 = vrot.lane.b32.xlu0 %v1137, 24
        %v6747 = vpop.permute.xlu0 %6746
        %6748 = vrot.lane.b32.xlu0 %v1138, 24
        %v6749 = vpop.permute.xlu0 %6748
        %6750 = vrot.lane.b32.xlu0 %v1139, 24
        %v6751 = vpop.permute.xlu0 %6750
        %6752 = vrot.lane.b32.xlu0 %v1140, 24
        %v6753 = vpop.permute.xlu0 %6752
        %6754 = vrot.lane.b32.xlu0 %v1141, 24
        %v6755 = vpop.permute.xlu0 %6754
        %6756 = vrot.lane.b32.xlu0 %v1142, 24
        %v6757 = vpop.permute.xlu0 %6756
        %6758 = vrot.lane.b32.xlu0 %v1143, 24
        %v6759 = vpop.permute.xlu0 %6758
        %6760 = vrot.lane.b32.xlu0 %v1144, 24
        %v6761 = vpop.permute.xlu0 %6760
        %6762 = vrot.lane.b32.xlu0 %v1145, 24
        %v6763 = vpop.permute.xlu0 %6762
        %6764 = vrot.lane.b32.xlu0 %v1146, 24
        %v6765 = vpop.permute.xlu0 %6764
        %6766 = vrot.lane.b32.xlu0 %v1147, 24
        %v6767 = vpop.permute.xlu0 %6766
        %v6872 = vrot.slane %v1108, 2
        %v6873 = vrot.slane %v1109, 2
        %v6874 = vsel %vm1284, %v6872, %v6873
        %v6875 = vrot.slane %v1110, 2
        %v6876 = vrot.slane %v1111, 2
        %v6877 = vsel %vm1284, %v6875, %v6876
        %v6878 = vrot.slane %v1112, 2
        %v6879 = vrot.slane %v1113, 2
        %v6880 = vsel %vm1284, %v6878, %v6879
        %v6881 = vrot.slane %v1114, 2
        %v6882 = vrot.slane %v1115, 2
        %v6883 = vsel %vm1284, %v6881, %v6882
        %v6884 = vrot.slane %v1116, 2
        %v6885 = vrot.slane %v1117, 2
        %v6886 = vsel %vm1284, %v6884, %v6885
        %v6887 = vrot.slane %v1118, 2
        %v6888 = vrot.slane %v1119, 2
        %v6889 = vsel %vm1284, %v6887, %v6888
        %v6890 = vrot.slane %v1120, 2
        %v6891 = vrot.slane %v1121, 2
        %v6892 = vsel %vm1284, %v6890, %v6891
        %v6893 = vrot.slane %v1122, 2
        %v6894 = vrot.slane %v1123, 2
        %v6895 = vsel %vm1284, %v6893, %v6894
        %v6896 = vrot.slane %v1132, 2
        %v6897 = vrot.slane %v1133, 2
        %v6898 = vsel %vm1284, %v6896, %v6897
        %v6899 = vrot.slane %v1134, 2
        %v6900 = vrot.slane %v1135, 2
        %v6901 = vsel %vm1284, %v6899, %v6900
        %v6902 = vrot.slane %v1136, 2
        %v6903 = vrot.slane %v1137, 2
        %v6904 = vsel %vm1284, %v6902, %v6903
        %v6905 = vrot.slane %v1138, 2
        %v6906 = vrot.slane %v1139, 2
        %v6907 = vsel %vm1284, %v6905, %v6906
        %v6908 = vrot.slane %v1140, 2
        %v6909 = vrot.slane %v1141, 2
        %v6910 = vsel %vm1284, %v6908, %v6909
        %v6911 = vrot.slane %v1142, 2
        %v6912 = vrot.slane %v1143, 2
        %v6913 = vsel %vm1284, %v6911, %v6912
        %v6914 = vrot.slane %v1144, 2
        %v6915 = vrot.slane %v1145, 2
        %v6916 = vsel %vm1284, %v6914, %v6915
        %v6917 = vrot.slane %v1146, 2
        %v6918 = vrot.slane %v1147, 2
        %v6919 = vsel %vm1284, %v6917, %v6918
        %6920 = vrot.lane.b32.xlu0 %v1383, 32
        %v6921 = vpop.permute.xlu0 %6920
        %6922 = vrot.lane.b32.xlu0 %v1382, 32
        %v6923 = vpop.permute.xlu0 %6922
        %6924 = vrot.lane.b32.xlu0 %v1386, 32
        %v6925 = vpop.permute.xlu0 %6924
        %6926 = vrot.lane.b32.xlu0 %v1385, 32
        %v6927 = vpop.permute.xlu0 %6926
        %6928 = vrot.lane.b32.xlu0 %v1388, 32
        %v6929 = vpop.permute.xlu0 %6928
        %6930 = vrot.lane.b32.xlu0 %v1391, 32
        %v6931 = vpop.permute.xlu0 %6930
        %6932 = vrot.lane.b32.xlu0 %v1394, 32
        %v6933 = vpop.permute.xlu0 %6932
        %6934 = vrot.lane.b32.xlu0 %v1397, 32
        %v6935 = vpop.permute.xlu0 %6934
        %6936 = vrot.lane.b32.xlu0 %v1400, 32
        %v6937 = vpop.permute.xlu0 %6936
        %6938 = vrot.lane.b32.xlu0 %v1403, 32
        %v6939 = vpop.permute.xlu0 %6938
        %6940 = vrot.lane.b32.xlu0 %v1407, 32
        %v6941 = vpop.permute.xlu0 %6940
        %6942 = vrot.lane.b32.xlu0 %v1406, 32
        %v6943 = vpop.permute.xlu0 %6942
        %6944 = vrot.lane.b32.xlu0 %v1410, 32
        %v6945 = vpop.permute.xlu0 %6944
        %6946 = vrot.lane.b32.xlu0 %v1409, 32
        %v6947 = vpop.permute.xlu0 %6946
        %6948 = vrot.lane.b32.xlu0 %v1412, 32
        %v6949 = vpop.permute.xlu0 %6948
        %6950 = vrot.lane.b32.xlu0 %v1415, 32
        %v6951 = vpop.permute.xlu0 %6950
        %6952 = vrot.lane.b32.xlu0 %v1418, 32
        %v6953 = vpop.permute.xlu0 %6952
        %6954 = vrot.lane.b32.xlu0 %v1421, 32
        %v6955 = vpop.permute.xlu0 %6954
        %6956 = vrot.lane.b32.xlu0 %v1424, 32
        %v6957 = vpop.permute.xlu0 %6956
        %6958 = vrot.lane.b32.xlu0 %v1427, 32
        %v6959 = vpop.permute.xlu0 %6958
        %6960 = vrot.lane.b32.xlu0 %v1431, 32
        %v6961 = vpop.permute.xlu0 %6960
        %6962 = vrot.lane.b32.xlu0 %v1430, 32
        %v6963 = vpop.permute.xlu0 %6962
        %6964 = vrot.lane.b32.xlu0 %v1434, 32
        %v6965 = vpop.permute.xlu0 %6964
        %6966 = vrot.lane.b32.xlu0 %v1433, 32
        %v6967 = vpop.permute.xlu0 %6966
        %6968 = vrot.lane.b32.xlu0 %v1436, 32
        %v6969 = vpop.permute.xlu0 %6968
        %6970 = vrot.lane.b32.xlu0 %v1439, 32
        %v6971 = vpop.permute.xlu0 %6970
        %6972 = vrot.lane.b32.xlu0 %v1442, 32
        %v6973 = vpop.permute.xlu0 %6972
        %6974 = vrot.lane.b32.xlu0 %v1445, 32
        %v6975 = vpop.permute.xlu0 %6974
        %6976 = vrot.lane.b32.xlu0 %v1448, 32
        %v6977 = vpop.permute.xlu0 %6976
        %6978 = vrot.lane.b32.xlu0 %v1451, 32
        %v6979 = vpop.permute.xlu0 %6978
        %6980 = vrot.lane.b32.xlu0 %v1455, 32
        %v6981 = vpop.permute.xlu0 %6980
        %6982 = vrot.lane.b32.xlu0 %v1454, 32
        %v6983 = vpop.permute.xlu0 %6982
        %6984 = vrot.lane.b32.xlu0 %v1458, 32
        %v6985 = vpop.permute.xlu0 %6984
        %6986 = vrot.lane.b32.xlu0 %v1457, 32
        %v6987 = vpop.permute.xlu0 %6986
        %6988 = vrot.lane.b32.xlu0 %v1460, 32
        %v6989 = vpop.permute.xlu0 %6988
        %6990 = vrot.lane.b32.xlu0 %v1463, 32
        %v6991 = vpop.permute.xlu0 %6990
        %6992 = vrot.lane.b32.xlu0 %v1466, 32
        %v6993 = vpop.permute.xlu0 %6992
        %6994 = vrot.lane.b32.xlu0 %v1469, 32
        %v6995 = vpop.permute.xlu0 %6994
        %6996 = vrot.lane.b32.xlu0 %v1472, 32
        %v6997 = vpop.permute.xlu0 %6996
        %6998 = vrot.lane.b32.xlu0 %v1475, 32
        %v6999 = vpop.permute.xlu0 %6998
        %7000 = vrot.lane.b32.xlu0 %v3688, 32
        %v7001 = vpop.permute.xlu0 %7000
        %7002 = vrot.lane.b32.xlu0 %v3687, 32
        %v7003 = vpop.permute.xlu0 %7002
        %7004 = vrot.lane.b32.xlu0 %v3691, 32
        %v7005 = vpop.permute.xlu0 %7004
        %7006 = vrot.lane.b32.xlu0 %v3690, 32
        %v7007 = vpop.permute.xlu0 %7006
        %7008 = vrot.lane.b32.xlu0 %v3694, 32
        %v7009 = vpop.permute.xlu0 %7008
        %7010 = vrot.lane.b32.xlu0 %v3693, 32
        %v7011 = vpop.permute.xlu0 %7010
        %7012 = vrot.lane.b32.xlu0 %v3697, 32
        %v7013 = vpop.permute.xlu0 %7012
        %7014 = vrot.lane.b32.xlu0 %v3696, 32
        %v7015 = vpop.permute.xlu0 %7014
        %7016 = vrot.lane.b32.xlu0 %v3700, 32
        %v7017 = vpop.permute.xlu0 %7016
        %7018 = vrot.lane.b32.xlu0 %v3699, 32
        %v7019 = vpop.permute.xlu0 %7018
        %7020 = vrot.lane.b32.xlu0 %v3703, 32
        %v7021 = vpop.permute.xlu0 %7020
        %7022 = vrot.lane.b32.xlu0 %v3702, 32
        %v7023 = vpop.permute.xlu0 %7022
        %7024 = vrot.lane.b32.xlu0 %v3706, 32
        %v7025 = vpop.permute.xlu0 %7024
        %7026 = vrot.lane.b32.xlu0 %v3705, 32
        %v7027 = vpop.permute.xlu0 %7026
        %7028 = vrot.lane.b32.xlu0 %v3709, 32
        %v7029 = vpop.permute.xlu0 %7028
        %7030 = vrot.lane.b32.xlu0 %v3708, 32
        %v7031 = vpop.permute.xlu0 %7030
        %7032 = vrot.lane.b32.xlu0 %v3712, 32
        %v7033 = vpop.permute.xlu0 %7032
        %7034 = vrot.lane.b32.xlu0 %v3711, 32
        %v7035 = vpop.permute.xlu0 %7034
        %7036 = vrot.lane.b32.xlu0 %v3715, 32
        %v7037 = vpop.permute.xlu0 %7036
        %7038 = vrot.lane.b32.xlu0 %v3714, 32
        %v7039 = vpop.permute.xlu0 %7038
        %7040 = vrot.lane.b32.xlu0 %v3718, 32
        %v7041 = vpop.permute.xlu0 %7040
        %7042 = vrot.lane.b32.xlu0 %v3717, 32
        %v7043 = vpop.permute.xlu0 %7042
        %7044 = vrot.lane.b32.xlu0 %v3721, 32
        %v7045 = vpop.permute.xlu0 %7044
        %7046 = vrot.lane.b32.xlu0 %v3720, 32
        %v7047 = vpop.permute.xlu0 %7046
        %7048 = vrot.lane.b32.xlu0 %v3724, 32
        %v7049 = vpop.permute.xlu0 %7048
        %7050 = vrot.lane.b32.xlu0 %v3723, 32
        %v7051 = vpop.permute.xlu0 %7050
        %7052 = vrot.lane.b32.xlu0 %v3727, 32
        %v7053 = vpop.permute.xlu0 %7052
        %7054 = vrot.lane.b32.xlu0 %v3726, 32
        %v7055 = vpop.permute.xlu0 %7054
        %7056 = vrot.lane.b32.xlu0 %v3730, 32
        %v7057 = vpop.permute.xlu0 %7056
        %7058 = vrot.lane.b32.xlu0 %v3729, 32
        %v7059 = vpop.permute.xlu0 %7058
        %7060 = vrot.lane.b32.xlu0 %v3733, 32
        %v7061 = vpop.permute.xlu0 %7060
        %7062 = vrot.lane.b32.xlu0 %v3732, 32
        %v7063 = vpop.permute.xlu0 %7062
        %7064 = vrot.lane.b32.xlu0 %v6874, 32
        %v7065 = vpop.permute.xlu0 %7064
        %7066 = vrot.lane.b32.xlu0 %v6873, 32
        %v7067 = vpop.permute.xlu0 %7066
        %7068 = vrot.lane.b32.xlu0 %v6877, 32
        %v7069 = vpop.permute.xlu0 %7068
        %7070 = vrot.lane.b32.xlu0 %v6876, 32
        %v7071 = vpop.permute.xlu0 %7070
        %7072 = vrot.lane.b32.xlu0 %v6880, 32
        %v7073 = vpop.permute.xlu0 %7072
        %7074 = vrot.lane.b32.xlu0 %v6879, 32
        %v7075 = vpop.permute.xlu0 %7074
        %7076 = vrot.lane.b32.xlu0 %v6883, 32
        %v7077 = vpop.permute.xlu0 %7076
        %7078 = vrot.lane.b32.xlu0 %v6882, 32
        %v7079 = vpop.permute.xlu0 %7078
        %7080 = vrot.lane.b32.xlu0 %v6886, 32
        %v7081 = vpop.permute.xlu0 %7080
        %7082 = vrot.lane.b32.xlu0 %v6885, 32
        %v7083 = vpop.permute.xlu0 %7082
        %7084 = vrot.lane.b32.xlu0 %v6889, 32
        %v7085 = vpop.permute.xlu0 %7084
        %7086 = vrot.lane.b32.xlu0 %v6888, 32
        %v7087 = vpop.permute.xlu0 %7086
        %7088 = vrot.lane.b32.xlu0 %v6892, 32
        %v7089 = vpop.permute.xlu0 %7088
        %7090 = vrot.lane.b32.xlu0 %v6891, 32
        %v7091 = vpop.permute.xlu0 %7090
        %7092 = vrot.lane.b32.xlu0 %v6895, 32
        %v7093 = vpop.permute.xlu0 %7092
        %7094 = vrot.lane.b32.xlu0 %v6894, 32
        %v7095 = vpop.permute.xlu0 %7094
        %7096 = vrot.lane.b32.xlu0 %v6898, 32
        %v7097 = vpop.permute.xlu0 %7096
        %7098 = vrot.lane.b32.xlu0 %v6897, 32
        %v7099 = vpop.permute.xlu0 %7098
        %7100 = vrot.lane.b32.xlu0 %v6901, 32
        %v7101 = vpop.permute.xlu0 %7100
        %7102 = vrot.lane.b32.xlu0 %v6900, 32
        %v7103 = vpop.permute.xlu0 %7102
        %7104 = vrot.lane.b32.xlu0 %v6904, 32
        %v7105 = vpop.permute.xlu0 %7104
        %7106 = vrot.lane.b32.xlu0 %v6903, 32
        %v7107 = vpop.permute.xlu0 %7106
        %7108 = vrot.lane.b32.xlu0 %v6907, 32
        %v7109 = vpop.permute.xlu0 %7108
        %7110 = vrot.lane.b32.xlu0 %v6906, 32
        %v7111 = vpop.permute.xlu0 %7110
        %7112 = vrot.lane.b32.xlu0 %v6910, 32
        %v7113 = vpop.permute.xlu0 %7112
        %7114 = vrot.lane.b32.xlu0 %v6909, 32
        %v7115 = vpop.permute.xlu0 %7114
        %7116 = vrot.lane.b32.xlu0 %v6913, 32
        %v7117 = vpop.permute.xlu0 %7116
        %7118 = vrot.lane.b32.xlu0 %v6912, 32
        %v7119 = vpop.permute.xlu0 %7118
        %7120 = vrot.lane.b32.xlu0 %v6916, 32
        %v7121 = vpop.permute.xlu0 %7120
        %7122 = vrot.lane.b32.xlu0 %v6915, 32
        %v7123 = vpop.permute.xlu0 %7122
        %7124 = vrot.lane.b32.xlu0 %v6919, 32
        %v7125 = vpop.permute.xlu0 %7124
        %7126 = vrot.lane.b32.xlu0 %v6918, 32
        %v7127 = vpop.permute.xlu0 %7126
        %v7236 = vrot.slane %v980, 6
        %v7237 = vrot.slane %v982, 6
        %v7238 = vrot.slane %v1004, 6
        %v7239 = vrot.slane %v1006, 6
        %v7240 = vrot.slane %v1028, 6
        %v7241 = vrot.slane %v1030, 6
        %v7242 = vrot.slane %v1052, 6
        %v7243 = vrot.slane %v1054, 6
        %v7244 = vrot.slane %v1076, 6
        %v7245 = vrot.slane %v1078, 6
        %v7246 = vrot.slane %v1100, 6
        %v7247 = vrot.slane %v1102, 6
        %v7248 = vrot.slane %v1124, 6
        %v7249 = vrot.slane %v1126, 6
        %v7250 = vrot.slane %v1148, 6
        %v7251 = vrot.slane %v1150, 6
        %7252 = vrot.lane.b32.xlu0 %v6290, 40
        %v7253 = vpop.permute.xlu0 %7252
        %7254 = vrot.lane.b32.xlu0 %v6291, 40
        %v7255 = vpop.permute.xlu0 %7254
        %7256 = vrot.lane.b32.xlu0 %v6292, 40
        %v7257 = vpop.permute.xlu0 %7256
        %7258 = vrot.lane.b32.xlu0 %v6293, 40
        %v7259 = vpop.permute.xlu0 %7258
        %7260 = vrot.lane.b32.xlu0 %v6294, 40
        %v7261 = vpop.permute.xlu0 %7260
        %7262 = vrot.lane.b32.xlu0 %v6295, 40
        %v7263 = vpop.permute.xlu0 %7262
        %7264 = vrot.lane.b32.xlu0 %v7236, 40
        %v7265 = vpop.permute.xlu0 %7264
        %7266 = vrot.lane.b32.xlu0 %v7237, 40
        %v7267 = vpop.permute.xlu0 %7266
        %7268 = vrot.lane.b32.xlu0 %v6298, 40
        %v7269 = vpop.permute.xlu0 %7268
        %7270 = vrot.lane.b32.xlu0 %v6299, 40
        %v7271 = vpop.permute.xlu0 %7270
        %7272 = vrot.lane.b32.xlu0 %v6300, 40
        %v7273 = vpop.permute.xlu0 %7272
        %7274 = vrot.lane.b32.xlu0 %v6301, 40
        %v7275 = vpop.permute.xlu0 %7274
        %7276 = vrot.lane.b32.xlu0 %v6302, 40
        %v7277 = vpop.permute.xlu0 %7276
        %7278 = vrot.lane.b32.xlu0 %v6303, 40
        %v7279 = vpop.permute.xlu0 %7278
        %7280 = vrot.lane.b32.xlu0 %v7238, 40
        %v7281 = vpop.permute.xlu0 %7280
        %7282 = vrot.lane.b32.xlu0 %v7239, 40
        %v7283 = vpop.permute.xlu0 %7282
        %7284 = vrot.lane.b32.xlu0 %v6306, 40
        %v7285 = vpop.permute.xlu0 %7284
        %7286 = vrot.lane.b32.xlu0 %v6307, 40
        %v7287 = vpop.permute.xlu0 %7286
        %7288 = vrot.lane.b32.xlu0 %v6308, 40
        %v7289 = vpop.permute.xlu0 %7288
        %7290 = vrot.lane.b32.xlu0 %v6309, 40
        %v7291 = vpop.permute.xlu0 %7290
        %7292 = vrot.lane.b32.xlu0 %v6310, 40
        %v7293 = vpop.permute.xlu0 %7292
        %7294 = vrot.lane.b32.xlu0 %v6311, 40
        %v7295 = vpop.permute.xlu0 %7294
        %7296 = vrot.lane.b32.xlu0 %v7240, 40
        %v7297 = vpop.permute.xlu0 %7296
        %7298 = vrot.lane.b32.xlu0 %v7241, 40
        %v7299 = vpop.permute.xlu0 %7298
        %7300 = vrot.lane.b32.xlu0 %v6314, 40
        %v7301 = vpop.permute.xlu0 %7300
        %7302 = vrot.lane.b32.xlu0 %v6315, 40
        %v7303 = vpop.permute.xlu0 %7302
        %7304 = vrot.lane.b32.xlu0 %v6316, 40
        %v7305 = vpop.permute.xlu0 %7304
        %7306 = vrot.lane.b32.xlu0 %v6317, 40
        %v7307 = vpop.permute.xlu0 %7306
        %7308 = vrot.lane.b32.xlu0 %v6318, 40
        %v7309 = vpop.permute.xlu0 %7308
        %7310 = vrot.lane.b32.xlu0 %v6319, 40
        %v7311 = vpop.permute.xlu0 %7310
        %7312 = vrot.lane.b32.xlu0 %v7242, 40
        %v7313 = vpop.permute.xlu0 %7312
        %7314 = vrot.lane.b32.xlu0 %v7243, 40
        %v7315 = vpop.permute.xlu0 %7314
        %7316 = vrot.lane.b32.xlu0 %v6322, 40
        %v7317 = vpop.permute.xlu0 %7316
        %7318 = vrot.lane.b32.xlu0 %v6323, 40
        %v7319 = vpop.permute.xlu0 %7318
        %7320 = vrot.lane.b32.xlu0 %v6324, 40
        %v7321 = vpop.permute.xlu0 %7320
        %7322 = vrot.lane.b32.xlu0 %v6325, 40
        %v7323 = vpop.permute.xlu0 %7322
        %7324 = vrot.lane.b32.xlu0 %v6326, 40
        %v7325 = vpop.permute.xlu0 %7324
        %7326 = vrot.lane.b32.xlu0 %v6327, 40
        %v7327 = vpop.permute.xlu0 %7326
        %7328 = vrot.lane.b32.xlu0 %v7244, 40
        %v7329 = vpop.permute.xlu0 %7328
        %7330 = vrot.lane.b32.xlu0 %v7245, 40
        %v7331 = vpop.permute.xlu0 %7330
        %7332 = vrot.lane.b32.xlu0 %v6330, 40
        %v7333 = vpop.permute.xlu0 %7332
        %7334 = vrot.lane.b32.xlu0 %v6331, 40
        %v7335 = vpop.permute.xlu0 %7334
        %7336 = vrot.lane.b32.xlu0 %v6332, 40
        %v7337 = vpop.permute.xlu0 %7336
        %7338 = vrot.lane.b32.xlu0 %v6333, 40
        %v7339 = vpop.permute.xlu0 %7338
        %7340 = vrot.lane.b32.xlu0 %v6334, 40
        %v7341 = vpop.permute.xlu0 %7340
        %7342 = vrot.lane.b32.xlu0 %v6335, 40
        %v7343 = vpop.permute.xlu0 %7342
        %7344 = vrot.lane.b32.xlu0 %v7246, 40
        %v7345 = vpop.permute.xlu0 %7344
        %7346 = vrot.lane.b32.xlu0 %v7247, 40
        %v7347 = vpop.permute.xlu0 %7346
        %7348 = vrot.lane.b32.xlu0 %v6338, 40
        %v7349 = vpop.permute.xlu0 %7348
        %7350 = vrot.lane.b32.xlu0 %v6339, 40
        %v7351 = vpop.permute.xlu0 %7350
        %7352 = vrot.lane.b32.xlu0 %v6340, 40
        %v7353 = vpop.permute.xlu0 %7352
        %7354 = vrot.lane.b32.xlu0 %v6341, 40
        %v7355 = vpop.permute.xlu0 %7354
        %7356 = vrot.lane.b32.xlu0 %v6342, 40
        %v7357 = vpop.permute.xlu0 %7356
        %7358 = vrot.lane.b32.xlu0 %v6343, 40
        %v7359 = vpop.permute.xlu0 %7358
        %7360 = vrot.lane.b32.xlu0 %v7248, 40
        %v7361 = vpop.permute.xlu0 %7360
        %7362 = vrot.lane.b32.xlu0 %v7249, 40
        %v7363 = vpop.permute.xlu0 %7362
        %7364 = vrot.lane.b32.xlu0 %v6346, 40
        %v7365 = vpop.permute.xlu0 %7364
        %7366 = vrot.lane.b32.xlu0 %v6347, 40
        %v7367 = vpop.permute.xlu0 %7366
        %7368 = vrot.lane.b32.xlu0 %v6348, 40
        %v7369 = vpop.permute.xlu0 %7368
        %7370 = vrot.lane.b32.xlu0 %v6349, 40
        %v7371 = vpop.permute.xlu0 %7370
        %7372 = vrot.lane.b32.xlu0 %v6350, 40
        %v7373 = vpop.permute.xlu0 %7372
        %7374 = vrot.lane.b32.xlu0 %v6351, 40
        %v7375 = vpop.permute.xlu0 %7374
        %7376 = vrot.lane.b32.xlu0 %v7250, 40
        %v7377 = vpop.permute.xlu0 %7376
        %7378 = vrot.lane.b32.xlu0 %v7251, 40
        %v7379 = vpop.permute.xlu0 %7378
        %7448 = vrot.lane.b32.xlu0 %v968, 48
        %v7449 = vpop.permute.xlu0 %7448
        %7450 = vrot.lane.b32.xlu0 %v969, 48
        %v7451 = vpop.permute.xlu0 %7450
        %7452 = vrot.lane.b32.xlu0 %v970, 48
        %v7453 = vpop.permute.xlu0 %7452
        %7454 = vrot.lane.b32.xlu0 %v971, 48
        %v7455 = vpop.permute.xlu0 %7454
        %7456 = vrot.lane.b32.xlu0 %v973, 48
        %v7457 = vpop.permute.xlu0 %7456
        %7458 = vrot.lane.b32.xlu0 %v975, 48
        %v7459 = vpop.permute.xlu0 %7458
        %7460 = vrot.lane.b32.xlu0 %v977, 48
        %v7461 = vpop.permute.xlu0 %7460
        %7462 = vrot.lane.b32.xlu0 %v979, 48
        %v7463 = vpop.permute.xlu0 %7462
        %7464 = vrot.lane.b32.xlu0 %v981, 48
        %v7465 = vpop.permute.xlu0 %7464
        %7466 = vrot.lane.b32.xlu0 %v983, 48
        %v7467 = vpop.permute.xlu0 %7466
        %7468 = vrot.lane.b32.xlu0 %v992, 48
        %v7469 = vpop.permute.xlu0 %7468
        %7470 = vrot.lane.b32.xlu0 %v993, 48
        %v7471 = vpop.permute.xlu0 %7470
        %7472 = vrot.lane.b32.xlu0 %v994, 48
        %v7473 = vpop.permute.xlu0 %7472
        %7474 = vrot.lane.b32.xlu0 %v995, 48
        %v7475 = vpop.permute.xlu0 %7474
        %7476 = vrot.lane.b32.xlu0 %v997, 48
        %v7477 = vpop.permute.xlu0 %7476
        %7478 = vrot.lane.b32.xlu0 %v999, 48
        %v7479 = vpop.permute.xlu0 %7478
        %7480 = vrot.lane.b32.xlu0 %v1001, 48
        %v7481 = vpop.permute.xlu0 %7480
        %7482 = vrot.lane.b32.xlu0 %v1003, 48
        %v7483 = vpop.permute.xlu0 %7482
        %7484 = vrot.lane.b32.xlu0 %v1005, 48
        %v7485 = vpop.permute.xlu0 %7484
        %7486 = vrot.lane.b32.xlu0 %v1007, 48
        %v7487 = vpop.permute.xlu0 %7486
        %7488 = vrot.lane.b32.xlu0 %v1016, 48
        %v7489 = vpop.permute.xlu0 %7488
        %7490 = vrot.lane.b32.xlu0 %v1017, 48
        %v7491 = vpop.permute.xlu0 %7490
        %7492 = vrot.lane.b32.xlu0 %v1018, 48
        %v7493 = vpop.permute.xlu0 %7492
        %7494 = vrot.lane.b32.xlu0 %v1019, 48
        %v7495 = vpop.permute.xlu0 %7494
        %7496 = vrot.lane.b32.xlu0 %v1021, 48
        %v7497 = vpop.permute.xlu0 %7496
        %7498 = vrot.lane.b32.xlu0 %v1023, 48
        %v7499 = vpop.permute.xlu0 %7498
        %7500 = vrot.lane.b32.xlu0 %v1025, 48
        %v7501 = vpop.permute.xlu0 %7500
        %7502 = vrot.lane.b32.xlu0 %v1027, 48
        %v7503 = vpop.permute.xlu0 %7502
        %7504 = vrot.lane.b32.xlu0 %v1029, 48
        %v7505 = vpop.permute.xlu0 %7504
        %7506 = vrot.lane.b32.xlu0 %v1031, 48
        %v7507 = vpop.permute.xlu0 %7506
        %7508 = vrot.lane.b32.xlu0 %v1040, 48
        %v7509 = vpop.permute.xlu0 %7508
        %7510 = vrot.lane.b32.xlu0 %v1041, 48
        %v7511 = vpop.permute.xlu0 %7510
        %7512 = vrot.lane.b32.xlu0 %v1042, 48
        %v7513 = vpop.permute.xlu0 %7512
        %7514 = vrot.lane.b32.xlu0 %v1043, 48
        %v7515 = vpop.permute.xlu0 %7514
        %7516 = vrot.lane.b32.xlu0 %v1045, 48
        %v7517 = vpop.permute.xlu0 %7516
        %7518 = vrot.lane.b32.xlu0 %v1047, 48
        %v7519 = vpop.permute.xlu0 %7518
        %7520 = vrot.lane.b32.xlu0 %v1049, 48
        %v7521 = vpop.permute.xlu0 %7520
        %7522 = vrot.lane.b32.xlu0 %v1051, 48
        %v7523 = vpop.permute.xlu0 %7522
        %7524 = vrot.lane.b32.xlu0 %v1053, 48
        %v7525 = vpop.permute.xlu0 %7524
        %7526 = vrot.lane.b32.xlu0 %v1055, 48
        %v7527 = vpop.permute.xlu0 %7526
        %7528 = vrot.lane.b32.xlu0 %v1064, 48
        %v7529 = vpop.permute.xlu0 %7528
        %7530 = vrot.lane.b32.xlu0 %v1065, 48
        %v7531 = vpop.permute.xlu0 %7530
        %7532 = vrot.lane.b32.xlu0 %v1066, 48
        %v7533 = vpop.permute.xlu0 %7532
        %7534 = vrot.lane.b32.xlu0 %v1067, 48
        %v7535 = vpop.permute.xlu0 %7534
        %7536 = vrot.lane.b32.xlu0 %v1068, 48
        %v7537 = vpop.permute.xlu0 %7536
        %7538 = vrot.lane.b32.xlu0 %v1069, 48
        %v7539 = vpop.permute.xlu0 %7538
        %7540 = vrot.lane.b32.xlu0 %v1070, 48
        %v7541 = vpop.permute.xlu0 %7540
        %7542 = vrot.lane.b32.xlu0 %v1071, 48
        %v7543 = vpop.permute.xlu0 %7542
        %7544 = vrot.lane.b32.xlu0 %v1072, 48
        %v7545 = vpop.permute.xlu0 %7544
        %7546 = vrot.lane.b32.xlu0 %v1073, 48
        %v7547 = vpop.permute.xlu0 %7546
        %7548 = vrot.lane.b32.xlu0 %v1074, 48
        %v7549 = vpop.permute.xlu0 %7548
        %7550 = vrot.lane.b32.xlu0 %v1075, 48
        %v7551 = vpop.permute.xlu0 %7550
        %7552 = vrot.lane.b32.xlu0 %v1076, 48
        %v7553 = vpop.permute.xlu0 %7552
        %7554 = vrot.lane.b32.xlu0 %v1077, 48
        %v7555 = vpop.permute.xlu0 %7554
        %7556 = vrot.lane.b32.xlu0 %v1078, 48
        %v7557 = vpop.permute.xlu0 %7556
        %7558 = vrot.lane.b32.xlu0 %v1079, 48
        %v7559 = vpop.permute.xlu0 %7558
        %7560 = vrot.lane.b32.xlu0 %v1088, 48
        %v7561 = vpop.permute.xlu0 %7560
        %7562 = vrot.lane.b32.xlu0 %v1089, 48
        %v7563 = vpop.permute.xlu0 %7562
        %7564 = vrot.lane.b32.xlu0 %v1090, 48
        %v7565 = vpop.permute.xlu0 %7564
        %7566 = vrot.lane.b32.xlu0 %v1091, 48
        %v7567 = vpop.permute.xlu0 %7566
        %7568 = vrot.lane.b32.xlu0 %v1092, 48
        %v7569 = vpop.permute.xlu0 %7568
        %7570 = vrot.lane.b32.xlu0 %v1093, 48
        %v7571 = vpop.permute.xlu0 %7570
        %7572 = vrot.lane.b32.xlu0 %v1094, 48
        %v7573 = vpop.permute.xlu0 %7572
        %7574 = vrot.lane.b32.xlu0 %v1095, 48
        %v7575 = vpop.permute.xlu0 %7574
        %7576 = vrot.lane.b32.xlu0 %v1096, 48
        %v7577 = vpop.permute.xlu0 %7576
        %7578 = vrot.lane.b32.xlu0 %v1097, 48
        %v7579 = vpop.permute.xlu0 %7578
        %7580 = vrot.lane.b32.xlu0 %v1098, 48
        %v7581 = vpop.permute.xlu0 %7580
        %7582 = vrot.lane.b32.xlu0 %v1099, 48
        %v7583 = vpop.permute.xlu0 %7582
        %7584 = vrot.lane.b32.xlu0 %v1100, 48
        %v7585 = vpop.permute.xlu0 %7584
        %7586 = vrot.lane.b32.xlu0 %v1101, 48
        %v7587 = vpop.permute.xlu0 %7586
        %7588 = vrot.lane.b32.xlu0 %v1102, 48
        %v7589 = vpop.permute.xlu0 %7588
        %7590 = vrot.lane.b32.xlu0 %v1103, 48
        %v7591 = vpop.permute.xlu0 %7590
        %7592 = vrot.lane.b32.xlu0 %v1112, 48
        %v7593 = vpop.permute.xlu0 %7592
        %7594 = vrot.lane.b32.xlu0 %v1113, 48
        %v7595 = vpop.permute.xlu0 %7594
        %7596 = vrot.lane.b32.xlu0 %v1114, 48
        %v7597 = vpop.permute.xlu0 %7596
        %7598 = vrot.lane.b32.xlu0 %v1115, 48
        %v7599 = vpop.permute.xlu0 %7598
        %7600 = vrot.lane.b32.xlu0 %v1116, 48
        %v7601 = vpop.permute.xlu0 %7600
        %7602 = vrot.lane.b32.xlu0 %v1117, 48
        %v7603 = vpop.permute.xlu0 %7602
        %7604 = vrot.lane.b32.xlu0 %v1118, 48
        %v7605 = vpop.permute.xlu0 %7604
        %7606 = vrot.lane.b32.xlu0 %v1119, 48
        %v7607 = vpop.permute.xlu0 %7606
        %7608 = vrot.lane.b32.xlu0 %v1120, 48
        %v7609 = vpop.permute.xlu0 %7608
        %7610 = vrot.lane.b32.xlu0 %v1121, 48
        %v7611 = vpop.permute.xlu0 %7610
        %7612 = vrot.lane.b32.xlu0 %v1122, 48
        %v7613 = vpop.permute.xlu0 %7612
        %7614 = vrot.lane.b32.xlu0 %v1123, 48
        %v7615 = vpop.permute.xlu0 %7614
        %7616 = vrot.lane.b32.xlu0 %v1124, 48
        %v7617 = vpop.permute.xlu0 %7616
        %7618 = vrot.lane.b32.xlu0 %v1125, 48
        %v7619 = vpop.permute.xlu0 %7618
        %7620 = vrot.lane.b32.xlu0 %v1126, 48
        %v7621 = vpop.permute.xlu0 %7620
        %7622 = vrot.lane.b32.xlu0 %v1127, 48
        %v7623 = vpop.permute.xlu0 %7622
        %7624 = vrot.lane.b32.xlu0 %v1136, 48
        %v7625 = vpop.permute.xlu0 %7624
        %7626 = vrot.lane.b32.xlu0 %v1137, 48
        %v7627 = vpop.permute.xlu0 %7626
        %7628 = vrot.lane.b32.xlu0 %v1138, 48
        %v7629 = vpop.permute.xlu0 %7628
        %7630 = vrot.lane.b32.xlu0 %v1139, 48
        %v7631 = vpop.permute.xlu0 %7630
        %7632 = vrot.lane.b32.xlu0 %v1140, 48
        %v7633 = vpop.permute.xlu0 %7632
        %7634 = vrot.lane.b32.xlu0 %v1141, 48
        %v7635 = vpop.permute.xlu0 %7634
        %7636 = vrot.lane.b32.xlu0 %v1142, 48
        %v7637 = vpop.permute.xlu0 %7636
        %7638 = vrot.lane.b32.xlu0 %v1143, 48
        %v7639 = vpop.permute.xlu0 %7638
        %7640 = vrot.lane.b32.xlu0 %v1144, 48
        %v7641 = vpop.permute.xlu0 %7640
        %7642 = vrot.lane.b32.xlu0 %v1145, 48
        %v7643 = vpop.permute.xlu0 %7642
        %7644 = vrot.lane.b32.xlu0 %v1146, 48
        %v7645 = vpop.permute.xlu0 %7644
        %7646 = vrot.lane.b32.xlu0 %v1147, 48
        %v7647 = vpop.permute.xlu0 %7646
        %7648 = vrot.lane.b32.xlu0 %v1148, 48
        %v7649 = vpop.permute.xlu0 %7648
        %7650 = vrot.lane.b32.xlu0 %v1149, 48
        %v7651 = vpop.permute.xlu0 %7650
        %7652 = vrot.lane.b32.xlu0 %v1150, 48
        %v7653 = vpop.permute.xlu0 %7652
        %7654 = vrot.lane.b32.xlu0 %v1151, 48
        %v7655 = vpop.permute.xlu0 %7654
        %v7760 = vrot.slane %v1124, 2
        %v7761 = vrot.slane %v1125, 2
        %v7762 = vsel %vm1284, %v7760, %v7761
        %v7763 = vrot.slane %v1126, 2
        %v7764 = vrot.slane %v1127, 2
        %v7765 = vsel %vm1284, %v7763, %v7764
        %v7766 = vrot.slane %v1148, 2
        %v7767 = vrot.slane %v1149, 2
        %v7768 = vsel %vm1284, %v7766, %v7767
        %v7769 = vrot.slane %v1150, 2
        %v7770 = vrot.slane %v1151, 2
        %v7771 = vsel %vm1284, %v7769, %v7770
        %7772 = vrot.lane.b32.xlu0 %v1389, 56
        %v7773 = vpop.permute.xlu0 %7772
        %7774 = vrot.lane.b32.xlu0 %v1388, 56
        %v7775 = vpop.permute.xlu0 %7774
        %7776 = vrot.lane.b32.xlu0 %v1392, 56
        %v7777 = vpop.permute.xlu0 %7776
        %7778 = vrot.lane.b32.xlu0 %v1391, 56
        %v7779 = vpop.permute.xlu0 %7778
        %7780 = vrot.lane.b32.xlu0 %v1394, 56
        %v7781 = vpop.permute.xlu0 %7780
        %7782 = vrot.lane.b32.xlu0 %v1397, 56
        %v7783 = vpop.permute.xlu0 %7782
        %7784 = vrot.lane.b32.xlu0 %v1400, 56
        %v7785 = vpop.permute.xlu0 %7784
        %7786 = vrot.lane.b32.xlu0 %v1403, 56
        %v7787 = vpop.permute.xlu0 %7786
        %7788 = vrot.lane.b32.xlu0 %v2303, 56
        %v7789 = vpop.permute.xlu0 %7788
        %7790 = vrot.lane.b32.xlu0 %v2306, 56
        %v7791 = vpop.permute.xlu0 %7790
        %7792 = vrot.lane.b32.xlu0 %v1413, 56
        %v7793 = vpop.permute.xlu0 %7792
        %7794 = vrot.lane.b32.xlu0 %v1412, 56
        %v7795 = vpop.permute.xlu0 %7794
        %7796 = vrot.lane.b32.xlu0 %v1416, 56
        %v7797 = vpop.permute.xlu0 %7796
        %7798 = vrot.lane.b32.xlu0 %v1415, 56
        %v7799 = vpop.permute.xlu0 %7798
        %7800 = vrot.lane.b32.xlu0 %v1418, 56
        %v7801 = vpop.permute.xlu0 %7800
        %7802 = vrot.lane.b32.xlu0 %v1421, 56
        %v7803 = vpop.permute.xlu0 %7802
        %7804 = vrot.lane.b32.xlu0 %v1424, 56
        %v7805 = vpop.permute.xlu0 %7804
        %7806 = vrot.lane.b32.xlu0 %v1427, 56
        %v7807 = vpop.permute.xlu0 %7806
        %7808 = vrot.lane.b32.xlu0 %v2309, 56
        %v7809 = vpop.permute.xlu0 %7808
        %7810 = vrot.lane.b32.xlu0 %v2312, 56
        %v7811 = vpop.permute.xlu0 %7810
        %7812 = vrot.lane.b32.xlu0 %v1437, 56
        %v7813 = vpop.permute.xlu0 %7812
        %7814 = vrot.lane.b32.xlu0 %v1436, 56
        %v7815 = vpop.permute.xlu0 %7814
        %7816 = vrot.lane.b32.xlu0 %v1440, 56
        %v7817 = vpop.permute.xlu0 %7816
        %7818 = vrot.lane.b32.xlu0 %v1439, 56
        %v7819 = vpop.permute.xlu0 %7818
        %7820 = vrot.lane.b32.xlu0 %v1442, 56
        %v7821 = vpop.permute.xlu0 %7820
        %7822 = vrot.lane.b32.xlu0 %v1445, 56
        %v7823 = vpop.permute.xlu0 %7822
        %7824 = vrot.lane.b32.xlu0 %v1448, 56
        %v7825 = vpop.permute.xlu0 %7824
        %7826 = vrot.lane.b32.xlu0 %v1451, 56
        %v7827 = vpop.permute.xlu0 %7826
        %7828 = vrot.lane.b32.xlu0 %v2315, 56
        %v7829 = vpop.permute.xlu0 %7828
        %7830 = vrot.lane.b32.xlu0 %v2318, 56
        %v7831 = vpop.permute.xlu0 %7830
        %7832 = vrot.lane.b32.xlu0 %v1461, 56
        %v7833 = vpop.permute.xlu0 %7832
        %7834 = vrot.lane.b32.xlu0 %v1460, 56
        %v7835 = vpop.permute.xlu0 %7834
        %7836 = vrot.lane.b32.xlu0 %v1464, 56
        %v7837 = vpop.permute.xlu0 %7836
        %7838 = vrot.lane.b32.xlu0 %v1463, 56
        %v7839 = vpop.permute.xlu0 %7838
        %7840 = vrot.lane.b32.xlu0 %v1466, 56
        %v7841 = vpop.permute.xlu0 %7840
        %7842 = vrot.lane.b32.xlu0 %v1469, 56
        %v7843 = vpop.permute.xlu0 %7842
        %7844 = vrot.lane.b32.xlu0 %v1472, 56
        %v7845 = vpop.permute.xlu0 %7844
        %7846 = vrot.lane.b32.xlu0 %v1475, 56
        %v7847 = vpop.permute.xlu0 %7846
        %7848 = vrot.lane.b32.xlu0 %v2321, 56
        %v7849 = vpop.permute.xlu0 %7848
        %7850 = vrot.lane.b32.xlu0 %v2324, 56
        %v7851 = vpop.permute.xlu0 %7850
        %7852 = vrot.lane.b32.xlu0 %v3694, 56
        %v7853 = vpop.permute.xlu0 %7852
        %7854 = vrot.lane.b32.xlu0 %v3693, 56
        %v7855 = vpop.permute.xlu0 %7854
        %7856 = vrot.lane.b32.xlu0 %v3697, 56
        %v7857 = vpop.permute.xlu0 %7856
        %7858 = vrot.lane.b32.xlu0 %v3696, 56
        %v7859 = vpop.permute.xlu0 %7858
        %7860 = vrot.lane.b32.xlu0 %v3700, 56
        %v7861 = vpop.permute.xlu0 %7860
        %7862 = vrot.lane.b32.xlu0 %v3699, 56
        %v7863 = vpop.permute.xlu0 %7862
        %7864 = vrot.lane.b32.xlu0 %v3703, 56
        %v7865 = vpop.permute.xlu0 %7864
        %7866 = vrot.lane.b32.xlu0 %v3702, 56
        %v7867 = vpop.permute.xlu0 %7866
        %7868 = vrot.lane.b32.xlu0 %v3706, 56
        %v7869 = vpop.permute.xlu0 %7868
        %7870 = vrot.lane.b32.xlu0 %v3705, 56
        %v7871 = vpop.permute.xlu0 %7870
        %7872 = vrot.lane.b32.xlu0 %v3709, 56
        %v7873 = vpop.permute.xlu0 %7872
        %7874 = vrot.lane.b32.xlu0 %v3708, 56
        %v7875 = vpop.permute.xlu0 %7874
        %7876 = vrot.lane.b32.xlu0 %v4368, 56
        %v7877 = vpop.permute.xlu0 %7876
        %7878 = vrot.lane.b32.xlu0 %v4367, 56
        %v7879 = vpop.permute.xlu0 %7878
        %7880 = vrot.lane.b32.xlu0 %v4371, 56
        %v7881 = vpop.permute.xlu0 %7880
        %7882 = vrot.lane.b32.xlu0 %v4370, 56
        %v7883 = vpop.permute.xlu0 %7882
        %7884 = vrot.lane.b32.xlu0 %v3718, 56
        %v7885 = vpop.permute.xlu0 %7884
        %7886 = vrot.lane.b32.xlu0 %v3717, 56
        %v7887 = vpop.permute.xlu0 %7886
        %7888 = vrot.lane.b32.xlu0 %v3721, 56
        %v7889 = vpop.permute.xlu0 %7888
        %7890 = vrot.lane.b32.xlu0 %v3720, 56
        %v7891 = vpop.permute.xlu0 %7890
        %7892 = vrot.lane.b32.xlu0 %v3724, 56
        %v7893 = vpop.permute.xlu0 %7892
        %7894 = vrot.lane.b32.xlu0 %v3723, 56
        %v7895 = vpop.permute.xlu0 %7894
        %7896 = vrot.lane.b32.xlu0 %v3727, 56
        %v7897 = vpop.permute.xlu0 %7896
        %7898 = vrot.lane.b32.xlu0 %v3726, 56
        %v7899 = vpop.permute.xlu0 %7898
        %7900 = vrot.lane.b32.xlu0 %v3730, 56
        %v7901 = vpop.permute.xlu0 %7900
        %7902 = vrot.lane.b32.xlu0 %v3729, 56
        %v7903 = vpop.permute.xlu0 %7902
        %7904 = vrot.lane.b32.xlu0 %v3733, 56
        %v7905 = vpop.permute.xlu0 %7904
        %7906 = vrot.lane.b32.xlu0 %v3732, 56
        %v7907 = vpop.permute.xlu0 %7906
        %7908 = vrot.lane.b32.xlu0 %v4374, 56
        %v7909 = vpop.permute.xlu0 %7908
        %7910 = vrot.lane.b32.xlu0 %v4373, 56
        %v7911 = vpop.permute.xlu0 %7910
        %7912 = vrot.lane.b32.xlu0 %v4377, 56
        %v7913 = vpop.permute.xlu0 %7912
        %7914 = vrot.lane.b32.xlu0 %v4376, 56
        %v7915 = vpop.permute.xlu0 %7914
        %7916 = vrot.lane.b32.xlu0 %v6880, 56
        %v7917 = vpop.permute.xlu0 %7916
        %7918 = vrot.lane.b32.xlu0 %v6879, 56
        %v7919 = vpop.permute.xlu0 %7918
        %7920 = vrot.lane.b32.xlu0 %v6883, 56
        %v7921 = vpop.permute.xlu0 %7920
        %7922 = vrot.lane.b32.xlu0 %v6882, 56
        %v7923 = vpop.permute.xlu0 %7922
        %7924 = vrot.lane.b32.xlu0 %v6886, 56
        %v7925 = vpop.permute.xlu0 %7924
        %7926 = vrot.lane.b32.xlu0 %v6885, 56
        %v7927 = vpop.permute.xlu0 %7926
        %7928 = vrot.lane.b32.xlu0 %v6889, 56
        %v7929 = vpop.permute.xlu0 %7928
        %7930 = vrot.lane.b32.xlu0 %v6888, 56
        %v7931 = vpop.permute.xlu0 %7930
        %7932 = vrot.lane.b32.xlu0 %v6892, 56
        %v7933 = vpop.permute.xlu0 %7932
        %7934 = vrot.lane.b32.xlu0 %v6891, 56
        %v7935 = vpop.permute.xlu0 %7934
        %7936 = vrot.lane.b32.xlu0 %v6895, 56
        %v7937 = vpop.permute.xlu0 %7936
        %7938 = vrot.lane.b32.xlu0 %v6894, 56
        %v7939 = vpop.permute.xlu0 %7938
        %7940 = vrot.lane.b32.xlu0 %v7762, 56
        %v7941 = vpop.permute.xlu0 %7940
        %7942 = vrot.lane.b32.xlu0 %v7761, 56
        %v7943 = vpop.permute.xlu0 %7942
        %7944 = vrot.lane.b32.xlu0 %v7765, 56
        %v7945 = vpop.permute.xlu0 %7944
        %7946 = vrot.lane.b32.xlu0 %v7764, 56
        %v7947 = vpop.permute.xlu0 %7946
        %7948 = vrot.lane.b32.xlu0 %v6904, 56
        %v7949 = vpop.permute.xlu0 %7948
        %7950 = vrot.lane.b32.xlu0 %v6903, 56
        %v7951 = vpop.permute.xlu0 %7950
        %7952 = vrot.lane.b32.xlu0 %v6907, 56
        %v7953 = vpop.permute.xlu0 %7952
        %7954 = vrot.lane.b32.xlu0 %v6906, 56
        %v7955 = vpop.permute.xlu0 %7954
        %7956 = vrot.lane.b32.xlu0 %v6910, 56
        %v7957 = vpop.permute.xlu0 %7956
        %7958 = vrot.lane.b32.xlu0 %v6909, 56
        %v7959 = vpop.permute.xlu0 %7958
        %7960 = vrot.lane.b32.xlu0 %v6913, 56
        %v7961 = vpop.permute.xlu0 %7960
        %7962 = vrot.lane.b32.xlu0 %v6912, 56
        %v7963 = vpop.permute.xlu0 %7962
        %7964 = vrot.lane.b32.xlu0 %v6916, 56
        %v7965 = vpop.permute.xlu0 %7964
        %7966 = vrot.lane.b32.xlu0 %v6915, 56
        %v7967 = vpop.permute.xlu0 %7966
        %7968 = vrot.lane.b32.xlu0 %v6919, 56
        %v7969 = vpop.permute.xlu0 %7968
        %7970 = vrot.lane.b32.xlu0 %v6918, 56
        %v7971 = vpop.permute.xlu0 %7970
        %7972 = vrot.lane.b32.xlu0 %v7768, 56
        %v7973 = vpop.permute.xlu0 %7972
        %7974 = vrot.lane.b32.xlu0 %v7767, 56
        %v7975 = vpop.permute.xlu0 %7974
        %7976 = vrot.lane.b32.xlu0 %v7771, 56
        %v7977 = vpop.permute.xlu0 %7976
        %7978 = vrot.lane.b32.xlu0 %v7770, 56
        %v7979 = vpop.permute.xlu0 %7978
        %v8088 = vrot.slane %v984, 6
        %v8089 = vrot.slane %v986, 6
        %v8090 = vrot.slane %v1008, 6
        %v8091 = vrot.slane %v1010, 6
        %v8092 = vrot.slane %v1032, 6
        %v8093 = vrot.slane %v1034, 6
        %v8094 = vrot.slane %v1056, 6
        %v8095 = vrot.slane %v1058, 6
        %v8096 = vrot.slane %v1080, 6
        %v8097 = vrot.slane %v1082, 6
        %v8098 = vrot.slane %v1104, 6
        %v8099 = vrot.slane %v1106, 6
        %v8100 = vrot.slane %v1128, 6
        %v8101 = vrot.slane %v1130, 6
        %v8102 = vrot.slane %v1152, 6
        %v8103 = vrot.slane %v1154, 6
        %8104 = vrot.lane.b32.xlu0 %v6292, 64
        %v8105 = vpop.permute.xlu0 %8104
        %8106 = vrot.lane.b32.xlu0 %v6293, 64
        %v8107 = vpop.permute.xlu0 %8106
        %8108 = vrot.lane.b32.xlu0 %v6294, 64
        %v8109 = vpop.permute.xlu0 %8108
        %8110 = vrot.lane.b32.xlu0 %v6295, 64
        %v8111 = vpop.permute.xlu0 %8110
        %8112 = vrot.lane.b32.xlu0 %v7236, 64
        %v8113 = vpop.permute.xlu0 %8112
        %8114 = vrot.lane.b32.xlu0 %v7237, 64
        %v8115 = vpop.permute.xlu0 %8114
        %8116 = vrot.lane.b32.xlu0 %v8088, 64
        %v8117 = vpop.permute.xlu0 %8116
        %8118 = vrot.lane.b32.xlu0 %v8089, 64
        %v8119 = vpop.permute.xlu0 %8118
        %8120 = vrot.lane.b32.xlu0 %v6300, 64
        %v8121 = vpop.permute.xlu0 %8120
        %8122 = vrot.lane.b32.xlu0 %v6301, 64
        %v8123 = vpop.permute.xlu0 %8122
        %8124 = vrot.lane.b32.xlu0 %v6302, 64
        %v8125 = vpop.permute.xlu0 %8124
        %8126 = vrot.lane.b32.xlu0 %v6303, 64
        %v8127 = vpop.permute.xlu0 %8126
        %8128 = vrot.lane.b32.xlu0 %v7238, 64
        %v8129 = vpop.permute.xlu0 %8128
        %8130 = vrot.lane.b32.xlu0 %v7239, 64
        %v8131 = vpop.permute.xlu0 %8130
        %8132 = vrot.lane.b32.xlu0 %v8090, 64
        %v8133 = vpop.permute.xlu0 %8132
        %8134 = vrot.lane.b32.xlu0 %v8091, 64
        %v8135 = vpop.permute.xlu0 %8134
        %8136 = vrot.lane.b32.xlu0 %v6308, 64
        %v8137 = vpop.permute.xlu0 %8136
        %8138 = vrot.lane.b32.xlu0 %v6309, 64
        %v8139 = vpop.permute.xlu0 %8138
        %8140 = vrot.lane.b32.xlu0 %v6310, 64
        %v8141 = vpop.permute.xlu0 %8140
        %8142 = vrot.lane.b32.xlu0 %v6311, 64
        %v8143 = vpop.permute.xlu0 %8142
        %8144 = vrot.lane.b32.xlu0 %v7240, 64
        %v8145 = vpop.permute.xlu0 %8144
        %8146 = vrot.lane.b32.xlu0 %v7241, 64
        %v8147 = vpop.permute.xlu0 %8146
        %8148 = vrot.lane.b32.xlu0 %v8092, 64
        %v8149 = vpop.permute.xlu0 %8148
        %8150 = vrot.lane.b32.xlu0 %v8093, 64
        %v8151 = vpop.permute.xlu0 %8150
        %8152 = vrot.lane.b32.xlu0 %v6316, 64
        %v8153 = vpop.permute.xlu0 %8152
        %8154 = vrot.lane.b32.xlu0 %v6317, 64
        %v8155 = vpop.permute.xlu0 %8154
        %8156 = vrot.lane.b32.xlu0 %v6318, 64
        %v8157 = vpop.permute.xlu0 %8156
        %8158 = vrot.lane.b32.xlu0 %v6319, 64
        %v8159 = vpop.permute.xlu0 %8158
        %8160 = vrot.lane.b32.xlu0 %v7242, 64
        %v8161 = vpop.permute.xlu0 %8160
        %8162 = vrot.lane.b32.xlu0 %v7243, 64
        %v8163 = vpop.permute.xlu0 %8162
        %8164 = vrot.lane.b32.xlu0 %v8094, 64
        %v8165 = vpop.permute.xlu0 %8164
        %8166 = vrot.lane.b32.xlu0 %v8095, 64
        %v8167 = vpop.permute.xlu0 %8166
        %8168 = vrot.lane.b32.xlu0 %v6324, 64
        %v8169 = vpop.permute.xlu0 %8168
        %8170 = vrot.lane.b32.xlu0 %v6325, 64
        %v8171 = vpop.permute.xlu0 %8170
        %8172 = vrot.lane.b32.xlu0 %v6326, 64
        %v8173 = vpop.permute.xlu0 %8172
        %8174 = vrot.lane.b32.xlu0 %v6327, 64
        %v8175 = vpop.permute.xlu0 %8174
        %8176 = vrot.lane.b32.xlu0 %v7244, 64
        %v8177 = vpop.permute.xlu0 %8176
        %8178 = vrot.lane.b32.xlu0 %v7245, 64
        %v8179 = vpop.permute.xlu0 %8178
        %8180 = vrot.lane.b32.xlu0 %v8096, 64
        %v8181 = vpop.permute.xlu0 %8180
        %8182 = vrot.lane.b32.xlu0 %v8097, 64
        %v8183 = vpop.permute.xlu0 %8182
        %8184 = vrot.lane.b32.xlu0 %v6332, 64
        %v8185 = vpop.permute.xlu0 %8184
        %8186 = vrot.lane.b32.xlu0 %v6333, 64
        %v8187 = vpop.permute.xlu0 %8186
        %8188 = vrot.lane.b32.xlu0 %v6334, 64
        %v8189 = vpop.permute.xlu0 %8188
        %8190 = vrot.lane.b32.xlu0 %v6335, 64
        %v8191 = vpop.permute.xlu0 %8190
        %8192 = vrot.lane.b32.xlu0 %v7246, 64
        %v8193 = vpop.permute.xlu0 %8192
        %8194 = vrot.lane.b32.xlu0 %v7247, 64
        %v8195 = vpop.permute.xlu0 %8194
        %8196 = vrot.lane.b32.xlu0 %v8098, 64
        %v8197 = vpop.permute.xlu0 %8196
        %8198 = vrot.lane.b32.xlu0 %v8099, 64
        %v8199 = vpop.permute.xlu0 %8198
        %8200 = vrot.lane.b32.xlu0 %v6340, 64
        %v8201 = vpop.permute.xlu0 %8200
        %8202 = vrot.lane.b32.xlu0 %v6341, 64
        %v8203 = vpop.permute.xlu0 %8202
        %8204 = vrot.lane.b32.xlu0 %v6342, 64
        %v8205 = vpop.permute.xlu0 %8204
        %8206 = vrot.lane.b32.xlu0 %v6343, 64
        %v8207 = vpop.permute.xlu0 %8206
        %8208 = vrot.lane.b32.xlu0 %v7248, 64
        %v8209 = vpop.permute.xlu0 %8208
        %8210 = vrot.lane.b32.xlu0 %v7249, 64
        %v8211 = vpop.permute.xlu0 %8210
        %8212 = vrot.lane.b32.xlu0 %v8100, 64
        %v8213 = vpop.permute.xlu0 %8212
        %8214 = vrot.lane.b32.xlu0 %v8101, 64
        %v8215 = vpop.permute.xlu0 %8214
        %8216 = vrot.lane.b32.xlu0 %v6348, 64
        %v8217 = vpop.permute.xlu0 %8216
        %8218 = vrot.lane.b32.xlu0 %v6349, 64
        %v8219 = vpop.permute.xlu0 %8218
        %8220 = vrot.lane.b32.xlu0 %v6350, 64
        %v8221 = vpop.permute.xlu0 %8220
        %8222 = vrot.lane.b32.xlu0 %v6351, 64
        %v8223 = vpop.permute.xlu0 %8222
        %8224 = vrot.lane.b32.xlu0 %v7250, 64
        %v8225 = vpop.permute.xlu0 %8224
        %8226 = vrot.lane.b32.xlu0 %v7251, 64
        %v8227 = vpop.permute.xlu0 %8226
        %8228 = vrot.lane.b32.xlu0 %v8102, 64
        %v8229 = vpop.permute.xlu0 %8228
        %8230 = vrot.lane.b32.xlu0 %v8103, 64
        %v8231 = vpop.permute.xlu0 %8230
        %8300 = vrot.lane.b32.xlu0 %v973, 72
        %v8301 = vpop.permute.xlu0 %8300
        %8302 = vrot.lane.b32.xlu0 %v975, 72
        %v8303 = vpop.permute.xlu0 %8302
        %8304 = vrot.lane.b32.xlu0 %v977, 72
        %v8305 = vpop.permute.xlu0 %8304
        %8306 = vrot.lane.b32.xlu0 %v979, 72
        %v8307 = vpop.permute.xlu0 %8306
        %8308 = vrot.lane.b32.xlu0 %v980, 72
        %v8309 = vpop.permute.xlu0 %8308
        %8310 = vrot.lane.b32.xlu0 %v981, 72
        %v8311 = vpop.permute.xlu0 %8310
        %8312 = vrot.lane.b32.xlu0 %v982, 72
        %v8313 = vpop.permute.xlu0 %8312
        %8314 = vrot.lane.b32.xlu0 %v983, 72
        %v8315 = vpop.permute.xlu0 %8314
        %8316 = vrot.lane.b32.xlu0 %v984, 72
        %v8317 = vpop.permute.xlu0 %8316
        %8318 = vrot.lane.b32.xlu0 %v985, 72
        %v8319 = vpop.permute.xlu0 %8318
        %8320 = vrot.lane.b32.xlu0 %v986, 72
        %v8321 = vpop.permute.xlu0 %8320
        %8322 = vrot.lane.b32.xlu0 %v987, 72
        %v8323 = vpop.permute.xlu0 %8322
        %8324 = vrot.lane.b32.xlu0 %v997, 72
        %v8325 = vpop.permute.xlu0 %8324
        %8326 = vrot.lane.b32.xlu0 %v999, 72
        %v8327 = vpop.permute.xlu0 %8326
        %8328 = vrot.lane.b32.xlu0 %v1001, 72
        %v8329 = vpop.permute.xlu0 %8328
        %8330 = vrot.lane.b32.xlu0 %v1003, 72
        %v8331 = vpop.permute.xlu0 %8330
        %8332 = vrot.lane.b32.xlu0 %v1004, 72
        %v8333 = vpop.permute.xlu0 %8332
        %8334 = vrot.lane.b32.xlu0 %v1005, 72
        %v8335 = vpop.permute.xlu0 %8334
        %8336 = vrot.lane.b32.xlu0 %v1006, 72
        %v8337 = vpop.permute.xlu0 %8336
        %8338 = vrot.lane.b32.xlu0 %v1007, 72
        %v8339 = vpop.permute.xlu0 %8338
        %8340 = vrot.lane.b32.xlu0 %v1008, 72
        %v8341 = vpop.permute.xlu0 %8340
        %8342 = vrot.lane.b32.xlu0 %v1009, 72
        %v8343 = vpop.permute.xlu0 %8342
        %8344 = vrot.lane.b32.xlu0 %v1010, 72
        %v8345 = vpop.permute.xlu0 %8344
        %8346 = vrot.lane.b32.xlu0 %v1011, 72
        %v8347 = vpop.permute.xlu0 %8346
        %8348 = vrot.lane.b32.xlu0 %v1021, 72
        %v8349 = vpop.permute.xlu0 %8348
        %8350 = vrot.lane.b32.xlu0 %v1023, 72
        %v8351 = vpop.permute.xlu0 %8350
        %8352 = vrot.lane.b32.xlu0 %v1025, 72
        %v8353 = vpop.permute.xlu0 %8352
        %8354 = vrot.lane.b32.xlu0 %v1027, 72
        %v8355 = vpop.permute.xlu0 %8354
        %8356 = vrot.lane.b32.xlu0 %v1028, 72
        %v8357 = vpop.permute.xlu0 %8356
        %8358 = vrot.lane.b32.xlu0 %v1029, 72
        %v8359 = vpop.permute.xlu0 %8358
        %8360 = vrot.lane.b32.xlu0 %v1030, 72
        %v8361 = vpop.permute.xlu0 %8360
        %8362 = vrot.lane.b32.xlu0 %v1031, 72
        %v8363 = vpop.permute.xlu0 %8362
        %8364 = vrot.lane.b32.xlu0 %v1032, 72
        %v8365 = vpop.permute.xlu0 %8364
        %8366 = vrot.lane.b32.xlu0 %v1033, 72
        %v8367 = vpop.permute.xlu0 %8366
        %8368 = vrot.lane.b32.xlu0 %v1034, 72
        %v8369 = vpop.permute.xlu0 %8368
        %8370 = vrot.lane.b32.xlu0 %v1035, 72
        %v8371 = vpop.permute.xlu0 %8370
        %8372 = vrot.lane.b32.xlu0 %v1045, 72
        %v8373 = vpop.permute.xlu0 %8372
        %8374 = vrot.lane.b32.xlu0 %v1047, 72
        %v8375 = vpop.permute.xlu0 %8374
        %8376 = vrot.lane.b32.xlu0 %v1049, 72
        %v8377 = vpop.permute.xlu0 %8376
        %8378 = vrot.lane.b32.xlu0 %v1051, 72
        %v8379 = vpop.permute.xlu0 %8378
        %8380 = vrot.lane.b32.xlu0 %v1052, 72
        %v8381 = vpop.permute.xlu0 %8380
        %8382 = vrot.lane.b32.xlu0 %v1053, 72
        %v8383 = vpop.permute.xlu0 %8382
        %8384 = vrot.lane.b32.xlu0 %v1054, 72
        %v8385 = vpop.permute.xlu0 %8384
        %8386 = vrot.lane.b32.xlu0 %v1055, 72
        %v8387 = vpop.permute.xlu0 %8386
        %8388 = vrot.lane.b32.xlu0 %v1056, 72
        %v8389 = vpop.permute.xlu0 %8388
        %8390 = vrot.lane.b32.xlu0 %v1057, 72
        %v8391 = vpop.permute.xlu0 %8390
        %8392 = vrot.lane.b32.xlu0 %v1058, 72
        %v8393 = vpop.permute.xlu0 %8392
        %8394 = vrot.lane.b32.xlu0 %v1059, 72
        %v8395 = vpop.permute.xlu0 %8394
        %8396 = vrot.lane.b32.xlu0 %v1069, 72
        %v8397 = vpop.permute.xlu0 %8396
        %8398 = vrot.lane.b32.xlu0 %v1071, 72
        %v8399 = vpop.permute.xlu0 %8398
        %8400 = vrot.lane.b32.xlu0 %v1073, 72
        %v8401 = vpop.permute.xlu0 %8400
        %8402 = vrot.lane.b32.xlu0 %v1075, 72
        %v8403 = vpop.permute.xlu0 %8402
        %8404 = vrot.lane.b32.xlu0 %v1076, 72
        %v8405 = vpop.permute.xlu0 %8404
        %8406 = vrot.lane.b32.xlu0 %v1077, 72
        %v8407 = vpop.permute.xlu0 %8406
        %8408 = vrot.lane.b32.xlu0 %v1078, 72
        %v8409 = vpop.permute.xlu0 %8408
        %8410 = vrot.lane.b32.xlu0 %v1079, 72
        %v8411 = vpop.permute.xlu0 %8410
        %8412 = vrot.lane.b32.xlu0 %v1080, 72
        %v8413 = vpop.permute.xlu0 %8412
        %8414 = vrot.lane.b32.xlu0 %v1081, 72
        %v8415 = vpop.permute.xlu0 %8414
        %8416 = vrot.lane.b32.xlu0 %v1082, 72
        %v8417 = vpop.permute.xlu0 %8416
        %8418 = vrot.lane.b32.xlu0 %v1083, 72
        %v8419 = vpop.permute.xlu0 %8418
        %8420 = vrot.lane.b32.xlu0 %v1093, 72
        %v8421 = vpop.permute.xlu0 %8420
        %8422 = vrot.lane.b32.xlu0 %v1095, 72
        %v8423 = vpop.permute.xlu0 %8422
        %8424 = vrot.lane.b32.xlu0 %v1097, 72
        %v8425 = vpop.permute.xlu0 %8424
        %8426 = vrot.lane.b32.xlu0 %v1099, 72
        %v8427 = vpop.permute.xlu0 %8426
        %8428 = vrot.lane.b32.xlu0 %v1100, 72
        %v8429 = vpop.permute.xlu0 %8428
        %8430 = vrot.lane.b32.xlu0 %v1101, 72
        %v8431 = vpop.permute.xlu0 %8430
        %8432 = vrot.lane.b32.xlu0 %v1102, 72
        %v8433 = vpop.permute.xlu0 %8432
        %8434 = vrot.lane.b32.xlu0 %v1103, 72
        %v8435 = vpop.permute.xlu0 %8434
        %8436 = vrot.lane.b32.xlu0 %v1104, 72
        %v8437 = vpop.permute.xlu0 %8436
        %8438 = vrot.lane.b32.xlu0 %v1105, 72
        %v8439 = vpop.permute.xlu0 %8438
        %8440 = vrot.lane.b32.xlu0 %v1106, 72
        %v8441 = vpop.permute.xlu0 %8440
        %8442 = vrot.lane.b32.xlu0 %v1107, 72
        %v8443 = vpop.permute.xlu0 %8442
        %8444 = vrot.lane.b32.xlu0 %v1116, 72
        %v8445 = vpop.permute.xlu0 %8444
        %8446 = vrot.lane.b32.xlu0 %v1117, 72
        %v8447 = vpop.permute.xlu0 %8446
        %8448 = vrot.lane.b32.xlu0 %v1118, 72
        %v8449 = vpop.permute.xlu0 %8448
        %8450 = vrot.lane.b32.xlu0 %v1119, 72
        %v8451 = vpop.permute.xlu0 %8450
        %8452 = vrot.lane.b32.xlu0 %v1120, 72
        %v8453 = vpop.permute.xlu0 %8452
        %8454 = vrot.lane.b32.xlu0 %v1121, 72
        %v8455 = vpop.permute.xlu0 %8454
        %8456 = vrot.lane.b32.xlu0 %v1122, 72
        %v8457 = vpop.permute.xlu0 %8456
        %8458 = vrot.lane.b32.xlu0 %v1123, 72
        %v8459 = vpop.permute.xlu0 %8458
        %8460 = vrot.lane.b32.xlu0 %v1124, 72
        %v8461 = vpop.permute.xlu0 %8460
        %8462 = vrot.lane.b32.xlu0 %v1125, 72
        %v8463 = vpop.permute.xlu0 %8462
        %8464 = vrot.lane.b32.xlu0 %v1126, 72
        %v8465 = vpop.permute.xlu0 %8464
        %8466 = vrot.lane.b32.xlu0 %v1127, 72
        %v8467 = vpop.permute.xlu0 %8466
        %8468 = vrot.lane.b32.xlu0 %v1128, 72
        %v8469 = vpop.permute.xlu0 %8468
        %8470 = vrot.lane.b32.xlu0 %v1129, 72
        %v8471 = vpop.permute.xlu0 %8470
        %8472 = vrot.lane.b32.xlu0 %v1130, 72
        %v8473 = vpop.permute.xlu0 %8472
        %8474 = vrot.lane.b32.xlu0 %v1131, 72
        %v8475 = vpop.permute.xlu0 %8474
        %8476 = vrot.lane.b32.xlu0 %v1140, 72
        %v8477 = vpop.permute.xlu0 %8476
        %8478 = vrot.lane.b32.xlu0 %v1141, 72
        %v8479 = vpop.permute.xlu0 %8478
        %8480 = vrot.lane.b32.xlu0 %v1142, 72
        %v8481 = vpop.permute.xlu0 %8480
        %8482 = vrot.lane.b32.xlu0 %v1143, 72
        %v8483 = vpop.permute.xlu0 %8482
        %8484 = vrot.lane.b32.xlu0 %v1144, 72
        %v8485 = vpop.permute.xlu0 %8484
        %8486 = vrot.lane.b32.xlu0 %v1145, 72
        %v8487 = vpop.permute.xlu0 %8486
        %8488 = vrot.lane.b32.xlu0 %v1146, 72
        %v8489 = vpop.permute.xlu0 %8488
        %8490 = vrot.lane.b32.xlu0 %v1147, 72
        %v8491 = vpop.permute.xlu0 %8490
        %8492 = vrot.lane.b32.xlu0 %v1148, 72
        %v8493 = vpop.permute.xlu0 %8492
        %8494 = vrot.lane.b32.xlu0 %v1149, 72
        %v8495 = vpop.permute.xlu0 %8494
        %8496 = vrot.lane.b32.xlu0 %v1150, 72
        %v8497 = vpop.permute.xlu0 %8496
        %8498 = vrot.lane.b32.xlu0 %v1151, 72
        %v8499 = vpop.permute.xlu0 %8498
        %8500 = vrot.lane.b32.xlu0 %v1152, 72
        %v8501 = vpop.permute.xlu0 %8500
        %8502 = vrot.lane.b32.xlu0 %v1153, 72
        %v8503 = vpop.permute.xlu0 %8502
        %8504 = vrot.lane.b32.xlu0 %v1154, 72
        %v8505 = vpop.permute.xlu0 %8504
        %8506 = vrot.lane.b32.xlu0 %v1155, 72
        %v8507 = vpop.permute.xlu0 %8506
        %v8612 = vrot.slane %v1128, 2
        %v8613 = vrot.slane %v1129, 2
        %v8614 = vsel %vm1284, %v8612, %v8613
        %v8615 = vrot.slane %v1130, 2
        %v8616 = vrot.slane %v1131, 2
        %v8617 = vsel %vm1284, %v8615, %v8616
        %v8618 = vrot.slane %v1152, 2
        %v8619 = vrot.slane %v1153, 2
        %v8620 = vsel %vm1284, %v8618, %v8619
        %v8621 = vrot.slane %v1154, 2
        %v8622 = vrot.slane %v1155, 2
        %v8623 = vsel %vm1284, %v8621, %v8622
        %8624 = vrot.lane.b32.xlu0 %v1394, 80
        %v8625 = vpop.permute.xlu0 %8624
        %8626 = vrot.lane.b32.xlu0 %v1397, 80
        %v8627 = vpop.permute.xlu0 %8626
        %8628 = vrot.lane.b32.xlu0 %v1400, 80
        %v8629 = vpop.permute.xlu0 %8628
        %8630 = vrot.lane.b32.xlu0 %v1403, 80
        %v8631 = vpop.permute.xlu0 %8630
        %8632 = vrot.lane.b32.xlu0 %v2304, 80
        %v8633 = vpop.permute.xlu0 %8632
        %8634 = vrot.lane.b32.xlu0 %v2303, 80
        %v8635 = vpop.permute.xlu0 %8634
        %8636 = vrot.lane.b32.xlu0 %v2307, 80
        %v8637 = vpop.permute.xlu0 %8636
        %8638 = vrot.lane.b32.xlu0 %v2306, 80
        %v8639 = vpop.permute.xlu0 %8638
        %8640 = vrot.lane.b32.xlu0 %v3008, 80
        %v8641 = vpop.permute.xlu0 %8640
        %8642 = vrot.lane.b32.xlu0 %v3007, 80
        %v8643 = vpop.permute.xlu0 %8642
        %8644 = vrot.lane.b32.xlu0 %v3011, 80
        %v8645 = vpop.permute.xlu0 %8644
        %8646 = vrot.lane.b32.xlu0 %v3010, 80
        %v8647 = vpop.permute.xlu0 %8646
        %8648 = vrot.lane.b32.xlu0 %v1418, 80
        %v8649 = vpop.permute.xlu0 %8648
        %8650 = vrot.lane.b32.xlu0 %v1421, 80
        %v8651 = vpop.permute.xlu0 %8650
        %8652 = vrot.lane.b32.xlu0 %v1424, 80
        %v8653 = vpop.permute.xlu0 %8652
        %8654 = vrot.lane.b32.xlu0 %v1427, 80
        %v8655 = vpop.permute.xlu0 %8654
        %8656 = vrot.lane.b32.xlu0 %v2310, 80
        %v8657 = vpop.permute.xlu0 %8656
        %8658 = vrot.lane.b32.xlu0 %v2309, 80
        %v8659 = vpop.permute.xlu0 %8658
        %8660 = vrot.lane.b32.xlu0 %v2313, 80
        %v8661 = vpop.permute.xlu0 %8660
        %8662 = vrot.lane.b32.xlu0 %v2312, 80
        %v8663 = vpop.permute.xlu0 %8662
        %8664 = vrot.lane.b32.xlu0 %v3014, 80
        %v8665 = vpop.permute.xlu0 %8664
        %8666 = vrot.lane.b32.xlu0 %v3013, 80
        %v8667 = vpop.permute.xlu0 %8666
        %8668 = vrot.lane.b32.xlu0 %v3017, 80
        %v8669 = vpop.permute.xlu0 %8668
        %8670 = vrot.lane.b32.xlu0 %v3016, 80
        %v8671 = vpop.permute.xlu0 %8670
        %8672 = vrot.lane.b32.xlu0 %v1442, 80
        %v8673 = vpop.permute.xlu0 %8672
        %8674 = vrot.lane.b32.xlu0 %v1445, 80
        %v8675 = vpop.permute.xlu0 %8674
        %8676 = vrot.lane.b32.xlu0 %v1448, 80
        %v8677 = vpop.permute.xlu0 %8676
        %8678 = vrot.lane.b32.xlu0 %v1451, 80
        %v8679 = vpop.permute.xlu0 %8678
        %8680 = vrot.lane.b32.xlu0 %v2316, 80
        %v8681 = vpop.permute.xlu0 %8680
        %8682 = vrot.lane.b32.xlu0 %v2315, 80
        %v8683 = vpop.permute.xlu0 %8682
        %8684 = vrot.lane.b32.xlu0 %v2319, 80
        %v8685 = vpop.permute.xlu0 %8684
        %8686 = vrot.lane.b32.xlu0 %v2318, 80
        %v8687 = vpop.permute.xlu0 %8686
        %8688 = vrot.lane.b32.xlu0 %v3020, 80
        %v8689 = vpop.permute.xlu0 %8688
        %8690 = vrot.lane.b32.xlu0 %v3019, 80
        %v8691 = vpop.permute.xlu0 %8690
        %8692 = vrot.lane.b32.xlu0 %v3023, 80
        %v8693 = vpop.permute.xlu0 %8692
        %8694 = vrot.lane.b32.xlu0 %v3022, 80
        %v8695 = vpop.permute.xlu0 %8694
        %8696 = vrot.lane.b32.xlu0 %v1466, 80
        %v8697 = vpop.permute.xlu0 %8696
        %8698 = vrot.lane.b32.xlu0 %v1469, 80
        %v8699 = vpop.permute.xlu0 %8698
        %8700 = vrot.lane.b32.xlu0 %v1472, 80
        %v8701 = vpop.permute.xlu0 %8700
        %8702 = vrot.lane.b32.xlu0 %v1475, 80
        %v8703 = vpop.permute.xlu0 %8702
        %8704 = vrot.lane.b32.xlu0 %v2322, 80
        %v8705 = vpop.permute.xlu0 %8704
        %8706 = vrot.lane.b32.xlu0 %v2321, 80
        %v8707 = vpop.permute.xlu0 %8706
        %8708 = vrot.lane.b32.xlu0 %v2325, 80
        %v8709 = vpop.permute.xlu0 %8708
        %8710 = vrot.lane.b32.xlu0 %v2324, 80
        %v8711 = vpop.permute.xlu0 %8710
        %8712 = vrot.lane.b32.xlu0 %v3026, 80
        %v8713 = vpop.permute.xlu0 %8712
        %8714 = vrot.lane.b32.xlu0 %v3025, 80
        %v8715 = vpop.permute.xlu0 %8714
        %8716 = vrot.lane.b32.xlu0 %v3029, 80
        %v8717 = vpop.permute.xlu0 %8716
        %8718 = vrot.lane.b32.xlu0 %v3028, 80
        %v8719 = vpop.permute.xlu0 %8718
        %8720 = vrot.lane.b32.xlu0 %v3699, 80
        %v8721 = vpop.permute.xlu0 %8720
        %8722 = vrot.lane.b32.xlu0 %v3702, 80
        %v8723 = vpop.permute.xlu0 %8722
        %8724 = vrot.lane.b32.xlu0 %v3705, 80
        %v8725 = vpop.permute.xlu0 %8724
        %8726 = vrot.lane.b32.xlu0 %v3708, 80
        %v8727 = vpop.permute.xlu0 %8726
        %8728 = vrot.lane.b32.xlu0 %v4368, 80
        %v8729 = vpop.permute.xlu0 %8728
        %8730 = vrot.lane.b32.xlu0 %v4367, 80
        %v8731 = vpop.permute.xlu0 %8730
        %8732 = vrot.lane.b32.xlu0 %v4371, 80
        %v8733 = vpop.permute.xlu0 %8732
        %8734 = vrot.lane.b32.xlu0 %v4370, 80
        %v8735 = vpop.permute.xlu0 %8734
        %8736 = vrot.lane.b32.xlu0 %v5950, 80
        %v8737 = vpop.permute.xlu0 %8736
        %8738 = vrot.lane.b32.xlu0 %v5949, 80
        %v8739 = vpop.permute.xlu0 %8738
        %8740 = vrot.lane.b32.xlu0 %v5953, 80
        %v8741 = vpop.permute.xlu0 %8740
        %8742 = vrot.lane.b32.xlu0 %v5952, 80
        %v8743 = vpop.permute.xlu0 %8742
        %8744 = vrot.lane.b32.xlu0 %v3723, 80
        %v8745 = vpop.permute.xlu0 %8744
        %8746 = vrot.lane.b32.xlu0 %v3726, 80
        %v8747 = vpop.permute.xlu0 %8746
        %8748 = vrot.lane.b32.xlu0 %v3729, 80
        %v8749 = vpop.permute.xlu0 %8748
        %8750 = vrot.lane.b32.xlu0 %v3732, 80
        %v8751 = vpop.permute.xlu0 %8750
        %8752 = vrot.lane.b32.xlu0 %v4374, 80
        %v8753 = vpop.permute.xlu0 %8752
        %8754 = vrot.lane.b32.xlu0 %v4373, 80
        %v8755 = vpop.permute.xlu0 %8754
        %8756 = vrot.lane.b32.xlu0 %v4377, 80
        %v8757 = vpop.permute.xlu0 %8756
        %8758 = vrot.lane.b32.xlu0 %v4376, 80
        %v8759 = vpop.permute.xlu0 %8758
        %8760 = vrot.lane.b32.xlu0 %v5956, 80
        %v8761 = vpop.permute.xlu0 %8760
        %8762 = vrot.lane.b32.xlu0 %v5955, 80
        %v8763 = vpop.permute.xlu0 %8762
        %8764 = vrot.lane.b32.xlu0 %v5959, 80
        %v8765 = vpop.permute.xlu0 %8764
        %8766 = vrot.lane.b32.xlu0 %v5958, 80
        %v8767 = vpop.permute.xlu0 %8766
        %8768 = vrot.lane.b32.xlu0 %v6886, 80
        %v8769 = vpop.permute.xlu0 %8768
        %8770 = vrot.lane.b32.xlu0 %v6885, 80
        %v8771 = vpop.permute.xlu0 %8770
        %8772 = vrot.lane.b32.xlu0 %v6889, 80
        %v8773 = vpop.permute.xlu0 %8772
        %8774 = vrot.lane.b32.xlu0 %v6888, 80
        %v8775 = vpop.permute.xlu0 %8774
        %8776 = vrot.lane.b32.xlu0 %v6892, 80
        %v8777 = vpop.permute.xlu0 %8776
        %8778 = vrot.lane.b32.xlu0 %v6891, 80
        %v8779 = vpop.permute.xlu0 %8778
        %8780 = vrot.lane.b32.xlu0 %v6895, 80
        %v8781 = vpop.permute.xlu0 %8780
        %8782 = vrot.lane.b32.xlu0 %v6894, 80
        %v8783 = vpop.permute.xlu0 %8782
        %8784 = vrot.lane.b32.xlu0 %v7762, 80
        %v8785 = vpop.permute.xlu0 %8784
        %8786 = vrot.lane.b32.xlu0 %v7761, 80
        %v8787 = vpop.permute.xlu0 %8786
        %8788 = vrot.lane.b32.xlu0 %v7765, 80
        %v8789 = vpop.permute.xlu0 %8788
        %8790 = vrot.lane.b32.xlu0 %v7764, 80
        %v8791 = vpop.permute.xlu0 %8790
        %8792 = vrot.lane.b32.xlu0 %v8614, 80
        %v8793 = vpop.permute.xlu0 %8792
        %8794 = vrot.lane.b32.xlu0 %v8613, 80
        %v8795 = vpop.permute.xlu0 %8794
        %8796 = vrot.lane.b32.xlu0 %v8617, 80
        %v8797 = vpop.permute.xlu0 %8796
        %8798 = vrot.lane.b32.xlu0 %v8616, 80
        %v8799 = vpop.permute.xlu0 %8798
        %8800 = vrot.lane.b32.xlu0 %v6910, 80
        %v8801 = vpop.permute.xlu0 %8800
        %8802 = vrot.lane.b32.xlu0 %v6909, 80
        %v8803 = vpop.permute.xlu0 %8802
        %8804 = vrot.lane.b32.xlu0 %v6913, 80
        %v8805 = vpop.permute.xlu0 %8804
        %8806 = vrot.lane.b32.xlu0 %v6912, 80
        %v8807 = vpop.permute.xlu0 %8806
        %8808 = vrot.lane.b32.xlu0 %v6916, 80
        %v8809 = vpop.permute.xlu0 %8808
        %8810 = vrot.lane.b32.xlu0 %v6915, 80
        %v8811 = vpop.permute.xlu0 %8810
        %8812 = vrot.lane.b32.xlu0 %v6919, 80
        %v8813 = vpop.permute.xlu0 %8812
        %8814 = vrot.lane.b32.xlu0 %v6918, 80
        %v8815 = vpop.permute.xlu0 %8814
        %8816 = vrot.lane.b32.xlu0 %v7768, 80
        %v8817 = vpop.permute.xlu0 %8816
        %8818 = vrot.lane.b32.xlu0 %v7767, 80
        %v8819 = vpop.permute.xlu0 %8818
        %8820 = vrot.lane.b32.xlu0 %v7771, 80
        %v8821 = vpop.permute.xlu0 %8820
        %8822 = vrot.lane.b32.xlu0 %v7770, 80
        %v8823 = vpop.permute.xlu0 %8822
        %8824 = vrot.lane.b32.xlu0 %v8620, 80
        %v8825 = vpop.permute.xlu0 %8824
        %8826 = vrot.lane.b32.xlu0 %v8619, 80
        %v8827 = vpop.permute.xlu0 %8826
        %8828 = vrot.lane.b32.xlu0 %v8623, 80
        %v8829 = vpop.permute.xlu0 %8828
        %8830 = vrot.lane.b32.xlu0 %v8622, 80
        %v8831 = vpop.permute.xlu0 %8830
        %v8936 = vsel %vm249, %v925, %v5961
        %v8937 = vsel %vm249, %v927, %v5963
        %v8938 = vsel %vm249, %v929, %v5965
        %v8939 = vsel %vm249, %v931, %v5967
        %v8940 = vsel %vm249, %v932, %v5969
        %v8941 = vsel %vm249, %v933, %v5971
        %v8942 = vsel %vm249, %v934, %v5973
        %v8943 = vsel %vm249, %v935, %v5975
        %v8944 = vsel %vm249, %v936, %v5977
        %v8945 = vsel %vm249, %v937, %v5979
        %v8946 = vsel %vm249, %v938, %v5981
        %v8947 = vsel %vm249, %v939, %v5983
        %v8948 = vsel %vm249, %v949, %v5985
        %v8949 = vsel %vm249, %v951, %v5987
        %v8950 = vsel %vm249, %v953, %v5989
        %v8951 = vsel %vm249, %v955, %v5991
        %v8952 = vsel %vm249, %v956, %v5993
        %v8953 = vsel %vm249, %v957, %v5995
        %v8954 = vsel %vm249, %v958, %v5997
        %v8955 = vsel %vm249, %v959, %v5999
        %v8956 = vsel %vm249, %v960, %v6001
        %v8957 = vsel %vm249, %v961, %v6003
        %v8958 = vsel %vm249, %v962, %v6005
        %v8959 = vsel %vm249, %v963, %v6007
        %v8960 = vsel %vm249, %v973, %v6009
        %v8961 = vsel %vm249, %v975, %v6011
        %v8962 = vsel %vm249, %v977, %v6013
        %v8963 = vsel %vm249, %v979, %v6015
        %v8964 = vsel %vm249, %v980, %v6017
        %v8965 = vsel %vm249, %v981, %v6019
        %v8966 = vsel %vm249, %v982, %v6021
        %v8967 = vsel %vm249, %v983, %v6023
        %v8968 = vsel %vm249, %v984, %v6025
        %v8969 = vsel %vm249, %v985, %v6027
        %v8970 = vsel %vm249, %v986, %v6029
        %v8971 = vsel %vm249, %v987, %v6031
        %v8972 = vsel %vm249, %v997, %v6033
        %v8973 = vsel %vm249, %v999, %v6035
        %v8974 = vsel %vm249, %v1001, %v6037
        %v8975 = vsel %vm249, %v1003, %v6039
        %v8976 = vsel %vm249, %v1004, %v6041
        %v8977 = vsel %vm249, %v1005, %v6043
        %v8978 = vsel %vm249, %v1006, %v6045
        %v8979 = vsel %vm249, %v1007, %v6047
        %v8980 = vsel %vm249, %v1008, %v6049
        %v8981 = vsel %vm249, %v1009, %v6051
        %v8982 = vsel %vm249, %v1010, %v6053
        %v8983 = vsel %vm249, %v1011, %v6055
        %v8984 = vsel %vm249, %v1021, %v6057
        %v8985 = vsel %vm249, %v1023, %v6059
        %v8986 = vsel %vm249, %v1025, %v6061
        %v8987 = vsel %vm249, %v1027, %v6063
        %v8988 = vsel %vm249, %v1028, %v6065
        %v8989 = vsel %vm249, %v1029, %v6067
        %v8990 = vsel %vm249, %v1030, %v6069
        %v8991 = vsel %vm249, %v1031, %v6071
        %v8992 = vsel %vm249, %v1032, %v6073
        %v8993 = vsel %vm249, %v1033, %v6075
        %v8994 = vsel %vm249, %v1034, %v6077
        %v8995 = vsel %vm249, %v1035, %v6079
        %v8996 = vsel %vm249, %v1045, %v6081
        %v8997 = vsel %vm249, %v1047, %v6083
        %v8998 = vsel %vm249, %v1049, %v6085
        %v8999 = vsel %vm249, %v1051, %v6087
        %v9000 = vsel %vm249, %v1052, %v6089
        %v9001 = vsel %vm249, %v1053, %v6091
        %v9002 = vsel %vm249, %v1054, %v6093
        %v9003 = vsel %vm249, %v1055, %v6095
        %v9004 = vsel %vm249, %v1056, %v6097
        %v9005 = vsel %vm249, %v1057, %v6099
        %v9006 = vsel %vm249, %v1058, %v6101
        %v9007 = vsel %vm249, %v1059, %v6103
        %v9008 = vsel %vm249, %v1068, %v6105
        %v9009 = vsel %vm249, %v1069, %v6107
        %v9010 = vsel %vm249, %v1070, %v6109
        %v9011 = vsel %vm249, %v1071, %v6111
        %v9012 = vsel %vm249, %v1072, %v6113
        %v9013 = vsel %vm249, %v1073, %v6115
        %v9014 = vsel %vm249, %v1074, %v6117
        %v9015 = vsel %vm249, %v1075, %v6119
        %v9016 = vsel %vm249, %v1076, %v6121
        %v9017 = vsel %vm249, %v1077, %v6123
        %v9018 = vsel %vm249, %v1078, %v6125
        %v9019 = vsel %vm249, %v1079, %v6127
        %v9020 = vsel %vm249, %v1080, %v6129
        %v9021 = vsel %vm249, %v1081, %v6131
        %v9022 = vsel %vm249, %v1082, %v6133
        %v9023 = vsel %vm249, %v1083, %v6135
        %v9024 = vsel %vm249, %v1092, %v6137
        %v9025 = vsel %vm249, %v1093, %v6139
        %v9026 = vsel %vm249, %v1094, %v6141
        %v9027 = vsel %vm249, %v1095, %v6143
        %v9028 = vsel %vm249, %v1096, %v6145
        %v9029 = vsel %vm249, %v1097, %v6147
        %v9030 = vsel %vm249, %v1098, %v6149
        %v9031 = vsel %vm249, %v1099, %v6151
        %v9032 = vsel %vm249, %v1100, %v6153
        %v9033 = vsel %vm249, %v1101, %v6155
        %v9034 = vsel %vm249, %v1102, %v6157
        %v9035 = vsel %vm249, %v1103, %v6159
        %v9036 = vsel %vm249, %v1104, %v6161
        %v9037 = vsel %vm249, %v1105, %v6163
        %v9038 = vsel %vm249, %v1106, %v6165
        %v9039 = vsel %vm249, %v1107, %v6167
        %v9040 = vsel %vm5034, %v4990, %v6353
        %v9041 = vsel %vm5034, %v8936, %v6353
        %v9042 = vsel %vm5034, %v4991, %v6355
        %v9043 = vsel %vm5034, %v8937, %v6355
        %v9044 = vsel %vm5034, %v4992, %v6357
        %v9045 = vsel %vm5034, %v8938, %v6357
        %v9046 = vsel %vm5034, %v4993, %v6359
        %v9047 = vsel %vm5034, %v8939, %v6359
        %v9048 = vsel %vm5034, %v8940, %v6361
        %v9049 = vsel %vm5034, %v8941, %v6361
        %v9050 = vsel %vm5034, %v8942, %v6363
        %v9051 = vsel %vm5034, %v8943, %v6363
        %v9052 = vsel %vm5034, %v8944, %v6365
        %v9053 = vsel %vm5034, %v8945, %v6365
        %v9054 = vsel %vm5034, %v8946, %v6367
        %v9055 = vsel %vm5034, %v8947, %v6367
        %v9056 = vsel %vm5034, %v4998, %v6369
        %v9057 = vsel %vm5034, %v8948, %v6369
        %v9058 = vsel %vm5034, %v4999, %v6371
        %v9059 = vsel %vm5034, %v8949, %v6371
        %v9060 = vsel %vm5034, %v5000, %v6373
        %v9061 = vsel %vm5034, %v8950, %v6373
        %v9062 = vsel %vm5034, %v5001, %v6375
        %v9063 = vsel %vm5034, %v8951, %v6375
        %v9064 = vsel %vm5034, %v8952, %v6377
        %v9065 = vsel %vm5034, %v8953, %v6377
        %v9066 = vsel %vm5034, %v8954, %v6379
        %v9067 = vsel %vm5034, %v8955, %v6379
        %v9068 = vsel %vm5034, %v8956, %v6381
        %v9069 = vsel %vm5034, %v8957, %v6381
        %v9070 = vsel %vm5034, %v8958, %v6383
        %v9071 = vsel %vm5034, %v8959, %v6383
        %v9072 = vsel %vm5034, %v5006, %v6385
        %v9073 = vsel %vm5034, %v8960, %v6385
        %v9074 = vsel %vm5034, %v5007, %v6387
        %v9075 = vsel %vm5034, %v8961, %v6387
        %v9076 = vsel %vm5034, %v5008, %v6389
        %v9077 = vsel %vm5034, %v8962, %v6389
        %v9078 = vsel %vm5034, %v5009, %v6391
        %v9079 = vsel %vm5034, %v8963, %v6391
        %v9080 = vsel %vm5034, %v8964, %v6393
        %v9081 = vsel %vm5034, %v8965, %v6393
        %v9082 = vsel %vm5034, %v8966, %v6395
        %v9083 = vsel %vm5034, %v8967, %v6395
        %v9084 = vsel %vm5034, %v8968, %v6397
        %v9085 = vsel %vm5034, %v8969, %v6397
        %v9086 = vsel %vm5034, %v8970, %v6399
        %v9087 = vsel %vm5034, %v8971, %v6399
        %v9088 = vsel %vm5034, %v5014, %v6401
        %v9089 = vsel %vm5034, %v8972, %v6401
        %v9090 = vsel %vm5034, %v5015, %v6403
        %v9091 = vsel %vm5034, %v8973, %v6403
        %v9092 = vsel %vm5034, %v5016, %v6405
        %v9093 = vsel %vm5034, %v8974, %v6405
        %v9094 = vsel %vm5034, %v5017, %v6407
        %v9095 = vsel %vm5034, %v8975, %v6407
        %v9096 = vsel %vm5034, %v8976, %v6409
        %v9097 = vsel %vm5034, %v8977, %v6409
        %v9098 = vsel %vm5034, %v8978, %v6411
        %v9099 = vsel %vm5034, %v8979, %v6411
        %v9100 = vsel %vm5034, %v8980, %v6413
        %v9101 = vsel %vm5034, %v8981, %v6413
        %v9102 = vsel %vm5034, %v8982, %v6415
        %v9103 = vsel %vm5034, %v8983, %v6415
        %v9104 = vsel %vm5034, %v5022, %v6417
        %v9105 = vsel %vm5034, %v8984, %v6417
        %v9106 = vsel %vm5034, %v5023, %v6419
        %v9107 = vsel %vm5034, %v8985, %v6419
        %v9108 = vsel %vm5034, %v5024, %v6421
        %v9109 = vsel %vm5034, %v8986, %v6421
        %v9110 = vsel %vm5034, %v5025, %v6423
        %v9111 = vsel %vm5034, %v8987, %v6423
        %v9112 = vsel %vm5034, %v8988, %v6425
        %v9113 = vsel %vm5034, %v8989, %v6425
        %v9114 = vsel %vm5034, %v8990, %v6427
        %v9115 = vsel %vm5034, %v8991, %v6427
        %v9116 = vsel %vm5034, %v8992, %v6429
        %v9117 = vsel %vm5034, %v8993, %v6429
        %v9118 = vsel %vm5034, %v8994, %v6431
        %v9119 = vsel %vm5034, %v8995, %v6431
        %v9120 = vsel %vm5034, %v5030, %v6433
        %v9121 = vsel %vm5034, %v8996, %v6433
        %v9122 = vsel %vm5034, %v5031, %v6435
        %v9123 = vsel %vm5034, %v8997, %v6435
        %v9124 = vsel %vm5034, %v5032, %v6437
        %v9125 = vsel %vm5034, %v8998, %v6437
        %v9126 = vsel %vm5034, %v5033, %v6439
        %v9127 = vsel %vm5034, %v8999, %v6439
        %v9128 = vsel %vm5034, %v9000, %v6441
        %v9129 = vsel %vm5034, %v9001, %v6441
        %v9130 = vsel %vm5034, %v9002, %v6443
        %v9131 = vsel %vm5034, %v9003, %v6443
        %v9132 = vsel %vm5034, %v9004, %v6445
        %v9133 = vsel %vm5034, %v9005, %v6445
        %v9134 = vsel %vm5034, %v9006, %v6447
        %v9135 = vsel %vm5034, %v9007, %v6447
        %v9136 = vsel %vm5034, %v9008, %v6449
        %v9137 = vsel %vm5034, %v9009, %v6449
        %v9138 = vsel %vm5034, %v9010, %v6451
        %v9139 = vsel %vm5034, %v9011, %v6451
        %v9140 = vsel %vm5034, %v9012, %v6453
        %v9141 = vsel %vm5034, %v9013, %v6453
        %v9142 = vsel %vm5034, %v9014, %v6455
        %v9143 = vsel %vm5034, %v9015, %v6455
        %v9144 = vsel %vm5034, %v9016, %v6457
        %v9145 = vsel %vm5034, %v9017, %v6457
        %v9146 = vsel %vm5034, %v9018, %v6459
        %v9147 = vsel %vm5034, %v9019, %v6459
        %v9148 = vsel %vm5034, %v9020, %v6461
        %v9149 = vsel %vm5034, %v9021, %v6461
        %v9150 = vsel %vm5034, %v9022, %v6463
        %v9151 = vsel %vm5034, %v9023, %v6463
        %v9152 = vsel %vm5034, %v9024, %v6465
        %v9153 = vsel %vm5034, %v9025, %v6465
        %v9154 = vsel %vm5034, %v9026, %v6467
        %v9155 = vsel %vm5034, %v9027, %v6467
        %v9156 = vsel %vm5034, %v9028, %v6469
        %v9157 = vsel %vm5034, %v9029, %v6469
        %v9158 = vsel %vm5034, %v9030, %v6471
        %v9159 = vsel %vm5034, %v9031, %v6471
        %v9160 = vsel %vm5034, %v9032, %v6473
        %v9161 = vsel %vm5034, %v9033, %v6473
        %v9162 = vsel %vm5034, %v9034, %v6475
        %v9163 = vsel %vm5034, %v9035, %v6475
        %v9164 = vsel %vm5034, %v9036, %v6477
        %v9165 = vsel %vm5034, %v9037, %v6477
        %v9166 = vsel %vm5034, %v9038, %v6479
        %v9167 = vsel %vm5034, %v9039, %v6479
        %v9168 = vsel %vm5099, %v9040, %v6561
        %v9169 = vsel %vm5099, %v9041, %v6563
        %v9170 = vsel %vm5099, %v9042, %v6565
        %v9171 = vsel %vm5099, %v9043, %v6567
        %v9172 = vsel %vm5099, %v9044, %v2135
        %v9173 = vsel %vm5099, %v9045, %v6569
        %v9174 = vsel %vm5099, %v9046, %v2137
        %v9175 = vsel %vm5099, %v9047, %v6571
        %v9176 = vsel %vm5099, %v9048, %v2139
        %v9177 = vsel %vm5099, %v9049, %v6573
        %v9178 = vsel %vm5099, %v9050, %v2141
        %v9179 = vsel %vm5099, %v9051, %v6575
        %v9180 = vsel %vm5099, %v9052, %v2143
        %v9181 = vsel %vm5099, %v9053, %v6577
        %v9182 = vsel %vm5099, %v9054, %v2145
        %v9183 = vsel %vm5099, %v9055, %v6579
        %v9184 = vsel %vm5099, %v9056, %v6581
        %v9185 = vsel %vm5099, %v9057, %v6583
        %v9186 = vsel %vm5099, %v9058, %v6585
        %v9187 = vsel %vm5099, %v9059, %v6587
        %v9188 = vsel %vm5099, %v9060, %v2151
        %v9189 = vsel %vm5099, %v9061, %v6589
        %v9190 = vsel %vm5099, %v9062, %v2153
        %v9191 = vsel %vm5099, %v9063, %v6591
        %v9192 = vsel %vm5099, %v9064, %v2155
        %v9193 = vsel %vm5099, %v9065, %v6593
        %v9194 = vsel %vm5099, %v9066, %v2157
        %v9195 = vsel %vm5099, %v9067, %v6595
        %v9196 = vsel %vm5099, %v9068, %v2159
        %v9197 = vsel %vm5099, %v9069, %v6597
        %v9198 = vsel %vm5099, %v9070, %v2161
        %v9199 = vsel %vm5099, %v9071, %v6599
        %v9200 = vsel %vm5099, %v9072, %v6601
        %v9201 = vsel %vm5099, %v9073, %v6603
        %v9202 = vsel %vm5099, %v9074, %v6605
        %v9203 = vsel %vm5099, %v9075, %v6607
        %v9204 = vsel %vm5099, %v9076, %v2167
        %v9205 = vsel %vm5099, %v9077, %v6609
        %v9206 = vsel %vm5099, %v9078, %v2169
        %v9207 = vsel %vm5099, %v9079, %v6611
        %v9208 = vsel %vm5099, %v9080, %v2171
        %v9209 = vsel %vm5099, %v9081, %v6613
        %v9210 = vsel %vm5099, %v9082, %v2173
        %v9211 = vsel %vm5099, %v9083, %v6615
        %v9212 = vsel %vm5099, %v9084, %v2175
        %v9213 = vsel %vm5099, %v9085, %v6617
        %v9214 = vsel %vm5099, %v9086, %v2177
        %v9215 = vsel %vm5099, %v9087, %v6619
        %v9216 = vsel %vm5099, %v9088, %v6621
        %v9217 = vsel %vm5099, %v9089, %v6623
        %v9218 = vsel %vm5099, %v9090, %v6625
        %v9219 = vsel %vm5099, %v9091, %v6627
        %v9220 = vsel %vm5099, %v9092, %v2183
        %v9221 = vsel %vm5099, %v9093, %v6629
        %v9222 = vsel %vm5099, %v9094, %v2185
        %v9223 = vsel %vm5099, %v9095, %v6631
        %v9224 = vsel %vm5099, %v9096, %v2187
        %v9225 = vsel %vm5099, %v9097, %v6633
        %v9226 = vsel %vm5099, %v9098, %v2189
        %v9227 = vsel %vm5099, %v9099, %v6635
        %v9228 = vsel %vm5099, %v9100, %v2191
        %v9229 = vsel %vm5099, %v9101, %v6637
        %v9230 = vsel %vm5099, %v9102, %v2193
        %v9231 = vsel %vm5099, %v9103, %v6639
        %v9232 = vsel %vm5099, %v9104, %v6641
        %v9233 = vsel %vm5099, %v9105, %v6643
        %v9234 = vsel %vm5099, %v9106, %v6645
        %v9235 = vsel %vm5099, %v9107, %v6647
        %v9236 = vsel %vm5099, %v9108, %v6649
        %v9237 = vsel %vm5099, %v9109, %v6651
        %v9238 = vsel %vm5099, %v9110, %v6653
        %v9239 = vsel %vm5099, %v9111, %v6655
        %v9240 = vsel %vm5099, %v9112, %v6657
        %v9241 = vsel %vm5099, %v9113, %v6659
        %v9242 = vsel %vm5099, %v9114, %v6661
        %v9243 = vsel %vm5099, %v9115, %v6663
        %v9244 = vsel %vm5099, %v9116, %v6665
        %v9245 = vsel %vm5099, %v9117, %v6667
        %v9246 = vsel %vm5099, %v9118, %v6669
        %v9247 = vsel %vm5099, %v9119, %v6671
        %v9248 = vsel %vm5099, %v9120, %v6673
        %v9249 = vsel %vm5099, %v9121, %v6675
        %v9250 = vsel %vm5099, %v9122, %v6677
        %v9251 = vsel %vm5099, %v9123, %v6679
        %v9252 = vsel %vm5099, %v9124, %v6681
        %v9253 = vsel %vm5099, %v9125, %v6683
        %v9254 = vsel %vm5099, %v9126, %v6685
        %v9255 = vsel %vm5099, %v9127, %v6687
        %v9256 = vsel %vm5099, %v9128, %v6689
        %v9257 = vsel %vm5099, %v9129, %v6691
        %v9258 = vsel %vm5099, %v9130, %v6693
        %v9259 = vsel %vm5099, %v9131, %v6695
        %v9260 = vsel %vm5099, %v9132, %v6697
        %v9261 = vsel %vm5099, %v9133, %v6699
        %v9262 = vsel %vm5099, %v9134, %v6701
        %v9263 = vsel %vm5099, %v9135, %v6703
        %v9264 = vsel %vm5099, %v9136, %v6705
        %v9265 = vsel %vm5099, %v9137, %v6707
        %v9266 = vsel %vm5099, %v9138, %v6709
        %v9267 = vsel %vm5099, %v9139, %v6711
        %v9268 = vsel %vm5099, %v9140, %v6713
        %v9269 = vsel %vm5099, %v9141, %v6715
        %v9270 = vsel %vm5099, %v9142, %v6717
        %v9271 = vsel %vm5099, %v9143, %v6719
        %v9272 = vsel %vm5099, %v9144, %v6721
        %v9273 = vsel %vm5099, %v9145, %v6723
        %v9274 = vsel %vm5099, %v9146, %v6725
        %v9275 = vsel %vm5099, %v9147, %v6727
        %v9276 = vsel %vm5099, %v9148, %v6729
        %v9277 = vsel %vm5099, %v9149, %v6731
        %v9278 = vsel %vm5099, %v9150, %v6733
        %v9279 = vsel %vm5099, %v9151, %v6735
        %v9280 = vsel %vm5099, %v9152, %v6737
        %v9281 = vsel %vm5099, %v9153, %v6739
        %v9282 = vsel %vm5099, %v9154, %v6741
        %v9283 = vsel %vm5099, %v9155, %v6743
        %v9284 = vsel %vm5099, %v9156, %v6745
        %v9285 = vsel %vm5099, %v9157, %v6747
        %v9286 = vsel %vm5099, %v9158, %v6749
        %v9287 = vsel %vm5099, %v9159, %v6751
        %v9288 = vsel %vm5099, %v9160, %v6753
        %v9289 = vsel %vm5099, %v9161, %v6755
        %v9290 = vsel %vm5099, %v9162, %v6757
        %v9291 = vsel %vm5099, %v9163, %v6759
        %v9292 = vsel %vm5099, %v9164, %v6761
        %v9293 = vsel %vm5099, %v9165, %v6763
        %v9294 = vsel %vm5099, %v9166, %v6765
        %v9295 = vsel %vm5099, %v9167, %v6767
        %v9296 = vsel %vm5164, %v9168, %v6921
        %v9297 = vsel %vm5164, %v9169, %v6923
        %v9298 = vsel %vm5164, %v9170, %v6925
        %v9299 = vsel %vm5164, %v9171, %v6927
        %v9300 = vsel %vm5164, %v9172, %v2391
        %v9301 = vsel %vm5164, %v9173, %v6929
        %v9302 = vsel %vm5164, %v9174, %v2393
        %v9303 = vsel %vm5164, %v9175, %v6931
        %v9304 = vsel %vm5164, %v9176, %v2395
        %v9305 = vsel %vm5164, %v9177, %v6933
        %v9306 = vsel %vm5164, %v9178, %v2397
        %v9307 = vsel %vm5164, %v9179, %v6935
        %v9308 = vsel %vm5164, %v9180, %v2399
        %v9309 = vsel %vm5164, %v9181, %v6937
        %v9310 = vsel %vm5164, %v9182, %v2401
        %v9311 = vsel %vm5164, %v9183, %v6939
        %v9312 = vsel %vm5164, %v9184, %v6941
        %v9313 = vsel %vm5164, %v9185, %v6943
        %v9314 = vsel %vm5164, %v9186, %v6945
        %v9315 = vsel %vm5164, %v9187, %v6947
        %v9316 = vsel %vm5164, %v9188, %v2407
        %v9317 = vsel %vm5164, %v9189, %v6949
        %v9318 = vsel %vm5164, %v9190, %v2409
        %v9319 = vsel %vm5164, %v9191, %v6951
        %v9320 = vsel %vm5164, %v9192, %v2411
        %v9321 = vsel %vm5164, %v9193, %v6953
        %v9322 = vsel %vm5164, %v9194, %v2413
        %v9323 = vsel %vm5164, %v9195, %v6955
        %v9324 = vsel %vm5164, %v9196, %v2415
        %v9325 = vsel %vm5164, %v9197, %v6957
        %v9326 = vsel %vm5164, %v9198, %v2417
        %v9327 = vsel %vm5164, %v9199, %v6959
        %v9328 = vsel %vm5164, %v9200, %v6961
        %v9329 = vsel %vm5164, %v9201, %v6963
        %v9330 = vsel %vm5164, %v9202, %v6965
        %v9331 = vsel %vm5164, %v9203, %v6967
        %v9332 = vsel %vm5164, %v9204, %v2423
        %v9333 = vsel %vm5164, %v9205, %v6969
        %v9334 = vsel %vm5164, %v9206, %v2425
        %v9335 = vsel %vm5164, %v9207, %v6971
        %v9336 = vsel %vm5164, %v9208, %v2427
        %v9337 = vsel %vm5164, %v9209, %v6973
        %v9338 = vsel %vm5164, %v9210, %v2429
        %v9339 = vsel %vm5164, %v9211, %v6975
        %v9340 = vsel %vm5164, %v9212, %v2431
        %v9341 = vsel %vm5164, %v9213, %v6977
        %v9342 = vsel %vm5164, %v9214, %v2433
        %v9343 = vsel %vm5164, %v9215, %v6979
        %v9344 = vsel %vm5164, %v9216, %v6981
        %v9345 = vsel %vm5164, %v9217, %v6983
        %v9346 = vsel %vm5164, %v9218, %v6985
        %v9347 = vsel %vm5164, %v9219, %v6987
        %v9348 = vsel %vm5164, %v9220, %v2439
        %v9349 = vsel %vm5164, %v9221, %v6989
        %v9350 = vsel %vm5164, %v9222, %v2441
        %v9351 = vsel %vm5164, %v9223, %v6991
        %v9352 = vsel %vm5164, %v9224, %v2443
        %v9353 = vsel %vm5164, %v9225, %v6993
        %v9354 = vsel %vm5164, %v9226, %v2445
        %v9355 = vsel %vm5164, %v9227, %v6995
        %v9356 = vsel %vm5164, %v9228, %v2447
        %v9357 = vsel %vm5164, %v9229, %v6997
        %v9358 = vsel %vm5164, %v9230, %v2449
        %v9359 = vsel %vm5164, %v9231, %v6999
        %v9360 = vsel %vm5164, %v9232, %v7001
        %v9361 = vsel %vm5164, %v9233, %v7003
        %v9362 = vsel %vm5164, %v9234, %v7005
        %v9363 = vsel %vm5164, %v9235, %v7007
        %v9364 = vsel %vm5164, %v9236, %v7009
        %v9365 = vsel %vm5164, %v9237, %v7011
        %v9366 = vsel %vm5164, %v9238, %v7013
        %v9367 = vsel %vm5164, %v9239, %v7015
        %v9368 = vsel %vm5164, %v9240, %v7017
        %v9369 = vsel %vm5164, %v9241, %v7019
        %v9370 = vsel %vm5164, %v9242, %v7021
        %v9371 = vsel %vm5164, %v9243, %v7023
        %v9372 = vsel %vm5164, %v9244, %v7025
        %v9373 = vsel %vm5164, %v9245, %v7027
        %v9374 = vsel %vm5164, %v9246, %v7029
        %v9375 = vsel %vm5164, %v9247, %v7031
        %v9376 = vsel %vm5164, %v9248, %v7033
        %v9377 = vsel %vm5164, %v9249, %v7035
        %v9378 = vsel %vm5164, %v9250, %v7037
        %v9379 = vsel %vm5164, %v9251, %v7039
        %v9380 = vsel %vm5164, %v9252, %v7041
        %v9381 = vsel %vm5164, %v9253, %v7043
        %v9382 = vsel %vm5164, %v9254, %v7045
        %v9383 = vsel %vm5164, %v9255, %v7047
        %v9384 = vsel %vm5164, %v9256, %v7049
        %v9385 = vsel %vm5164, %v9257, %v7051
        %v9386 = vsel %vm5164, %v9258, %v7053
        %v9387 = vsel %vm5164, %v9259, %v7055
        %v9388 = vsel %vm5164, %v9260, %v7057
        %v9389 = vsel %vm5164, %v9261, %v7059
        %v9390 = vsel %vm5164, %v9262, %v7061
        %v9391 = vsel %vm5164, %v9263, %v7063
        %v9392 = vsel %vm5164, %v9264, %v7065
        %v9393 = vsel %vm5164, %v9265, %v7067
        %v9394 = vsel %vm5164, %v9266, %v7069
        %v9395 = vsel %vm5164, %v9267, %v7071
        %v9396 = vsel %vm5164, %v9268, %v7073
        %v9397 = vsel %vm5164, %v9269, %v7075
        %v9398 = vsel %vm5164, %v9270, %v7077
        %v9399 = vsel %vm5164, %v9271, %v7079
        %v9400 = vsel %vm5164, %v9272, %v7081
        %v9401 = vsel %vm5164, %v9273, %v7083
        %v9402 = vsel %vm5164, %v9274, %v7085
        %v9403 = vsel %vm5164, %v9275, %v7087
        %v9404 = vsel %vm5164, %v9276, %v7089
        %v9405 = vsel %vm5164, %v9277, %v7091
        %v9406 = vsel %vm5164, %v9278, %v7093
        %v9407 = vsel %vm5164, %v9279, %v7095
        %v9408 = vsel %vm5164, %v9280, %v7097
        %v9409 = vsel %vm5164, %v9281, %v7099
        %v9410 = vsel %vm5164, %v9282, %v7101
        %v9411 = vsel %vm5164, %v9283, %v7103
        %v9412 = vsel %vm5164, %v9284, %v7105
        %v9413 = vsel %vm5164, %v9285, %v7107
        %v9414 = vsel %vm5164, %v9286, %v7109
        %v9415 = vsel %vm5164, %v9287, %v7111
        %v9416 = vsel %vm5164, %v9288, %v7113
        %v9417 = vsel %vm5164, %v9289, %v7115
        %v9418 = vsel %vm5164, %v9290, %v7117
        %v9419 = vsel %vm5164, %v9291, %v7119
        %v9420 = vsel %vm5164, %v9292, %v7121
        %v9421 = vsel %vm5164, %v9293, %v7123
        %v9422 = vsel %vm5164, %v9294, %v7125
        %v9423 = vsel %vm5164, %v9295, %v7127
        %v9424 = vsel %vm5229, %v9296, %v7253
        %v9425 = vsel %vm5229, %v9297, %v7253
        %v9426 = vsel %vm5229, %v9298, %v7255
        %v9427 = vsel %vm5229, %v9299, %v7255
        %v9428 = vsel %vm5229, %v9300, %v7257
        %v9429 = vsel %vm5229, %v9301, %v7257
        %v9430 = vsel %vm5229, %v9302, %v7259
        %v9431 = vsel %vm5229, %v9303, %v7259
        %v9432 = vsel %vm5229, %v9304, %v7261
        %v9433 = vsel %vm5229, %v9305, %v7261
        %v9434 = vsel %vm5229, %v9306, %v7263
        %v9435 = vsel %vm5229, %v9307, %v7263
        %v9436 = vsel %vm5229, %v9308, %v7265
        %v9437 = vsel %vm5229, %v9309, %v7265
        %v9438 = vsel %vm5229, %v9310, %v7267
        %v9439 = vsel %vm5229, %v9311, %v7267
        %v9440 = vsel %vm5229, %v9312, %v7269
        %v9441 = vsel %vm5229, %v9313, %v7269
        %v9442 = vsel %vm5229, %v9314, %v7271
        %v9443 = vsel %vm5229, %v9315, %v7271
        %v9444 = vsel %vm5229, %v9316, %v7273
        %v9445 = vsel %vm5229, %v9317, %v7273
        %v9446 = vsel %vm5229, %v9318, %v7275
        %v9447 = vsel %vm5229, %v9319, %v7275
        %v9448 = vsel %vm5229, %v9320, %v7277
        %v9449 = vsel %vm5229, %v9321, %v7277
        %v9450 = vsel %vm5229, %v9322, %v7279
        %v9451 = vsel %vm5229, %v9323, %v7279
        %v9452 = vsel %vm5229, %v9324, %v7281
        %v9453 = vsel %vm5229, %v9325, %v7281
        %v9454 = vsel %vm5229, %v9326, %v7283
        %v9455 = vsel %vm5229, %v9327, %v7283
        %v9456 = vsel %vm5229, %v9328, %v7285
        %v9457 = vsel %vm5229, %v9329, %v7285
        %v9458 = vsel %vm5229, %v9330, %v7287
        %v9459 = vsel %vm5229, %v9331, %v7287
        %v9460 = vsel %vm5229, %v9332, %v7289
        %v9461 = vsel %vm5229, %v9333, %v7289
        %v9462 = vsel %vm5229, %v9334, %v7291
        %v9463 = vsel %vm5229, %v9335, %v7291
        %v9464 = vsel %vm5229, %v9336, %v7293
        %v9465 = vsel %vm5229, %v9337, %v7293
        %v9466 = vsel %vm5229, %v9338, %v7295
        %v9467 = vsel %vm5229, %v9339, %v7295
        %v9468 = vsel %vm5229, %v9340, %v7297
        %v9469 = vsel %vm5229, %v9341, %v7297
        %v9470 = vsel %vm5229, %v9342, %v7299
        %v9471 = vsel %vm5229, %v9343, %v7299
        %v9472 = vsel %vm5229, %v9344, %v7301
        %v9473 = vsel %vm5229, %v9345, %v7301
        %v9474 = vsel %vm5229, %v9346, %v7303
        %v9475 = vsel %vm5229, %v9347, %v7303
        %v9476 = vsel %vm5229, %v9348, %v7305
        %v9477 = vsel %vm5229, %v9349, %v7305
        %v9478 = vsel %vm5229, %v9350, %v7307
        %v9479 = vsel %vm5229, %v9351, %v7307
        %v9480 = vsel %vm5229, %v9352, %v7309
        %v9481 = vsel %vm5229, %v9353, %v7309
        %v9482 = vsel %vm5229, %v9354, %v7311
        %v9483 = vsel %vm5229, %v9355, %v7311
        %v9484 = vsel %vm5229, %v9356, %v7313
        %v9485 = vsel %vm5229, %v9357, %v7313
        %v9486 = vsel %vm5229, %v9358, %v7315
        %v9487 = vsel %vm5229, %v9359, %v7315
        %v9488 = vsel %vm5229, %v9360, %v7317
        %v9489 = vsel %vm5229, %v9361, %v7317
        %v9490 = vsel %vm5229, %v9362, %v7319
        %v9491 = vsel %vm5229, %v9363, %v7319
        %v9492 = vsel %vm5229, %v9364, %v7321
        %v9493 = vsel %vm5229, %v9365, %v7321
        %v9494 = vsel %vm5229, %v9366, %v7323
        %v9495 = vsel %vm5229, %v9367, %v7323
        %v9496 = vsel %vm5229, %v9368, %v7325
        %v9497 = vsel %vm5229, %v9369, %v7325
        %v9498 = vsel %vm5229, %v9370, %v7327
        %v9499 = vsel %vm5229, %v9371, %v7327
        %v9500 = vsel %vm5229, %v9372, %v7329
        %v9501 = vsel %vm5229, %v9373, %v7329
        %v9502 = vsel %vm5229, %v9374, %v7331
        %v9503 = vsel %vm5229, %v9375, %v7331
        %v9504 = vsel %vm5229, %v9376, %v7333
        %v9505 = vsel %vm5229, %v9377, %v7333
        %v9506 = vsel %vm5229, %v9378, %v7335
        %v9507 = vsel %vm5229, %v9379, %v7335
        %v9508 = vsel %vm5229, %v9380, %v7337
        %v9509 = vsel %vm5229, %v9381, %v7337
        %v9510 = vsel %vm5229, %v9382, %v7339
        %v9511 = vsel %vm5229, %v9383, %v7339
        %v9512 = vsel %vm5229, %v9384, %v7341
        %v9513 = vsel %vm5229, %v9385, %v7341
        %v9514 = vsel %vm5229, %v9386, %v7343
        %v9515 = vsel %vm5229, %v9387, %v7343
        %v9516 = vsel %vm5229, %v9388, %v7345
        %v9517 = vsel %vm5229, %v9389, %v7345
        %v9518 = vsel %vm5229, %v9390, %v7347
        %v9519 = vsel %vm5229, %v9391, %v7347
        %v9520 = vsel %vm5229, %v9392, %v7349
        %v9521 = vsel %vm5229, %v9393, %v7349
        %v9522 = vsel %vm5229, %v9394, %v7351
        %v9523 = vsel %vm5229, %v9395, %v7351
        %v9524 = vsel %vm5229, %v9396, %v7353
        %v9525 = vsel %vm5229, %v9397, %v7353
        %v9526 = vsel %vm5229, %v9398, %v7355
        %v9527 = vsel %vm5229, %v9399, %v7355
        %v9528 = vsel %vm5229, %v9400, %v7357
        %v9529 = vsel %vm5229, %v9401, %v7357
        %v9530 = vsel %vm5229, %v9402, %v7359
        %v9531 = vsel %vm5229, %v9403, %v7359
        %v9532 = vsel %vm5229, %v9404, %v7361
        %v9533 = vsel %vm5229, %v9405, %v7361
        %v9534 = vsel %vm5229, %v9406, %v7363
        %v9535 = vsel %vm5229, %v9407, %v7363
        %v9536 = vsel %vm5229, %v9408, %v7365
        %v9537 = vsel %vm5229, %v9409, %v7365
        %v9538 = vsel %vm5229, %v9410, %v7367
        %v9539 = vsel %vm5229, %v9411, %v7367
        %v9540 = vsel %vm5229, %v9412, %v7369
        %v9541 = vsel %vm5229, %v9413, %v7369
        %v9542 = vsel %vm5229, %v9414, %v7371
        %v9543 = vsel %vm5229, %v9415, %v7371
        %v9544 = vsel %vm5229, %v9416, %v7373
        %v9545 = vsel %vm5229, %v9417, %v7373
        %v9546 = vsel %vm5229, %v9418, %v7375
        %v9547 = vsel %vm5229, %v9419, %v7375
        %v9548 = vsel %vm5229, %v9420, %v7377
        %v9549 = vsel %vm5229, %v9421, %v7377
        %v9550 = vsel %vm5229, %v9422, %v7379
        %v9551 = vsel %vm5229, %v9423, %v7379
        %v9552 = vsel %vm5294, %v9424, %v7449
        %v9553 = vsel %vm5294, %v9425, %v7451
        %v9554 = vsel %vm5294, %v9426, %v7453
        %v9555 = vsel %vm5294, %v9427, %v7455
        %v9556 = vsel %vm5294, %v9428, %v2839
        %v9557 = vsel %vm5294, %v9429, %v7457
        %v9558 = vsel %vm5294, %v9430, %v2841
        %v9559 = vsel %vm5294, %v9431, %v7459
        %v9560 = vsel %vm5294, %v9432, %v2843
        %v9561 = vsel %vm5294, %v9433, %v7461
        %v9562 = vsel %vm5294, %v9434, %v2845
        %v9563 = vsel %vm5294, %v9435, %v7463
        %v9564 = vsel %vm5294, %v9436, %v2847
        %v9565 = vsel %vm5294, %v9437, %v7465
        %v9566 = vsel %vm5294, %v9438, %v2849
        %v9567 = vsel %vm5294, %v9439, %v7467
        %v9568 = vsel %vm5294, %v9440, %v7469
        %v9569 = vsel %vm5294, %v9441, %v7471
        %v9570 = vsel %vm5294, %v9442, %v7473
        %v9571 = vsel %vm5294, %v9443, %v7475
        %v9572 = vsel %vm5294, %v9444, %v2855
        %v9573 = vsel %vm5294, %v9445, %v7477
        %v9574 = vsel %vm5294, %v9446, %v2857
        %v9575 = vsel %vm5294, %v9447, %v7479
        %v9576 = vsel %vm5294, %v9448, %v2859
        %v9577 = vsel %vm5294, %v9449, %v7481
        %v9578 = vsel %vm5294, %v9450, %v2861
        %v9579 = vsel %vm5294, %v9451, %v7483
        %v9580 = vsel %vm5294, %v9452, %v2863
        %v9581 = vsel %vm5294, %v9453, %v7485
        %v9582 = vsel %vm5294, %v9454, %v2865
        %v9583 = vsel %vm5294, %v9455, %v7487
        %v9584 = vsel %vm5294, %v9456, %v7489
        %v9585 = vsel %vm5294, %v9457, %v7491
        %v9586 = vsel %vm5294, %v9458, %v7493
        %v9587 = vsel %vm5294, %v9459, %v7495
        %v9588 = vsel %vm5294, %v9460, %v2871
        %v9589 = vsel %vm5294, %v9461, %v7497
        %v9590 = vsel %vm5294, %v9462, %v2873
        %v9591 = vsel %vm5294, %v9463, %v7499
        %v9592 = vsel %vm5294, %v9464, %v2875
        %v9593 = vsel %vm5294, %v9465, %v7501
        %v9594 = vsel %vm5294, %v9466, %v2877
        %v9595 = vsel %vm5294, %v9467, %v7503
        %v9596 = vsel %vm5294, %v9468, %v2879
        %v9597 = vsel %vm5294, %v9469, %v7505
        %v9598 = vsel %vm5294, %v9470, %v2881
        %v9599 = vsel %vm5294, %v9471, %v7507
        %v9600 = vsel %vm5294, %v9472, %v7509
        %v9601 = vsel %vm5294, %v9473, %v7511
        %v9602 = vsel %vm5294, %v9474, %v7513
        %v9603 = vsel %vm5294, %v9475, %v7515
        %v9604 = vsel %vm5294, %v9476, %v2887
        %v9605 = vsel %vm5294, %v9477, %v7517
        %v9606 = vsel %vm5294, %v9478, %v2889
        %v9607 = vsel %vm5294, %v9479, %v7519
        %v9608 = vsel %vm5294, %v9480, %v2891
        %v9609 = vsel %vm5294, %v9481, %v7521
        %v9610 = vsel %vm5294, %v9482, %v2893
        %v9611 = vsel %vm5294, %v9483, %v7523
        %v9612 = vsel %vm5294, %v9484, %v2895
        %v9613 = vsel %vm5294, %v9485, %v7525
        %v9614 = vsel %vm5294, %v9486, %v2897
        %v9615 = vsel %vm5294, %v9487, %v7527
        %v9616 = vsel %vm5294, %v9488, %v7529
        %v9617 = vsel %vm5294, %v9489, %v7531
        %v9618 = vsel %vm5294, %v9490, %v7533
        %v9619 = vsel %vm5294, %v9491, %v7535
        %v9620 = vsel %vm5294, %v9492, %v7537
        %v9621 = vsel %vm5294, %v9493, %v7539
        %v9622 = vsel %vm5294, %v9494, %v7541
        %v9623 = vsel %vm5294, %v9495, %v7543
        %v9624 = vsel %vm5294, %v9496, %v7545
        %v9625 = vsel %vm5294, %v9497, %v7547
        %v9626 = vsel %vm5294, %v9498, %v7549
        %v9627 = vsel %vm5294, %v9499, %v7551
        %v9628 = vsel %vm5294, %v9500, %v7553
        %v9629 = vsel %vm5294, %v9501, %v7555
        %v9630 = vsel %vm5294, %v9502, %v7557
        %v9631 = vsel %vm5294, %v9503, %v7559
        %v9632 = vsel %vm5294, %v9504, %v7561
        %v9633 = vsel %vm5294, %v9505, %v7563
        %v9634 = vsel %vm5294, %v9506, %v7565
        %v9635 = vsel %vm5294, %v9507, %v7567
        %v9636 = vsel %vm5294, %v9508, %v7569
        %v9637 = vsel %vm5294, %v9509, %v7571
        %v9638 = vsel %vm5294, %v9510, %v7573
        %v9639 = vsel %vm5294, %v9511, %v7575
        %v9640 = vsel %vm5294, %v9512, %v7577
        %v9641 = vsel %vm5294, %v9513, %v7579
        %v9642 = vsel %vm5294, %v9514, %v7581
        %v9643 = vsel %vm5294, %v9515, %v7583
        %v9644 = vsel %vm5294, %v9516, %v7585
        %v9645 = vsel %vm5294, %v9517, %v7587
        %v9646 = vsel %vm5294, %v9518, %v7589
        %v9647 = vsel %vm5294, %v9519, %v7591
        %v9648 = vsel %vm5294, %v9520, %v7593
        %v9649 = vsel %vm5294, %v9521, %v7595
        %v9650 = vsel %vm5294, %v9522, %v7597
        %v9651 = vsel %vm5294, %v9523, %v7599
        %v9652 = vsel %vm5294, %v9524, %v7601
        %v9653 = vsel %vm5294, %v9525, %v7603
        %v9654 = vsel %vm5294, %v9526, %v7605
        %v9655 = vsel %vm5294, %v9527, %v7607
        %v9656 = vsel %vm5294, %v9528, %v7609
        %v9657 = vsel %vm5294, %v9529, %v7611
        %v9658 = vsel %vm5294, %v9530, %v7613
        %v9659 = vsel %vm5294, %v9531, %v7615
        %v9660 = vsel %vm5294, %v9532, %v7617
        %v9661 = vsel %vm5294, %v9533, %v7619
        %v9662 = vsel %vm5294, %v9534, %v7621
        %v9663 = vsel %vm5294, %v9535, %v7623
        %v9664 = vsel %vm5294, %v9536, %v7625
        %v9665 = vsel %vm5294, %v9537, %v7627
        %v9666 = vsel %vm5294, %v9538, %v7629
        %v9667 = vsel %vm5294, %v9539, %v7631
        %v9668 = vsel %vm5294, %v9540, %v7633
        %v9669 = vsel %vm5294, %v9541, %v7635
        %v9670 = vsel %vm5294, %v9542, %v7637
        %v9671 = vsel %vm5294, %v9543, %v7639
        %v9672 = vsel %vm5294, %v9544, %v7641
        %v9673 = vsel %vm5294, %v9545, %v7643
        %v9674 = vsel %vm5294, %v9546, %v7645
        %v9675 = vsel %vm5294, %v9547, %v7647
        %v9676 = vsel %vm5294, %v9548, %v7649
        %v9677 = vsel %vm5294, %v9549, %v7651
        %v9678 = vsel %vm5294, %v9550, %v7653
        %v9679 = vsel %vm5294, %v9551, %v7655
        %v9680 = vsel %vm5359, %v9552, %v7773
        %v9681 = vsel %vm5359, %v9553, %v7775
        %v9682 = vsel %vm5359, %v9554, %v7777
        %v9683 = vsel %vm5359, %v9555, %v7779
        %v9684 = vsel %vm5359, %v9556, %v3095
        %v9685 = vsel %vm5359, %v9557, %v7781
        %v9686 = vsel %vm5359, %v9558, %v3097
        %v9687 = vsel %vm5359, %v9559, %v7783
        %v9688 = vsel %vm5359, %v9560, %v3099
        %v9689 = vsel %vm5359, %v9561, %v7785
        %v9690 = vsel %vm5359, %v9562, %v3101
        %v9691 = vsel %vm5359, %v9563, %v7787
        %v9692 = vsel %vm5359, %v9564, %v3103
        %v9693 = vsel %vm5359, %v9565, %v7789
        %v9694 = vsel %vm5359, %v9566, %v3105
        %v9695 = vsel %vm5359, %v9567, %v7791
        %v9696 = vsel %vm5359, %v9568, %v7793
        %v9697 = vsel %vm5359, %v9569, %v7795
        %v9698 = vsel %vm5359, %v9570, %v7797
        %v9699 = vsel %vm5359, %v9571, %v7799
        %v9700 = vsel %vm5359, %v9572, %v3111
        %v9701 = vsel %vm5359, %v9573, %v7801
        %v9702 = vsel %vm5359, %v9574, %v3113
        %v9703 = vsel %vm5359, %v9575, %v7803
        %v9704 = vsel %vm5359, %v9576, %v3115
        %v9705 = vsel %vm5359, %v9577, %v7805
        %v9706 = vsel %vm5359, %v9578, %v3117
        %v9707 = vsel %vm5359, %v9579, %v7807
        %v9708 = vsel %vm5359, %v9580, %v3119
        %v9709 = vsel %vm5359, %v9581, %v7809
        %v9710 = vsel %vm5359, %v9582, %v3121
        %v9711 = vsel %vm5359, %v9583, %v7811
        %v9712 = vsel %vm5359, %v9584, %v7813
        %v9713 = vsel %vm5359, %v9585, %v7815
        %v9714 = vsel %vm5359, %v9586, %v7817
        %v9715 = vsel %vm5359, %v9587, %v7819
        %v9716 = vsel %vm5359, %v9588, %v3127
        %v9717 = vsel %vm5359, %v9589, %v7821
        %v9718 = vsel %vm5359, %v9590, %v3129
        %v9719 = vsel %vm5359, %v9591, %v7823
        %v9720 = vsel %vm5359, %v9592, %v3131
        %v9721 = vsel %vm5359, %v9593, %v7825
        %v9722 = vsel %vm5359, %v9594, %v3133
        %v9723 = vsel %vm5359, %v9595, %v7827
        %v9724 = vsel %vm5359, %v9596, %v3135
        %v9725 = vsel %vm5359, %v9597, %v7829
        %v9726 = vsel %vm5359, %v9598, %v3137
        %v9727 = vsel %vm5359, %v9599, %v7831
        %v9728 = vsel %vm5359, %v9600, %v7833
        %v9729 = vsel %vm5359, %v9601, %v7835
        %v9730 = vsel %vm5359, %v9602, %v7837
        %v9731 = vsel %vm5359, %v9603, %v7839
        %v9732 = vsel %vm5359, %v9604, %v3143
        %v9733 = vsel %vm5359, %v9605, %v7841
        %v9734 = vsel %vm5359, %v9606, %v3145
        %v9735 = vsel %vm5359, %v9607, %v7843
        %v9736 = vsel %vm5359, %v9608, %v3147
        %v9737 = vsel %vm5359, %v9609, %v7845
        %v9738 = vsel %vm5359, %v9610, %v3149
        %v9739 = vsel %vm5359, %v9611, %v7847
        %v9740 = vsel %vm5359, %v9612, %v3151
        %v9741 = vsel %vm5359, %v9613, %v7849
        %v9742 = vsel %vm5359, %v9614, %v3153
        %v9743 = vsel %vm5359, %v9615, %v7851
        %v9744 = vsel %vm5359, %v9616, %v7853
        %v9745 = vsel %vm5359, %v9617, %v7855
        %v9746 = vsel %vm5359, %v9618, %v7857
        %v9747 = vsel %vm5359, %v9619, %v7859
        %v9748 = vsel %vm5359, %v9620, %v7861
        %v9749 = vsel %vm5359, %v9621, %v7863
        %v9750 = vsel %vm5359, %v9622, %v7865
        %v9751 = vsel %vm5359, %v9623, %v7867
        %v9752 = vsel %vm5359, %v9624, %v7869
        %v9753 = vsel %vm5359, %v9625, %v7871
        %v9754 = vsel %vm5359, %v9626, %v7873
        %v9755 = vsel %vm5359, %v9627, %v7875
        %v9756 = vsel %vm5359, %v9628, %v7877
        %v9757 = vsel %vm5359, %v9629, %v7879
        %v9758 = vsel %vm5359, %v9630, %v7881
        %v9759 = vsel %vm5359, %v9631, %v7883
        %v9760 = vsel %vm5359, %v9632, %v7885
        %v9761 = vsel %vm5359, %v9633, %v7887
        %v9762 = vsel %vm5359, %v9634, %v7889
        %v9763 = vsel %vm5359, %v9635, %v7891
        %v9764 = vsel %vm5359, %v9636, %v7893
        %v9765 = vsel %vm5359, %v9637, %v7895
        %v9766 = vsel %vm5359, %v9638, %v7897
        %v9767 = vsel %vm5359, %v9639, %v7899
        %v9768 = vsel %vm5359, %v9640, %v7901
        %v9769 = vsel %vm5359, %v9641, %v7903
        %v9770 = vsel %vm5359, %v9642, %v7905
        %v9771 = vsel %vm5359, %v9643, %v7907
        %v9772 = vsel %vm5359, %v9644, %v7909
        %v9773 = vsel %vm5359, %v9645, %v7911
        %v9774 = vsel %vm5359, %v9646, %v7913
        %v9775 = vsel %vm5359, %v9647, %v7915
        %v9776 = vsel %vm5359, %v9648, %v7917
        %v9777 = vsel %vm5359, %v9649, %v7919
        %v9778 = vsel %vm5359, %v9650, %v7921
        %v9779 = vsel %vm5359, %v9651, %v7923
        %v9780 = vsel %vm5359, %v9652, %v7925
        %v9781 = vsel %vm5359, %v9653, %v7927
        %v9782 = vsel %vm5359, %v9654, %v7929
        %v9783 = vsel %vm5359, %v9655, %v7931
        %v9784 = vsel %vm5359, %v9656, %v7933
        %v9785 = vsel %vm5359, %v9657, %v7935
        %v9786 = vsel %vm5359, %v9658, %v7937
        %v9787 = vsel %vm5359, %v9659, %v7939
        %v9788 = vsel %vm5359, %v9660, %v7941
        %v9789 = vsel %vm5359, %v9661, %v7943
        %v9790 = vsel %vm5359, %v9662, %v7945
        %v9791 = vsel %vm5359, %v9663, %v7947
        %v9792 = vsel %vm5359, %v9664, %v7949
        %v9793 = vsel %vm5359, %v9665, %v7951
        %v9794 = vsel %vm5359, %v9666, %v7953
        %v9795 = vsel %vm5359, %v9667, %v7955
        %v9796 = vsel %vm5359, %v9668, %v7957
        %v9797 = vsel %vm5359, %v9669, %v7959
        %v9798 = vsel %vm5359, %v9670, %v7961
        %v9799 = vsel %vm5359, %v9671, %v7963
        %v9800 = vsel %vm5359, %v9672, %v7965
        %v9801 = vsel %vm5359, %v9673, %v7967
        %v9802 = vsel %vm5359, %v9674, %v7969
        %v9803 = vsel %vm5359, %v9675, %v7971
        %v9804 = vsel %vm5359, %v9676, %v7973
        %v9805 = vsel %vm5359, %v9677, %v7975
        %v9806 = vsel %vm5359, %v9678, %v7977
        %v9807 = vsel %vm5359, %v9679, %v7979
        %v9808 = vsel %vm5424, %v9680, %v8105
        %v9809 = vsel %vm5424, %v9681, %v8105
        %v9810 = vsel %vm5424, %v9682, %v8107
        %v9811 = vsel %vm5424, %v9683, %v8107
        %v9812 = vsel %vm5424, %v9684, %v8109
        %v9813 = vsel %vm5424, %v9685, %v8109
        %v9814 = vsel %vm5424, %v9686, %v8111
        %v9815 = vsel %vm5424, %v9687, %v8111
        %v9816 = vsel %vm5424, %v9688, %v8113
        %v9817 = vsel %vm5424, %v9689, %v8113
        %v9818 = vsel %vm5424, %v9690, %v8115
        %v9819 = vsel %vm5424, %v9691, %v8115
        %v9820 = vsel %vm5424, %v9692, %v8117
        %v9821 = vsel %vm5424, %v9693, %v8117
        %v9822 = vsel %vm5424, %v9694, %v8119
        %v9823 = vsel %vm5424, %v9695, %v8119
        %v9824 = vsel %vm5424, %v9696, %v8121
        %v9825 = vsel %vm5424, %v9697, %v8121
        %v9826 = vsel %vm5424, %v9698, %v8123
        %v9827 = vsel %vm5424, %v9699, %v8123
        %v9828 = vsel %vm5424, %v9700, %v8125
        %v9829 = vsel %vm5424, %v9701, %v8125
        %v9830 = vsel %vm5424, %v9702, %v8127
        %v9831 = vsel %vm5424, %v9703, %v8127
        %v9832 = vsel %vm5424, %v9704, %v8129
        %v9833 = vsel %vm5424, %v9705, %v8129
        %v9834 = vsel %vm5424, %v9706, %v8131
        %v9835 = vsel %vm5424, %v9707, %v8131
        %v9836 = vsel %vm5424, %v9708, %v8133
        %v9837 = vsel %vm5424, %v9709, %v8133
        %v9838 = vsel %vm5424, %v9710, %v8135
        %v9839 = vsel %vm5424, %v9711, %v8135
        %v9840 = vsel %vm5424, %v9712, %v8137
        %v9841 = vsel %vm5424, %v9713, %v8137
        %v9842 = vsel %vm5424, %v9714, %v8139
        %v9843 = vsel %vm5424, %v9715, %v8139
        %v9844 = vsel %vm5424, %v9716, %v8141
        %v9845 = vsel %vm5424, %v9717, %v8141
        %v9846 = vsel %vm5424, %v9718, %v8143
        %v9847 = vsel %vm5424, %v9719, %v8143
        %v9848 = vsel %vm5424, %v9720, %v8145
        %v9849 = vsel %vm5424, %v9721, %v8145
        %v9850 = vsel %vm5424, %v9722, %v8147
        %v9851 = vsel %vm5424, %v9723, %v8147
        %v9852 = vsel %vm5424, %v9724, %v8149
        %v9853 = vsel %vm5424, %v9725, %v8149
        %v9854 = vsel %vm5424, %v9726, %v8151
        %v9855 = vsel %vm5424, %v9727, %v8151
        %v9856 = vsel %vm5424, %v9728, %v8153
        %v9857 = vsel %vm5424, %v9729, %v8153
        %v9858 = vsel %vm5424, %v9730, %v8155
        %v9859 = vsel %vm5424, %v9731, %v8155
        %v9860 = vsel %vm5424, %v9732, %v8157
        %v9861 = vsel %vm5424, %v9733, %v8157
        %v9862 = vsel %vm5424, %v9734, %v8159
        %v9863 = vsel %vm5424, %v9735, %v8159
        %v9864 = vsel %vm5424, %v9736, %v8161
        %v9865 = vsel %vm5424, %v9737, %v8161
        %v9866 = vsel %vm5424, %v9738, %v8163
        %v9867 = vsel %vm5424, %v9739, %v8163
        %v9868 = vsel %vm5424, %v9740, %v8165
        %v9869 = vsel %vm5424, %v9741, %v8165
        %v9870 = vsel %vm5424, %v9742, %v8167
        %v9871 = vsel %vm5424, %v9743, %v8167
        %v9872 = vsel %vm5424, %v9744, %v8169
        %v9873 = vsel %vm5424, %v9745, %v8169
        %v9874 = vsel %vm5424, %v9746, %v8171
        %v9875 = vsel %vm5424, %v9747, %v8171
        %v9876 = vsel %vm5424, %v9748, %v8173
        %v9877 = vsel %vm5424, %v9749, %v8173
        %v9878 = vsel %vm5424, %v9750, %v8175
        %v9879 = vsel %vm5424, %v9751, %v8175
        %v9880 = vsel %vm5424, %v9752, %v8177
        %v9881 = vsel %vm5424, %v9753, %v8177
        %v9882 = vsel %vm5424, %v9754, %v8179
        %v9883 = vsel %vm5424, %v9755, %v8179
        %v9884 = vsel %vm5424, %v9756, %v8181
        %v9885 = vsel %vm5424, %v9757, %v8181
        %v9886 = vsel %vm5424, %v9758, %v8183
        %v9887 = vsel %vm5424, %v9759, %v8183
        %v9888 = vsel %vm5424, %v9760, %v8185
        %v9889 = vsel %vm5424, %v9761, %v8185
        %v9890 = vsel %vm5424, %v9762, %v8187
        %v9891 = vsel %vm5424, %v9763, %v8187
        %v9892 = vsel %vm5424, %v9764, %v8189
        %v9893 = vsel %vm5424, %v9765, %v8189
        %v9894 = vsel %vm5424, %v9766, %v8191
        %v9895 = vsel %vm5424, %v9767, %v8191
        %v9896 = vsel %vm5424, %v9768, %v8193
        %v9897 = vsel %vm5424, %v9769, %v8193
        %v9898 = vsel %vm5424, %v9770, %v8195
        %v9899 = vsel %vm5424, %v9771, %v8195
        %v9900 = vsel %vm5424, %v9772, %v8197
        %v9901 = vsel %vm5424, %v9773, %v8197
        %v9902 = vsel %vm5424, %v9774, %v8199
        %v9903 = vsel %vm5424, %v9775, %v8199
        %v9904 = vsel %vm5424, %v9776, %v8201
        %v9905 = vsel %vm5424, %v9777, %v8201
        %v9906 = vsel %vm5424, %v9778, %v8203
        %v9907 = vsel %vm5424, %v9779, %v8203
        %v9908 = vsel %vm5424, %v9780, %v8205
        %v9909 = vsel %vm5424, %v9781, %v8205
        %v9910 = vsel %vm5424, %v9782, %v8207
        %v9911 = vsel %vm5424, %v9783, %v8207
        %v9912 = vsel %vm5424, %v9784, %v8209
        %v9913 = vsel %vm5424, %v9785, %v8209
        %v9914 = vsel %vm5424, %v9786, %v8211
        %v9915 = vsel %vm5424, %v9787, %v8211
        %v9916 = vsel %vm5424, %v9788, %v8213
        %v9917 = vsel %vm5424, %v9789, %v8213
        %v9918 = vsel %vm5424, %v9790, %v8215
        %v9919 = vsel %vm5424, %v9791, %v8215
        %v9920 = vsel %vm5424, %v9792, %v8217
        %v9921 = vsel %vm5424, %v9793, %v8217
        %v9922 = vsel %vm5424, %v9794, %v8219
        %v9923 = vsel %vm5424, %v9795, %v8219
        %v9924 = vsel %vm5424, %v9796, %v8221
        %v9925 = vsel %vm5424, %v9797, %v8221
        %v9926 = vsel %vm5424, %v9798, %v8223
        %v9927 = vsel %vm5424, %v9799, %v8223
        %v9928 = vsel %vm5424, %v9800, %v8225
        %v9929 = vsel %vm5424, %v9801, %v8225
        %v9930 = vsel %vm5424, %v9802, %v8227
        %v9931 = vsel %vm5424, %v9803, %v8227
        %v9932 = vsel %vm5424, %v9804, %v8229
        %v9933 = vsel %vm5424, %v9805, %v8229
        %v9934 = vsel %vm5424, %v9806, %v8231
        %v9935 = vsel %vm5424, %v9807, %v8231
        %v9936 = vsel %vm5489, %v9808, %v3519
        %v9937 = vsel %vm5489, %v9809, %v8301
        %v9938 = vsel %vm5489, %v9810, %v3521
        %v9939 = vsel %vm5489, %v9811, %v8303
        %v9940 = vsel %vm5489, %v9812, %v3523
        %v9941 = vsel %vm5489, %v9813, %v8305
        %v9942 = vsel %vm5489, %v9814, %v3525
        %v9943 = vsel %vm5489, %v9815, %v8307
        %v9944 = vsel %vm5489, %v9816, %v8309
        %v9945 = vsel %vm5489, %v9817, %v8311
        %v9946 = vsel %vm5489, %v9818, %v8313
        %v9947 = vsel %vm5489, %v9819, %v8315
        %v9948 = vsel %vm5489, %v9820, %v8317
        %v9949 = vsel %vm5489, %v9821, %v8319
        %v9950 = vsel %vm5489, %v9822, %v8321
        %v9951 = vsel %vm5489, %v9823, %v8323
        %v9952 = vsel %vm5489, %v9824, %v3535
        %v9953 = vsel %vm5489, %v9825, %v8325
        %v9954 = vsel %vm5489, %v9826, %v3537
        %v9955 = vsel %vm5489, %v9827, %v8327
        %v9956 = vsel %vm5489, %v9828, %v3539
        %v9957 = vsel %vm5489, %v9829, %v8329
        %v9958 = vsel %vm5489, %v9830, %v3541
        %v9959 = vsel %vm5489, %v9831, %v8331
        %v9960 = vsel %vm5489, %v9832, %v8333
        %v9961 = vsel %vm5489, %v9833, %v8335
        %v9962 = vsel %vm5489, %v9834, %v8337
        %v9963 = vsel %vm5489, %v9835, %v8339
        %v9964 = vsel %vm5489, %v9836, %v8341
        %v9965 = vsel %vm5489, %v9837, %v8343
        %v9966 = vsel %vm5489, %v9838, %v8345
        %v9967 = vsel %vm5489, %v9839, %v8347
        %v9968 = vsel %vm5489, %v9840, %v3551
        %v9969 = vsel %vm5489, %v9841, %v8349
        %v9970 = vsel %vm5489, %v9842, %v3553
        %v9971 = vsel %vm5489, %v9843, %v8351
        %v9972 = vsel %vm5489, %v9844, %v3555
        %v9973 = vsel %vm5489, %v9845, %v8353
        %v9974 = vsel %vm5489, %v9846, %v3557
        %v9975 = vsel %vm5489, %v9847, %v8355
        %v9976 = vsel %vm5489, %v9848, %v8357
        %v9977 = vsel %vm5489, %v9849, %v8359
        %v9978 = vsel %vm5489, %v9850, %v8361
        %v9979 = vsel %vm5489, %v9851, %v8363
        %v9980 = vsel %vm5489, %v9852, %v8365
        %v9981 = vsel %vm5489, %v9853, %v8367
        %v9982 = vsel %vm5489, %v9854, %v8369
        %v9983 = vsel %vm5489, %v9855, %v8371
        %v9984 = vsel %vm5489, %v9856, %v3567
        %v9985 = vsel %vm5489, %v9857, %v8373
        %v9986 = vsel %vm5489, %v9858, %v3569
        %v9987 = vsel %vm5489, %v9859, %v8375
        %v9988 = vsel %vm5489, %v9860, %v3571
        %v9989 = vsel %vm5489, %v9861, %v8377
        %v9990 = vsel %vm5489, %v9862, %v3573
        %v9991 = vsel %vm5489, %v9863, %v8379
        %v9992 = vsel %vm5489, %v9864, %v8381
        %v9993 = vsel %vm5489, %v9865, %v8383
        %v9994 = vsel %vm5489, %v9866, %v8385
        %v9995 = vsel %vm5489, %v9867, %v8387
        %v9996 = vsel %vm5489, %v9868, %v8389
        %v9997 = vsel %vm5489, %v9869, %v8391
        %v9998 = vsel %vm5489, %v9870, %v8393
        %v9999 = vsel %vm5489, %v9871, %v8395
        %v10000 = vsel %vm5489, %v9872, %v3583
        %v10001 = vsel %vm5489, %v9873, %v8397
        %v10002 = vsel %vm5489, %v9874, %v3585
        %v10003 = vsel %vm5489, %v9875, %v8399
        %v10004 = vsel %vm5489, %v9876, %v3587
        %v10005 = vsel %vm5489, %v9877, %v8401
        %v10006 = vsel %vm5489, %v9878, %v3589
        %v10007 = vsel %vm5489, %v9879, %v8403
        %v10008 = vsel %vm5489, %v9880, %v8405
        %v10009 = vsel %vm5489, %v9881, %v8407
        %v10010 = vsel %vm5489, %v9882, %v8409
        %v10011 = vsel %vm5489, %v9883, %v8411
        %v10012 = vsel %vm5489, %v9884, %v8413
        %v10013 = vsel %vm5489, %v9885, %v8415
        %v10014 = vsel %vm5489, %v9886, %v8417
        %v10015 = vsel %vm5489, %v9887, %v8419
        %v10016 = vsel %vm5489, %v9888, %v3599
        %v10017 = vsel %vm5489, %v9889, %v8421
        %v10018 = vsel %vm5489, %v9890, %v3601
        %v10019 = vsel %vm5489, %v9891, %v8423
        %v10020 = vsel %vm5489, %v9892, %v3603
        %v10021 = vsel %vm5489, %v9893, %v8425
        %v10022 = vsel %vm5489, %v9894, %v3605
        %v10023 = vsel %vm5489, %v9895, %v8427
        %v10024 = vsel %vm5489, %v9896, %v8429
        %v10025 = vsel %vm5489, %v9897, %v8431
        %v10026 = vsel %vm5489, %v9898, %v8433
        %v10027 = vsel %vm5489, %v9899, %v8435
        %v10028 = vsel %vm5489, %v9900, %v8437
        %v10029 = vsel %vm5489, %v9901, %v8439
        %v10030 = vsel %vm5489, %v9902, %v8441
        %v10031 = vsel %vm5489, %v9903, %v8443
        %v10032 = vsel %vm5489, %v9904, %v8445
        %v10033 = vsel %vm5489, %v9905, %v8447
        %v10034 = vsel %vm5489, %v9906, %v8449
        %v10035 = vsel %vm5489, %v9907, %v8451
        %v10036 = vsel %vm5489, %v9908, %v8453
        %v10037 = vsel %vm5489, %v9909, %v8455
        %v10038 = vsel %vm5489, %v9910, %v8457
        %v10039 = vsel %vm5489, %v9911, %v8459
        %v10040 = vsel %vm5489, %v9912, %v8461
        %v10041 = vsel %vm5489, %v9913, %v8463
        %v10042 = vsel %vm5489, %v9914, %v8465
        %v10043 = vsel %vm5489, %v9915, %v8467
        %v10044 = vsel %vm5489, %v9916, %v8469
        %v10045 = vsel %vm5489, %v9917, %v8471
        %v10046 = vsel %vm5489, %v9918, %v8473
        %v10047 = vsel %vm5489, %v9919, %v8475
        %v10048 = vsel %vm5489, %v9920, %v8477
        %v10049 = vsel %vm5489, %v9921, %v8479
        %v10050 = vsel %vm5489, %v9922, %v8481
        %v10051 = vsel %vm5489, %v9923, %v8483
        %v10052 = vsel %vm5489, %v9924, %v8485
        %v10053 = vsel %vm5489, %v9925, %v8487
        %v10054 = vsel %vm5489, %v9926, %v8489
        %v10055 = vsel %vm5489, %v9927, %v8491
        %v10056 = vsel %vm5489, %v9928, %v8493
        %v10057 = vsel %vm5489, %v9929, %v8495
        %v10058 = vsel %vm5489, %v9930, %v8497
        %v10059 = vsel %vm5489, %v9931, %v8499
        %v10060 = vsel %vm5489, %v9932, %v8501
        %v10061 = vsel %vm5489, %v9933, %v8503
        %v10062 = vsel %vm5489, %v9934, %v8505
        %v10063 = vsel %vm5489, %v9935, %v8507
        %v10064 = vsel %vm5554, %v9936, %v3775
        %v10065 = vsel %vm5554, %v9937, %v8625
        %v10066 = vsel %vm5554, %v9938, %v3777
        %v10067 = vsel %vm5554, %v9939, %v8627
        %v10068 = vsel %vm5554, %v9940, %v3779
        %v10069 = vsel %vm5554, %v9941, %v8629
        %v10070 = vsel %vm5554, %v9942, %v3781
        %v10071 = vsel %vm5554, %v9943, %v8631
        %v10072 = vsel %vm5554, %v9944, %v8633
        %v10073 = vsel %vm5554, %v9945, %v8635
        %v10074 = vsel %vm5554, %v9946, %v8637
        %v10075 = vsel %vm5554, %v9947, %v8639
        %v10076 = vsel %vm5554, %v9948, %v8641
        %v10077 = vsel %vm5554, %v9949, %v8643
        %v10078 = vsel %vm5554, %v9950, %v8645
        %v10079 = vsel %vm5554, %v9951, %v8647
        %v10080 = vsel %vm5554, %v9952, %v3791
        %v10081 = vsel %vm5554, %v9953, %v8649
        %v10082 = vsel %vm5554, %v9954, %v3793
        %v10083 = vsel %vm5554, %v9955, %v8651
        %v10084 = vsel %vm5554, %v9956, %v3795
        %v10085 = vsel %vm5554, %v9957, %v8653
        %v10086 = vsel %vm5554, %v9958, %v3797
        %v10087 = vsel %vm5554, %v9959, %v8655
        %v10088 = vsel %vm5554, %v9960, %v8657
        %v10089 = vsel %vm5554, %v9961, %v8659
        %v10090 = vsel %vm5554, %v9962, %v8661
        %v10091 = vsel %vm5554, %v9963, %v8663
        %v10092 = vsel %vm5554, %v9964, %v8665
        %v10093 = vsel %vm5554, %v9965, %v8667
        %v10094 = vsel %vm5554, %v9966, %v8669
        %v10095 = vsel %vm5554, %v9967, %v8671
        %v10096 = vsel %vm5554, %v9968, %v3807
        %v10097 = vsel %vm5554, %v9969, %v8673
        %v10098 = vsel %vm5554, %v9970, %v3809
        %v10099 = vsel %vm5554, %v9971, %v8675
        %v10100 = vsel %vm5554, %v9972, %v3811
        %v10101 = vsel %vm5554, %v9973, %v8677
        %v10102 = vsel %vm5554, %v9974, %v3813
        %v10103 = vsel %vm5554, %v9975, %v8679
        %v10104 = vsel %vm5554, %v9976, %v8681
        %v10105 = vsel %vm5554, %v9977, %v8683
        %v10106 = vsel %vm5554, %v9978, %v8685
        %v10107 = vsel %vm5554, %v9979, %v8687
        %v10108 = vsel %vm5554, %v9980, %v8689
        %v10109 = vsel %vm5554, %v9981, %v8691
        %v10110 = vsel %vm5554, %v9982, %v8693
        %v10111 = vsel %vm5554, %v9983, %v8695
        %v10112 = vsel %vm5554, %v9984, %v3823
        %v10113 = vsel %vm5554, %v9985, %v8697
        %v10114 = vsel %vm5554, %v9986, %v3825
        %v10115 = vsel %vm5554, %v9987, %v8699
        %v10116 = vsel %vm5554, %v9988, %v3827
        %v10117 = vsel %vm5554, %v9989, %v8701
        %v10118 = vsel %vm5554, %v9990, %v3829
        %v10119 = vsel %vm5554, %v9991, %v8703
        %v10120 = vsel %vm5554, %v9992, %v8705
        %v10121 = vsel %vm5554, %v9993, %v8707
        %v10122 = vsel %vm5554, %v9994, %v8709
        %v10123 = vsel %vm5554, %v9995, %v8711
        %v10124 = vsel %vm5554, %v9996, %v8713
        %v10125 = vsel %vm5554, %v9997, %v8715
        %v10126 = vsel %vm5554, %v9998, %v8717
        %v10127 = vsel %vm5554, %v9999, %v8719
        %v10128 = vsel %vm5554, %v10000, %v3839
        %v10129 = vsel %vm5554, %v10001, %v8721
        %v10130 = vsel %vm5554, %v10002, %v3841
        %v10131 = vsel %vm5554, %v10003, %v8723
        %v10132 = vsel %vm5554, %v10004, %v3843
        %v10133 = vsel %vm5554, %v10005, %v8725
        %v10134 = vsel %vm5554, %v10006, %v3845
        %v10135 = vsel %vm5554, %v10007, %v8727
        %v10136 = vsel %vm5554, %v10008, %v8729
        %v10137 = vsel %vm5554, %v10009, %v8731
        %v10138 = vsel %vm5554, %v10010, %v8733
        %v10139 = vsel %vm5554, %v10011, %v8735
        %v10140 = vsel %vm5554, %v10012, %v8737
        %v10141 = vsel %vm5554, %v10013, %v8739
        %v10142 = vsel %vm5554, %v10014, %v8741
        %v10143 = vsel %vm5554, %v10015, %v8743
        %v10144 = vsel %vm5554, %v10016, %v3855
        %v10145 = vsel %vm5554, %v10017, %v8745
        %v10146 = vsel %vm5554, %v10018, %v3857
        %v10147 = vsel %vm5554, %v10019, %v8747
        %v10148 = vsel %vm5554, %v10020, %v3859
        %v10149 = vsel %vm5554, %v10021, %v8749
        %v10150 = vsel %vm5554, %v10022, %v3861
        %v10151 = vsel %vm5554, %v10023, %v8751
        %v10152 = vsel %vm5554, %v10024, %v8753
        %v10153 = vsel %vm5554, %v10025, %v8755
        %v10154 = vsel %vm5554, %v10026, %v8757
        %v10155 = vsel %vm5554, %v10027, %v8759
        %v10156 = vsel %vm5554, %v10028, %v8761
        %v10157 = vsel %vm5554, %v10029, %v8763
        %v10158 = vsel %vm5554, %v10030, %v8765
        %v10159 = vsel %vm5554, %v10031, %v8767
        %v10160 = vsel %vm5554, %v10032, %v8769
        %v10161 = vsel %vm5554, %v10033, %v8771
        %v10162 = vsel %vm5554, %v10034, %v8773
        %v10163 = vsel %vm5554, %v10035, %v8775
        %v10164 = vsel %vm5554, %v10036, %v8777
        %v10165 = vsel %vm5554, %v10037, %v8779
        %v10166 = vsel %vm5554, %v10038, %v8781
        %v10167 = vsel %vm5554, %v10039, %v8783
        %v10168 = vsel %vm5554, %v10040, %v8785
        %v10169 = vsel %vm5554, %v10041, %v8787
        %v10170 = vsel %vm5554, %v10042, %v8789
        %v10171 = vsel %vm5554, %v10043, %v8791
        %v10172 = vsel %vm5554, %v10044, %v8793
        %v10173 = vsel %vm5554, %v10045, %v8795
        %v10174 = vsel %vm5554, %v10046, %v8797
        %v10175 = vsel %vm5554, %v10047, %v8799
        %v10176 = vsel %vm5554, %v10048, %v8801
        %v10177 = vsel %vm5554, %v10049, %v8803
        %v10178 = vsel %vm5554, %v10050, %v8805
        %v10179 = vsel %vm5554, %v10051, %v8807
        %v10180 = vsel %vm5554, %v10052, %v8809
        %v10181 = vsel %vm5554, %v10053, %v8811
        %v10182 = vsel %vm5554, %v10054, %v8813
        %v10183 = vsel %vm5554, %v10055, %v8815
        %v10184 = vsel %vm5554, %v10056, %v8817
        %v10185 = vsel %vm5554, %v10057, %v8819
        %v10186 = vsel %vm5554, %v10058, %v8821
        %v10187 = vsel %vm5554, %v10059, %v8823
        %v10188 = vsel %vm5554, %v10060, %v8825
        %v10189 = vsel %vm5554, %v10061, %v8827
        %v10190 = vsel %vm5554, %v10062, %v8829
        %v10191 = vsel %vm5554, %v10063, %v8831
        %v10320 = vrot.slane %v10064, 2
        %v10321 = vrot.slane %v10065, 2
        %v10322 = vsel %vm1284, %v10320, %v10321
        %v10323 = vrot.slane %v10066, 2
        %v10324 = vrot.slane %v10067, 2
        %v10325 = vsel %vm1284, %v10323, %v10324
        %v10326 = vrot.slane %v10068, 2
        %v10327 = vrot.slane %v10069, 2
        %v10328 = vsel %vm1284, %v10326, %v10327
        %v10329 = vrot.slane %v10070, 2
        %v10330 = vrot.slane %v10071, 2
        %v10331 = vsel %vm1284, %v10329, %v10330
        %v10332 = vrot.slane %v10072, 2
        %v10333 = vrot.slane %v10073, 2
        %v10334 = vsel %vm1284, %v10332, %v10333
        %v10335 = vrot.slane %v10074, 2
        %v10336 = vrot.slane %v10075, 2
        %v10337 = vsel %vm1284, %v10335, %v10336
        %v10338 = vrot.slane %v10076, 2
        %v10339 = vrot.slane %v10077, 2
        %v10340 = vsel %vm1284, %v10338, %v10339
        %v10341 = vrot.slane %v10078, 2
        %v10342 = vrot.slane %v10079, 2
        %v10343 = vsel %vm1284, %v10341, %v10342
        %v10344 = vrot.slane %v10080, 2
        %v10345 = vrot.slane %v10081, 2
        %v10346 = vsel %vm1284, %v10344, %v10345
        %v10347 = vrot.slane %v10082, 2
        %v10348 = vrot.slane %v10083, 2
        %v10349 = vsel %vm1284, %v10347, %v10348
        %v10350 = vrot.slane %v10084, 2
        %v10351 = vrot.slane %v10085, 2
        %v10352 = vsel %vm1284, %v10350, %v10351
        %v10353 = vrot.slane %v10086, 2
        %v10354 = vrot.slane %v10087, 2
        %v10355 = vsel %vm1284, %v10353, %v10354
        %v10356 = vrot.slane %v10088, 2
        %v10357 = vrot.slane %v10089, 2
        %v10358 = vsel %vm1284, %v10356, %v10357
        %v10359 = vrot.slane %v10090, 2
        %v10360 = vrot.slane %v10091, 2
        %v10361 = vsel %vm1284, %v10359, %v10360
        %v10362 = vrot.slane %v10092, 2
        %v10363 = vrot.slane %v10093, 2
        %v10364 = vsel %vm1284, %v10362, %v10363
        %v10365 = vrot.slane %v10094, 2
        %v10366 = vrot.slane %v10095, 2
        %v10367 = vsel %vm1284, %v10365, %v10366
        %v10368 = vrot.slane %v10096, 2
        %v10369 = vrot.slane %v10097, 2
        %v10370 = vsel %vm1284, %v10368, %v10369
        %v10371 = vrot.slane %v10098, 2
        %v10372 = vrot.slane %v10099, 2
        %v10373 = vsel %vm1284, %v10371, %v10372
        %v10374 = vrot.slane %v10100, 2
        %v10375 = vrot.slane %v10101, 2
        %v10376 = vsel %vm1284, %v10374, %v10375
        %v10377 = vrot.slane %v10102, 2
        %v10378 = vrot.slane %v10103, 2
        %v10379 = vsel %vm1284, %v10377, %v10378
        %v10380 = vrot.slane %v10104, 2
        %v10381 = vrot.slane %v10105, 2
        %v10382 = vsel %vm1284, %v10380, %v10381
        %v10383 = vrot.slane %v10106, 2
        %v10384 = vrot.slane %v10107, 2
        %v10385 = vsel %vm1284, %v10383, %v10384
        %v10386 = vrot.slane %v10108, 2
        %v10387 = vrot.slane %v10109, 2
        %v10388 = vsel %vm1284, %v10386, %v10387
        %v10389 = vrot.slane %v10110, 2
        %v10390 = vrot.slane %v10111, 2
        %v10391 = vsel %vm1284, %v10389, %v10390
        %v10392 = vrot.slane %v10112, 2
        %v10393 = vrot.slane %v10113, 2
        %v10394 = vsel %vm1284, %v10392, %v10393
        %v10395 = vrot.slane %v10114, 2
        %v10396 = vrot.slane %v10115, 2
        %v10397 = vsel %vm1284, %v10395, %v10396
        %v10398 = vrot.slane %v10116, 2
        %v10399 = vrot.slane %v10117, 2
        %v10400 = vsel %vm1284, %v10398, %v10399
        %v10401 = vrot.slane %v10118, 2
        %v10402 = vrot.slane %v10119, 2
        %v10403 = vsel %vm1284, %v10401, %v10402
        %v10404 = vrot.slane %v10120, 2
        %v10405 = vrot.slane %v10121, 2
        %v10406 = vsel %vm1284, %v10404, %v10405
        %v10407 = vrot.slane %v10122, 2
        %v10408 = vrot.slane %v10123, 2
        %v10409 = vsel %vm1284, %v10407, %v10408
        %v10410 = vrot.slane %v10124, 2
        %v10411 = vrot.slane %v10125, 2
        %v10412 = vsel %vm1284, %v10410, %v10411
        %v10413 = vrot.slane %v10126, 2
        %v10414 = vrot.slane %v10127, 2
        %v10415 = vsel %vm1284, %v10413, %v10414
        %v10416 = vrot.slane %v10128, 2
        %v10417 = vrot.slane %v10129, 2
        %v10418 = vsel %vm1284, %v10416, %v10417
        %v10419 = vrot.slane %v10130, 2
        %v10420 = vrot.slane %v10131, 2
        %v10421 = vsel %vm1284, %v10419, %v10420
        %v10422 = vrot.slane %v10132, 2
        %v10423 = vrot.slane %v10133, 2
        %v10424 = vsel %vm1284, %v10422, %v10423
        %v10425 = vrot.slane %v10134, 2
        %v10426 = vrot.slane %v10135, 2
        %v10427 = vsel %vm1284, %v10425, %v10426
        %v10428 = vrot.slane %v10136, 2
        %v10429 = vrot.slane %v10137, 2
        %v10430 = vsel %vm1284, %v10428, %v10429
        %v10431 = vrot.slane %v10138, 2
        %v10432 = vrot.slane %v10139, 2
        %v10433 = vsel %vm1284, %v10431, %v10432
        %v10434 = vrot.slane %v10140, 2
        %v10435 = vrot.slane %v10141, 2
        %v10436 = vsel %vm1284, %v10434, %v10435
        %v10437 = vrot.slane %v10142, 2
        %v10438 = vrot.slane %v10143, 2
        %v10439 = vsel %vm1284, %v10437, %v10438
        %v10440 = vrot.slane %v10144, 2
        %v10441 = vrot.slane %v10145, 2
        %v10442 = vsel %vm1284, %v10440, %v10441
        %v10443 = vrot.slane %v10146, 2
        %v10444 = vrot.slane %v10147, 2
        %v10445 = vsel %vm1284, %v10443, %v10444
        %v10446 = vrot.slane %v10148, 2
        %v10447 = vrot.slane %v10149, 2
        %v10448 = vsel %vm1284, %v10446, %v10447
        %v10449 = vrot.slane %v10150, 2
        %v10450 = vrot.slane %v10151, 2
        %v10451 = vsel %vm1284, %v10449, %v10450
        %v10452 = vrot.slane %v10152, 2
        %v10453 = vrot.slane %v10153, 2
        %v10454 = vsel %vm1284, %v10452, %v10453
        %v10455 = vrot.slane %v10154, 2
        %v10456 = vrot.slane %v10155, 2
        %v10457 = vsel %vm1284, %v10455, %v10456
        %v10458 = vrot.slane %v10156, 2
        %v10459 = vrot.slane %v10157, 2
        %v10460 = vsel %vm1284, %v10458, %v10459
        %v10461 = vrot.slane %v10158, 2
        %v10462 = vrot.slane %v10159, 2
        %v10463 = vsel %vm1284, %v10461, %v10462
        %v10464 = vrot.slane %v10160, 2
        %v10465 = vrot.slane %v10161, 2
        %v10466 = vsel %vm1284, %v10464, %v10465
        %v10467 = vrot.slane %v10162, 2
        %v10468 = vrot.slane %v10163, 2
        %v10469 = vsel %vm1284, %v10467, %v10468
        %v10470 = vrot.slane %v10164, 2
        %v10471 = vrot.slane %v10165, 2
        %v10472 = vsel %vm1284, %v10470, %v10471
        %v10473 = vrot.slane %v10166, 2
        %v10474 = vrot.slane %v10167, 2
        %v10475 = vsel %vm1284, %v10473, %v10474
        %v10476 = vrot.slane %v10168, 2
        %v10477 = vrot.slane %v10169, 2
        %v10478 = vsel %vm1284, %v10476, %v10477
        %v10479 = vrot.slane %v10170, 2
        %v10480 = vrot.slane %v10171, 2
        %v10481 = vsel %vm1284, %v10479, %v10480
        %v10482 = vrot.slane %v10172, 2
        %v10483 = vrot.slane %v10173, 2
        %v10484 = vsel %vm1284, %v10482, %v10483
        %v10485 = vrot.slane %v10174, 2
        %v10486 = vrot.slane %v10175, 2
        %v10487 = vsel %vm1284, %v10485, %v10486
        %v10488 = vrot.slane %v10176, 2
        %v10489 = vrot.slane %v10177, 2
        %v10490 = vsel %vm1284, %v10488, %v10489
        %v10491 = vrot.slane %v10178, 2
        %v10492 = vrot.slane %v10179, 2
        %v10493 = vsel %vm1284, %v10491, %v10492
        %v10494 = vrot.slane %v10180, 2
        %v10495 = vrot.slane %v10181, 2
        %v10496 = vsel %vm1284, %v10494, %v10495
        %v10497 = vrot.slane %v10182, 2
        %v10498 = vrot.slane %v10183, 2
        %v10499 = vsel %vm1284, %v10497, %v10498
        %v10500 = vrot.slane %v10184, 2
        %v10501 = vrot.slane %v10185, 2
        %v10502 = vsel %vm1284, %v10500, %v10501
        %v10503 = vrot.slane %v10186, 2
        %v10504 = vrot.slane %v10187, 2
        %v10505 = vsel %vm1284, %v10503, %v10504
        %v10506 = vrot.slane %v10188, 2
        %v10507 = vrot.slane %v10189, 2
        %v10508 = vsel %vm1284, %v10506, %v10507
        %v10509 = vrot.slane %v10190, 2
        %v10510 = vrot.slane %v10191, 2
        %v10511 = vsel %vm1284, %v10509, %v10510
        %v10512 = vld [vmem:[#allocation8] sm:$0xff]
        %v10513 = vld [vmem:[#allocation8 + $0x8] sm:$0xff]
        %v10514 = vld [vmem:[#allocation8 + $0x10] sm:$0xff]
        %v10515 = vld [vmem:[#allocation8 + $0x18] sm:$0xff]
        %v10516 = vld [vmem:[#allocation8 + $0x20] sm:$0xff]
        %v10517 = vld [vmem:[#allocation8 + $0x28] sm:$0xff]
        %v10518 = vld [vmem:[#allocation8 + $0x30] sm:$0xff]
        %v10519 = vld [vmem:[#allocation8 + $0x38] sm:$0xff]
        %v10520 = vld [vmem:[#allocation8 + $0x40] sm:$0xff]
        %v10521 = vld [vmem:[#allocation8 + $0x48] sm:$0xff]
        %v10522 = vld [vmem:[#allocation8 + $0x50] sm:$0xff]
        %v10523 = vld [vmem:[#allocation8 + $0x58] sm:$0xff]
        %v10524 = vld [vmem:[#allocation8 + $0x60] sm:$0xff]
        %v10525 = vld [vmem:[#allocation8 + $0x68] sm:$0xff]
        %v10526 = vld [vmem:[#allocation8 + $0x70] sm:$0xff]
        %v10527 = vld [vmem:[#allocation8 + $0x78] sm:$0xff]
        %v10528 = vld [vmem:[#allocation8 + $0x80] sm:$0xff]
        %v10529 = vld [vmem:[#allocation8 + $0x88] sm:$0xff]
        %v10530 = vld [vmem:[#allocation8 + $0x90] sm:$0xff]
        %v10531 = vld [vmem:[#allocation8 + $0x98] sm:$0xff]
        %v10532 = vld [vmem:[#allocation8 + $0xa0] sm:$0xff]
        %v10533 = vld [vmem:[#allocation8 + $0xa8] sm:$0xff]
        %v10534 = vld [vmem:[#allocation8 + $0xb0] sm:$0xff]
        %v10535 = vld [vmem:[#allocation8 + $0xb8] sm:$0xff]
        %v10536 = vld [vmem:[#allocation8 + $0xc0] sm:$0xff]
        %v10537 = vld [vmem:[#allocation8 + $0xc8] sm:$0xff]
        %v10538 = vld [vmem:[#allocation8 + $0xd0] sm:$0xff]
        %v10539 = vsel %vm5619, %v10322, 0
        %v10541 = vsel %vm5619, %v10325, 0
        %v10543 = vsel %vm5619, %v10328, 0
        %v10545 = vsel %vm5619, %v10331, 0
        %v10547 = vsel %vm5619, %v10334, 0
        %v10549 = vsel %vm5619, %v10337, 0
        %v10551 = vsel %vm5619, %v10340, 0
        %v10553 = vsel %vm5619, %v10343, 0
        %v10555 = vsel %vm5619, %v10346, 0
        %v10557 = vsel %vm5619, %v10349, 0
        %v10559 = vsel %vm5619, %v10352, 0
        %v10561 = vsel %vm5619, %v10355, 0
        %v10563 = vsel %vm5619, %v10358, 0
        %v10565 = vsel %vm5619, %v10361, 0
        %v10567 = vsel %vm5619, %v10364, 0
        %v10569 = vsel %vm5619, %v10367, 0
        %v10571 = vsel %vm5619, %v10370, 0
        %v10573 = vsel %vm5619, %v10373, 0
        %v10575 = vsel %vm5619, %v10376, 0
        %v10577 = vsel %vm5619, %v10379, 0
        %v10579 = vsel %vm5619, %v10382, 0
        %v10581 = vsel %vm5619, %v10385, 0
        %v10583 = vsel %vm5619, %v10388, 0
        %v10585 = vsel %vm5619, %v10391, 0
        %v10587 = vsel %vm5619, %v10394, 0
        %v10589 = vsel %vm5619, %v10397, 0
        %v10591 = vsel %vm5619, %v10400, 0
        %v10593 = vsel %vm5619, %v10403, 0
        %v10595 = vsel %vm5619, %v10406, 0
        %v10597 = vsel %vm5619, %v10409, 0
        %v10599 = vsel %vm5619, %v10412, 0
        %v10601 = vsel %vm5619, %v10415, 0
        %v10603 = vsel %vm5619, %v10418, 0
        %v10605 = vsel %vm5619, %v10421, 0
        %v10607 = vsel %vm5619, %v10424, 0
        %v10609 = vsel %vm5619, %v10427, 0
        %v10611 = vsel %vm5619, %v10430, 0
        %v10613 = vsel %vm5619, %v10433, 0
        %v10615 = vsel %vm5619, %v10436, 0
        %v10617 = vsel %vm5619, %v10439, 0
        %v10619 = vsel %vm5619, %v10442, 0
        %v10621 = vsel %vm5619, %v10445, 0
        %v10623 = vsel %vm5619, %v10448, 0
        %v10625 = vsel %vm5619, %v10451, 0
        %v10627 = vsel %vm5619, %v10454, 0
        %v10629 = vsel %vm5619, %v10457, 0
        %v10631 = vsel %vm5619, %v10460, 0
        %v10633 = vsel %vm5619, %v10463, 0
        %v10635 = vsel %vm5619, %v10466, 0
        %v10637 = vsel %vm5619, %v10469, 0
        %v10639 = vsel %vm5619, %v10472, 0
        %v10641 = vsel %vm5619, %v10475, 0
        %v10643 = vsel %vm5619, %v10478, 0
        %v10645 = vsel %vm5619, %v10481, 0
        %v10647 = vsel %vm5619, %v10484, 0
        %v10649 = vsel %vm5619, %v10487, 0
        %v10651 = vsel %vm5619, %v10490, 0
        %v10653 = vsel %vm5619, %v10493, 0
        %v10655 = vsel %vm5619, %v10496, 0
        %v10657 = vsel %vm5619, %v10499, 0
        %v10659 = vsel %vm5619, %v10502, 0
        %v10661 = vsel %vm5619, %v10505, 0
        %v10663 = vsel %vm5619, %v10508, 0
        %v10665 = vsel %vm5619, %v10511, 0
        %10667 = vmatpush.msra.mxu0 %v10527
        %10668 = vmatpush.msra.mxu0 %v10526
        %10669 = vmatpush.msra.mxu0 %v10525
        %10670 = vmatpush.msra.mxu0 %v10524
        %10671 = vmatpush.msra.mxu0 %v10523
        %10672 = vmatpush.msra.mxu0 %v10522
        %10673 = vmatpush.msra.mxu0 %v10521
        %10674 = vmatpush.msra.mxu0 %v10520
        %10675 = vmatpush.msra.mxu0 %v10519
        %10676 = vmatpush.msra.mxu0 %v10518
        %10677 = vmatpush.msra.mxu0 %v10517
        %10678 = vmatpush.msra.mxu0 %v10516
        %10679 = vmatpush.msra.mxu0 %v10515
        %10680 = vmatpush.msra.mxu0 %v10514
        %10681 = vmatpush.msra.mxu0 %v10513
        %10682 = vmatpush.msra.mxu0 %v10512
        %10683 = vmatmul.f32.gmra.mxu0 %v5880
        %v10684 = vpop.f32.mrf.mxu0
        %v10685 = vadd.f32 0.0, %v10684
        %10686 = vmatmul.f32.gmra.mxu0 %v5881
        %v10687 = vpop.f32.mrf.mxu0
        %v10688 = vadd.f32 0.0, %v10687
        %10689 = vmatmul.f32.gmra.mxu0 %v5882
        %v10690 = vpop.f32.mrf.mxu0
        %v10691 = vadd.f32 0.0, %v10690
        %10692 = vmatmul.f32.gmra.mxu0 %v5883
        %v10693 = vpop.f32.mrf.mxu0
        %v10694 = vadd.f32 0.0, %v10693
        %10695 = vmatmul.f32.gmra.mxu0 %v5884
        %v10696 = vpop.f32.mrf.mxu0
        %v10697 = vadd.f32 0.0, %v10696
        %10698 = vmatmul.f32.gmra.mxu0 %v5885
        %v10699 = vpop.f32.mrf.mxu0
        %v10700 = vadd.f32 0.0, %v10699
        %10701 = vmatmul.f32.gmra.mxu0 %v5886
        %v10702 = vpop.f32.mrf.mxu0
        %v10703 = vadd.f32 0.0, %v10702
        %10704 = vmatmul.f32.gmra.mxu0 %v5887
        %v10705 = vpop.f32.mrf.mxu0
        %v10706 = vadd.f32 0.0, %v10705
        %10707 = vmatmul.f32.gmra.mxu0 %v5888
        %v10708 = vpop.f32.mrf.mxu0
        %v10709 = vadd.f32 0.0, %v10708
        %10710 = vmatmul.f32.gmra.mxu0 %v5889
        %v10711 = vpop.f32.mrf.mxu0
        %v10712 = vadd.f32 0.0, %v10711
        %10713 = vmatmul.f32.gmra.mxu0 %v5890
        %v10714 = vpop.f32.mrf.mxu0
        %v10715 = vadd.f32 0.0, %v10714
        %10716 = vmatmul.f32.gmra.mxu0 %v5891
        %v10717 = vpop.f32.mrf.mxu0
        %v10718 = vadd.f32 0.0, %v10717
        %10719 = vmatmul.f32.gmra.mxu0 %v5892
        %v10720 = vpop.f32.mrf.mxu0
        %v10721 = vadd.f32 0.0, %v10720
        %10722 = vmatmul.f32.gmra.mxu0 %v5893
        %v10723 = vpop.f32.mrf.mxu0
        %v10724 = vadd.f32 0.0, %v10723
        %10725 = vmatmul.f32.gmra.mxu0 %v5894
        %v10726 = vpop.f32.mrf.mxu0
        %v10727 = vadd.f32 0.0, %v10726
        %10728 = vmatmul.f32.gmra.mxu0 %v5895
        %v10729 = vpop.f32.mrf.mxu0
        %v10730 = vadd.f32 0.0, %v10729
        %10731 = vmatmul.f32.gmra.mxu0 %v5896
        %v10732 = vpop.f32.mrf.mxu0
        %v10733 = vadd.f32 0.0, %v10732
        %10734 = vmatmul.f32.gmra.mxu0 %v5897
        %v10735 = vpop.f32.mrf.mxu0
        %v10736 = vadd.f32 0.0, %v10735
        %10737 = vmatmul.f32.gmra.mxu0 %v5898
        %v10738 = vpop.f32.mrf.mxu0
        %v10739 = vadd.f32 0.0, %v10738
        %10740 = vmatmul.f32.gmra.mxu0 %v5899
        %v10741 = vpop.f32.mrf.mxu0
        %v10742 = vadd.f32 0.0, %v10741
        %10743 = vmatmul.f32.gmra.mxu0 %v5900
        %v10744 = vpop.f32.mrf.mxu0
        %v10745 = vadd.f32 0.0, %v10744
        %10746 = vmatmul.f32.gmra.mxu0 %v5901
        %v10747 = vpop.f32.mrf.mxu0
        %v10748 = vadd.f32 0.0, %v10747
        %10749 = vmatmul.f32.gmra.mxu0 %v5902
        %v10750 = vpop.f32.mrf.mxu0
        %v10751 = vadd.f32 0.0, %v10750
        %10752 = vmatmul.f32.gmra.mxu0 %v5903
        %v10753 = vpop.f32.mrf.mxu0
        %v10754 = vadd.f32 0.0, %v10753
        %10755 = vmatmul.f32.gmra.mxu0 %v5904
        %v10756 = vpop.f32.mrf.mxu0
        %v10757 = vadd.f32 0.0, %v10756
        %10758 = vmatmul.f32.gmra.mxu0 %v5905
        %v10759 = vpop.f32.mrf.mxu0
        %v10760 = vadd.f32 0.0, %v10759
        %10761 = vmatmul.f32.gmra.mxu0 %v5906
        %v10762 = vpop.f32.mrf.mxu0
        %v10763 = vadd.f32 0.0, %v10762
        %10764 = vmatmul.f32.gmra.mxu0 %v5907
        %v10765 = vpop.f32.mrf.mxu0
        %v10766 = vadd.f32 0.0, %v10765
        %10767 = vmatmul.f32.gmra.mxu0 %v5908
        %v10768 = vpop.f32.mrf.mxu0
        %v10769 = vadd.f32 0.0, %v10768
        %10770 = vmatmul.f32.gmra.mxu0 %v5909
        %v10771 = vpop.f32.mrf.mxu0
        %v10772 = vadd.f32 0.0, %v10771
        %10773 = vmatmul.f32.gmra.mxu0 %v5910
        %v10774 = vpop.f32.mrf.mxu0
        %v10775 = vadd.f32 0.0, %v10774
        %10776 = vmatmul.f32.gmra.mxu0 %v5911
        %v10777 = vpop.f32.mrf.mxu0
        %v10778 = vadd.f32 0.0, %v10777
        %10779 = vmatmul.f32.gmra.mxu0 %v5912
        %v10780 = vpop.f32.mrf.mxu0
        %v10781 = vadd.f32 0.0, %v10780
        %10782 = vmatmul.f32.gmra.mxu0 %v5913
        %v10783 = vpop.f32.mrf.mxu0
        %v10784 = vadd.f32 0.0, %v10783
        %10785 = vmatmul.f32.gmra.mxu0 %v5914
        %v10786 = vpop.f32.mrf.mxu0
        %v10787 = vadd.f32 0.0, %v10786
        %10788 = vmatmul.f32.gmra.mxu0 %v5915
        %v10789 = vpop.f32.mrf.mxu0
        %v10790 = vadd.f32 0.0, %v10789
        %10791 = vmatmul.f32.gmra.mxu0 %v5916
        %v10792 = vpop.f32.mrf.mxu0
        %v10793 = vadd.f32 0.0, %v10792
        %10794 = vmatmul.f32.gmra.mxu0 %v5917
        %v10795 = vpop.f32.mrf.mxu0
        %v10796 = vadd.f32 0.0, %v10795
        %10797 = vmatmul.f32.gmra.mxu0 %v5918
        %v10798 = vpop.f32.mrf.mxu0
        %v10799 = vadd.f32 0.0, %v10798
        %10800 = vmatmul.f32.gmra.mxu0 %v5919
        %v10801 = vpop.f32.mrf.mxu0
        %v10802 = vadd.f32 0.0, %v10801
        %10803 = vmatmul.f32.gmra.mxu0 %v5920
        %v10804 = vpop.f32.mrf.mxu0
        %v10805 = vadd.f32 0.0, %v10804
        %10806 = vmatmul.f32.gmra.mxu0 %v5921
        %v10807 = vpop.f32.mrf.mxu0
        %v10808 = vadd.f32 0.0, %v10807
        %10809 = vmatmul.f32.gmra.mxu0 %v5922
        %v10810 = vpop.f32.mrf.mxu0
        %v10811 = vadd.f32 0.0, %v10810
        %10812 = vmatmul.f32.gmra.mxu0 %v5923
        %v10813 = vpop.f32.mrf.mxu0
        %v10814 = vadd.f32 0.0, %v10813
        %10815 = vmatmul.f32.gmra.mxu0 %v5924
        %v10816 = vpop.f32.mrf.mxu0
        %v10817 = vadd.f32 0.0, %v10816
        %10818 = vmatmul.f32.gmra.mxu0 %v5925
        %v10819 = vpop.f32.mrf.mxu0
        %v10820 = vadd.f32 0.0, %v10819
        %10821 = vmatmul.f32.gmra.mxu0 %v5926
        %v10822 = vpop.f32.mrf.mxu0
        %v10823 = vadd.f32 0.0, %v10822
        %10824 = vmatmul.f32.gmra.mxu0 %v5927
        %v10825 = vpop.f32.mrf.mxu0
        %v10826 = vadd.f32 0.0, %v10825
        %10827 = vmatmul.f32.gmra.mxu0 %v5928
        %v10828 = vpop.f32.mrf.mxu0
        %v10829 = vadd.f32 0.0, %v10828
        %10830 = vmatmul.f32.gmra.mxu0 %v5929
        %v10831 = vpop.f32.mrf.mxu0
        %v10832 = vadd.f32 0.0, %v10831
        %10833 = vmatmul.f32.gmra.mxu0 %v5930
        %v10834 = vpop.f32.mrf.mxu0
        %v10835 = vadd.f32 0.0, %v10834
        %10836 = vmatmul.f32.gmra.mxu0 %v5931
        %v10837 = vpop.f32.mrf.mxu0
        %v10838 = vadd.f32 0.0, %v10837
        %10839 = vmatmul.f32.gmra.mxu0 %v5932
        %v10840 = vpop.f32.mrf.mxu0
        %v10841 = vadd.f32 0.0, %v10840
        %10842 = vmatmul.f32.gmra.mxu0 %v5933
        %v10843 = vpop.f32.mrf.mxu0
        %v10844 = vadd.f32 0.0, %v10843
        %10845 = vmatmul.f32.gmra.mxu0 %v5934
        %v10846 = vpop.f32.mrf.mxu0
        %v10847 = vadd.f32 0.0, %v10846
        %10848 = vmatmul.f32.gmra.mxu0 %v5935
        %v10849 = vpop.f32.mrf.mxu0
        %v10850 = vadd.f32 0.0, %v10849
        %10851 = vmatmul.f32.gmra.mxu0 %v5936
        %v10852 = vpop.f32.mrf.mxu0
        %v10853 = vadd.f32 0.0, %v10852
        %10854 = vmatmul.f32.gmra.mxu0 %v5937
        %v10855 = vpop.f32.mrf.mxu0
        %v10856 = vadd.f32 0.0, %v10855
        %10857 = vmatmul.f32.gmra.mxu0 %v5938
        %v10858 = vpop.f32.mrf.mxu0
        %v10859 = vadd.f32 0.0, %v10858
        %10860 = vmatmul.f32.gmra.mxu0 %v5939
        %v10861 = vpop.f32.mrf.mxu0
        %v10862 = vadd.f32 0.0, %v10861
        %10863 = vmatmul.f32.gmra.mxu0 %v5940
        %v10864 = vpop.f32.mrf.mxu0
        %v10865 = vadd.f32 0.0, %v10864
        %10866 = vmatmul.f32.gmra.mxu0 %v5941
        %v10867 = vpop.f32.mrf.mxu0
        %v10868 = vadd.f32 0.0, %v10867
        %10869 = vmatmul.f32.gmra.mxu0 %v5942
        %v10870 = vpop.f32.mrf.mxu0
        %v10871 = vadd.f32 0.0, %v10870
        %10872 = vmatmul.f32.gmra.mxu0 %v5943
        %v10873 = vpop.f32.mrf.mxu0
        %v10874 = vadd.f32 0.0, %v10873
        %10875 = vdwg.mxu0
        %10876 = vmatpush.msra.mxu0 0.0
        %10877 = vmatpush.msra.mxu0 0.0
        %10878 = vmatpush.msra.mxu0 0.0
        %10879 = vmatpush.msra.mxu0 0.0
        %10880 = vmatpush.msra.mxu0 0.0
        %10881 = vmatpush.msra.mxu0 %v10538
        %10882 = vmatpush.msra.mxu0 %v10537
        %10883 = vmatpush.msra.mxu0 %v10536
        %10884 = vmatpush.msra.mxu0 %v10535
        %10885 = vmatpush.msra.mxu0 %v10534
        %10886 = vmatpush.msra.mxu0 %v10533
        %10887 = vmatpush.msra.mxu0 %v10532
        %10888 = vmatpush.msra.mxu0 %v10531
        %10889 = vmatpush.msra.mxu0 %v10530
        %10890 = vmatpush.msra.mxu0 %v10529
        %10891 = vmatpush.msra.mxu0 %v10528
        %10892 = vmatmul.f32.gmra.mxu0 %v10539
        %v10893 = vpop.f32.mrf.mxu0
        %v10894 = vadd.f32 %v10685, %v10893
        %10895 = vmatmul.f32.gmra.mxu0 %v10541
        %v10896 = vpop.f32.mrf.mxu0
        %v10897 = vadd.f32 %v10688, %v10896
        %10898 = vmatmul.f32.gmra.mxu0 %v10543
        %v10899 = vpop.f32.mrf.mxu0
        %v10900 = vadd.f32 %v10691, %v10899
        %10901 = vmatmul.f32.gmra.mxu0 %v10545
        %v10902 = vpop.f32.mrf.mxu0
        %v10903 = vadd.f32 %v10694, %v10902
        %10904 = vmatmul.f32.gmra.mxu0 %v10547
        %v10905 = vpop.f32.mrf.mxu0
        %v10906 = vadd.f32 %v10697, %v10905
        %10907 = vmatmul.f32.gmra.mxu0 %v10549
        %v10908 = vpop.f32.mrf.mxu0
        %v10909 = vadd.f32 %v10700, %v10908
        %10910 = vmatmul.f32.gmra.mxu0 %v10551
        %v10911 = vpop.f32.mrf.mxu0
        %v10912 = vadd.f32 %v10703, %v10911
        %10913 = vmatmul.f32.gmra.mxu0 %v10553
        %v10914 = vpop.f32.mrf.mxu0
        %v10915 = vadd.f32 %v10706, %v10914
        %10916 = vmatmul.f32.gmra.mxu0 %v10555
        %v10917 = vpop.f32.mrf.mxu0
        %v10918 = vadd.f32 %v10709, %v10917
        %10919 = vmatmul.f32.gmra.mxu0 %v10557
        %v10920 = vpop.f32.mrf.mxu0
        %v10921 = vadd.f32 %v10712, %v10920
        %10922 = vmatmul.f32.gmra.mxu0 %v10559
        %v10923 = vpop.f32.mrf.mxu0
        %v10924 = vadd.f32 %v10715, %v10923
        %10925 = vmatmul.f32.gmra.mxu0 %v10561
        %v10926 = vpop.f32.mrf.mxu0
        %v10927 = vadd.f32 %v10718, %v10926
        %10928 = vmatmul.f32.gmra.mxu0 %v10563
        %v10929 = vpop.f32.mrf.mxu0
        %v10930 = vadd.f32 %v10721, %v10929
        %10931 = vmatmul.f32.gmra.mxu0 %v10565
        %v10932 = vpop.f32.mrf.mxu0
        %v10933 = vadd.f32 %v10724, %v10932
        %10934 = vmatmul.f32.gmra.mxu0 %v10567
        %v10935 = vpop.f32.mrf.mxu0
        %v10936 = vadd.f32 %v10727, %v10935
        %10937 = vmatmul.f32.gmra.mxu0 %v10569
        %v10938 = vpop.f32.mrf.mxu0
        %v10939 = vadd.f32 %v10730, %v10938
        %10940 = vmatmul.f32.gmra.mxu0 %v10571
        %v10941 = vpop.f32.mrf.mxu0
        %v10942 = vadd.f32 %v10733, %v10941
        %10943 = vmatmul.f32.gmra.mxu0 %v10573
        %v10944 = vpop.f32.mrf.mxu0
        %v10945 = vadd.f32 %v10736, %v10944
        %10946 = vmatmul.f32.gmra.mxu0 %v10575
        %v10947 = vpop.f32.mrf.mxu0
        %v10948 = vadd.f32 %v10739, %v10947
        %10949 = vmatmul.f32.gmra.mxu0 %v10577
        %v10950 = vpop.f32.mrf.mxu0
        %v10951 = vadd.f32 %v10742, %v10950
        %10952 = vmatmul.f32.gmra.mxu0 %v10579
        %v10953 = vpop.f32.mrf.mxu0
        %v10954 = vadd.f32 %v10745, %v10953
        %10955 = vmatmul.f32.gmra.mxu0 %v10581
        %v10956 = vpop.f32.mrf.mxu0
        %v10957 = vadd.f32 %v10748, %v10956
        %10958 = vmatmul.f32.gmra.mxu0 %v10583
        %v10959 = vpop.f32.mrf.mxu0
        %v10960 = vadd.f32 %v10751, %v10959
        %10961 = vmatmul.f32.gmra.mxu0 %v10585
        %v10962 = vpop.f32.mrf.mxu0
        %v10963 = vadd.f32 %v10754, %v10962
        %10964 = vmatmul.f32.gmra.mxu0 %v10587
        %v10965 = vpop.f32.mrf.mxu0
        %v10966 = vadd.f32 %v10757, %v10965
        %10967 = vmatmul.f32.gmra.mxu0 %v10589
        %v10968 = vpop.f32.mrf.mxu0
        %v10969 = vadd.f32 %v10760, %v10968
        %10970 = vmatmul.f32.gmra.mxu0 %v10591
        %v10971 = vpop.f32.mrf.mxu0
        %v10972 = vadd.f32 %v10763, %v10971
        %10973 = vmatmul.f32.gmra.mxu0 %v10593
        %v10974 = vpop.f32.mrf.mxu0
        %v10975 = vadd.f32 %v10766, %v10974
        %10976 = vmatmul.f32.gmra.mxu0 %v10595
        %v10977 = vpop.f32.mrf.mxu0
        %v10978 = vadd.f32 %v10769, %v10977
        %10979 = vmatmul.f32.gmra.mxu0 %v10597
        %v10980 = vpop.f32.mrf.mxu0
        %v10981 = vadd.f32 %v10772, %v10980
        %10982 = vmatmul.f32.gmra.mxu0 %v10599
        %v10983 = vpop.f32.mrf.mxu0
        %v10984 = vadd.f32 %v10775, %v10983
        %10985 = vmatmul.f32.gmra.mxu0 %v10601
        %v10986 = vpop.f32.mrf.mxu0
        %v10987 = vadd.f32 %v10778, %v10986
        %10988 = vmatmul.f32.gmra.mxu0 %v10603
        %v10989 = vpop.f32.mrf.mxu0
        %v10990 = vadd.f32 %v10781, %v10989
        %10991 = vmatmul.f32.gmra.mxu0 %v10605
        %v10992 = vpop.f32.mrf.mxu0
        %v10993 = vadd.f32 %v10784, %v10992
        %10994 = vmatmul.f32.gmra.mxu0 %v10607
        %v10995 = vpop.f32.mrf.mxu0
        %v10996 = vadd.f32 %v10787, %v10995
        %10997 = vmatmul.f32.gmra.mxu0 %v10609
        %v10998 = vpop.f32.mrf.mxu0
        %v10999 = vadd.f32 %v10790, %v10998
        %11000 = vmatmul.f32.gmra.mxu0 %v10611
        %v11001 = vpop.f32.mrf.mxu0
        %v11002 = vadd.f32 %v10793, %v11001
        %11003 = vmatmul.f32.gmra.mxu0 %v10613
        %v11004 = vpop.f32.mrf.mxu0
        %v11005 = vadd.f32 %v10796, %v11004
        %11006 = vmatmul.f32.gmra.mxu0 %v10615
        %v11007 = vpop.f32.mrf.mxu0
        %v11008 = vadd.f32 %v10799, %v11007
        %11009 = vmatmul.f32.gmra.mxu0 %v10617
        %v11010 = vpop.f32.mrf.mxu0
        %v11011 = vadd.f32 %v10802, %v11010
        %11012 = vmatmul.f32.gmra.mxu0 %v10619
        %v11013 = vpop.f32.mrf.mxu0
        %v11014 = vadd.f32 %v10805, %v11013
        %11015 = vmatmul.f32.gmra.mxu0 %v10621
        %v11016 = vpop.f32.mrf.mxu0
        %v11017 = vadd.f32 %v10808, %v11016
        %11018 = vmatmul.f32.gmra.mxu0 %v10623
        %v11019 = vpop.f32.mrf.mxu0
        %v11020 = vadd.f32 %v10811, %v11019
        %11021 = vmatmul.f32.gmra.mxu0 %v10625
        %v11022 = vpop.f32.mrf.mxu0
        %v11023 = vadd.f32 %v10814, %v11022
        %11024 = vmatmul.f32.gmra.mxu0 %v10627
        %v11025 = vpop.f32.mrf.mxu0
        %v11026 = vadd.f32 %v10817, %v11025
        %11027 = vmatmul.f32.gmra.mxu0 %v10629
        %v11028 = vpop.f32.mrf.mxu0
        %v11029 = vadd.f32 %v10820, %v11028
        %11030 = vmatmul.f32.gmra.mxu0 %v10631
        %v11031 = vpop.f32.mrf.mxu0
        %v11032 = vadd.f32 %v10823, %v11031
        %11033 = vmatmul.f32.gmra.mxu0 %v10633
        %v11034 = vpop.f32.mrf.mxu0
        %v11035 = vadd.f32 %v10826, %v11034
        %11036 = vmatmul.f32.gmra.mxu0 %v10635
        %v11037 = vpop.f32.mrf.mxu0
        %v11038 = vadd.f32 %v10829, %v11037
        %11039 = vmatmul.f32.gmra.mxu0 %v10637
        %v11040 = vpop.f32.mrf.mxu0
        %v11041 = vadd.f32 %v10832, %v11040
        %11042 = vmatmul.f32.gmra.mxu0 %v10639
        %v11043 = vpop.f32.mrf.mxu0
        %v11044 = vadd.f32 %v10835, %v11043
        %11045 = vmatmul.f32.gmra.mxu0 %v10641
        %v11046 = vpop.f32.mrf.mxu0
        %v11047 = vadd.f32 %v10838, %v11046
        %11048 = vmatmul.f32.gmra.mxu0 %v10643
        %v11049 = vpop.f32.mrf.mxu0
        %v11050 = vadd.f32 %v10841, %v11049
        %11051 = vmatmul.f32.gmra.mxu0 %v10645
        %v11052 = vpop.f32.mrf.mxu0
        %v11053 = vadd.f32 %v10844, %v11052
        %11054 = vmatmul.f32.gmra.mxu0 %v10647
        %v11055 = vpop.f32.mrf.mxu0
        %v11056 = vadd.f32 %v10847, %v11055
        %11057 = vmatmul.f32.gmra.mxu0 %v10649
        %v11058 = vpop.f32.mrf.mxu0
        %v11059 = vadd.f32 %v10850, %v11058
        %11060 = vmatmul.f32.gmra.mxu0 %v10651
        %v11061 = vpop.f32.mrf.mxu0
        %v11062 = vadd.f32 %v10853, %v11061
        %11063 = vmatmul.f32.gmra.mxu0 %v10653
        %v11064 = vpop.f32.mrf.mxu0
        %v11065 = vadd.f32 %v10856, %v11064
        %11066 = vmatmul.f32.gmra.mxu0 %v10655
        %v11067 = vpop.f32.mrf.mxu0
        %v11068 = vadd.f32 %v10859, %v11067
        %11069 = vmatmul.f32.gmra.mxu0 %v10657
        %v11070 = vpop.f32.mrf.mxu0
        %v11071 = vadd.f32 %v10862, %v11070
        %11072 = vmatmul.f32.gmra.mxu0 %v10659
        %v11073 = vpop.f32.mrf.mxu0
        %v11074 = vadd.f32 %v10865, %v11073
        %11075 = vmatmul.f32.gmra.mxu0 %v10661
        %v11076 = vpop.f32.mrf.mxu0
        %v11077 = vadd.f32 %v10868, %v11076
        %11078 = vmatmul.f32.gmra.mxu0 %v10663
        %v11079 = vpop.f32.mrf.mxu0
        %v11080 = vadd.f32 %v10871, %v11079
        %11081 = vmatmul.f32.gmra.mxu0 %v10665
        %v11082 = vpop.f32.mrf.mxu0
        %v11083 = vadd.f32 %v10874, %v11082
        %11084 = vdwg.mxu0
        %11085 = vst [vmem:[%s248] sm:$0xff] %v10894
        %11086 = vst [vmem:[%s248 + $0x8] sm:$0xff] %v10897
        %11087 = vst [vmem:[%s248 + $0x10] sm:$0xff] %v10900
        %11088 = vst [vmem:[%s248 + $0x18] sm:$0xff] %v10903
        %11089 = vst [vmem:[%s248 + $0x20] sm:$0xff] %v10906
        %11090 = vst [vmem:[%s248 + $0x28] sm:$0xff] %v10909
        %11091 = vst [vmem:[%s248 + $0x30] sm:$0xff] %v10912
        %11092 = vst [vmem:[%s248 + $0x38] sm:$0xff] %v10915
        %11093 = vst [vmem:[%s248 + $0x40] sm:$0xff] %v10918
        %11094 = vst [vmem:[%s248 + $0x48] sm:$0xff] %v10921
        %11095 = vst [vmem:[%s248 + $0x50] sm:$0xff] %v10924
        %11096 = vst [vmem:[%s248 + $0x58] sm:$0xff] %v10927
        %11097 = vst [vmem:[%s248 + $0x60] sm:$0xff] %v10930
        %11098 = vst [vmem:[%s248 + $0x68] sm:$0xff] %v10933
        %11099 = vst [vmem:[%s248 + $0x70] sm:$0xff] %v10936
        %11100 = vst [vmem:[%s248 + $0x78] sm:$0xff] %v10939
        %11101 = vst [vmem:[%s248 + $0x80] sm:$0xff] %v10942
        %11102 = vst [vmem:[%s248 + $0x88] sm:$0xff] %v10945
        %11103 = vst [vmem:[%s248 + $0x90] sm:$0xff] %v10948
        %11104 = vst [vmem:[%s248 + $0x98] sm:$0xff] %v10951
        %11105 = vst [vmem:[%s248 + $0xa0] sm:$0xff] %v10954
        %11106 = vst [vmem:[%s248 + $0xa8] sm:$0xff] %v10957
        %11107 = vst [vmem:[%s248 + $0xb0] sm:$0xff] %v10960
        %11108 = vst [vmem:[%s248 + $0xb8] sm:$0xff] %v10963
        %11109 = vst [vmem:[%s248 + $0xc0] sm:$0xff] %v10966
        %11110 = vst [vmem:[%s248 + $0xc8] sm:$0xff] %v10969
        %11111 = vst [vmem:[%s248 + $0xd0] sm:$0xff] %v10972
        %11112 = vst [vmem:[%s248 + $0xd8] sm:$0xff] %v10975
        %11113 = vst [vmem:[%s248 + $0xe0] sm:$0xff] %v10978
        %11114 = vst [vmem:[%s248 + $0xe8] sm:$0xff] %v10981
        %11115 = vst [vmem:[%s248 + $0xf0] sm:$0xff] %v10984
        %11116 = vst [vmem:[%s248 + $0xf8] sm:$0xff] %v10987
        %11117 = vst [vmem:[%s248 + $0x100] sm:$0xff] %v10990
        %11118 = vst [vmem:[%s248 + $0x108] sm:$0xff] %v10993
        %11119 = vst [vmem:[%s248 + $0x110] sm:$0xff] %v10996
        %11120 = vst [vmem:[%s248 + $0x118] sm:$0xff] %v10999
        %11121 = vst [vmem:[%s248 + $0x120] sm:$0xff] %v11002
        %11122 = vst [vmem:[%s248 + $0x128] sm:$0xff] %v11005
        %11123 = vst [vmem:[%s248 + $0x130] sm:$0xff] %v11008
        %11124 = vst [vmem:[%s248 + $0x138] sm:$0xff] %v11011
        %11125 = vst [vmem:[%s248 + $0x140] sm:$0xff] %v11014
        %11126 = vst [vmem:[%s248 + $0x148] sm:$0xff] %v11017
        %11127 = vst [vmem:[%s248 + $0x150] sm:$0xff] %v11020
        %11128 = vst [vmem:[%s248 + $0x158] sm:$0xff] %v11023
        %11129 = vst [vmem:[%s248 + $0x160] sm:$0xff] %v11026
        %11130 = vst [vmem:[%s248 + $0x168] sm:$0xff] %v11029
        %11131 = vst [vmem:[%s248 + $0x170] sm:$0xff] %v11032
        %11132 = vst [vmem:[%s248 + $0x178] sm:$0xff] %v11035
        %11133 = vst [vmem:[%s248 + $0x180] sm:$0xff] %v11038
        %11134 = vst [vmem:[%s248 + $0x188] sm:$0xff] %v11041
        %11135 = vst [vmem:[%s248 + $0x190] sm:$0xff] %v11044
        %11136 = vst [vmem:[%s248 + $0x198] sm:$0xff] %v11047
        %11137 = vst [vmem:[%s248 + $0x1a0] sm:$0xff] %v11050
        %11138 = vst [vmem:[%s248 + $0x1a8] sm:$0xff] %v11053
        %11139 = vst [vmem:[%s248 + $0x1b0] sm:$0xff] %v11056
        %11140 = vst [vmem:[%s248 + $0x1b8] sm:$0xff] %v11059
        %11141 = vst [vmem:[%s248 + $0x1c0] sm:$0xff] %v11062
        %11142 = vst [vmem:[%s248 + $0x1c8] sm:$0xff] %v11065
        %11143 = vst [vmem:[%s248 + $0x1d0] sm:$0xff] %v11068
        %11144 = vst [vmem:[%s248 + $0x1d8] sm:$0xff] %v11071
        %11145 = vst [vmem:[%s248 + $0x1e0] sm:$0xff] %v11074
        %11146 = vst [vmem:[%s248 + $0x1e8] sm:$0xff] %v11077
        %11147 = vst [vmem:[%s248 + $0x1f0] sm:$0xff] %v11080
        %11148 = vst [vmem:[%s248 + $0x1f8] sm:$0xff] %v11083
        %s11149 = sand.u32 %s119, 1
        %s11150 = scalar_lea.sflag [#allocation5], %s11149
        %s11151 = sand.u32 %s119, 1
        %s11152 = smul.addr %s11151, 512
        %s11153 = scalar_lea.vmem [#allocation9], %s11152
        // Predicated region
        $region49: #{tpu_custom_call.1} parent=35 // pred_check
          %p11154 = pneg %p129
        $region50: #{tpu_custom_call.1} parent=35 // pred_check_branch
          %11156 = sbr.rel (%p11154) target = $region52
        $region51: #{tpu_custom_call.1} parent=35 // pred_region
          %11158 = vsyncadd %s11150, 0
          %s11159 = smul.addr %s22, 64
          %s11160 = smul.addr %s11159, 8
          %s11161 = scalar_lea.hbm %s4, %s11160
          %s11162 = sshll.u32 %s11153, 4
          %s11163 = int_to_ptr.vmem [resolvable:$true] %s11162
          %s11164 = sshll.u32 %s11161, 4
          %s11165 = int_to_ptr.hbm [resolvable:$true] %s11164
          %11170 = dma.vmem_to_hbm [thread:$0]  %s11163, 8192, %s11165, %s11150, 128, 128, 8
        $region52: #{tpu_custom_call.1} parent=35 // pred_fallthru
          _
      $region36: #{tpu_custom_call.1} parent=5 // pred_fallthru
        _
      %p11171 = scmp.le.s32.totalorder 2, %s17
      // Predicated region
      $region53: #{tpu_custom_call.1} parent=5 // pred_check
        %p11172 = pneg %p11171
      $region54: #{tpu_custom_call.1} parent=5 // pred_check_branch
        %11174 = sbr.rel (%p11172) target = $region56
      $region55: #{tpu_custom_call.1} parent=5 // pred_region
        %s11175 = ssub.s32 %s17, 2
        // Predicated region
        $region57: #{tpu_custom_call.1} parent=55 // pred_check
          %p11176 = pneg %p135
        $region58: #{tpu_custom_call.1} parent=55 // pred_check_branch
          %11178 = sbr.rel (%p11176) target = $region60
        $region59: #{tpu_custom_call.1} parent=55 // pred_region
          %s11179 = sand.u32 %s120, 1
          %s11180 = scalar_lea.sflag [#allocation5], %s11179
          %s11181 = sand.u32 %s120, 1
          %s11182 = smul.addr %s11181, 512
          %s11183 = scalar_lea.vmem [#allocation9], %s11182
          %11185 = dma.done %s11180, 8192
        $region60: #{tpu_custom_call.1} parent=55 // pred_fallthru
          _
      $region56: #{tpu_custom_call.1} parent=5 // pred_fallthru
        _
    $region6: #{tpu_custom_call.1} parent=1 // loop_footer
      %s21 = sadd.s32 1, %s17
    $region7: #{tpu_custom_call.1} parent=1 // loop_footer_branch
      %16 = sbr.rel target = $region3
    $region8: #{tpu_custom_call.1} parent=1 // loop_exit
      _
    %11186 = vsyncpa [#allocation4], 1
    %s11187 = scalar_lea.sflag [#allocation4], 1
    %11188 = vsyncpa %s11187, 1
    %11189 = vsyncpa [#allocation7], 1
    %11190 = vsyncpa [#allocation5], 1
    %s11191 = scalar_lea.sflag [#allocation5], 1
    %11192 = vsyncpa %s11191, 1

</llo_original>
